<compile_context>
chip_gen: v6e
topology: v6e:2x2x1
jax: 0.10.0
libtpu: 0.0.40
codegen_flags: <defaults>
</compile_context>

<pallas_src>
import numpy as np

import jax
import jax.numpy as jnp
from jax.experimental import pallas as pl
from jax.experimental.pallas import tpu as pltpu


# -----------------------------------------------------------------------------
# Single fused kernel: g/theta/phi projections + attention + folded head +
# Linear(L -> out_len), whole batch in one grid step, everything in VMEM.
# -----------------------------------------------------------------------------
def _transformer_kernel(x_ref, wg_ref, bg_ref, wt_ref, bt_ref, wp_ref, bp_ref,
                        b1_ref, sel_ref, f_ref, whx_ref, wlin_ref, blin_ref,
                        out_ref):
    f32 = jnp.float32
    B, C, L = x_ref.shape
    P = sel_ref.shape[0]                      # number of reshape shift-groups

    # (L, L) identity built from 2-D iotas; used to transpose x tiles via a
    # rhs-transposed MXU matmul (xt_b = I_L @ x_b^T) instead of a vector
    # transpose, which keeps the lowering on well-supported matmul paths.
    eye = (jax.lax.broadcasted_iota(jnp.int32, (L, L), 0)
           == jax.lax.broadcasted_iota(jnp.int32, (L, L), 1)).astype(f32)

    # ---- x^T tiles for every batch element, stacked into one (B*L, C) slab --
    xts = [
        jax.lax.dot_general(eye, x_ref[b], (((1,), (1,)), ((), ())),
                            preferred_element_type=f32)            # (L, C)
        for b in range(B)
    ]
    xt = xts[0] if B == 1 else jnp.concatenate(xts, axis=0)        # (B*L, C)

    # ---- fused-over-batch g / theta / phi 1x1-conv projections --------------
    def proj(w_ref, b_ref):
        # (B*L, C_in) x (C_out, C_in)^T -> (B*L, C_out)
        return jax.lax.dot_general(xt, w_ref[...], (((1,), (1,)), ((), ())),
                                   preferred_element_type=f32) + b_ref[...]

    g_all = proj(wg_ref, bg_ref)              # (B*L, C)
    th_all = proj(wt_ref, bt_ref)             # (B*L, C)  (1/N folded in weights)
    ph_all = proj(wp_ref, bp_ref)             # (B*L, C)

    b1 = b1_ref[...]                          # (L, C)   carries folded w_hy
    whx = whx_ref[...]                        # (1, C)   = W_head2
    wlin = wlin_ref[...]                      # (O, L)
    blin = blin_ref[...]                      # (1, O)   (head bias folded in)

    for b in range(B):
        g_t = g_all[b * L:(b + 1) * L]        # (L, C)
        th_t = th_all[b * L:(b + 1) * L]      # (L, C)
        ph_t = ph_all[b * L:(b + 1) * L]      # (L, C)

        # f/N = (theta/N) @ phi^T   and   y = (f/N) @ g
        f = jax.lax.dot_general(th_t, ph_t, (((1,), (1,)), ((), ())),
                                preferred_element_type=f32)        # (L, L)
        y = jnp.dot(f, g_t, preferred_element_type=f32)            # (L, C)

        # h_y = w_hy @ view(y, (C, L))  — PyTorch's raw row-major re-view —
        # computed without materialising the reshape:
        #   z = y * B1 ;  h_y = sum_r (SEL[r] @ z) @ F[r]
        z = y * b1                                                  # (L, C)
        h = jnp.dot(whx, x_ref[b], preferred_element_type=f32)     # (1, L)
        for r in range(P):
            sel_r = sel_ref[pl.ds(r, 1), :]                        # (1, L)
            zr = jnp.dot(sel_r, z, preferred_element_type=f32)     # (1, C)
            h = h + jnp.dot(zr, f_ref[r], preferred_element_type=f32)  # (1, L)

        # Linear over length: (1, L) x (O, L)^T + b -> (1, O)
        o = jax.lax.dot_general(h, wlin, (((1,), (1,)), ((), ())),
                                preferred_element_type=f32) + blin
        out_ref[pl.ds(b, 1), :] = o.astype(out_ref.dtype)


# -----------------------------------------------------------------------------
# Wrapper: host-side algebraic folds + one fused pallas_call.
# -----------------------------------------------------------------------------
def transformer_forward(x, params):
    """Equivalent of Transformer.forward(x) for x of shape (B, 32, L)."""
    b, c, l = x.shape
    out_len = params["w_linear"].shape[0]
    dtype = x.dtype

    # ---- tiny parameter-only algebraic folds (feedback items 5 & 6) ---------
    inv_n = jnp.float32(1.0 / l)
    w_theta_s = params["w_theta"] * inv_n                 # fold 1/N into theta
    b_theta_s = params["b_theta"] * inv_n
    w_hy = params["w_head2"] @ params["w_w"]              # (1, C) = W_h2 @ W_w
    w_hx = params["w_head2"]                              # (1, C)
    b_h = (params["w_head2"] @ params["b_w"])[0] + params["b_head2"][0]
    # fold the scalar head bias into the Linear bias
    b_lin_eff = params["b_linear"] + b_h * jnp.sum(params["w_linear"], axis=1)

    # ---- constants that express  w_hy @ reshape(y,(C,L))  as plain matmuls --
    # y (L,C) row-major-reshaped to (C,L):
    #   h_y[l'] = sum_{l,c} y[l,c] * w_hy[(l*C+c)//L] * [(l*C+c) % L == l']
    # Group rows by the shift s_l = (l*C) % L (period p = L // gcd(C, L)).
    p = l // int(np.gcd(c, l))
    ls = np.arange(l)[:, None]
    cs = np.arange(c)[None, :]
    idx_hi = (ls * c + cs) // l                                        # (L, C)
    b1 = jnp.take(w_hy.reshape(-1), jnp.asarray(idx_hi))               # (L, C)
    shifts = (np.arange(p) * c) % l
    fmats = np.zeros((p, c, l), dtype=np.float32)
    fmats[np.arange(p)[:, None], cs, (shifts[:, None] + cs) % l] = 1.0  # (p,C,L)
    sel = np.zeros((p, l), dtype=np.float32)
    sel[np.arange(l) % p, np.arange(l)] = 1.0                           # (p, L)

    row = lambda v: v.reshape(1, -1)

    fused = pl.pallas_call(
        _transformer_kernel,
        out_shape=jax.ShapeDtypeStruct((b, out_len), dtype),
        grid_spec=pltpu.PrefetchScalarGridSpec(
            num_scalar_prefetch=0,
            grid=(1,),
            in_specs=[
                pl.BlockSpec((b, c, l), lambda i: (0, 0, 0)),        # x
                pl.BlockSpec((c, c), lambda i: (0, 0)),              # W_g
                pl.BlockSpec((1, c), lambda i: (0, 0)),              # b_g
                pl.BlockSpec((c, c), lambda i: (0, 0)),              # W_theta/N
                pl.BlockSpec((1, c), lambda i: (0, 0)),              # b_theta/N
                pl.BlockSpec((c, c), lambda i: (0, 0)),              # W_phi
                pl.BlockSpec((1, c), lambda i: (0, 0)),              # b_phi
                pl.BlockSpec((l, c), lambda i: (0, 0)),              # B1
                pl.BlockSpec((p, l), lambda i: (0, 0)),              # SEL
                pl.BlockSpec((p, c, l), lambda i: (0, 0, 0)),        # F
                pl.BlockSpec((1, c), lambda i: (0, 0)),              # W_head2
                pl.BlockSpec((out_len, l), lambda i: (0, 0)),        # W_linear
                pl.BlockSpec((1, out_len), lambda i: (0, 0)),        # b_lin_eff
            ],
            out_specs=pl.BlockSpec((b, out_len), lambda i: (0, 0)),
        ),
        compiler_params=pltpu.CompilerParams(
            dimension_semantics=("arbitrary",)),
    )
    return fused(x,
                 params["w_g"], row(params["b_g"]),
                 w_theta_s, row(b_theta_s),
                 params["w_phi"], row(params["b_phi"]),
                 b1, jnp.asarray(sel), jnp.asarray(fmats),
                 w_hx, params["w_linear"], row(b_lin_eff))           # (B, O)


if __name__ == "__main__":
    # Make the pure-JAX reference matmuls run at full f32 precision so the
    # numerical comparison against the MXU kernels is tight.
    jax.config.update("jax_default_matmul_precision", "highest")

    key = jax.random.PRNGKey(0)
    B, C, L, OUT_LEN = 2, 32, 16, 8   # in_channels = inter_channels = 32 (fixed)

    ks = jax.random.split(key, 13)
    mk = lambda k, shape: 0.1 * jax.random.normal(k, shape, dtype=jnp.float32)

    params = dict(
        w_g=mk(ks[0], (C, C)), b_g=mk(ks[1], (C,)),
        w_theta=mk(ks[2], (C, C)), b_theta=mk(ks[3], (C,)),
        w_phi=mk(ks[4], (C, C)), b_phi=mk(ks[5], (C,)),
        w_w=mk(ks[6], (C, C)), b_w=mk(ks[7], (C,)),
        w_head2=mk(ks[8], (1, C)), b_head2=mk(ks[9], (1,)),
        w_linear=mk(ks[10], (OUT_LEN, L)), b_linear=mk(ks[11], (OUT_LEN,)),
    )
    x = jax.random.normal(ks[12], (B, C, L), dtype=jnp.float32)

    out = jax.jit(transformer_forward)(x, params)
    out = jax.block_until_ready(out)
    assert out.shape == (B, OUT_LEN)
    assert out.dtype == jnp.float32

    # Pure-JAX reference with the exact PyTorch forward semantics.
    def reference(x, p):
        bsz, c, l = x.shape
        conv = lambda w, bb, t: jnp.einsum("oc,bcl->bol", w, t) + bb[None, :, None]
        g = conv(p["w_g"], p["b_g"], x)
        th = conv(p["w_theta"], p["b_theta"], x)
        ph = conv(p["w_phi"], p["b_phi"], x)
        theta_x = jnp.transpose(th, (0, 2, 1))               # (B, L, C)
        g_x = jnp.transpose(g, (0, 2, 1))                    # (B, L, C)
        f = jnp.matmul(theta_x, ph)                          # (B, L, L)
        y = jnp.matmul(f / l, g_x)                           # (B, L, C)
        y = y.reshape(bsz, c, l)                             # the .view(B, C, L)
        w_y = conv(p["w_w"], p["b_w"], y)
        xr = w_y + x
        h = conv(p["w_head2"], p["b_head2"], xr)[:, 0, :]    # (B, L)
        return h @ p["w_linear"].T + p["b_linear"][None, :]

    ref = reference(x, params)
    assert jnp.allclose(out, ref, atol=1e-3, rtol=1e-3), float(
        jnp.max(jnp.abs(out - ref)))

    print("KERNEL_OK")
</pallas_src>

<mosaic_0001>
module attributes {stable_mosaic.version = 11 : i64} {
  func.func @_transformer_kernel(%arg0: i32, %arg1: memref<2x32x16xf32, #tpu.memory_space<vmem>>, %arg2: memref<32x32xf32, #tpu.memory_space<vmem>>, %arg3: memref<1x32xf32, #tpu.memory_space<vmem>>, %arg4: memref<32x32xf32, #tpu.memory_space<vmem>>, %arg5: memref<1x32xf32, #tpu.memory_space<vmem>>, %arg6: memref<32x32xf32, #tpu.memory_space<vmem>>, %arg7: memref<1x32xf32, #tpu.memory_space<vmem>>, %arg8: memref<16x32xf32, #tpu.memory_space<vmem>>, %arg9: memref<1x16xf32, #tpu.memory_space<vmem>>, %arg10: memref<1x32x16xf32, #tpu.memory_space<vmem>>, %arg11: memref<1x32xf32, #tpu.memory_space<vmem>>, %arg12: memref<8x16xf32, #tpu.memory_space<vmem>>, %arg13: memref<1x8xf32, #tpu.memory_space<vmem>>, %arg14: memref<2x8xf32, #tpu.memory_space<vmem>>) attributes {dimension_semantics = [#tpu.dimension_semantics<arbitrary>], iteration_bounds = array<i64: 1>, scalar_prefetch = 0 : i64, scratch_operands = 0 : i64, tpu.core_type = #tpu.core_type<tc>, window_params = [{pipeline_mode = #tpu.pipeline_mode<synchronous>, transform_indices = @transform_0, window_bounds = array<i64: 2, 32, 16>}, {pipeline_mode = #tpu.pipeline_mode<synchronous>, transform_indices = @transform_1, window_bounds = array<i64: 32, 32>}, {pipeline_mode = #tpu.pipeline_mode<synchronous>, transform_indices = @transform_2, window_bounds = array<i64: 1, 32>}, {pipeline_mode = #tpu.pipeline_mode<synchronous>, transform_indices = @transform_3, window_bounds = array<i64: 32, 32>}, {pipeline_mode = #tpu.pipeline_mode<synchronous>, transform_indices = @transform_4, window_bounds = array<i64: 1, 32>}, {pipeline_mode = #tpu.pipeline_mode<synchronous>, transform_indices = @transform_5, window_bounds = array<i64: 32, 32>}, {pipeline_mode = #tpu.pipeline_mode<synchronous>, transform_indices = @transform_6, window_bounds = array<i64: 1, 32>}, {pipeline_mode = #tpu.pipeline_mode<synchronous>, transform_indices = @transform_7, window_bounds = array<i64: 16, 32>}, {pipeline_mode = #tpu.pipeline_mode<synchronous>, transform_indices = @transform_8, window_bounds = array<i64: 1, 16>}, {pipeline_mode = #tpu.pipeline_mode<synchronous>, transform_indices = @transform_9, window_bounds = array<i64: 1, 32, 16>}, {pipeline_mode = #tpu.pipeline_mode<synchronous>, transform_indices = @transform_10, window_bounds = array<i64: 1, 32>}, {pipeline_mode = #tpu.pipeline_mode<synchronous>, transform_indices = @transform_11, window_bounds = array<i64: 8, 16>}, {pipeline_mode = #tpu.pipeline_mode<synchronous>, transform_indices = @transform_12, window_bounds = array<i64: 1, 8>}, {pipeline_mode = #tpu.pipeline_mode<synchronous>, transform_indices = @transform_13, window_bounds = array<i64: 2, 8>}]} {
    %0 = tpu.iota {dimensions = array<i32: 0>} : vector<16x16xi32>
    %1 = tpu.iota {dimensions = array<i32: 1>} : vector<16x16xi32>
    %2 = arith.cmpi eq, %0, %1 : vector<16x16xi32>
    %3 = arith.extui %2 : vector<16x16xi1> to vector<16x16xi32>
    %4 = arith.sitofp %3 : vector<16x16xi32> to vector<16x16xf32>
    %c0 = arith.constant 0 : index
    %c0_0 = arith.constant 0 : index
    %c0_1 = arith.constant 0 : index
    %5 = vector.load %arg1[%c0, %c0_0, %c0_1] : memref<2x32x16xf32, #tpu.memory_space<vmem>>, vector<1x32x16xf32>
    %6 = vector.shape_cast %5 : vector<1x32x16xf32> to vector<32x16xf32>
    %cst = arith.constant dense<0.000000e+00> : vector<16x32xf32>
    %7 = tpu.matmul %4, %6, %cst {dimension_numbers = #tpu.dot_dimension_numbers<[1], [1], [0], [0], [0, 0, 1, 0], [], []>, precision = #tpu.contract_precision<fp32>} : vector<16x16xf32>, vector<32x16xf32>, vector<16x32xf32> -> vector<16x32xf32>
    %c1 = arith.constant 1 : index
    %c0_2 = arith.constant 0 : index
    %c0_3 = arith.constant 0 : index
    %8 = vector.load %arg1[%c1, %c0_2, %c0_3] : memref<2x32x16xf32, #tpu.memory_space<vmem>>, vector<1x32x16xf32>
    %9 = vector.shape_cast %8 : vector<1x32x16xf32> to vector<32x16xf32>
    %cst_4 = arith.constant dense<0.000000e+00> : vector<16x32xf32>
    %10 = tpu.matmul %4, %9, %cst_4 {dimension_numbers = #tpu.dot_dimension_numbers<[1], [1], [0], [0], [0, 0, 1, 0], [], []>, precision = #tpu.contract_precision<fp32>} : vector<16x16xf32>, vector<32x16xf32>, vector<16x32xf32> -> vector<16x32xf32>
    %11 = tpu.concatenate %7, %10 in 0 : vector<16x32xf32>, vector<16x32xf32> -> vector<32x32xf32>
    %c0_5 = arith.constant 0 : index
    %c0_6 = arith.constant 0 : index
    %12 = vector.load %arg2[%c0_5, %c0_6] : memref<32x32xf32, #tpu.memory_space<vmem>>, vector<32x32xf32>
    %cst_7 = arith.constant dense<0.000000e+00> : vector<32x32xf32>
    %13 = tpu.matmul %11, %12, %cst_7 {dimension_numbers = #tpu.dot_dimension_numbers<[1], [1], [0], [0], [0, 0, 1, 0], [], []>, precision = #tpu.contract_precision<fp32>} : vector<32x32xf32>, vector<32x32xf32>, vector<32x32xf32> -> vector<32x32xf32>
    %c0_8 = arith.constant 0 : index
    %c0_9 = arith.constant 0 : index
    %14 = vector.load %arg3[%c0_8, %c0_9] : memref<1x32xf32, #tpu.memory_space<vmem>>, vector<1x32xf32>
    %15 = vector.broadcast %14 : vector<1x32xf32> to vector<32x32xf32>
    %16 = arith.addf %13, %15 : vector<32x32xf32>
    %c0_10 = arith.constant 0 : index
    %c0_11 = arith.constant 0 : index
    %17 = vector.load %arg4[%c0_10, %c0_11] : memref<32x32xf32, #tpu.memory_space<vmem>>, vector<32x32xf32>
    %cst_12 = arith.constant dense<0.000000e+00> : vector<32x32xf32>
    %18 = tpu.matmul %11, %17, %cst_12 {dimension_numbers = #tpu.dot_dimension_numbers<[1], [1], [0], [0], [0, 0, 1, 0], [], []>, precision = #tpu.contract_precision<fp32>} : vector<32x32xf32>, vector<32x32xf32>, vector<32x32xf32> -> vector<32x32xf32>
    %c0_13 = arith.constant 0 : index
    %c0_14 = arith.constant 0 : index
    %19 = vector.load %arg5[%c0_13, %c0_14] : memref<1x32xf32, #tpu.memory_space<vmem>>, vector<1x32xf32>
    %20 = vector.broadcast %19 : vector<1x32xf32> to vector<32x32xf32>
    %21 = arith.addf %18, %20 : vector<32x32xf32>
    %c0_15 = arith.constant 0 : index
    %c0_16 = arith.constant 0 : index
    %22 = vector.load %arg6[%c0_15, %c0_16] : memref<32x32xf32, #tpu.memory_space<vmem>>, vector<32x32xf32>
    %cst_17 = arith.constant dense<0.000000e+00> : vector<32x32xf32>
    %23 = tpu.matmul %11, %22, %cst_17 {dimension_numbers = #tpu.dot_dimension_numbers<[1], [1], [0], [0], [0, 0, 1, 0], [], []>, precision = #tpu.contract_precision<fp32>} : vector<32x32xf32>, vector<32x32xf32>, vector<32x32xf32> -> vector<32x32xf32>
    %c0_18 = arith.constant 0 : index
    %c0_19 = arith.constant 0 : index
    %24 = vector.load %arg7[%c0_18, %c0_19] : memref<1x32xf32, #tpu.memory_space<vmem>>, vector<1x32xf32>
    %25 = vector.broadcast %24 : vector<1x32xf32> to vector<32x32xf32>
    %26 = arith.addf %23, %25 : vector<32x32xf32>
    %c0_20 = arith.constant 0 : index
    %c0_21 = arith.constant 0 : index
    %27 = vector.load %arg8[%c0_20, %c0_21] : memref<16x32xf32, #tpu.memory_space<vmem>>, vector<16x32xf32>
    %c0_22 = arith.constant 0 : index
    %c0_23 = arith.constant 0 : index
    %28 = vector.load %arg11[%c0_22, %c0_23] : memref<1x32xf32, #tpu.memory_space<vmem>>, vector<1x32xf32>
    %c0_24 = arith.constant 0 : index
    %c0_25 = arith.constant 0 : index
    %29 = vector.load %arg12[%c0_24, %c0_25] : memref<8x16xf32, #tpu.memory_space<vmem>>, vector<8x16xf32>
    %c0_26 = arith.constant 0 : index
    %c0_27 = arith.constant 0 : index
    %30 = vector.load %arg13[%c0_26, %c0_27] : memref<1x8xf32, #tpu.memory_space<vmem>>, vector<1x8xf32>
    %31 = vector.extract_strided_slice %16 {offsets = [0, 0], sizes = [16, 32], strides = [1, 1]} : vector<32x32xf32> to vector<16x32xf32>
    %32 = vector.extract_strided_slice %21 {offsets = [0, 0], sizes = [16, 32], strides = [1, 1]} : vector<32x32xf32> to vector<16x32xf32>
    %33 = vector.extract_strided_slice %26 {offsets = [0, 0], sizes = [16, 32], strides = [1, 1]} : vector<32x32xf32> to vector<16x32xf32>
    %cst_28 = arith.constant dense<0.000000e+00> : vector<16x16xf32>
    %34 = tpu.matmul %32, %33, %cst_28 {dimension_numbers = #tpu.dot_dimension_numbers<[1], [1], [0], [0], [0, 0, 1, 0], [], []>, precision = #tpu.contract_precision<fp32>} : vector<16x32xf32>, vector<16x32xf32>, vector<16x16xf32> -> vector<16x16xf32>
    %cst_29 = arith.constant dense<0.000000e+00> : vector<16x32xf32>
    %35 = tpu.matmul %34, %31, %cst_29 {dimension_numbers = #tpu.dot_dimension_numbers<[1], [0], [0], [1], [0, 0, 1, 1], [], []>, precision = #tpu.contract_precision<fp32>} : vector<16x16xf32>, vector<16x32xf32>, vector<16x32xf32> -> vector<16x32xf32>
    %36 = arith.mulf %35, %27 : vector<16x32xf32>
    %c0_30 = arith.constant 0 : index
    %c0_31 = arith.constant 0 : index
    %c0_32 = arith.constant 0 : index
    %37 = vector.load %arg1[%c0_30, %c0_31, %c0_32] : memref<2x32x16xf32, #tpu.memory_space<vmem>>, vector<1x32x16xf32>
    %38 = vector.shape_cast %37 : vector<1x32x16xf32> to vector<32x16xf32>
    %cst_33 = arith.constant dense<0.000000e+00> : vector<1x16xf32>
    %39 = tpu.matmul %28, %38, %cst_33 {dimension_numbers = #tpu.dot_dimension_numbers<[1], [0], [0], [1], [0, 0, 1, 1], [], []>, precision = #tpu.contract_precision<fp32>} : vector<1x32xf32>, vector<32x16xf32>, vector<1x16xf32> -> vector<1x16xf32>
    %c0_34 = arith.constant 0 : index
    %c0_35 = arith.constant 0 : index
    %40 = vector.load %arg9[%c0_34, %c0_35] : memref<1x16xf32, #tpu.memory_space<vmem>>, vector<1x16xf32>
    %cst_36 = arith.constant dense<0.000000e+00> : vector<1x32xf32>
    %41 = tpu.matmul %40, %36, %cst_36 {dimension_numbers = #tpu.dot_dimension_numbers<[1], [0], [0], [1], [0, 0, 1, 1], [], []>, precision = #tpu.contract_precision<fp32>} : vector<1x16xf32>, vector<16x32xf32>, vector<1x32xf32> -> vector<1x32xf32>
    %c0_37 = arith.constant 0 : index
    %c0_38 = arith.constant 0 : index
    %c0_39 = arith.constant 0 : index
    %42 = vector.load %arg10[%c0_37, %c0_38, %c0_39] : memref<1x32x16xf32, #tpu.memory_space<vmem>>, vector<1x32x16xf32>
    %43 = vector.shape_cast %42 : vector<1x32x16xf32> to vector<32x16xf32>
    %cst_40 = arith.constant dense<0.000000e+00> : vector<1x16xf32>
    %44 = tpu.matmul %41, %43, %cst_40 {dimension_numbers = #tpu.dot_dimension_numbers<[1], [0], [0], [1], [0, 0, 1, 1], [], []>, precision = #tpu.contract_precision<fp32>} : vector<1x32xf32>, vector<32x16xf32>, vector<1x16xf32> -> vector<1x16xf32>
    %45 = arith.addf %39, %44 : vector<1x16xf32>
    %cst_41 = arith.constant dense<0.000000e+00> : vector<1x8xf32>
    %46 = tpu.matmul %45, %29, %cst_41 {dimension_numbers = #tpu.dot_dimension_numbers<[1], [1], [0], [0], [0, 0, 1, 0], [], []>, precision = #tpu.contract_precision<fp32>} : vector<1x16xf32>, vector<8x16xf32>, vector<1x8xf32> -> vector<1x8xf32>
    %47 = arith.addf %46, %30 : vector<1x8xf32>
    %c0_42 = arith.constant 0 : index
    %c0_43 = arith.constant 0 : index
    %48 = vector.load %arg14[%c0_42, %c0_43] : memref<2x8xf32, #tpu.memory_space<vmem>>, vector<1x8xf32>
    tpu.vector_store %arg14[%c0_42, %c0_43], %47 {strides = array<i32>} : memref<2x8xf32, #tpu.memory_space<vmem>>, vector<1x8xf32>,
    %49 = vector.extract_strided_slice %16 {offsets = [16, 0], sizes = [16, 32], strides = [1, 1]} : vector<32x32xf32> to vector<16x32xf32>
    %50 = vector.extract_strided_slice %21 {offsets = [16, 0], sizes = [16, 32], strides = [1, 1]} : vector<32x32xf32> to vector<16x32xf32>
    %51 = vector.extract_strided_slice %26 {offsets = [16, 0], sizes = [16, 32], strides = [1, 1]} : vector<32x32xf32> to vector<16x32xf32>
    %cst_44 = arith.constant dense<0.000000e+00> : vector<16x16xf32>
    %52 = tpu.matmul %50, %51, %cst_44 {dimension_numbers = #tpu.dot_dimension_numbers<[1], [1], [0], [0], [0, 0, 1, 0], [], []>, precision = #tpu.contract_precision<fp32>} : vector<16x32xf32>, vector<16x32xf32>, vector<16x16xf32> -> vector<16x16xf32>
    %cst_45 = arith.constant dense<0.000000e+00> : vector<16x32xf32>
    %53 = tpu.matmul %52, %49, %cst_45 {dimension_numbers = #tpu.dot_dimension_numbers<[1], [0], [0], [1], [0, 0, 1, 1], [], []>, precision = #tpu.contract_precision<fp32>} : vector<16x16xf32>, vector<16x32xf32>, vector<16x32xf32> -> vector<16x32xf32>
    %54 = arith.mulf %53, %27 : vector<16x32xf32>
    %c1_46 = arith.constant 1 : index
    %c0_47 = arith.constant 0 : index
    %c0_48 = arith.constant 0 : index
    %55 = vector.load %arg1[%c1_46, %c0_47, %c0_48] : memref<2x32x16xf32, #tpu.memory_space<vmem>>, vector<1x32x16xf32>
    %56 = vector.shape_cast %55 : vector<1x32x16xf32> to vector<32x16xf32>
    %cst_49 = arith.constant dense<0.000000e+00> : vector<1x16xf32>
    %57 = tpu.matmul %28, %56, %cst_49 {dimension_numbers = #tpu.dot_dimension_numbers<[1], [0], [0], [1], [0, 0, 1, 1], [], []>, precision = #tpu.contract_precision<fp32>} : vector<1x32xf32>, vector<32x16xf32>, vector<1x16xf32> -> vector<1x16xf32>
    %c0_50 = arith.constant 0 : index
    %c0_51 = arith.constant 0 : index
    %58 = vector.load %arg9[%c0_50, %c0_51] : memref<1x16xf32, #tpu.memory_space<vmem>>, vector<1x16xf32>
    %cst_52 = arith.constant dense<0.000000e+00> : vector<1x32xf32>
    %59 = tpu.matmul %58, %54, %cst_52 {dimension_numbers = #tpu.dot_dimension_numbers<[1], [0], [0], [1], [0, 0, 1, 1], [], []>, precision = #tpu.contract_precision<fp32>} : vector<1x16xf32>, vector<16x32xf32>, vector<1x32xf32> -> vector<1x32xf32>
    %c0_53 = arith.constant 0 : index
    %c0_54 = arith.constant 0 : index
    %c0_55 = arith.constant 0 : index
    %60 = vector.load %arg10[%c0_53, %c0_54, %c0_55] : memref<1x32x16xf32, #tpu.memory_space<vmem>>, vector<1x32x16xf32>
    %61 = vector.shape_cast %60 : vector<1x32x16xf32> to vector<32x16xf32>
    %cst_56 = arith.constant dense<0.000000e+00> : vector<1x16xf32>
    %62 = tpu.matmul %59, %61, %cst_56 {dimension_numbers = #tpu.dot_dimension_numbers<[1], [0], [0], [1], [0, 0, 1, 1], [], []>, precision = #tpu.contract_precision<fp32>} : vector<1x32xf32>, vector<32x16xf32>, vector<1x16xf32> -> vector<1x16xf32>
    %63 = arith.addf %57, %62 : vector<1x16xf32>
    %cst_57 = arith.constant dense<0.000000e+00> : vector<1x8xf32>
    %64 = tpu.matmul %63, %29, %cst_57 {dimension_numbers = #tpu.dot_dimension_numbers<[1], [1], [0], [0], [0, 0, 1, 0], [], []>, precision = #tpu.contract_precision<fp32>} : vector<1x16xf32>, vector<8x16xf32>, vector<1x8xf32> -> vector<1x8xf32>
    %65 = arith.addf %64, %30 : vector<1x8xf32>
    %c1_58 = arith.constant 1 : index
    %c0_59 = arith.constant 0 : index
    %66 = vector.load %arg14[%c1_58, %c0_59] : memref<2x8xf32, #tpu.memory_space<vmem>>, vector<1x8xf32>
    tpu.vector_store %arg14[%c1_58, %c0_59], %65 {strides = array<i32>} : memref<2x8xf32, #tpu.memory_space<vmem>>, vector<1x8xf32>,
    return
  }
  func.func @transform_0(%arg0: i32) -> (i32, i32, i32) {
    %c0_i32 = arith.constant 0 : i32
    %c0_i32_0 = arith.constant 0 : i32
    %c0_i32_1 = arith.constant 0 : i32
    %c0_i32_2 = arith.constant 0 : i32
    return %c0_i32, %c0_i32_0, %c0_i32_1 : i32, i32, i32
  }
  func.func @transform_1(%arg0: i32) -> (i32, i32) {
    %c0_i32 = arith.constant 0 : i32
    %c0_i32_0 = arith.constant 0 : i32
    %c0_i32_1 = arith.constant 0 : i32
    return %c0_i32, %c0_i32_0 : i32, i32
  }
  func.func @transform_2(%arg0: i32) -> (i32, i32) {
    %c0_i32 = arith.constant 0 : i32
    %c0_i32_0 = arith.constant 0 : i32
    %c0_i32_1 = arith.constant 0 : i32
    return %c0_i32, %c0_i32_0 : i32, i32
  }
  func.func @transform_3(%arg0: i32) -> (i32, i32) {
    %c0_i32 = arith.constant 0 : i32
    %c0_i32_0 = arith.constant 0 : i32
    %c0_i32_1 = arith.constant 0 : i32
    return %c0_i32, %c0_i32_0 : i32, i32
  }
  func.func @transform_4(%arg0: i32) -> (i32, i32) {
    %c0_i32 = arith.constant 0 : i32
    %c0_i32_0 = arith.constant 0 : i32
    %c0_i32_1 = arith.constant 0 : i32
    return %c0_i32, %c0_i32_0 : i32, i32
  }
  func.func @transform_5(%arg0: i32) -> (i32, i32) {
    %c0_i32 = arith.constant 0 : i32
    %c0_i32_0 = arith.constant 0 : i32
    %c0_i32_1 = arith.constant 0 : i32
    return %c0_i32, %c0_i32_0 : i32, i32
  }
  func.func @transform_6(%arg0: i32) -> (i32, i32) {
    %c0_i32 = arith.constant 0 : i32
    %c0_i32_0 = arith.constant 0 : i32
    %c0_i32_1 = arith.constant 0 : i32
    return %c0_i32, %c0_i32_0 : i32, i32
  }
  func.func @transform_7(%arg0: i32) -> (i32, i32) {
    %c0_i32 = arith.constant 0 : i32
    %c0_i32_0 = arith.constant 0 : i32
    %c0_i32_1 = arith.constant 0 : i32
    return %c0_i32, %c0_i32_0 : i32, i32
  }
  func.func @transform_8(%arg0: i32) -> (i32, i32) {
    %c0_i32 = arith.constant 0 : i32
    %c0_i32_0 = arith.constant 0 : i32
    %c0_i32_1 = arith.constant 0 : i32
    return %c0_i32, %c0_i32_0 : i32, i32
  }
  func.func @transform_9(%arg0: i32) -> (i32, i32, i32) {
    %c0_i32 = arith.constant 0 : i32
    %c0_i32_0 = arith.constant 0 : i32
    %c0_i32_1 = arith.constant 0 : i32
    %c0_i32_2 = arith.constant 0 : i32
    return %c0_i32, %c0_i32_0, %c0_i32_1 : i32, i32, i32
  }
  func.func @transform_10(%arg0: i32) -> (i32, i32) {
    %c0_i32 = arith.constant 0 : i32
    %c0_i32_0 = arith.constant 0 : i32
    %c0_i32_1 = arith.constant 0 : i32
    return %c0_i32, %c0_i32_0 : i32, i32
  }
  func.func @transform_11(%arg0: i32) -> (i32, i32) {
    %c0_i32 = arith.constant 0 : i32
    %c0_i32_0 = arith.constant 0 : i32
    %c0_i32_1 = arith.constant 0 : i32
    return %c0_i32, %c0_i32_0 : i32, i32
  }
  func.func @transform_12(%arg0: i32) -> (i32, i32) {
    %c0_i32 = arith.constant 0 : i32
    %c0_i32_0 = arith.constant 0 : i32
    %c0_i32_1 = arith.constant 0 : i32
    return %c0_i32, %c0_i32_0 : i32, i32
  }
  func.func @transform_13(%arg0: i32) -> (i32, i32) {
    %c0_i32 = arith.constant 0 : i32
    %c0_i32_0 = arith.constant 0 : i32
    %c0_i32_1 = arith.constant 0 : i32
    return %c0_i32, %c0_i32_0 : i32, i32
  }
}

</mosaic_0001>

<llo_original>
// kernel: transformer_forward.1
$region0: #{transformer_forward.1}
  #allocation0 [shape = 'u32[]', space=smem, size = 0x4, offset = 0x4, fixed_abs, tag = 'smem constant byte address 0x4 - core index']
  #allocation1 [shape = 'u32[144,128]{1,0:T(1,128)}', space=vmem, size = 0x12000, scoped, tag = 'internal scratch']
  %s0 = inlined_call_operand.vmem [shape: f32[2,32,16], index: 0, kind: input, shape index: {}]
  %s1 = inlined_call_operand.vmem [shape: f32[32,32], index: 1, kind: input, shape index: {}]
  %s2 = inlined_call_operand.vmem [shape: f32[1,32], index: 2, kind: input, shape index: {}]
  %s3 = inlined_call_operand.vmem [shape: f32[32,32], index: 3, kind: input, shape index: {}]
  %s4 = inlined_call_operand.vmem [shape: f32[1,32], index: 4, kind: input, shape index: {}]
  %s5 = inlined_call_operand.vmem [shape: f32[32,32], index: 5, kind: input, shape index: {}]
  %s6 = inlined_call_operand.vmem [shape: f32[1,32], index: 6, kind: input, shape index: {}]
  %s7 = inlined_call_operand.vmem [shape: f32[16,32], index: 7, kind: input, shape index: {}]
  %s8 = inlined_call_operand.vmem [shape: f32[1,16], index: 8, kind: input, shape index: {}]
  %s9 = inlined_call_operand.vmem [shape: f32[1,32,16], index: 9, kind: input, shape index: {}]
  %s10 = inlined_call_operand.vmem [shape: f32[1,32], index: 10, kind: input, shape index: {}]
  %s11 = inlined_call_operand.vmem [shape: f32[8,16], index: 11, kind: input, shape index: {}]
  %s12 = inlined_call_operand.vmem [shape: f32[1,8], index: 12, kind: input, shape index: {}]
  %s13 = inlined_call_operand.hbm [shape: f32[2,8], index: 13, kind: output, shape index: {}]
  %s14 = sld [smem:[#allocation0]]
  $region62: #{transformer_forward.1} parent=0
    _
  %s16 = ssub.s32 1, %s14
  %s17 = scalar_select 0, %s16, %s14
  $region1: #{transformer_forward.1} parent=0
    #allocation2 [shape = 'u8[1024]{0}', space=vmem, size = 0x400, scoped, tag = 'output window, operand 0, single buffered']
    #allocation3 [shape = 's32[1]{0}', space=sflag, size = 0x4, scoped, tag = 'scoped memory for transformer_forward.1']
    %18 = vsyncpa [#allocation3], 0
    // Predicated region
    $region2: #{transformer_forward.1} parent=1 // pred_check
      _
    $region3: #{transformer_forward.1} parent=1 // pred_check_branch
      %20 = sbr.rel (0) target = $region5
    $region4: #{transformer_forward.1} parent=1 // pred_region
      _
    $region5: #{transformer_forward.1} parent=1 // pred_fallthru
      _
    // Predicated region
    $region6: #{transformer_forward.1} parent=1 // pred_check
      _
    $region7: #{transformer_forward.1} parent=1 // pred_check_branch
      %22 = sbr.rel (0) target = $region9
    $region8: #{transformer_forward.1} parent=1 // pred_region
      _
    $region9: #{transformer_forward.1} parent=1 // pred_fallthru
      _
    // Predicated region
    $region10: #{transformer_forward.1} parent=1 // pred_check
      _
    $region11: #{transformer_forward.1} parent=1 // pred_check_branch
      %24 = sbr.rel (0) target = $region13
    $region12: #{transformer_forward.1} parent=1 // pred_region
      _
    $region13: #{transformer_forward.1} parent=1 // pred_fallthru
      _
    // Predicated region
    $region14: #{transformer_forward.1} parent=1 // pred_check
      _
    $region15: #{transformer_forward.1} parent=1 // pred_check_branch
      %26 = sbr.rel (0) target = $region17
    $region16: #{transformer_forward.1} parent=1 // pred_region
      _
    $region17: #{transformer_forward.1} parent=1 // pred_fallthru
      _
    // Predicated region
    $region18: #{transformer_forward.1} parent=1 // pred_check
      _
    $region19: #{transformer_forward.1} parent=1 // pred_check_branch
      %28 = sbr.rel (0) target = $region21
    $region20: #{transformer_forward.1} parent=1 // pred_region
      _
    $region21: #{transformer_forward.1} parent=1 // pred_fallthru
      _
    // Predicated region
    $region22: #{transformer_forward.1} parent=1 // pred_check
      _
    $region23: #{transformer_forward.1} parent=1 // pred_check_branch
      %30 = sbr.rel (0) target = $region25
    $region24: #{transformer_forward.1} parent=1 // pred_region
      _
    $region25: #{transformer_forward.1} parent=1 // pred_fallthru
      _
    // Predicated region
    $region26: #{transformer_forward.1} parent=1 // pred_check
      _
    $region27: #{transformer_forward.1} parent=1 // pred_check_branch
      %32 = sbr.rel (0) target = $region29
    $region28: #{transformer_forward.1} parent=1 // pred_region
      _
    $region29: #{transformer_forward.1} parent=1 // pred_fallthru
      _
    // Predicated region
    $region30: #{transformer_forward.1} parent=1 // pred_check
      _
    $region31: #{transformer_forward.1} parent=1 // pred_check_branch
      %34 = sbr.rel (0) target = $region33
    $region32: #{transformer_forward.1} parent=1 // pred_region
      _
    $region33: #{transformer_forward.1} parent=1 // pred_fallthru
      _
    // Predicated region
    $region34: #{transformer_forward.1} parent=1 // pred_check
      _
    $region35: #{transformer_forward.1} parent=1 // pred_check_branch
      %36 = sbr.rel (0) target = $region37
    $region36: #{transformer_forward.1} parent=1 // pred_region
      _
    $region37: #{transformer_forward.1} parent=1 // pred_fallthru
      _
    // Predicated region
    $region38: #{transformer_forward.1} parent=1 // pred_check
      _
    $region39: #{transformer_forward.1} parent=1 // pred_check_branch
      %38 = sbr.rel (0) target = $region41
    $region40: #{transformer_forward.1} parent=1 // pred_region
      _
    $region41: #{transformer_forward.1} parent=1 // pred_fallthru
      _
    // Predicated region
    $region42: #{transformer_forward.1} parent=1 // pred_check
      _
    $region43: #{transformer_forward.1} parent=1 // pred_check_branch
      %40 = sbr.rel (0) target = $region45
    $region44: #{transformer_forward.1} parent=1 // pred_region
      _
    $region45: #{transformer_forward.1} parent=1 // pred_fallthru
      _
    // Predicated region
    $region46: #{transformer_forward.1} parent=1 // pred_check
      _
    $region47: #{transformer_forward.1} parent=1 // pred_check_branch
      %42 = sbr.rel (0) target = $region49
    $region48: #{transformer_forward.1} parent=1 // pred_region
      _
    $region49: #{transformer_forward.1} parent=1 // pred_fallthru
      _
    // Predicated region
    $region50: #{transformer_forward.1} parent=1 // pred_check
      _
    $region51: #{transformer_forward.1} parent=1 // pred_check_branch
      %44 = sbr.rel (0) target = $region53
    $region52: #{transformer_forward.1} parent=1 // pred_region
      _
    $region53: #{transformer_forward.1} parent=1 // pred_fallthru
      _
    %v45 = vlaneseq
    %v46 = vshrl.u32 %v45, 7
    %v47 = vadd.s32 %v46, 8
    %v48 = vlaneseq
    %v49 = vand.u32 %v48, 127
    %vm50 = vcmp.eq.s32.totalorder %v46, %v49
    %vm51 = vcmp.eq.s32.totalorder %v47, %v49
    %v52 = vsel %vm50, 1, 0
    %v53 = vsel %vm51, 1, 0
    %v54 = vcvt.s32.f32 %v52
    %v55 = vcvt.s32.f32 %v53
    %v56 = vld [vmem:[%s0] sm:$0xff]
    %v57 = vld [vmem:[%s0 + $0x8] sm:$0xff]
    %v58 = vld [vmem:[%s0 + $0x10] sm:$0xff]
    %v59 = vld [vmem:[%s0 + $0x18] sm:$0xff]
    %vm60 = vcmask 130048
    %v62 = vsel %vm60, %v54, 0
    %v65 = vsel %vm60, %v55, 0
    %v68 = vsel %vm60, %v56, 0
    %v71 = vsel %vm60, %v57, 0
    %v74 = vsel %vm60, %v58, 0
    %v77 = vsel %vm60, %v59, 0
    %79 = vmatprep.subr.mxu0 0.0
    %80 = vmatpush1.xpose.msra.mxu0 0.0
    %81 = vmatprep.subr.mxu0 0.0
    %82 = vmatpush1.xpose.msra.mxu0 0.0
    %83 = vmatprep.subr.mxu0 0.0
    %84 = vmatpush1.xpose.msra.mxu0 0.0
    %85 = vmatprep.subr.mxu0 0.0
    %86 = vmatpush1.xpose.msra.mxu0 0.0
    %87 = vmatprep.subr.mxu0 0.0
    %88 = vmatpush1.xpose.msra.mxu0 0.0
    %89 = vmatprep.subr.mxu0 0.0
    %90 = vmatpush1.xpose.msra.mxu0 0.0
    %91 = vmatprep.subr.mxu0 0.0
    %92 = vmatpush1.xpose.msra.mxu0 0.0
    %93 = vmatprep.subr.mxu0 0.0
    %94 = vmatpush1.xpose.msra.mxu0 0.0
    %95 = vmatprep.subr.mxu0 0.0
    %96 = vmatpush1.xpose.msra.mxu0 0.0
    %97 = vmatprep.subr.mxu0 0.0
    %98 = vmatpush1.xpose.msra.mxu0 0.0
    %99 = vmatprep.subr.mxu0 0.0
    %100 = vmatpush1.xpose.msra.mxu0 0.0
    %101 = vmatprep.subr.mxu0 0.0
    %102 = vmatpush1.xpose.msra.mxu0 0.0
    %103 = vmatprep.subr.mxu0 0.0
    %v104 = vand.u32 %v77, 4294901760
    %105 = vmatpush1.xpose.msra.mxu0 %v104
    %106 = vmatprep.subr.mxu0 0.0
    %v107 = vand.u32 %v74, 4294901760
    %108 = vmatpush1.xpose.msra.mxu0 %v107
    %109 = vmatprep.subr.mxu0 0.0
    %v110 = vand.u32 %v71, 4294901760
    %111 = vmatpush1.xpose.msra.mxu0 %v110
    %112 = vmatprep.subr.mxu0 0.0
    %v113 = vand.u32 %v68, 4294901760
    %114 = vmatpush1.xpose.msra.mxu0 %v113
    %115 = vmatprep.subr.mxu0 0.0
    %116 = vmatpush2.xpose.msra.mxu0 0.0
    %117 = vmatprep.subr.mxu0 0.0
    %118 = vmatpush2.xpose.msra.mxu0 0.0
    %119 = vmatprep.subr.mxu0 0.0
    %120 = vmatpush2.xpose.msra.mxu0 0.0
    %121 = vmatprep.subr.mxu0 0.0
    %122 = vmatpush2.xpose.msra.mxu0 0.0
    %123 = vmatprep.subr.mxu0 0.0
    %124 = vmatpush2.xpose.msra.mxu0 0.0
    %125 = vmatprep.subr.mxu0 0.0
    %126 = vmatpush2.xpose.msra.mxu0 0.0
    %127 = vmatprep.subr.mxu0 0.0
    %128 = vmatpush2.xpose.msra.mxu0 0.0
    %129 = vmatprep.subr.mxu0 0.0
    %130 = vmatpush2.xpose.msra.mxu0 0.0
    %131 = vmatprep.subr.mxu0 0.0
    %132 = vmatpush2.xpose.msra.mxu0 0.0
    %133 = vmatprep.subr.mxu0 0.0
    %134 = vmatpush2.xpose.msra.mxu0 0.0
    %135 = vmatprep.subr.mxu0 0.0
    %136 = vmatpush2.xpose.msra.mxu0 0.0
    %137 = vmatprep.subr.mxu0 0.0
    %138 = vmatpush2.xpose.msra.mxu0 0.0
    %139 = vmatprep.subr.mxu0 0.0
    %140 = vmatpush2.xpose.msra.mxu0 0.0
    %141 = vmatprep.subr.mxu0 0.0
    %142 = vmatpush2.xpose.msra.mxu0 0.0
    %143 = vmatprep.subr.mxu0 0.0
    %144 = vmatpush2.xpose.msra.mxu0 0.0
    %145 = vmatprep.subr.mxu0 0.0
    %146 = vmatpush2.xpose.msra.mxu0 0.0
    %147 = vmatprep.mubr.f32.mxu0 0.0
    %v148 = vand.u32 %v62, 4294901760
    %v149 = vsub.f32 %v62, %v148
    %v150 = vand.u32 %v149, 4294901760
    %v151 = vsub.f32 %v149, %v150
    %v152 = vand.u32 %v151, 4294901760
    %153 = vmatmul.mubr.f32.gmra.mxu0 %v152
    %v154 = vpop.f32.mrf.mxu0
    %v155 = vadd.f32 0.0, %v154
    %v156 = vpop.f32.mrf.mxu0
    %157 = vmatprep.mubr.f32.mxu0 0.0
    %v158 = vand.u32 %v65, 4294901760
    %v159 = vsub.f32 %v65, %v158
    %v160 = vand.u32 %v159, 4294901760
    %v161 = vsub.f32 %v159, %v160
    %v162 = vand.u32 %v161, 4294901760
    %163 = vmatmul.mubr.f32.gmra.mxu0 %v162
    %v164 = vpop.f32.mrf.mxu0
    %v165 = vadd.f32 0.0, %v164
    %v166 = vpop.f32.mrf.mxu0
    %167 = vdwg.mxu0
    %168 = vmatprep.subr.mxu0 0.0
    %169 = vmatpush1.xpose.msra.mxu0 0.0
    %170 = vmatprep.subr.mxu0 0.0
    %171 = vmatpush1.xpose.msra.mxu0 0.0
    %172 = vmatprep.subr.mxu0 0.0
    %173 = vmatpush1.xpose.msra.mxu0 0.0
    %174 = vmatprep.subr.mxu0 0.0
    %175 = vmatpush1.xpose.msra.mxu0 0.0
    %176 = vmatprep.subr.mxu0 0.0
    %177 = vmatpush1.xpose.msra.mxu0 0.0
    %178 = vmatprep.subr.mxu0 0.0
    %179 = vmatpush1.xpose.msra.mxu0 0.0
    %180 = vmatprep.subr.mxu0 0.0
    %181 = vmatpush1.xpose.msra.mxu0 0.0
    %182 = vmatprep.subr.mxu0 0.0
    %183 = vmatpush1.xpose.msra.mxu0 0.0
    %184 = vmatprep.subr.mxu0 0.0
    %185 = vmatpush1.xpose.msra.mxu0 0.0
    %186 = vmatprep.subr.mxu0 0.0
    %187 = vmatpush1.xpose.msra.mxu0 0.0
    %188 = vmatprep.subr.mxu0 0.0
    %189 = vmatpush1.xpose.msra.mxu0 0.0
    %190 = vmatprep.subr.mxu0 0.0
    %191 = vmatpush1.xpose.msra.mxu0 0.0
    %192 = vmatprep.subr.mxu0 0.0
    %v193 = vand.u32 %v77, 4294901760
    %v194 = vsub.f32 %v77, %v193
    %v195 = vand.u32 %v194, 4294901760
    %v196 = vsub.f32 %v194, %v195
    %v197 = vand.u32 %v196, 4294901760
    %198 = vmatpush1.xpose.msra.mxu0 %v197
    %199 = vmatprep.subr.mxu0 0.0
    %v200 = vand.u32 %v74, 4294901760
    %v201 = vsub.f32 %v74, %v200
    %v202 = vand.u32 %v201, 4294901760
    %v203 = vsub.f32 %v201, %v202
    %v204 = vand.u32 %v203, 4294901760
    %205 = vmatpush1.xpose.msra.mxu0 %v204
    %206 = vmatprep.subr.mxu0 0.0
    %v207 = vand.u32 %v71, 4294901760
    %v208 = vsub.f32 %v71, %v207
    %v209 = vand.u32 %v208, 4294901760
    %v210 = vsub.f32 %v208, %v209
    %v211 = vand.u32 %v210, 4294901760
    %212 = vmatpush1.xpose.msra.mxu0 %v211
    %213 = vmatprep.subr.mxu0 0.0
    %v214 = vand.u32 %v68, 4294901760
    %v215 = vsub.f32 %v68, %v214
    %v216 = vand.u32 %v215, 4294901760
    %v217 = vsub.f32 %v215, %v216
    %v218 = vand.u32 %v217, 4294901760
    %219 = vmatpush1.xpose.msra.mxu0 %v218
    %220 = vmatprep.subr.mxu0 0.0
    %221 = vmatpush2.xpose.msra.mxu0 0.0
    %222 = vmatprep.subr.mxu0 0.0
    %223 = vmatpush2.xpose.msra.mxu0 0.0
    %224 = vmatprep.subr.mxu0 0.0
    %225 = vmatpush2.xpose.msra.mxu0 0.0
    %226 = vmatprep.subr.mxu0 0.0
    %227 = vmatpush2.xpose.msra.mxu0 0.0
    %228 = vmatprep.subr.mxu0 0.0
    %229 = vmatpush2.xpose.msra.mxu0 0.0
    %230 = vmatprep.subr.mxu0 0.0
    %231 = vmatpush2.xpose.msra.mxu0 0.0
    %232 = vmatprep.subr.mxu0 0.0
    %233 = vmatpush2.xpose.msra.mxu0 0.0
    %234 = vmatprep.subr.mxu0 0.0
    %235 = vmatpush2.xpose.msra.mxu0 0.0
    %236 = vmatprep.subr.mxu0 0.0
    %237 = vmatpush2.xpose.msra.mxu0 0.0
    %238 = vmatprep.subr.mxu0 0.0
    %239 = vmatpush2.xpose.msra.mxu0 0.0
    %240 = vmatprep.subr.mxu0 0.0
    %241 = vmatpush2.xpose.msra.mxu0 0.0
    %242 = vmatprep.subr.mxu0 0.0
    %243 = vmatpush2.xpose.msra.mxu0 0.0
    %244 = vmatprep.subr.mxu0 0.0
    %245 = vmatpush2.xpose.msra.mxu0 0.0
    %246 = vmatprep.subr.mxu0 0.0
    %247 = vmatpush2.xpose.msra.mxu0 0.0
    %248 = vmatprep.subr.mxu0 0.0
    %249 = vmatpush2.xpose.msra.mxu0 0.0
    %250 = vmatprep.subr.mxu0 0.0
    %251 = vmatpush2.xpose.msra.mxu0 0.0
    %252 = vmatprep.mubr.f32.mxu0 0.0
    %v253 = vand.u32 %v62, 4294901760
    %254 = vmatmul.mubr.f32.gmra.mxu0 %v253
    %v255 = vpop.f32.mrf.mxu0
    %v256 = vadd.f32 %v155, %v255
    %v257 = vpop.f32.mrf.mxu0
    %258 = vmatprep.mubr.f32.mxu0 0.0
    %v259 = vand.u32 %v65, 4294901760
    %260 = vmatmul.mubr.f32.gmra.mxu0 %v259
    %v261 = vpop.f32.mrf.mxu0
    %v262 = vadd.f32 %v165, %v261
    %v263 = vpop.f32.mrf.mxu0
    %264 = vdwg.mxu0
    %265 = vmatprep.subr.mxu0 0.0
    %266 = vmatpush1.xpose.msra.mxu0 0.0
    %267 = vmatprep.subr.mxu0 0.0
    %268 = vmatpush1.xpose.msra.mxu0 0.0
    %269 = vmatprep.subr.mxu0 0.0
    %270 = vmatpush1.xpose.msra.mxu0 0.0
    %271 = vmatprep.subr.mxu0 0.0
    %272 = vmatpush1.xpose.msra.mxu0 0.0
    %273 = vmatprep.subr.mxu0 0.0
    %274 = vmatpush1.xpose.msra.mxu0 0.0
    %275 = vmatprep.subr.mxu0 0.0
    %276 = vmatpush1.xpose.msra.mxu0 0.0
    %277 = vmatprep.subr.mxu0 0.0
    %278 = vmatpush1.xpose.msra.mxu0 0.0
    %279 = vmatprep.subr.mxu0 0.0
    %280 = vmatpush1.xpose.msra.mxu0 0.0
    %281 = vmatprep.subr.mxu0 0.0
    %282 = vmatpush1.xpose.msra.mxu0 0.0
    %283 = vmatprep.subr.mxu0 0.0
    %284 = vmatpush1.xpose.msra.mxu0 0.0
    %285 = vmatprep.subr.mxu0 0.0
    %286 = vmatpush1.xpose.msra.mxu0 0.0
    %287 = vmatprep.subr.mxu0 0.0
    %288 = vmatpush1.xpose.msra.mxu0 0.0
    %289 = vmatprep.subr.mxu0 0.0
    %v290 = vand.u32 %v77, 4294901760
    %v291 = vsub.f32 %v77, %v290
    %292 = vmatpush1.xpose.msra.mxu0 %v291
    %293 = vmatprep.subr.mxu0 0.0
    %v294 = vand.u32 %v74, 4294901760
    %v295 = vsub.f32 %v74, %v294
    %296 = vmatpush1.xpose.msra.mxu0 %v295
    %297 = vmatprep.subr.mxu0 0.0
    %v298 = vand.u32 %v71, 4294901760
    %v299 = vsub.f32 %v71, %v298
    %300 = vmatpush1.xpose.msra.mxu0 %v299
    %301 = vmatprep.subr.mxu0 0.0
    %v302 = vand.u32 %v68, 4294901760
    %v303 = vsub.f32 %v68, %v302
    %304 = vmatpush1.xpose.msra.mxu0 %v303
    %305 = vmatprep.subr.mxu0 0.0
    %306 = vmatpush2.xpose.msra.mxu0 0.0
    %307 = vmatprep.subr.mxu0 0.0
    %308 = vmatpush2.xpose.msra.mxu0 0.0
    %309 = vmatprep.subr.mxu0 0.0
    %310 = vmatpush2.xpose.msra.mxu0 0.0
    %311 = vmatprep.subr.mxu0 0.0
    %312 = vmatpush2.xpose.msra.mxu0 0.0
    %313 = vmatprep.subr.mxu0 0.0
    %314 = vmatpush2.xpose.msra.mxu0 0.0
    %315 = vmatprep.subr.mxu0 0.0
    %316 = vmatpush2.xpose.msra.mxu0 0.0
    %317 = vmatprep.subr.mxu0 0.0
    %318 = vmatpush2.xpose.msra.mxu0 0.0
    %319 = vmatprep.subr.mxu0 0.0
    %320 = vmatpush2.xpose.msra.mxu0 0.0
    %321 = vmatprep.subr.mxu0 0.0
    %322 = vmatpush2.xpose.msra.mxu0 0.0
    %323 = vmatprep.subr.mxu0 0.0
    %324 = vmatpush2.xpose.msra.mxu0 0.0
    %325 = vmatprep.subr.mxu0 0.0
    %326 = vmatpush2.xpose.msra.mxu0 0.0
    %327 = vmatprep.subr.mxu0 0.0
    %328 = vmatpush2.xpose.msra.mxu0 0.0
    %329 = vmatprep.subr.mxu0 0.0
    %330 = vmatpush2.xpose.msra.mxu0 0.0
    %331 = vmatprep.subr.mxu0 0.0
    %332 = vmatpush2.xpose.msra.mxu0 0.0
    %333 = vmatprep.subr.mxu0 0.0
    %334 = vmatpush2.xpose.msra.mxu0 0.0
    %335 = vmatprep.subr.mxu0 0.0
    %336 = vmatpush2.xpose.msra.mxu0 0.0
    %337 = vmatprep.mubr.f32.mxu0 0.0
    %v338 = vand.u32 %v62, 4294901760
    %v339 = vsub.f32 %v62, %v338
    %340 = vmatmul.mubr.f32.gmra.mxu0 %v339
    %v341 = vpop.f32.mrf.mxu0
    %v342 = vadd.f32 %v256, %v341
    %v343 = vpop.f32.mrf.mxu0
    %344 = vmatprep.mubr.f32.mxu0 0.0
    %v345 = vand.u32 %v65, 4294901760
    %v346 = vsub.f32 %v65, %v345
    %347 = vmatmul.mubr.f32.gmra.mxu0 %v346
    %v348 = vpop.f32.mrf.mxu0
    %v349 = vadd.f32 %v262, %v348
    %v350 = vpop.f32.mrf.mxu0
    %351 = vdwg.mxu0
    %352 = vmatprep.subr.mxu0 0.0
    %353 = vmatpush1.xpose.msra.mxu0 0.0
    %354 = vmatprep.subr.mxu0 0.0
    %355 = vmatpush1.xpose.msra.mxu0 0.0
    %356 = vmatprep.subr.mxu0 0.0
    %357 = vmatpush1.xpose.msra.mxu0 0.0
    %358 = vmatprep.subr.mxu0 0.0
    %359 = vmatpush1.xpose.msra.mxu0 0.0
    %360 = vmatprep.subr.mxu0 0.0
    %361 = vmatpush1.xpose.msra.mxu0 0.0
    %362 = vmatprep.subr.mxu0 0.0
    %363 = vmatpush1.xpose.msra.mxu0 0.0
    %364 = vmatprep.subr.mxu0 0.0
    %365 = vmatpush1.xpose.msra.mxu0 0.0
    %366 = vmatprep.subr.mxu0 0.0
    %367 = vmatpush1.xpose.msra.mxu0 0.0
    %368 = vmatprep.subr.mxu0 0.0
    %369 = vmatpush1.xpose.msra.mxu0 0.0
    %370 = vmatprep.subr.mxu0 0.0
    %371 = vmatpush1.xpose.msra.mxu0 0.0
    %372 = vmatprep.subr.mxu0 0.0
    %373 = vmatpush1.xpose.msra.mxu0 0.0
    %374 = vmatprep.subr.mxu0 0.0
    %375 = vmatpush1.xpose.msra.mxu0 0.0
    %376 = vmatprep.subr.mxu0 0.0
    %v377 = vand.u32 %v77, 4294901760
    %378 = vmatpush1.xpose.msra.mxu0 %v377
    %379 = vmatprep.subr.mxu0 0.0
    %v380 = vand.u32 %v74, 4294901760
    %381 = vmatpush1.xpose.msra.mxu0 %v380
    %382 = vmatprep.subr.mxu0 0.0
    %v383 = vand.u32 %v71, 4294901760
    %384 = vmatpush1.xpose.msra.mxu0 %v383
    %385 = vmatprep.subr.mxu0 0.0
    %v386 = vand.u32 %v68, 4294901760
    %387 = vmatpush1.xpose.msra.mxu0 %v386
    %388 = vmatprep.subr.mxu0 0.0
    %389 = vmatpush2.xpose.msra.mxu0 0.0
    %390 = vmatprep.subr.mxu0 0.0
    %391 = vmatpush2.xpose.msra.mxu0 0.0
    %392 = vmatprep.subr.mxu0 0.0
    %393 = vmatpush2.xpose.msra.mxu0 0.0
    %394 = vmatprep.subr.mxu0 0.0
    %395 = vmatpush2.xpose.msra.mxu0 0.0
    %396 = vmatprep.subr.mxu0 0.0
    %397 = vmatpush2.xpose.msra.mxu0 0.0
    %398 = vmatprep.subr.mxu0 0.0
    %399 = vmatpush2.xpose.msra.mxu0 0.0
    %400 = vmatprep.subr.mxu0 0.0
    %401 = vmatpush2.xpose.msra.mxu0 0.0
    %402 = vmatprep.subr.mxu0 0.0
    %403 = vmatpush2.xpose.msra.mxu0 0.0
    %404 = vmatprep.subr.mxu0 0.0
    %405 = vmatpush2.xpose.msra.mxu0 0.0
    %406 = vmatprep.subr.mxu0 0.0
    %407 = vmatpush2.xpose.msra.mxu0 0.0
    %408 = vmatprep.subr.mxu0 0.0
    %409 = vmatpush2.xpose.msra.mxu0 0.0
    %410 = vmatprep.subr.mxu0 0.0
    %411 = vmatpush2.xpose.msra.mxu0 0.0
    %412 = vmatprep.subr.mxu0 0.0
    %413 = vmatpush2.xpose.msra.mxu0 0.0
    %414 = vmatprep.subr.mxu0 0.0
    %415 = vmatpush2.xpose.msra.mxu0 0.0
    %416 = vmatprep.subr.mxu0 0.0
    %417 = vmatpush2.xpose.msra.mxu0 0.0
    %418 = vmatprep.subr.mxu0 0.0
    %419 = vmatpush2.xpose.msra.mxu0 0.0
    %420 = vmatprep.mubr.f32.mxu0 0.0
    %v421 = vand.u32 %v62, 4294901760
    %v422 = vsub.f32 %v62, %v421
    %v423 = vand.u32 %v422, 4294901760
    %424 = vmatmul.mubr.f32.gmra.mxu0 %v423
    %v425 = vpop.f32.mrf.mxu0
    %v426 = vadd.f32 %v342, %v425
    %v427 = vpop.f32.mrf.mxu0
    %428 = vmatprep.mubr.f32.mxu0 0.0
    %v429 = vand.u32 %v65, 4294901760
    %v430 = vsub.f32 %v65, %v429
    %v431 = vand.u32 %v430, 4294901760
    %432 = vmatmul.mubr.f32.gmra.mxu0 %v431
    %v433 = vpop.f32.mrf.mxu0
    %v434 = vadd.f32 %v349, %v433
    %v435 = vpop.f32.mrf.mxu0
    %436 = vdwg.mxu0
    %437 = vmatprep.subr.mxu0 0.0
    %438 = vmatpush1.xpose.msra.mxu0 0.0
    %439 = vmatprep.subr.mxu0 0.0
    %440 = vmatpush1.xpose.msra.mxu0 0.0
    %441 = vmatprep.subr.mxu0 0.0
    %442 = vmatpush1.xpose.msra.mxu0 0.0
    %443 = vmatprep.subr.mxu0 0.0
    %444 = vmatpush1.xpose.msra.mxu0 0.0
    %445 = vmatprep.subr.mxu0 0.0
    %446 = vmatpush1.xpose.msra.mxu0 0.0
    %447 = vmatprep.subr.mxu0 0.0
    %448 = vmatpush1.xpose.msra.mxu0 0.0
    %449 = vmatprep.subr.mxu0 0.0
    %450 = vmatpush1.xpose.msra.mxu0 0.0
    %451 = vmatprep.subr.mxu0 0.0
    %452 = vmatpush1.xpose.msra.mxu0 0.0
    %453 = vmatprep.subr.mxu0 0.0
    %454 = vmatpush1.xpose.msra.mxu0 0.0
    %455 = vmatprep.subr.mxu0 0.0
    %456 = vmatpush1.xpose.msra.mxu0 0.0
    %457 = vmatprep.subr.mxu0 0.0
    %458 = vmatpush1.xpose.msra.mxu0 0.0
    %459 = vmatprep.subr.mxu0 0.0
    %460 = vmatpush1.xpose.msra.mxu0 0.0
    %461 = vmatprep.subr.mxu0 0.0
    %v462 = vand.u32 %v77, 4294901760
    %v463 = vsub.f32 %v77, %v462
    %v464 = vand.u32 %v463, 4294901760
    %465 = vmatpush1.xpose.msra.mxu0 %v464
    %466 = vmatprep.subr.mxu0 0.0
    %v467 = vand.u32 %v74, 4294901760
    %v468 = vsub.f32 %v74, %v467
    %v469 = vand.u32 %v468, 4294901760
    %470 = vmatpush1.xpose.msra.mxu0 %v469
    %471 = vmatprep.subr.mxu0 0.0
    %v472 = vand.u32 %v71, 4294901760
    %v473 = vsub.f32 %v71, %v472
    %v474 = vand.u32 %v473, 4294901760
    %475 = vmatpush1.xpose.msra.mxu0 %v474
    %476 = vmatprep.subr.mxu0 0.0
    %v477 = vand.u32 %v68, 4294901760
    %v478 = vsub.f32 %v68, %v477
    %v479 = vand.u32 %v478, 4294901760
    %480 = vmatpush1.xpose.msra.mxu0 %v479
    %481 = vmatprep.subr.mxu0 0.0
    %482 = vmatpush2.xpose.msra.mxu0 0.0
    %483 = vmatprep.subr.mxu0 0.0
    %484 = vmatpush2.xpose.msra.mxu0 0.0
    %485 = vmatprep.subr.mxu0 0.0
    %486 = vmatpush2.xpose.msra.mxu0 0.0
    %487 = vmatprep.subr.mxu0 0.0
    %488 = vmatpush2.xpose.msra.mxu0 0.0
    %489 = vmatprep.subr.mxu0 0.0
    %490 = vmatpush2.xpose.msra.mxu0 0.0
    %491 = vmatprep.subr.mxu0 0.0
    %492 = vmatpush2.xpose.msra.mxu0 0.0
    %493 = vmatprep.subr.mxu0 0.0
    %494 = vmatpush2.xpose.msra.mxu0 0.0
    %495 = vmatprep.subr.mxu0 0.0
    %496 = vmatpush2.xpose.msra.mxu0 0.0
    %497 = vmatprep.subr.mxu0 0.0
    %498 = vmatpush2.xpose.msra.mxu0 0.0
    %499 = vmatprep.subr.mxu0 0.0
    %500 = vmatpush2.xpose.msra.mxu0 0.0
    %501 = vmatprep.subr.mxu0 0.0
    %502 = vmatpush2.xpose.msra.mxu0 0.0
    %503 = vmatprep.subr.mxu0 0.0
    %504 = vmatpush2.xpose.msra.mxu0 0.0
    %505 = vmatprep.subr.mxu0 0.0
    %506 = vmatpush2.xpose.msra.mxu0 0.0
    %507 = vmatprep.subr.mxu0 0.0
    %508 = vmatpush2.xpose.msra.mxu0 0.0
    %509 = vmatprep.subr.mxu0 0.0
    %510 = vmatpush2.xpose.msra.mxu0 0.0
    %511 = vmatprep.subr.mxu0 0.0
    %512 = vmatpush2.xpose.msra.mxu0 0.0
    %513 = vmatprep.mubr.f32.mxu0 0.0
    %v514 = vand.u32 %v62, 4294901760
    %515 = vmatmul.mubr.f32.gmra.mxu0 %v514
    %v516 = vpop.f32.mrf.mxu0
    %v517 = vadd.f32 %v426, %v516
    %v518 = vpop.f32.mrf.mxu0
    %519 = vmatprep.mubr.f32.mxu0 0.0
    %v520 = vand.u32 %v65, 4294901760
    %521 = vmatmul.mubr.f32.gmra.mxu0 %v520
    %v522 = vpop.f32.mrf.mxu0
    %v523 = vadd.f32 %v434, %v522
    %v524 = vpop.f32.mrf.mxu0
    %525 = vdwg.mxu0
    %526 = vmatprep.subr.mxu0 0.0
    %527 = vmatpush1.xpose.msra.mxu0 0.0
    %528 = vmatprep.subr.mxu0 0.0
    %529 = vmatpush1.xpose.msra.mxu0 0.0
    %530 = vmatprep.subr.mxu0 0.0
    %531 = vmatpush1.xpose.msra.mxu0 0.0
    %532 = vmatprep.subr.mxu0 0.0
    %533 = vmatpush1.xpose.msra.mxu0 0.0
    %534 = vmatprep.subr.mxu0 0.0
    %535 = vmatpush1.xpose.msra.mxu0 0.0
    %536 = vmatprep.subr.mxu0 0.0
    %537 = vmatpush1.xpose.msra.mxu0 0.0
    %538 = vmatprep.subr.mxu0 0.0
    %539 = vmatpush1.xpose.msra.mxu0 0.0
    %540 = vmatprep.subr.mxu0 0.0
    %541 = vmatpush1.xpose.msra.mxu0 0.0
    %542 = vmatprep.subr.mxu0 0.0
    %543 = vmatpush1.xpose.msra.mxu0 0.0
    %544 = vmatprep.subr.mxu0 0.0
    %545 = vmatpush1.xpose.msra.mxu0 0.0
    %546 = vmatprep.subr.mxu0 0.0
    %547 = vmatpush1.xpose.msra.mxu0 0.0
    %548 = vmatprep.subr.mxu0 0.0
    %549 = vmatpush1.xpose.msra.mxu0 0.0
    %550 = vmatprep.subr.mxu0 0.0
    %v551 = vand.u32 %v77, 4294901760
    %552 = vmatpush1.xpose.msra.mxu0 %v551
    %553 = vmatprep.subr.mxu0 0.0
    %v554 = vand.u32 %v74, 4294901760
    %555 = vmatpush1.xpose.msra.mxu0 %v554
    %556 = vmatprep.subr.mxu0 0.0
    %v557 = vand.u32 %v71, 4294901760
    %558 = vmatpush1.xpose.msra.mxu0 %v557
    %559 = vmatprep.subr.mxu0 0.0
    %v560 = vand.u32 %v68, 4294901760
    %561 = vmatpush1.xpose.msra.mxu0 %v560
    %562 = vmatprep.subr.mxu0 0.0
    %563 = vmatpush2.xpose.msra.mxu0 0.0
    %564 = vmatprep.subr.mxu0 0.0
    %565 = vmatpush2.xpose.msra.mxu0 0.0
    %566 = vmatprep.subr.mxu0 0.0
    %567 = vmatpush2.xpose.msra.mxu0 0.0
    %568 = vmatprep.subr.mxu0 0.0
    %569 = vmatpush2.xpose.msra.mxu0 0.0
    %570 = vmatprep.subr.mxu0 0.0
    %571 = vmatpush2.xpose.msra.mxu0 0.0
    %572 = vmatprep.subr.mxu0 0.0
    %573 = vmatpush2.xpose.msra.mxu0 0.0
    %574 = vmatprep.subr.mxu0 0.0
    %575 = vmatpush2.xpose.msra.mxu0 0.0
    %576 = vmatprep.subr.mxu0 0.0
    %577 = vmatpush2.xpose.msra.mxu0 0.0
    %578 = vmatprep.subr.mxu0 0.0
    %579 = vmatpush2.xpose.msra.mxu0 0.0
    %580 = vmatprep.subr.mxu0 0.0
    %581 = vmatpush2.xpose.msra.mxu0 0.0
    %582 = vmatprep.subr.mxu0 0.0
    %583 = vmatpush2.xpose.msra.mxu0 0.0
    %584 = vmatprep.subr.mxu0 0.0
    %585 = vmatpush2.xpose.msra.mxu0 0.0
    %586 = vmatprep.subr.mxu0 0.0
    %587 = vmatpush2.xpose.msra.mxu0 0.0
    %588 = vmatprep.subr.mxu0 0.0
    %589 = vmatpush2.xpose.msra.mxu0 0.0
    %590 = vmatprep.subr.mxu0 0.0
    %591 = vmatpush2.xpose.msra.mxu0 0.0
    %592 = vmatprep.subr.mxu0 0.0
    %593 = vmatpush2.xpose.msra.mxu0 0.0
    %594 = vmatprep.mubr.f32.mxu0 0.0
    %v595 = vand.u32 %v62, 4294901760
    %596 = vmatmul.mubr.f32.gmra.mxu0 %v595
    %v597 = vpop.f32.mrf.mxu0
    %v598 = vadd.f32 %v517, %v597
    %v599 = vpop.f32.mrf.mxu0
    %600 = vmatprep.mubr.f32.mxu0 0.0
    %v601 = vand.u32 %v65, 4294901760
    %602 = vmatmul.mubr.f32.gmra.mxu0 %v601
    %v603 = vpop.f32.mrf.mxu0
    %v604 = vadd.f32 %v523, %v603
    %v605 = vpop.f32.mrf.mxu0
    %606 = vdwg.mxu0
    %s607 = scalar_lea.vmem %s0, 32
    %v608 = vld [vmem:[%s607] sm:$0xff]
    %v609 = vld [vmem:[%s607 + $0x8] sm:$0xff]
    %v610 = vld [vmem:[%s607 + $0x10] sm:$0xff]
    %v611 = vld [vmem:[%s607 + $0x18] sm:$0xff]
    %v613 = vsel %vm60, %v608, 0
    %v616 = vsel %vm60, %v609, 0
    %v619 = vsel %vm60, %v610, 0
    %v622 = vsel %vm60, %v611, 0
    %624 = vmatprep.subr.mxu0 0.0
    %625 = vmatpush1.xpose.msra.mxu0 0.0
    %626 = vmatprep.subr.mxu0 0.0
    %627 = vmatpush1.xpose.msra.mxu0 0.0
    %628 = vmatprep.subr.mxu0 0.0
    %629 = vmatpush1.xpose.msra.mxu0 0.0
    %630 = vmatprep.subr.mxu0 0.0
    %631 = vmatpush1.xpose.msra.mxu0 0.0
    %632 = vmatprep.subr.mxu0 0.0
    %633 = vmatpush1.xpose.msra.mxu0 0.0
    %634 = vmatprep.subr.mxu0 0.0
    %635 = vmatpush1.xpose.msra.mxu0 0.0
    %636 = vmatprep.subr.mxu0 0.0
    %637 = vmatpush1.xpose.msra.mxu0 0.0
    %638 = vmatprep.subr.mxu0 0.0
    %639 = vmatpush1.xpose.msra.mxu0 0.0
    %640 = vmatprep.subr.mxu0 0.0
    %641 = vmatpush1.xpose.msra.mxu0 0.0
    %642 = vmatprep.subr.mxu0 0.0
    %643 = vmatpush1.xpose.msra.mxu0 0.0
    %644 = vmatprep.subr.mxu0 0.0
    %645 = vmatpush1.xpose.msra.mxu0 0.0
    %646 = vmatprep.subr.mxu0 0.0
    %647 = vmatpush1.xpose.msra.mxu0 0.0
    %648 = vmatprep.subr.mxu0 0.0
    %v649 = vand.u32 %v622, 4294901760
    %650 = vmatpush1.xpose.msra.mxu0 %v649
    %651 = vmatprep.subr.mxu0 0.0
    %v652 = vand.u32 %v619, 4294901760
    %653 = vmatpush1.xpose.msra.mxu0 %v652
    %654 = vmatprep.subr.mxu0 0.0
    %v655 = vand.u32 %v616, 4294901760
    %656 = vmatpush1.xpose.msra.mxu0 %v655
    %657 = vmatprep.subr.mxu0 0.0
    %v658 = vand.u32 %v613, 4294901760
    %659 = vmatpush1.xpose.msra.mxu0 %v658
    %660 = vmatprep.subr.mxu0 0.0
    %661 = vmatpush2.xpose.msra.mxu0 0.0
    %662 = vmatprep.subr.mxu0 0.0
    %663 = vmatpush2.xpose.msra.mxu0 0.0
    %664 = vmatprep.subr.mxu0 0.0
    %665 = vmatpush2.xpose.msra.mxu0 0.0
    %666 = vmatprep.subr.mxu0 0.0
    %667 = vmatpush2.xpose.msra.mxu0 0.0
    %668 = vmatprep.subr.mxu0 0.0
    %669 = vmatpush2.xpose.msra.mxu0 0.0
    %670 = vmatprep.subr.mxu0 0.0
    %671 = vmatpush2.xpose.msra.mxu0 0.0
    %672 = vmatprep.subr.mxu0 0.0
    %673 = vmatpush2.xpose.msra.mxu0 0.0
    %674 = vmatprep.subr.mxu0 0.0
    %675 = vmatpush2.xpose.msra.mxu0 0.0
    %676 = vmatprep.subr.mxu0 0.0
    %677 = vmatpush2.xpose.msra.mxu0 0.0
    %678 = vmatprep.subr.mxu0 0.0
    %679 = vmatpush2.xpose.msra.mxu0 0.0
    %680 = vmatprep.subr.mxu0 0.0
    %681 = vmatpush2.xpose.msra.mxu0 0.0
    %682 = vmatprep.subr.mxu0 0.0
    %683 = vmatpush2.xpose.msra.mxu0 0.0
    %684 = vmatprep.subr.mxu0 0.0
    %685 = vmatpush2.xpose.msra.mxu0 0.0
    %686 = vmatprep.subr.mxu0 0.0
    %687 = vmatpush2.xpose.msra.mxu0 0.0
    %688 = vmatprep.subr.mxu0 0.0
    %689 = vmatpush2.xpose.msra.mxu0 0.0
    %690 = vmatprep.subr.mxu0 0.0
    %691 = vmatpush2.xpose.msra.mxu0 0.0
    %692 = vmatprep.mubr.f32.mxu0 0.0
    %v693 = vand.u32 %v62, 4294901760
    %v694 = vsub.f32 %v62, %v693
    %v695 = vand.u32 %v694, 4294901760
    %v696 = vsub.f32 %v694, %v695
    %v697 = vand.u32 %v696, 4294901760
    %698 = vmatmul.mubr.f32.gmra.mxu0 %v697
    %v699 = vpop.f32.mrf.mxu0
    %v700 = vadd.f32 0.0, %v699
    %v701 = vpop.f32.mrf.mxu0
    %702 = vmatprep.mubr.f32.mxu0 0.0
    %v703 = vand.u32 %v65, 4294901760
    %v704 = vsub.f32 %v65, %v703
    %v705 = vand.u32 %v704, 4294901760
    %v706 = vsub.f32 %v704, %v705
    %v707 = vand.u32 %v706, 4294901760
    %708 = vmatmul.mubr.f32.gmra.mxu0 %v707
    %v709 = vpop.f32.mrf.mxu0
    %v710 = vadd.f32 0.0, %v709
    %v711 = vpop.f32.mrf.mxu0
    %712 = vdwg.mxu0
    %713 = vmatprep.subr.mxu0 0.0
    %714 = vmatpush1.xpose.msra.mxu0 0.0
    %715 = vmatprep.subr.mxu0 0.0
    %716 = vmatpush1.xpose.msra.mxu0 0.0
    %717 = vmatprep.subr.mxu0 0.0
    %718 = vmatpush1.xpose.msra.mxu0 0.0
    %719 = vmatprep.subr.mxu0 0.0
    %720 = vmatpush1.xpose.msra.mxu0 0.0
    %721 = vmatprep.subr.mxu0 0.0
    %722 = vmatpush1.xpose.msra.mxu0 0.0
    %723 = vmatprep.subr.mxu0 0.0
    %724 = vmatpush1.xpose.msra.mxu0 0.0
    %725 = vmatprep.subr.mxu0 0.0
    %726 = vmatpush1.xpose.msra.mxu0 0.0
    %727 = vmatprep.subr.mxu0 0.0
    %728 = vmatpush1.xpose.msra.mxu0 0.0
    %729 = vmatprep.subr.mxu0 0.0
    %730 = vmatpush1.xpose.msra.mxu0 0.0
    %731 = vmatprep.subr.mxu0 0.0
    %732 = vmatpush1.xpose.msra.mxu0 0.0
    %733 = vmatprep.subr.mxu0 0.0
    %734 = vmatpush1.xpose.msra.mxu0 0.0
    %735 = vmatprep.subr.mxu0 0.0
    %736 = vmatpush1.xpose.msra.mxu0 0.0
    %737 = vmatprep.subr.mxu0 0.0
    %v738 = vand.u32 %v622, 4294901760
    %v739 = vsub.f32 %v622, %v738
    %v740 = vand.u32 %v739, 4294901760
    %v741 = vsub.f32 %v739, %v740
    %v742 = vand.u32 %v741, 4294901760
    %743 = vmatpush1.xpose.msra.mxu0 %v742
    %744 = vmatprep.subr.mxu0 0.0
    %v745 = vand.u32 %v619, 4294901760
    %v746 = vsub.f32 %v619, %v745
    %v747 = vand.u32 %v746, 4294901760
    %v748 = vsub.f32 %v746, %v747
    %v749 = vand.u32 %v748, 4294901760
    %750 = vmatpush1.xpose.msra.mxu0 %v749
    %751 = vmatprep.subr.mxu0 0.0
    %v752 = vand.u32 %v616, 4294901760
    %v753 = vsub.f32 %v616, %v752
    %v754 = vand.u32 %v753, 4294901760
    %v755 = vsub.f32 %v753, %v754
    %v756 = vand.u32 %v755, 4294901760
    %757 = vmatpush1.xpose.msra.mxu0 %v756
    %758 = vmatprep.subr.mxu0 0.0
    %v759 = vand.u32 %v613, 4294901760
    %v760 = vsub.f32 %v613, %v759
    %v761 = vand.u32 %v760, 4294901760
    %v762 = vsub.f32 %v760, %v761
    %v763 = vand.u32 %v762, 4294901760
    %764 = vmatpush1.xpose.msra.mxu0 %v763
    %765 = vmatprep.subr.mxu0 0.0
    %766 = vmatpush2.xpose.msra.mxu0 0.0
    %767 = vmatprep.subr.mxu0 0.0
    %768 = vmatpush2.xpose.msra.mxu0 0.0
    %769 = vmatprep.subr.mxu0 0.0
    %770 = vmatpush2.xpose.msra.mxu0 0.0
    %771 = vmatprep.subr.mxu0 0.0
    %772 = vmatpush2.xpose.msra.mxu0 0.0
    %773 = vmatprep.subr.mxu0 0.0
    %774 = vmatpush2.xpose.msra.mxu0 0.0
    %775 = vmatprep.subr.mxu0 0.0
    %776 = vmatpush2.xpose.msra.mxu0 0.0
    %777 = vmatprep.subr.mxu0 0.0
    %778 = vmatpush2.xpose.msra.mxu0 0.0
    %779 = vmatprep.subr.mxu0 0.0
    %780 = vmatpush2.xpose.msra.mxu0 0.0
    %781 = vmatprep.subr.mxu0 0.0
    %782 = vmatpush2.xpose.msra.mxu0 0.0
    %783 = vmatprep.subr.mxu0 0.0
    %784 = vmatpush2.xpose.msra.mxu0 0.0
    %785 = vmatprep.subr.mxu0 0.0
    %786 = vmatpush2.xpose.msra.mxu0 0.0
    %787 = vmatprep.subr.mxu0 0.0
    %788 = vmatpush2.xpose.msra.mxu0 0.0
    %789 = vmatprep.subr.mxu0 0.0
    %790 = vmatpush2.xpose.msra.mxu0 0.0
    %791 = vmatprep.subr.mxu0 0.0
    %792 = vmatpush2.xpose.msra.mxu0 0.0
    %793 = vmatprep.subr.mxu0 0.0
    %794 = vmatpush2.xpose.msra.mxu0 0.0
    %795 = vmatprep.subr.mxu0 0.0
    %796 = vmatpush2.xpose.msra.mxu0 0.0
    %797 = vmatprep.mubr.f32.mxu0 0.0
    %v798 = vand.u32 %v62, 4294901760
    %799 = vmatmul.mubr.f32.gmra.mxu0 %v798
    %v800 = vpop.f32.mrf.mxu0
    %v801 = vadd.f32 %v700, %v800
    %v802 = vpop.f32.mrf.mxu0
    %803 = vmatprep.mubr.f32.mxu0 0.0
    %v804 = vand.u32 %v65, 4294901760
    %805 = vmatmul.mubr.f32.gmra.mxu0 %v804
    %v806 = vpop.f32.mrf.mxu0
    %v807 = vadd.f32 %v710, %v806
    %v808 = vpop.f32.mrf.mxu0
    %809 = vdwg.mxu0
    %810 = vmatprep.subr.mxu0 0.0
    %811 = vmatpush1.xpose.msra.mxu0 0.0
    %812 = vmatprep.subr.mxu0 0.0
    %813 = vmatpush1.xpose.msra.mxu0 0.0
    %814 = vmatprep.subr.mxu0 0.0
    %815 = vmatpush1.xpose.msra.mxu0 0.0
    %816 = vmatprep.subr.mxu0 0.0
    %817 = vmatpush1.xpose.msra.mxu0 0.0
    %818 = vmatprep.subr.mxu0 0.0
    %819 = vmatpush1.xpose.msra.mxu0 0.0
    %820 = vmatprep.subr.mxu0 0.0
    %821 = vmatpush1.xpose.msra.mxu0 0.0
    %822 = vmatprep.subr.mxu0 0.0
    %823 = vmatpush1.xpose.msra.mxu0 0.0
    %824 = vmatprep.subr.mxu0 0.0
    %825 = vmatpush1.xpose.msra.mxu0 0.0
    %826 = vmatprep.subr.mxu0 0.0
    %827 = vmatpush1.xpose.msra.mxu0 0.0
    %828 = vmatprep.subr.mxu0 0.0
    %829 = vmatpush1.xpose.msra.mxu0 0.0
    %830 = vmatprep.subr.mxu0 0.0
    %831 = vmatpush1.xpose.msra.mxu0 0.0
    %832 = vmatprep.subr.mxu0 0.0
    %833 = vmatpush1.xpose.msra.mxu0 0.0
    %834 = vmatprep.subr.mxu0 0.0
    %v835 = vand.u32 %v622, 4294901760
    %v836 = vsub.f32 %v622, %v835
    %837 = vmatpush1.xpose.msra.mxu0 %v836
    %838 = vmatprep.subr.mxu0 0.0
    %v839 = vand.u32 %v619, 4294901760
    %v840 = vsub.f32 %v619, %v839
    %841 = vmatpush1.xpose.msra.mxu0 %v840
    %842 = vmatprep.subr.mxu0 0.0
    %v843 = vand.u32 %v616, 4294901760
    %v844 = vsub.f32 %v616, %v843
    %845 = vmatpush1.xpose.msra.mxu0 %v844
    %846 = vmatprep.subr.mxu0 0.0
    %v847 = vand.u32 %v613, 4294901760
    %v848 = vsub.f32 %v613, %v847
    %849 = vmatpush1.xpose.msra.mxu0 %v848
    %850 = vmatprep.subr.mxu0 0.0
    %851 = vmatpush2.xpose.msra.mxu0 0.0
    %852 = vmatprep.subr.mxu0 0.0
    %853 = vmatpush2.xpose.msra.mxu0 0.0
    %854 = vmatprep.subr.mxu0 0.0
    %855 = vmatpush2.xpose.msra.mxu0 0.0
    %856 = vmatprep.subr.mxu0 0.0
    %857 = vmatpush2.xpose.msra.mxu0 0.0
    %858 = vmatprep.subr.mxu0 0.0
    %859 = vmatpush2.xpose.msra.mxu0 0.0
    %860 = vmatprep.subr.mxu0 0.0
    %861 = vmatpush2.xpose.msra.mxu0 0.0
    %862 = vmatprep.subr.mxu0 0.0
    %863 = vmatpush2.xpose.msra.mxu0 0.0
    %864 = vmatprep.subr.mxu0 0.0
    %865 = vmatpush2.xpose.msra.mxu0 0.0
    %866 = vmatprep.subr.mxu0 0.0
    %867 = vmatpush2.xpose.msra.mxu0 0.0
    %868 = vmatprep.subr.mxu0 0.0
    %869 = vmatpush2.xpose.msra.mxu0 0.0
    %870 = vmatprep.subr.mxu0 0.0
    %871 = vmatpush2.xpose.msra.mxu0 0.0
    %872 = vmatprep.subr.mxu0 0.0
    %873 = vmatpush2.xpose.msra.mxu0 0.0
    %874 = vmatprep.subr.mxu0 0.0
    %875 = vmatpush2.xpose.msra.mxu0 0.0
    %876 = vmatprep.subr.mxu0 0.0
    %877 = vmatpush2.xpose.msra.mxu0 0.0
    %878 = vmatprep.subr.mxu0 0.0
    %879 = vmatpush2.xpose.msra.mxu0 0.0
    %880 = vmatprep.subr.mxu0 0.0
    %881 = vmatpush2.xpose.msra.mxu0 0.0
    %882 = vmatprep.mubr.f32.mxu0 0.0
    %v883 = vand.u32 %v62, 4294901760
    %v884 = vsub.f32 %v62, %v883
    %885 = vmatmul.mubr.f32.gmra.mxu0 %v884
    %v886 = vpop.f32.mrf.mxu0
    %v887 = vadd.f32 %v801, %v886
    %v888 = vpop.f32.mrf.mxu0
    %889 = vmatprep.mubr.f32.mxu0 0.0
    %v890 = vand.u32 %v65, 4294901760
    %v891 = vsub.f32 %v65, %v890
    %892 = vmatmul.mubr.f32.gmra.mxu0 %v891
    %v893 = vpop.f32.mrf.mxu0
    %v894 = vadd.f32 %v807, %v893
    %v895 = vpop.f32.mrf.mxu0
    %896 = vdwg.mxu0
    %897 = vmatprep.subr.mxu0 0.0
    %898 = vmatpush1.xpose.msra.mxu0 0.0
    %899 = vmatprep.subr.mxu0 0.0
    %900 = vmatpush1.xpose.msra.mxu0 0.0
    %901 = vmatprep.subr.mxu0 0.0
    %902 = vmatpush1.xpose.msra.mxu0 0.0
    %903 = vmatprep.subr.mxu0 0.0
    %904 = vmatpush1.xpose.msra.mxu0 0.0
    %905 = vmatprep.subr.mxu0 0.0
    %906 = vmatpush1.xpose.msra.mxu0 0.0
    %907 = vmatprep.subr.mxu0 0.0
    %908 = vmatpush1.xpose.msra.mxu0 0.0
    %909 = vmatprep.subr.mxu0 0.0
    %910 = vmatpush1.xpose.msra.mxu0 0.0
    %911 = vmatprep.subr.mxu0 0.0
    %912 = vmatpush1.xpose.msra.mxu0 0.0
    %913 = vmatprep.subr.mxu0 0.0
    %914 = vmatpush1.xpose.msra.mxu0 0.0
    %915 = vmatprep.subr.mxu0 0.0
    %916 = vmatpush1.xpose.msra.mxu0 0.0
    %917 = vmatprep.subr.mxu0 0.0
    %918 = vmatpush1.xpose.msra.mxu0 0.0
    %919 = vmatprep.subr.mxu0 0.0
    %920 = vmatpush1.xpose.msra.mxu0 0.0
    %921 = vmatprep.subr.mxu0 0.0
    %v922 = vand.u32 %v622, 4294901760
    %923 = vmatpush1.xpose.msra.mxu0 %v922
    %924 = vmatprep.subr.mxu0 0.0
    %v925 = vand.u32 %v619, 4294901760
    %926 = vmatpush1.xpose.msra.mxu0 %v925
    %927 = vmatprep.subr.mxu0 0.0
    %v928 = vand.u32 %v616, 4294901760
    %929 = vmatpush1.xpose.msra.mxu0 %v928
    %930 = vmatprep.subr.mxu0 0.0
    %v931 = vand.u32 %v613, 4294901760
    %932 = vmatpush1.xpose.msra.mxu0 %v931
    %933 = vmatprep.subr.mxu0 0.0
    %934 = vmatpush2.xpose.msra.mxu0 0.0
    %935 = vmatprep.subr.mxu0 0.0
    %936 = vmatpush2.xpose.msra.mxu0 0.0
    %937 = vmatprep.subr.mxu0 0.0
    %938 = vmatpush2.xpose.msra.mxu0 0.0
    %939 = vmatprep.subr.mxu0 0.0
    %940 = vmatpush2.xpose.msra.mxu0 0.0
    %941 = vmatprep.subr.mxu0 0.0
    %942 = vmatpush2.xpose.msra.mxu0 0.0
    %943 = vmatprep.subr.mxu0 0.0
    %944 = vmatpush2.xpose.msra.mxu0 0.0
    %945 = vmatprep.subr.mxu0 0.0
    %946 = vmatpush2.xpose.msra.mxu0 0.0
    %947 = vmatprep.subr.mxu0 0.0
    %948 = vmatpush2.xpose.msra.mxu0 0.0
    %949 = vmatprep.subr.mxu0 0.0
    %950 = vmatpush2.xpose.msra.mxu0 0.0
    %951 = vmatprep.subr.mxu0 0.0
    %952 = vmatpush2.xpose.msra.mxu0 0.0
    %953 = vmatprep.subr.mxu0 0.0
    %954 = vmatpush2.xpose.msra.mxu0 0.0
    %955 = vmatprep.subr.mxu0 0.0
    %956 = vmatpush2.xpose.msra.mxu0 0.0
    %957 = vmatprep.subr.mxu0 0.0
    %958 = vmatpush2.xpose.msra.mxu0 0.0
    %959 = vmatprep.subr.mxu0 0.0
    %960 = vmatpush2.xpose.msra.mxu0 0.0
    %961 = vmatprep.subr.mxu0 0.0
    %962 = vmatpush2.xpose.msra.mxu0 0.0
    %963 = vmatprep.subr.mxu0 0.0
    %964 = vmatpush2.xpose.msra.mxu0 0.0
    %965 = vmatprep.mubr.f32.mxu0 0.0
    %v966 = vand.u32 %v62, 4294901760
    %v967 = vsub.f32 %v62, %v966
    %v968 = vand.u32 %v967, 4294901760
    %969 = vmatmul.mubr.f32.gmra.mxu0 %v968
    %v970 = vpop.f32.mrf.mxu0
    %v971 = vadd.f32 %v887, %v970
    %v972 = vpop.f32.mrf.mxu0
    %973 = vmatprep.mubr.f32.mxu0 0.0
    %v974 = vand.u32 %v65, 4294901760
    %v975 = vsub.f32 %v65, %v974
    %v976 = vand.u32 %v975, 4294901760
    %977 = vmatmul.mubr.f32.gmra.mxu0 %v976
    %v978 = vpop.f32.mrf.mxu0
    %v979 = vadd.f32 %v894, %v978
    %v980 = vpop.f32.mrf.mxu0
    %981 = vdwg.mxu0
    %982 = vmatprep.subr.mxu0 0.0
    %983 = vmatpush1.xpose.msra.mxu0 0.0
    %984 = vmatprep.subr.mxu0 0.0
    %985 = vmatpush1.xpose.msra.mxu0 0.0
    %986 = vmatprep.subr.mxu0 0.0
    %987 = vmatpush1.xpose.msra.mxu0 0.0
    %988 = vmatprep.subr.mxu0 0.0
    %989 = vmatpush1.xpose.msra.mxu0 0.0
    %990 = vmatprep.subr.mxu0 0.0
    %991 = vmatpush1.xpose.msra.mxu0 0.0
    %992 = vmatprep.subr.mxu0 0.0
    %993 = vmatpush1.xpose.msra.mxu0 0.0
    %994 = vmatprep.subr.mxu0 0.0
    %995 = vmatpush1.xpose.msra.mxu0 0.0
    %996 = vmatprep.subr.mxu0 0.0
    %997 = vmatpush1.xpose.msra.mxu0 0.0
    %998 = vmatprep.subr.mxu0 0.0
    %999 = vmatpush1.xpose.msra.mxu0 0.0
    %1000 = vmatprep.subr.mxu0 0.0
    %1001 = vmatpush1.xpose.msra.mxu0 0.0
    %1002 = vmatprep.subr.mxu0 0.0
    %1003 = vmatpush1.xpose.msra.mxu0 0.0
    %1004 = vmatprep.subr.mxu0 0.0
    %1005 = vmatpush1.xpose.msra.mxu0 0.0
    %1006 = vmatprep.subr.mxu0 0.0
    %v1007 = vand.u32 %v622, 4294901760
    %v1008 = vsub.f32 %v622, %v1007
    %v1009 = vand.u32 %v1008, 4294901760
    %1010 = vmatpush1.xpose.msra.mxu0 %v1009
    %1011 = vmatprep.subr.mxu0 0.0
    %v1012 = vand.u32 %v619, 4294901760
    %v1013 = vsub.f32 %v619, %v1012
    %v1014 = vand.u32 %v1013, 4294901760
    %1015 = vmatpush1.xpose.msra.mxu0 %v1014
    %1016 = vmatprep.subr.mxu0 0.0
    %v1017 = vand.u32 %v616, 4294901760
    %v1018 = vsub.f32 %v616, %v1017
    %v1019 = vand.u32 %v1018, 4294901760
    %1020 = vmatpush1.xpose.msra.mxu0 %v1019
    %1021 = vmatprep.subr.mxu0 0.0
    %v1022 = vand.u32 %v613, 4294901760
    %v1023 = vsub.f32 %v613, %v1022
    %v1024 = vand.u32 %v1023, 4294901760
    %1025 = vmatpush1.xpose.msra.mxu0 %v1024
    %1026 = vmatprep.subr.mxu0 0.0
    %1027 = vmatpush2.xpose.msra.mxu0 0.0
    %1028 = vmatprep.subr.mxu0 0.0
    %1029 = vmatpush2.xpose.msra.mxu0 0.0
    %1030 = vmatprep.subr.mxu0 0.0
    %1031 = vmatpush2.xpose.msra.mxu0 0.0
    %1032 = vmatprep.subr.mxu0 0.0
    %1033 = vmatpush2.xpose.msra.mxu0 0.0
    %1034 = vmatprep.subr.mxu0 0.0
    %1035 = vmatpush2.xpose.msra.mxu0 0.0
    %1036 = vmatprep.subr.mxu0 0.0
    %1037 = vmatpush2.xpose.msra.mxu0 0.0
    %1038 = vmatprep.subr.mxu0 0.0
    %1039 = vmatpush2.xpose.msra.mxu0 0.0
    %1040 = vmatprep.subr.mxu0 0.0
    %1041 = vmatpush2.xpose.msra.mxu0 0.0
    %1042 = vmatprep.subr.mxu0 0.0
    %1043 = vmatpush2.xpose.msra.mxu0 0.0
    %1044 = vmatprep.subr.mxu0 0.0
    %1045 = vmatpush2.xpose.msra.mxu0 0.0
    %1046 = vmatprep.subr.mxu0 0.0
    %1047 = vmatpush2.xpose.msra.mxu0 0.0
    %1048 = vmatprep.subr.mxu0 0.0
    %1049 = vmatpush2.xpose.msra.mxu0 0.0
    %1050 = vmatprep.subr.mxu0 0.0
    %1051 = vmatpush2.xpose.msra.mxu0 0.0
    %1052 = vmatprep.subr.mxu0 0.0
    %1053 = vmatpush2.xpose.msra.mxu0 0.0
    %1054 = vmatprep.subr.mxu0 0.0
    %1055 = vmatpush2.xpose.msra.mxu0 0.0
    %1056 = vmatprep.subr.mxu0 0.0
    %1057 = vmatpush2.xpose.msra.mxu0 0.0
    %1058 = vmatprep.mubr.f32.mxu0 0.0
    %v1059 = vand.u32 %v62, 4294901760
    %1060 = vmatmul.mubr.f32.gmra.mxu0 %v1059
    %v1061 = vpop.f32.mrf.mxu0
    %v1062 = vadd.f32 %v971, %v1061
    %v1063 = vpop.f32.mrf.mxu0
    %1064 = vmatprep.mubr.f32.mxu0 0.0
    %v1065 = vand.u32 %v65, 4294901760
    %1066 = vmatmul.mubr.f32.gmra.mxu0 %v1065
    %v1067 = vpop.f32.mrf.mxu0
    %v1068 = vadd.f32 %v979, %v1067
    %v1069 = vpop.f32.mrf.mxu0
    %1070 = vdwg.mxu0
    %1071 = vmatprep.subr.mxu0 0.0
    %1072 = vmatpush1.xpose.msra.mxu0 0.0
    %1073 = vmatprep.subr.mxu0 0.0
    %1074 = vmatpush1.xpose.msra.mxu0 0.0
    %1075 = vmatprep.subr.mxu0 0.0
    %1076 = vmatpush1.xpose.msra.mxu0 0.0
    %1077 = vmatprep.subr.mxu0 0.0
    %1078 = vmatpush1.xpose.msra.mxu0 0.0
    %1079 = vmatprep.subr.mxu0 0.0
    %1080 = vmatpush1.xpose.msra.mxu0 0.0
    %1081 = vmatprep.subr.mxu0 0.0
    %1082 = vmatpush1.xpose.msra.mxu0 0.0
    %1083 = vmatprep.subr.mxu0 0.0
    %1084 = vmatpush1.xpose.msra.mxu0 0.0
    %1085 = vmatprep.subr.mxu0 0.0
    %1086 = vmatpush1.xpose.msra.mxu0 0.0
    %1087 = vmatprep.subr.mxu0 0.0
    %1088 = vmatpush1.xpose.msra.mxu0 0.0
    %1089 = vmatprep.subr.mxu0 0.0
    %1090 = vmatpush1.xpose.msra.mxu0 0.0
    %1091 = vmatprep.subr.mxu0 0.0
    %1092 = vmatpush1.xpose.msra.mxu0 0.0
    %1093 = vmatprep.subr.mxu0 0.0
    %1094 = vmatpush1.xpose.msra.mxu0 0.0
    %1095 = vmatprep.subr.mxu0 0.0
    %v1096 = vand.u32 %v622, 4294901760
    %1097 = vmatpush1.xpose.msra.mxu0 %v1096
    %1098 = vmatprep.subr.mxu0 0.0
    %v1099 = vand.u32 %v619, 4294901760
    %1100 = vmatpush1.xpose.msra.mxu0 %v1099
    %1101 = vmatprep.subr.mxu0 0.0
    %v1102 = vand.u32 %v616, 4294901760
    %1103 = vmatpush1.xpose.msra.mxu0 %v1102
    %1104 = vmatprep.subr.mxu0 0.0
    %v1105 = vand.u32 %v613, 4294901760
    %1106 = vmatpush1.xpose.msra.mxu0 %v1105
    %1107 = vmatprep.subr.mxu0 0.0
    %1108 = vmatpush2.xpose.msra.mxu0 0.0
    %1109 = vmatprep.subr.mxu0 0.0
    %1110 = vmatpush2.xpose.msra.mxu0 0.0
    %1111 = vmatprep.subr.mxu0 0.0
    %1112 = vmatpush2.xpose.msra.mxu0 0.0
    %1113 = vmatprep.subr.mxu0 0.0
    %1114 = vmatpush2.xpose.msra.mxu0 0.0
    %1115 = vmatprep.subr.mxu0 0.0
    %1116 = vmatpush2.xpose.msra.mxu0 0.0
    %1117 = vmatprep.subr.mxu0 0.0
    %1118 = vmatpush2.xpose.msra.mxu0 0.0
    %1119 = vmatprep.subr.mxu0 0.0
    %1120 = vmatpush2.xpose.msra.mxu0 0.0
    %1121 = vmatprep.subr.mxu0 0.0
    %1122 = vmatpush2.xpose.msra.mxu0 0.0
    %1123 = vmatprep.subr.mxu0 0.0
    %1124 = vmatpush2.xpose.msra.mxu0 0.0
    %1125 = vmatprep.subr.mxu0 0.0
    %1126 = vmatpush2.xpose.msra.mxu0 0.0
    %1127 = vmatprep.subr.mxu0 0.0
    %1128 = vmatpush2.xpose.msra.mxu0 0.0
    %1129 = vmatprep.subr.mxu0 0.0
    %1130 = vmatpush2.xpose.msra.mxu0 0.0
    %1131 = vmatprep.subr.mxu0 0.0
    %1132 = vmatpush2.xpose.msra.mxu0 0.0
    %1133 = vmatprep.subr.mxu0 0.0
    %1134 = vmatpush2.xpose.msra.mxu0 0.0
    %1135 = vmatprep.subr.mxu0 0.0
    %1136 = vmatpush2.xpose.msra.mxu0 0.0
    %1137 = vmatprep.subr.mxu0 0.0
    %1138 = vmatpush2.xpose.msra.mxu0 0.0
    %1139 = vmatprep.mubr.f32.mxu0 0.0
    %v1140 = vand.u32 %v62, 4294901760
    %1141 = vmatmul.mubr.f32.gmra.mxu0 %v1140
    %v1142 = vpop.f32.mrf.mxu0
    %v1143 = vadd.f32 %v1062, %v1142
    %v1144 = vpop.f32.mrf.mxu0
    %1145 = vmatprep.mubr.f32.mxu0 0.0
    %v1146 = vand.u32 %v65, 4294901760
    %1147 = vmatmul.mubr.f32.gmra.mxu0 %v1146
    %v1148 = vpop.f32.mrf.mxu0
    %v1149 = vadd.f32 %v1068, %v1148
    %v1150 = vpop.f32.mrf.mxu0
    %1151 = vdwg.mxu0
    %v1152 = vld [vmem:[%s1] sm:$0xff]
    %v1153 = vld [vmem:[%s1 + $0x8] sm:$0xff]
    %v1154 = vld [vmem:[%s1 + $0x10] sm:$0xff]
    %v1155 = vld [vmem:[%s1 + $0x18] sm:$0xff]
    %v1156 = vld [vmem:[%s2] sm:$0x1]
    %v1158 = vlaneseq
    %v1159 = vshrl.u32 %v1158, 7
    %v1160 = vsub.s32 0, %v1159
    %v1161 = vrot.slane %v1156, %v1160
    %vm1163 = vcmask 261120
    %v1165 = vsel %vm1163, %v598, 0
    %v1168 = vsel %vm1163, %v604, 0
    %v1171 = vsel %vm1163, %v1143, 0
    %v1174 = vsel %vm1163, %v1149, 0
    %v1177 = vsel %vm1163, %v1152, 0
    %v1180 = vsel %vm1163, %v1153, 0
    %v1183 = vsel %vm1163, %v1154, 0
    %v1186 = vsel %vm1163, %v1155, 0
    %1188 = vmatprep.subr.mxu0 0.0
    %1189 = vmatpush1.xpose.msra.mxu0 0.0
    %1190 = vmatprep.subr.mxu0 0.0
    %1191 = vmatpush1.xpose.msra.mxu0 0.0
    %1192 = vmatprep.subr.mxu0 0.0
    %1193 = vmatpush1.xpose.msra.mxu0 0.0
    %1194 = vmatprep.subr.mxu0 0.0
    %1195 = vmatpush1.xpose.msra.mxu0 0.0
    %1196 = vmatprep.subr.mxu0 0.0
    %1197 = vmatpush1.xpose.msra.mxu0 0.0
    %1198 = vmatprep.subr.mxu0 0.0
    %1199 = vmatpush1.xpose.msra.mxu0 0.0
    %1200 = vmatprep.subr.mxu0 0.0
    %1201 = vmatpush1.xpose.msra.mxu0 0.0
    %1202 = vmatprep.subr.mxu0 0.0
    %1203 = vmatpush1.xpose.msra.mxu0 0.0
    %1204 = vmatprep.subr.mxu0 0.0
    %1205 = vmatpush1.xpose.msra.mxu0 0.0
    %1206 = vmatprep.subr.mxu0 0.0
    %1207 = vmatpush1.xpose.msra.mxu0 0.0
    %1208 = vmatprep.subr.mxu0 0.0
    %1209 = vmatpush1.xpose.msra.mxu0 0.0
    %1210 = vmatprep.subr.mxu0 0.0
    %1211 = vmatpush1.xpose.msra.mxu0 0.0
    %1212 = vmatprep.subr.mxu0 0.0
    %v1213 = vand.u32 %v1186, 4294901760
    %1214 = vmatpush1.xpose.msra.mxu0 %v1213
    %1215 = vmatprep.subr.mxu0 0.0
    %v1216 = vand.u32 %v1183, 4294901760
    %1217 = vmatpush1.xpose.msra.mxu0 %v1216
    %1218 = vmatprep.subr.mxu0 0.0
    %v1219 = vand.u32 %v1180, 4294901760
    %1220 = vmatpush1.xpose.msra.mxu0 %v1219
    %1221 = vmatprep.subr.mxu0 0.0
    %v1222 = vand.u32 %v1177, 4294901760
    %1223 = vmatpush1.xpose.msra.mxu0 %v1222
    %1224 = vmatprep.subr.mxu0 0.0
    %1225 = vmatpush2.xpose.msra.mxu0 0.0
    %1226 = vmatprep.subr.mxu0 0.0
    %1227 = vmatpush2.xpose.msra.mxu0 0.0
    %1228 = vmatprep.subr.mxu0 0.0
    %1229 = vmatpush2.xpose.msra.mxu0 0.0
    %1230 = vmatprep.subr.mxu0 0.0
    %1231 = vmatpush2.xpose.msra.mxu0 0.0
    %1232 = vmatprep.subr.mxu0 0.0
    %1233 = vmatpush2.xpose.msra.mxu0 0.0
    %1234 = vmatprep.subr.mxu0 0.0
    %1235 = vmatpush2.xpose.msra.mxu0 0.0
    %1236 = vmatprep.subr.mxu0 0.0
    %1237 = vmatpush2.xpose.msra.mxu0 0.0
    %1238 = vmatprep.subr.mxu0 0.0
    %1239 = vmatpush2.xpose.msra.mxu0 0.0
    %1240 = vmatprep.subr.mxu0 0.0
    %1241 = vmatpush2.xpose.msra.mxu0 0.0
    %1242 = vmatprep.subr.mxu0 0.0
    %1243 = vmatpush2.xpose.msra.mxu0 0.0
    %1244 = vmatprep.subr.mxu0 0.0
    %1245 = vmatpush2.xpose.msra.mxu0 0.0
    %1246 = vmatprep.subr.mxu0 0.0
    %1247 = vmatpush2.xpose.msra.mxu0 0.0
    %1248 = vmatprep.subr.mxu0 0.0
    %1249 = vmatpush2.xpose.msra.mxu0 0.0
    %1250 = vmatprep.subr.mxu0 0.0
    %1251 = vmatpush2.xpose.msra.mxu0 0.0
    %1252 = vmatprep.subr.mxu0 0.0
    %1253 = vmatpush2.xpose.msra.mxu0 0.0
    %1254 = vmatprep.subr.mxu0 0.0
    %1255 = vmatpush2.xpose.msra.mxu0 0.0
    %1256 = vmatprep.mubr.f32.mxu0 0.0
    %v1257 = vand.u32 %v1165, 4294901760
    %v1258 = vsub.f32 %v1165, %v1257
    %v1259 = vand.u32 %v1258, 4294901760
    %v1260 = vsub.f32 %v1258, %v1259
    %v1261 = vand.u32 %v1260, 4294901760
    %1262 = vmatmul.mubr.f32.gmra.mxu0 %v1261
    %v1263 = vpop.f32.mrf.mxu0
    %v1264 = vadd.f32 %v1161, %v1263
    %v1265 = vpop.f32.mrf.mxu0
    %1266 = vmatprep.mubr.f32.mxu0 0.0
    %v1267 = vand.u32 %v1168, 4294901760
    %v1268 = vsub.f32 %v1168, %v1267
    %v1269 = vand.u32 %v1268, 4294901760
    %v1270 = vsub.f32 %v1268, %v1269
    %v1271 = vand.u32 %v1270, 4294901760
    %1272 = vmatmul.mubr.f32.gmra.mxu0 %v1271
    %v1273 = vpop.f32.mrf.mxu0
    %v1274 = vadd.f32 %v1161, %v1273
    %v1275 = vpop.f32.mrf.mxu0
    %1276 = vmatprep.mubr.f32.mxu0 0.0
    %v1277 = vand.u32 %v1171, 4294901760
    %v1278 = vsub.f32 %v1171, %v1277
    %v1279 = vand.u32 %v1278, 4294901760
    %v1280 = vsub.f32 %v1278, %v1279
    %v1281 = vand.u32 %v1280, 4294901760
    %1282 = vmatmul.mubr.f32.gmra.mxu0 %v1281
    %v1283 = vpop.f32.mrf.mxu0
    %v1284 = vadd.f32 %v1161, %v1283
    %v1285 = vpop.f32.mrf.mxu0
    %1286 = vmatprep.mubr.f32.mxu0 0.0
    %v1287 = vand.u32 %v1174, 4294901760
    %v1288 = vsub.f32 %v1174, %v1287
    %v1289 = vand.u32 %v1288, 4294901760
    %v1290 = vsub.f32 %v1288, %v1289
    %v1291 = vand.u32 %v1290, 4294901760
    %1292 = vmatmul.mubr.f32.gmra.mxu0 %v1291
    %v1293 = vpop.f32.mrf.mxu0
    %v1294 = vadd.f32 %v1161, %v1293
    %v1295 = vpop.f32.mrf.mxu0
    %1296 = vdwg.mxu0
    %1297 = vmatprep.subr.mxu0 0.0
    %1298 = vmatpush1.xpose.msra.mxu0 0.0
    %1299 = vmatprep.subr.mxu0 0.0
    %1300 = vmatpush1.xpose.msra.mxu0 0.0
    %1301 = vmatprep.subr.mxu0 0.0
    %1302 = vmatpush1.xpose.msra.mxu0 0.0
    %1303 = vmatprep.subr.mxu0 0.0
    %1304 = vmatpush1.xpose.msra.mxu0 0.0
    %1305 = vmatprep.subr.mxu0 0.0
    %1306 = vmatpush1.xpose.msra.mxu0 0.0
    %1307 = vmatprep.subr.mxu0 0.0
    %1308 = vmatpush1.xpose.msra.mxu0 0.0
    %1309 = vmatprep.subr.mxu0 0.0
    %1310 = vmatpush1.xpose.msra.mxu0 0.0
    %1311 = vmatprep.subr.mxu0 0.0
    %1312 = vmatpush1.xpose.msra.mxu0 0.0
    %1313 = vmatprep.subr.mxu0 0.0
    %1314 = vmatpush1.xpose.msra.mxu0 0.0
    %1315 = vmatprep.subr.mxu0 0.0
    %1316 = vmatpush1.xpose.msra.mxu0 0.0
    %1317 = vmatprep.subr.mxu0 0.0
    %1318 = vmatpush1.xpose.msra.mxu0 0.0
    %1319 = vmatprep.subr.mxu0 0.0
    %1320 = vmatpush1.xpose.msra.mxu0 0.0
    %1321 = vmatprep.subr.mxu0 0.0
    %v1322 = vand.u32 %v1186, 4294901760
    %v1323 = vsub.f32 %v1186, %v1322
    %v1324 = vand.u32 %v1323, 4294901760
    %v1325 = vsub.f32 %v1323, %v1324
    %v1326 = vand.u32 %v1325, 4294901760
    %1327 = vmatpush1.xpose.msra.mxu0 %v1326
    %1328 = vmatprep.subr.mxu0 0.0
    %v1329 = vand.u32 %v1183, 4294901760
    %v1330 = vsub.f32 %v1183, %v1329
    %v1331 = vand.u32 %v1330, 4294901760
    %v1332 = vsub.f32 %v1330, %v1331
    %v1333 = vand.u32 %v1332, 4294901760
    %1334 = vmatpush1.xpose.msra.mxu0 %v1333
    %1335 = vmatprep.subr.mxu0 0.0
    %v1336 = vand.u32 %v1180, 4294901760
    %v1337 = vsub.f32 %v1180, %v1336
    %v1338 = vand.u32 %v1337, 4294901760
    %v1339 = vsub.f32 %v1337, %v1338
    %v1340 = vand.u32 %v1339, 4294901760
    %1341 = vmatpush1.xpose.msra.mxu0 %v1340
    %1342 = vmatprep.subr.mxu0 0.0
    %v1343 = vand.u32 %v1177, 4294901760
    %v1344 = vsub.f32 %v1177, %v1343
    %v1345 = vand.u32 %v1344, 4294901760
    %v1346 = vsub.f32 %v1344, %v1345
    %v1347 = vand.u32 %v1346, 4294901760
    %1348 = vmatpush1.xpose.msra.mxu0 %v1347
    %1349 = vmatprep.subr.mxu0 0.0
    %1350 = vmatpush2.xpose.msra.mxu0 0.0
    %1351 = vmatprep.subr.mxu0 0.0
    %1352 = vmatpush2.xpose.msra.mxu0 0.0
    %1353 = vmatprep.subr.mxu0 0.0
    %1354 = vmatpush2.xpose.msra.mxu0 0.0
    %1355 = vmatprep.subr.mxu0 0.0
    %1356 = vmatpush2.xpose.msra.mxu0 0.0
    %1357 = vmatprep.subr.mxu0 0.0
    %1358 = vmatpush2.xpose.msra.mxu0 0.0
    %1359 = vmatprep.subr.mxu0 0.0
    %1360 = vmatpush2.xpose.msra.mxu0 0.0
    %1361 = vmatprep.subr.mxu0 0.0
    %1362 = vmatpush2.xpose.msra.mxu0 0.0
    %1363 = vmatprep.subr.mxu0 0.0
    %1364 = vmatpush2.xpose.msra.mxu0 0.0
    %1365 = vmatprep.subr.mxu0 0.0
    %1366 = vmatpush2.xpose.msra.mxu0 0.0
    %1367 = vmatprep.subr.mxu0 0.0
    %1368 = vmatpush2.xpose.msra.mxu0 0.0
    %1369 = vmatprep.subr.mxu0 0.0
    %1370 = vmatpush2.xpose.msra.mxu0 0.0
    %1371 = vmatprep.subr.mxu0 0.0
    %1372 = vmatpush2.xpose.msra.mxu0 0.0
    %1373 = vmatprep.subr.mxu0 0.0
    %1374 = vmatpush2.xpose.msra.mxu0 0.0
    %1375 = vmatprep.subr.mxu0 0.0
    %1376 = vmatpush2.xpose.msra.mxu0 0.0
    %1377 = vmatprep.subr.mxu0 0.0
    %1378 = vmatpush2.xpose.msra.mxu0 0.0
    %1379 = vmatprep.subr.mxu0 0.0
    %1380 = vmatpush2.xpose.msra.mxu0 0.0
    %1381 = vmatprep.mubr.f32.mxu0 0.0
    %v1382 = vand.u32 %v1165, 4294901760
    %1383 = vmatmul.mubr.f32.gmra.mxu0 %v1382
    %v1384 = vpop.f32.mrf.mxu0
    %v1385 = vadd.f32 %v1264, %v1384
    %v1386 = vpop.f32.mrf.mxu0
    %1387 = vmatprep.mubr.f32.mxu0 0.0
    %v1388 = vand.u32 %v1168, 4294901760
    %1389 = vmatmul.mubr.f32.gmra.mxu0 %v1388
    %v1390 = vpop.f32.mrf.mxu0
    %v1391 = vadd.f32 %v1274, %v1390
    %v1392 = vpop.f32.mrf.mxu0
    %1393 = vmatprep.mubr.f32.mxu0 0.0
    %v1394 = vand.u32 %v1171, 4294901760
    %1395 = vmatmul.mubr.f32.gmra.mxu0 %v1394
    %v1396 = vpop.f32.mrf.mxu0
    %v1397 = vadd.f32 %v1284, %v1396
    %v1398 = vpop.f32.mrf.mxu0
    %1399 = vmatprep.mubr.f32.mxu0 0.0
    %v1400 = vand.u32 %v1174, 4294901760
    %1401 = vmatmul.mubr.f32.gmra.mxu0 %v1400
    %v1402 = vpop.f32.mrf.mxu0
    %v1403 = vadd.f32 %v1294, %v1402
    %v1404 = vpop.f32.mrf.mxu0
    %1405 = vdwg.mxu0
    %1406 = vmatprep.subr.mxu0 0.0
    %1407 = vmatpush1.xpose.msra.mxu0 0.0
    %1408 = vmatprep.subr.mxu0 0.0
    %1409 = vmatpush1.xpose.msra.mxu0 0.0
    %1410 = vmatprep.subr.mxu0 0.0
    %1411 = vmatpush1.xpose.msra.mxu0 0.0
    %1412 = vmatprep.subr.mxu0 0.0
    %1413 = vmatpush1.xpose.msra.mxu0 0.0
    %1414 = vmatprep.subr.mxu0 0.0
    %1415 = vmatpush1.xpose.msra.mxu0 0.0
    %1416 = vmatprep.subr.mxu0 0.0
    %1417 = vmatpush1.xpose.msra.mxu0 0.0
    %1418 = vmatprep.subr.mxu0 0.0
    %1419 = vmatpush1.xpose.msra.mxu0 0.0
    %1420 = vmatprep.subr.mxu0 0.0
    %1421 = vmatpush1.xpose.msra.mxu0 0.0
    %1422 = vmatprep.subr.mxu0 0.0
    %1423 = vmatpush1.xpose.msra.mxu0 0.0
    %1424 = vmatprep.subr.mxu0 0.0
    %1425 = vmatpush1.xpose.msra.mxu0 0.0
    %1426 = vmatprep.subr.mxu0 0.0
    %1427 = vmatpush1.xpose.msra.mxu0 0.0
    %1428 = vmatprep.subr.mxu0 0.0
    %1429 = vmatpush1.xpose.msra.mxu0 0.0
    %1430 = vmatprep.subr.mxu0 0.0
    %v1431 = vand.u32 %v1186, 4294901760
    %v1432 = vsub.f32 %v1186, %v1431
    %1433 = vmatpush1.xpose.msra.mxu0 %v1432
    %1434 = vmatprep.subr.mxu0 0.0
    %v1435 = vand.u32 %v1183, 4294901760
    %v1436 = vsub.f32 %v1183, %v1435
    %1437 = vmatpush1.xpose.msra.mxu0 %v1436
    %1438 = vmatprep.subr.mxu0 0.0
    %v1439 = vand.u32 %v1180, 4294901760
    %v1440 = vsub.f32 %v1180, %v1439
    %1441 = vmatpush1.xpose.msra.mxu0 %v1440
    %1442 = vmatprep.subr.mxu0 0.0
    %v1443 = vand.u32 %v1177, 4294901760
    %v1444 = vsub.f32 %v1177, %v1443
    %1445 = vmatpush1.xpose.msra.mxu0 %v1444
    %1446 = vmatprep.subr.mxu0 0.0
    %1447 = vmatpush2.xpose.msra.mxu0 0.0
    %1448 = vmatprep.subr.mxu0 0.0
    %1449 = vmatpush2.xpose.msra.mxu0 0.0
    %1450 = vmatprep.subr.mxu0 0.0
    %1451 = vmatpush2.xpose.msra.mxu0 0.0
    %1452 = vmatprep.subr.mxu0 0.0
    %1453 = vmatpush2.xpose.msra.mxu0 0.0
    %1454 = vmatprep.subr.mxu0 0.0
    %1455 = vmatpush2.xpose.msra.mxu0 0.0
    %1456 = vmatprep.subr.mxu0 0.0
    %1457 = vmatpush2.xpose.msra.mxu0 0.0
    %1458 = vmatprep.subr.mxu0 0.0
    %1459 = vmatpush2.xpose.msra.mxu0 0.0
    %1460 = vmatprep.subr.mxu0 0.0
    %1461 = vmatpush2.xpose.msra.mxu0 0.0
    %1462 = vmatprep.subr.mxu0 0.0
    %1463 = vmatpush2.xpose.msra.mxu0 0.0
    %1464 = vmatprep.subr.mxu0 0.0
    %1465 = vmatpush2.xpose.msra.mxu0 0.0
    %1466 = vmatprep.subr.mxu0 0.0
    %1467 = vmatpush2.xpose.msra.mxu0 0.0
    %1468 = vmatprep.subr.mxu0 0.0
    %1469 = vmatpush2.xpose.msra.mxu0 0.0
    %1470 = vmatprep.subr.mxu0 0.0
    %1471 = vmatpush2.xpose.msra.mxu0 0.0
    %1472 = vmatprep.subr.mxu0 0.0
    %1473 = vmatpush2.xpose.msra.mxu0 0.0
    %1474 = vmatprep.subr.mxu0 0.0
    %1475 = vmatpush2.xpose.msra.mxu0 0.0
    %1476 = vmatprep.subr.mxu0 0.0
    %1477 = vmatpush2.xpose.msra.mxu0 0.0
    %1478 = vmatprep.mubr.f32.mxu0 0.0
    %v1479 = vand.u32 %v1165, 4294901760
    %v1480 = vsub.f32 %v1165, %v1479
    %1481 = vmatmul.mubr.f32.gmra.mxu0 %v1480
    %v1482 = vpop.f32.mrf.mxu0
    %v1483 = vadd.f32 %v1385, %v1482
    %v1484 = vpop.f32.mrf.mxu0
    %1485 = vmatprep.mubr.f32.mxu0 0.0
    %v1486 = vand.u32 %v1168, 4294901760
    %v1487 = vsub.f32 %v1168, %v1486
    %1488 = vmatmul.mubr.f32.gmra.mxu0 %v1487
    %v1489 = vpop.f32.mrf.mxu0
    %v1490 = vadd.f32 %v1391, %v1489
    %v1491 = vpop.f32.mrf.mxu0
    %1492 = vmatprep.mubr.f32.mxu0 0.0
    %v1493 = vand.u32 %v1171, 4294901760
    %v1494 = vsub.f32 %v1171, %v1493
    %1495 = vmatmul.mubr.f32.gmra.mxu0 %v1494
    %v1496 = vpop.f32.mrf.mxu0
    %v1497 = vadd.f32 %v1397, %v1496
    %v1498 = vpop.f32.mrf.mxu0
    %1499 = vmatprep.mubr.f32.mxu0 0.0
    %v1500 = vand.u32 %v1174, 4294901760
    %v1501 = vsub.f32 %v1174, %v1500
    %1502 = vmatmul.mubr.f32.gmra.mxu0 %v1501
    %v1503 = vpop.f32.mrf.mxu0
    %v1504 = vadd.f32 %v1403, %v1503
    %v1505 = vpop.f32.mrf.mxu0
    %1506 = vdwg.mxu0
    %1507 = vmatprep.subr.mxu0 0.0
    %1508 = vmatpush1.xpose.msra.mxu0 0.0
    %1509 = vmatprep.subr.mxu0 0.0
    %1510 = vmatpush1.xpose.msra.mxu0 0.0
    %1511 = vmatprep.subr.mxu0 0.0
    %1512 = vmatpush1.xpose.msra.mxu0 0.0
    %1513 = vmatprep.subr.mxu0 0.0
    %1514 = vmatpush1.xpose.msra.mxu0 0.0
    %1515 = vmatprep.subr.mxu0 0.0
    %1516 = vmatpush1.xpose.msra.mxu0 0.0
    %1517 = vmatprep.subr.mxu0 0.0
    %1518 = vmatpush1.xpose.msra.mxu0 0.0
    %1519 = vmatprep.subr.mxu0 0.0
    %1520 = vmatpush1.xpose.msra.mxu0 0.0
    %1521 = vmatprep.subr.mxu0 0.0
    %1522 = vmatpush1.xpose.msra.mxu0 0.0
    %1523 = vmatprep.subr.mxu0 0.0
    %1524 = vmatpush1.xpose.msra.mxu0 0.0
    %1525 = vmatprep.subr.mxu0 0.0
    %1526 = vmatpush1.xpose.msra.mxu0 0.0
    %1527 = vmatprep.subr.mxu0 0.0
    %1528 = vmatpush1.xpose.msra.mxu0 0.0
    %1529 = vmatprep.subr.mxu0 0.0
    %1530 = vmatpush1.xpose.msra.mxu0 0.0
    %1531 = vmatprep.subr.mxu0 0.0
    %v1532 = vand.u32 %v1186, 4294901760
    %1533 = vmatpush1.xpose.msra.mxu0 %v1532
    %1534 = vmatprep.subr.mxu0 0.0
    %v1535 = vand.u32 %v1183, 4294901760
    %1536 = vmatpush1.xpose.msra.mxu0 %v1535
    %1537 = vmatprep.subr.mxu0 0.0
    %v1538 = vand.u32 %v1180, 4294901760
    %1539 = vmatpush1.xpose.msra.mxu0 %v1538
    %1540 = vmatprep.subr.mxu0 0.0
    %v1541 = vand.u32 %v1177, 4294901760
    %1542 = vmatpush1.xpose.msra.mxu0 %v1541
    %1543 = vmatprep.subr.mxu0 0.0
    %1544 = vmatpush2.xpose.msra.mxu0 0.0
    %1545 = vmatprep.subr.mxu0 0.0
    %1546 = vmatpush2.xpose.msra.mxu0 0.0
    %1547 = vmatprep.subr.mxu0 0.0
    %1548 = vmatpush2.xpose.msra.mxu0 0.0
    %1549 = vmatprep.subr.mxu0 0.0
    %1550 = vmatpush2.xpose.msra.mxu0 0.0
    %1551 = vmatprep.subr.mxu0 0.0
    %1552 = vmatpush2.xpose.msra.mxu0 0.0
    %1553 = vmatprep.subr.mxu0 0.0
    %1554 = vmatpush2.xpose.msra.mxu0 0.0
    %1555 = vmatprep.subr.mxu0 0.0
    %1556 = vmatpush2.xpose.msra.mxu0 0.0
    %1557 = vmatprep.subr.mxu0 0.0
    %1558 = vmatpush2.xpose.msra.mxu0 0.0
    %1559 = vmatprep.subr.mxu0 0.0
    %1560 = vmatpush2.xpose.msra.mxu0 0.0
    %1561 = vmatprep.subr.mxu0 0.0
    %1562 = vmatpush2.xpose.msra.mxu0 0.0
    %1563 = vmatprep.subr.mxu0 0.0
    %1564 = vmatpush2.xpose.msra.mxu0 0.0
    %1565 = vmatprep.subr.mxu0 0.0
    %1566 = vmatpush2.xpose.msra.mxu0 0.0
    %1567 = vmatprep.subr.mxu0 0.0
    %1568 = vmatpush2.xpose.msra.mxu0 0.0
    %1569 = vmatprep.subr.mxu0 0.0
    %1570 = vmatpush2.xpose.msra.mxu0 0.0
    %1571 = vmatprep.subr.mxu0 0.0
    %1572 = vmatpush2.xpose.msra.mxu0 0.0
    %1573 = vmatprep.subr.mxu0 0.0
    %1574 = vmatpush2.xpose.msra.mxu0 0.0
    %1575 = vmatprep.mubr.f32.mxu0 0.0
    %v1576 = vand.u32 %v1165, 4294901760
    %v1577 = vsub.f32 %v1165, %v1576
    %v1578 = vand.u32 %v1577, 4294901760
    %1579 = vmatmul.mubr.f32.gmra.mxu0 %v1578
    %v1580 = vpop.f32.mrf.mxu0
    %v1581 = vadd.f32 %v1483, %v1580
    %v1582 = vpop.f32.mrf.mxu0
    %1583 = vmatprep.mubr.f32.mxu0 0.0
    %v1584 = vand.u32 %v1168, 4294901760
    %v1585 = vsub.f32 %v1168, %v1584
    %v1586 = vand.u32 %v1585, 4294901760
    %1587 = vmatmul.mubr.f32.gmra.mxu0 %v1586
    %v1588 = vpop.f32.mrf.mxu0
    %v1589 = vadd.f32 %v1490, %v1588
    %v1590 = vpop.f32.mrf.mxu0
    %1591 = vmatprep.mubr.f32.mxu0 0.0
    %v1592 = vand.u32 %v1171, 4294901760
    %v1593 = vsub.f32 %v1171, %v1592
    %v1594 = vand.u32 %v1593, 4294901760
    %1595 = vmatmul.mubr.f32.gmra.mxu0 %v1594
    %v1596 = vpop.f32.mrf.mxu0
    %v1597 = vadd.f32 %v1497, %v1596
    %v1598 = vpop.f32.mrf.mxu0
    %1599 = vmatprep.mubr.f32.mxu0 0.0
    %v1600 = vand.u32 %v1174, 4294901760
    %v1601 = vsub.f32 %v1174, %v1600
    %v1602 = vand.u32 %v1601, 4294901760
    %1603 = vmatmul.mubr.f32.gmra.mxu0 %v1602
    %v1604 = vpop.f32.mrf.mxu0
    %v1605 = vadd.f32 %v1504, %v1604
    %v1606 = vpop.f32.mrf.mxu0
    %1607 = vdwg.mxu0
    %1608 = vmatprep.subr.mxu0 0.0
    %1609 = vmatpush1.xpose.msra.mxu0 0.0
    %1610 = vmatprep.subr.mxu0 0.0
    %1611 = vmatpush1.xpose.msra.mxu0 0.0
    %1612 = vmatprep.subr.mxu0 0.0
    %1613 = vmatpush1.xpose.msra.mxu0 0.0
    %1614 = vmatprep.subr.mxu0 0.0
    %1615 = vmatpush1.xpose.msra.mxu0 0.0
    %1616 = vmatprep.subr.mxu0 0.0
    %1617 = vmatpush1.xpose.msra.mxu0 0.0
    %1618 = vmatprep.subr.mxu0 0.0
    %1619 = vmatpush1.xpose.msra.mxu0 0.0
    %1620 = vmatprep.subr.mxu0 0.0
    %1621 = vmatpush1.xpose.msra.mxu0 0.0
    %1622 = vmatprep.subr.mxu0 0.0
    %1623 = vmatpush1.xpose.msra.mxu0 0.0
    %1624 = vmatprep.subr.mxu0 0.0
    %1625 = vmatpush1.xpose.msra.mxu0 0.0
    %1626 = vmatprep.subr.mxu0 0.0
    %1627 = vmatpush1.xpose.msra.mxu0 0.0
    %1628 = vmatprep.subr.mxu0 0.0
    %1629 = vmatpush1.xpose.msra.mxu0 0.0
    %1630 = vmatprep.subr.mxu0 0.0
    %1631 = vmatpush1.xpose.msra.mxu0 0.0
    %1632 = vmatprep.subr.mxu0 0.0
    %v1633 = vand.u32 %v1186, 4294901760
    %v1634 = vsub.f32 %v1186, %v1633
    %v1635 = vand.u32 %v1634, 4294901760
    %1636 = vmatpush1.xpose.msra.mxu0 %v1635
    %1637 = vmatprep.subr.mxu0 0.0
    %v1638 = vand.u32 %v1183, 4294901760
    %v1639 = vsub.f32 %v1183, %v1638
    %v1640 = vand.u32 %v1639, 4294901760
    %1641 = vmatpush1.xpose.msra.mxu0 %v1640
    %1642 = vmatprep.subr.mxu0 0.0
    %v1643 = vand.u32 %v1180, 4294901760
    %v1644 = vsub.f32 %v1180, %v1643
    %v1645 = vand.u32 %v1644, 4294901760
    %1646 = vmatpush1.xpose.msra.mxu0 %v1645
    %1647 = vmatprep.subr.mxu0 0.0
    %v1648 = vand.u32 %v1177, 4294901760
    %v1649 = vsub.f32 %v1177, %v1648
    %v1650 = vand.u32 %v1649, 4294901760
    %1651 = vmatpush1.xpose.msra.mxu0 %v1650
    %1652 = vmatprep.subr.mxu0 0.0
    %1653 = vmatpush2.xpose.msra.mxu0 0.0
    %1654 = vmatprep.subr.mxu0 0.0
    %1655 = vmatpush2.xpose.msra.mxu0 0.0
    %1656 = vmatprep.subr.mxu0 0.0
    %1657 = vmatpush2.xpose.msra.mxu0 0.0
    %1658 = vmatprep.subr.mxu0 0.0
    %1659 = vmatpush2.xpose.msra.mxu0 0.0
    %1660 = vmatprep.subr.mxu0 0.0
    %1661 = vmatpush2.xpose.msra.mxu0 0.0
    %1662 = vmatprep.subr.mxu0 0.0
    %1663 = vmatpush2.xpose.msra.mxu0 0.0
    %1664 = vmatprep.subr.mxu0 0.0
    %1665 = vmatpush2.xpose.msra.mxu0 0.0
    %1666 = vmatprep.subr.mxu0 0.0
    %1667 = vmatpush2.xpose.msra.mxu0 0.0
    %1668 = vmatprep.subr.mxu0 0.0
    %1669 = vmatpush2.xpose.msra.mxu0 0.0
    %1670 = vmatprep.subr.mxu0 0.0
    %1671 = vmatpush2.xpose.msra.mxu0 0.0
    %1672 = vmatprep.subr.mxu0 0.0
    %1673 = vmatpush2.xpose.msra.mxu0 0.0
    %1674 = vmatprep.subr.mxu0 0.0
    %1675 = vmatpush2.xpose.msra.mxu0 0.0
    %1676 = vmatprep.subr.mxu0 0.0
    %1677 = vmatpush2.xpose.msra.mxu0 0.0
    %1678 = vmatprep.subr.mxu0 0.0
    %1679 = vmatpush2.xpose.msra.mxu0 0.0
    %1680 = vmatprep.subr.mxu0 0.0
    %1681 = vmatpush2.xpose.msra.mxu0 0.0
    %1682 = vmatprep.subr.mxu0 0.0
    %1683 = vmatpush2.xpose.msra.mxu0 0.0
    %1684 = vmatprep.mubr.f32.mxu0 0.0
    %v1685 = vand.u32 %v1165, 4294901760
    %1686 = vmatmul.mubr.f32.gmra.mxu0 %v1685
    %v1687 = vpop.f32.mrf.mxu0
    %v1688 = vadd.f32 %v1581, %v1687
    %v1689 = vpop.f32.mrf.mxu0
    %1690 = vmatprep.mubr.f32.mxu0 0.0
    %v1691 = vand.u32 %v1168, 4294901760
    %1692 = vmatmul.mubr.f32.gmra.mxu0 %v1691
    %v1693 = vpop.f32.mrf.mxu0
    %v1694 = vadd.f32 %v1589, %v1693
    %v1695 = vpop.f32.mrf.mxu0
    %1696 = vmatprep.mubr.f32.mxu0 0.0
    %v1697 = vand.u32 %v1171, 4294901760
    %1698 = vmatmul.mubr.f32.gmra.mxu0 %v1697
    %v1699 = vpop.f32.mrf.mxu0
    %v1700 = vadd.f32 %v1597, %v1699
    %v1701 = vpop.f32.mrf.mxu0
    %1702 = vmatprep.mubr.f32.mxu0 0.0
    %v1703 = vand.u32 %v1174, 4294901760
    %1704 = vmatmul.mubr.f32.gmra.mxu0 %v1703
    %v1705 = vpop.f32.mrf.mxu0
    %v1706 = vadd.f32 %v1605, %v1705
    %v1707 = vpop.f32.mrf.mxu0
    %1708 = vdwg.mxu0
    %1709 = vmatprep.subr.mxu0 0.0
    %1710 = vmatpush1.xpose.msra.mxu0 0.0
    %1711 = vmatprep.subr.mxu0 0.0
    %1712 = vmatpush1.xpose.msra.mxu0 0.0
    %1713 = vmatprep.subr.mxu0 0.0
    %1714 = vmatpush1.xpose.msra.mxu0 0.0
    %1715 = vmatprep.subr.mxu0 0.0
    %1716 = vmatpush1.xpose.msra.mxu0 0.0
    %1717 = vmatprep.subr.mxu0 0.0
    %1718 = vmatpush1.xpose.msra.mxu0 0.0
    %1719 = vmatprep.subr.mxu0 0.0
    %1720 = vmatpush1.xpose.msra.mxu0 0.0
    %1721 = vmatprep.subr.mxu0 0.0
    %1722 = vmatpush1.xpose.msra.mxu0 0.0
    %1723 = vmatprep.subr.mxu0 0.0
    %1724 = vmatpush1.xpose.msra.mxu0 0.0
    %1725 = vmatprep.subr.mxu0 0.0
    %1726 = vmatpush1.xpose.msra.mxu0 0.0
    %1727 = vmatprep.subr.mxu0 0.0
    %1728 = vmatpush1.xpose.msra.mxu0 0.0
    %1729 = vmatprep.subr.mxu0 0.0
    %1730 = vmatpush1.xpose.msra.mxu0 0.0
    %1731 = vmatprep.subr.mxu0 0.0
    %1732 = vmatpush1.xpose.msra.mxu0 0.0
    %1733 = vmatprep.subr.mxu0 0.0
    %v1734 = vand.u32 %v1186, 4294901760
    %1735 = vmatpush1.xpose.msra.mxu0 %v1734
    %1736 = vmatprep.subr.mxu0 0.0
    %v1737 = vand.u32 %v1183, 4294901760
    %1738 = vmatpush1.xpose.msra.mxu0 %v1737
    %1739 = vmatprep.subr.mxu0 0.0
    %v1740 = vand.u32 %v1180, 4294901760
    %1741 = vmatpush1.xpose.msra.mxu0 %v1740
    %1742 = vmatprep.subr.mxu0 0.0
    %v1743 = vand.u32 %v1177, 4294901760
    %1744 = vmatpush1.xpose.msra.mxu0 %v1743
    %1745 = vmatprep.subr.mxu0 0.0
    %1746 = vmatpush2.xpose.msra.mxu0 0.0
    %1747 = vmatprep.subr.mxu0 0.0
    %1748 = vmatpush2.xpose.msra.mxu0 0.0
    %1749 = vmatprep.subr.mxu0 0.0
    %1750 = vmatpush2.xpose.msra.mxu0 0.0
    %1751 = vmatprep.subr.mxu0 0.0
    %1752 = vmatpush2.xpose.msra.mxu0 0.0
    %1753 = vmatprep.subr.mxu0 0.0
    %1754 = vmatpush2.xpose.msra.mxu0 0.0
    %1755 = vmatprep.subr.mxu0 0.0
    %1756 = vmatpush2.xpose.msra.mxu0 0.0
    %1757 = vmatprep.subr.mxu0 0.0
    %1758 = vmatpush2.xpose.msra.mxu0 0.0
    %1759 = vmatprep.subr.mxu0 0.0
    %1760 = vmatpush2.xpose.msra.mxu0 0.0
    %1761 = vmatprep.subr.mxu0 0.0
    %1762 = vmatpush2.xpose.msra.mxu0 0.0
    %1763 = vmatprep.subr.mxu0 0.0
    %1764 = vmatpush2.xpose.msra.mxu0 0.0
    %1765 = vmatprep.subr.mxu0 0.0
    %1766 = vmatpush2.xpose.msra.mxu0 0.0
    %1767 = vmatprep.subr.mxu0 0.0
    %1768 = vmatpush2.xpose.msra.mxu0 0.0
    %1769 = vmatprep.subr.mxu0 0.0
    %1770 = vmatpush2.xpose.msra.mxu0 0.0
    %1771 = vmatprep.subr.mxu0 0.0
    %1772 = vmatpush2.xpose.msra.mxu0 0.0
    %1773 = vmatprep.subr.mxu0 0.0
    %1774 = vmatpush2.xpose.msra.mxu0 0.0
    %1775 = vmatprep.subr.mxu0 0.0
    %1776 = vmatpush2.xpose.msra.mxu0 0.0
    %1777 = vmatprep.mubr.f32.mxu0 0.0
    %v1778 = vand.u32 %v1165, 4294901760
    %1779 = vmatmul.mubr.f32.gmra.mxu0 %v1778
    %v1780 = vpop.f32.mrf.mxu0
    %v1781 = vadd.f32 %v1688, %v1780
    %v1782 = vpop.f32.mrf.mxu0
    %1783 = vmatprep.mubr.f32.mxu0 0.0
    %v1784 = vand.u32 %v1168, 4294901760
    %1785 = vmatmul.mubr.f32.gmra.mxu0 %v1784
    %v1786 = vpop.f32.mrf.mxu0
    %v1787 = vadd.f32 %v1694, %v1786
    %v1788 = vpop.f32.mrf.mxu0
    %1789 = vmatprep.mubr.f32.mxu0 0.0
    %v1790 = vand.u32 %v1171, 4294901760
    %1791 = vmatmul.mubr.f32.gmra.mxu0 %v1790
    %v1792 = vpop.f32.mrf.mxu0
    %v1793 = vadd.f32 %v1700, %v1792
    %v1794 = vpop.f32.mrf.mxu0
    %1795 = vmatprep.mubr.f32.mxu0 0.0
    %v1796 = vand.u32 %v1174, 4294901760
    %1797 = vmatmul.mubr.f32.gmra.mxu0 %v1796
    %v1798 = vpop.f32.mrf.mxu0
    %v1799 = vadd.f32 %v1706, %v1798
    %v1800 = vpop.f32.mrf.mxu0
    %1801 = vdwg.mxu0
    %v1802 = vld [vmem:[%s3] sm:$0xff]
    %v1803 = vld [vmem:[%s3 + $0x8] sm:$0xff]
    %v1804 = vld [vmem:[%s3 + $0x10] sm:$0xff]
    %v1805 = vld [vmem:[%s3 + $0x18] sm:$0xff]
    %v1806 = vld [vmem:[%s4] sm:$0x1]
    %v1808 = vlaneseq
    %v1809 = vshrl.u32 %v1808, 7
    %v1810 = vsub.s32 0, %v1809
    %v1811 = vrot.slane %v1806, %v1810
    %v1814 = vsel %vm1163, %v1802, 0
    %v1817 = vsel %vm1163, %v1803, 0
    %v1820 = vsel %vm1163, %v1804, 0
    %v1823 = vsel %vm1163, %v1805, 0
    %1825 = vmatprep.subr.mxu0 0.0
    %1826 = vmatpush1.xpose.msra.mxu0 0.0
    %1827 = vmatprep.subr.mxu0 0.0
    %1828 = vmatpush1.xpose.msra.mxu0 0.0
    %1829 = vmatprep.subr.mxu0 0.0
    %1830 = vmatpush1.xpose.msra.mxu0 0.0
    %1831 = vmatprep.subr.mxu0 0.0
    %1832 = vmatpush1.xpose.msra.mxu0 0.0
    %1833 = vmatprep.subr.mxu0 0.0
    %1834 = vmatpush1.xpose.msra.mxu0 0.0
    %1835 = vmatprep.subr.mxu0 0.0
    %1836 = vmatpush1.xpose.msra.mxu0 0.0
    %1837 = vmatprep.subr.mxu0 0.0
    %1838 = vmatpush1.xpose.msra.mxu0 0.0
    %1839 = vmatprep.subr.mxu0 0.0
    %1840 = vmatpush1.xpose.msra.mxu0 0.0
    %1841 = vmatprep.subr.mxu0 0.0
    %1842 = vmatpush1.xpose.msra.mxu0 0.0
    %1843 = vmatprep.subr.mxu0 0.0
    %1844 = vmatpush1.xpose.msra.mxu0 0.0
    %1845 = vmatprep.subr.mxu0 0.0
    %1846 = vmatpush1.xpose.msra.mxu0 0.0
    %1847 = vmatprep.subr.mxu0 0.0
    %1848 = vmatpush1.xpose.msra.mxu0 0.0
    %1849 = vmatprep.subr.mxu0 0.0
    %v1850 = vand.u32 %v1823, 4294901760
    %1851 = vmatpush1.xpose.msra.mxu0 %v1850
    %1852 = vmatprep.subr.mxu0 0.0
    %v1853 = vand.u32 %v1820, 4294901760
    %1854 = vmatpush1.xpose.msra.mxu0 %v1853
    %1855 = vmatprep.subr.mxu0 0.0
    %v1856 = vand.u32 %v1817, 4294901760
    %1857 = vmatpush1.xpose.msra.mxu0 %v1856
    %1858 = vmatprep.subr.mxu0 0.0
    %v1859 = vand.u32 %v1814, 4294901760
    %1860 = vmatpush1.xpose.msra.mxu0 %v1859
    %1861 = vmatprep.subr.mxu0 0.0
    %1862 = vmatpush2.xpose.msra.mxu0 0.0
    %1863 = vmatprep.subr.mxu0 0.0
    %1864 = vmatpush2.xpose.msra.mxu0 0.0
    %1865 = vmatprep.subr.mxu0 0.0
    %1866 = vmatpush2.xpose.msra.mxu0 0.0
    %1867 = vmatprep.subr.mxu0 0.0
    %1868 = vmatpush2.xpose.msra.mxu0 0.0
    %1869 = vmatprep.subr.mxu0 0.0
    %1870 = vmatpush2.xpose.msra.mxu0 0.0
    %1871 = vmatprep.subr.mxu0 0.0
    %1872 = vmatpush2.xpose.msra.mxu0 0.0
    %1873 = vmatprep.subr.mxu0 0.0
    %1874 = vmatpush2.xpose.msra.mxu0 0.0
    %1875 = vmatprep.subr.mxu0 0.0
    %1876 = vmatpush2.xpose.msra.mxu0 0.0
    %1877 = vmatprep.subr.mxu0 0.0
    %1878 = vmatpush2.xpose.msra.mxu0 0.0
    %1879 = vmatprep.subr.mxu0 0.0
    %1880 = vmatpush2.xpose.msra.mxu0 0.0
    %1881 = vmatprep.subr.mxu0 0.0
    %1882 = vmatpush2.xpose.msra.mxu0 0.0
    %1883 = vmatprep.subr.mxu0 0.0
    %1884 = vmatpush2.xpose.msra.mxu0 0.0
    %1885 = vmatprep.subr.mxu0 0.0
    %1886 = vmatpush2.xpose.msra.mxu0 0.0
    %1887 = vmatprep.subr.mxu0 0.0
    %1888 = vmatpush2.xpose.msra.mxu0 0.0
    %1889 = vmatprep.subr.mxu0 0.0
    %1890 = vmatpush2.xpose.msra.mxu0 0.0
    %1891 = vmatprep.subr.mxu0 0.0
    %1892 = vmatpush2.xpose.msra.mxu0 0.0
    %1893 = vmatprep.mubr.f32.mxu0 0.0
    %v1894 = vand.u32 %v1165, 4294901760
    %v1895 = vsub.f32 %v1165, %v1894
    %v1896 = vand.u32 %v1895, 4294901760
    %v1897 = vsub.f32 %v1895, %v1896
    %v1898 = vand.u32 %v1897, 4294901760
    %1899 = vmatmul.mubr.f32.gmra.mxu0 %v1898
    %v1900 = vpop.f32.mrf.mxu0
    %v1901 = vadd.f32 %v1811, %v1900
    %v1902 = vpop.f32.mrf.mxu0
    %1903 = vmatprep.mubr.f32.mxu0 0.0
    %v1904 = vand.u32 %v1168, 4294901760
    %v1905 = vsub.f32 %v1168, %v1904
    %v1906 = vand.u32 %v1905, 4294901760
    %v1907 = vsub.f32 %v1905, %v1906
    %v1908 = vand.u32 %v1907, 4294901760
    %1909 = vmatmul.mubr.f32.gmra.mxu0 %v1908
    %v1910 = vpop.f32.mrf.mxu0
    %v1911 = vadd.f32 %v1811, %v1910
    %v1912 = vpop.f32.mrf.mxu0
    %1913 = vmatprep.mubr.f32.mxu0 0.0
    %v1914 = vand.u32 %v1171, 4294901760
    %v1915 = vsub.f32 %v1171, %v1914
    %v1916 = vand.u32 %v1915, 4294901760
    %v1917 = vsub.f32 %v1915, %v1916
    %v1918 = vand.u32 %v1917, 4294901760
    %1919 = vmatmul.mubr.f32.gmra.mxu0 %v1918
    %v1920 = vpop.f32.mrf.mxu0
    %v1921 = vadd.f32 %v1811, %v1920
    %v1922 = vpop.f32.mrf.mxu0
    %1923 = vmatprep.mubr.f32.mxu0 0.0
    %v1924 = vand.u32 %v1174, 4294901760
    %v1925 = vsub.f32 %v1174, %v1924
    %v1926 = vand.u32 %v1925, 4294901760
    %v1927 = vsub.f32 %v1925, %v1926
    %v1928 = vand.u32 %v1927, 4294901760
    %1929 = vmatmul.mubr.f32.gmra.mxu0 %v1928
    %v1930 = vpop.f32.mrf.mxu0
    %v1931 = vadd.f32 %v1811, %v1930
    %v1932 = vpop.f32.mrf.mxu0
    %1933 = vdwg.mxu0
    %1934 = vmatprep.subr.mxu0 0.0
    %1935 = vmatpush1.xpose.msra.mxu0 0.0
    %1936 = vmatprep.subr.mxu0 0.0
    %1937 = vmatpush1.xpose.msra.mxu0 0.0
    %1938 = vmatprep.subr.mxu0 0.0
    %1939 = vmatpush1.xpose.msra.mxu0 0.0
    %1940 = vmatprep.subr.mxu0 0.0
    %1941 = vmatpush1.xpose.msra.mxu0 0.0
    %1942 = vmatprep.subr.mxu0 0.0
    %1943 = vmatpush1.xpose.msra.mxu0 0.0
    %1944 = vmatprep.subr.mxu0 0.0
    %1945 = vmatpush1.xpose.msra.mxu0 0.0
    %1946 = vmatprep.subr.mxu0 0.0
    %1947 = vmatpush1.xpose.msra.mxu0 0.0
    %1948 = vmatprep.subr.mxu0 0.0
    %1949 = vmatpush1.xpose.msra.mxu0 0.0
    %1950 = vmatprep.subr.mxu0 0.0
    %1951 = vmatpush1.xpose.msra.mxu0 0.0
    %1952 = vmatprep.subr.mxu0 0.0
    %1953 = vmatpush1.xpose.msra.mxu0 0.0
    %1954 = vmatprep.subr.mxu0 0.0
    %1955 = vmatpush1.xpose.msra.mxu0 0.0
    %1956 = vmatprep.subr.mxu0 0.0
    %1957 = vmatpush1.xpose.msra.mxu0 0.0
    %1958 = vmatprep.subr.mxu0 0.0
    %v1959 = vand.u32 %v1823, 4294901760
    %v1960 = vsub.f32 %v1823, %v1959
    %v1961 = vand.u32 %v1960, 4294901760
    %v1962 = vsub.f32 %v1960, %v1961
    %v1963 = vand.u32 %v1962, 4294901760
    %1964 = vmatpush1.xpose.msra.mxu0 %v1963
    %1965 = vmatprep.subr.mxu0 0.0
    %v1966 = vand.u32 %v1820, 4294901760
    %v1967 = vsub.f32 %v1820, %v1966
    %v1968 = vand.u32 %v1967, 4294901760
    %v1969 = vsub.f32 %v1967, %v1968
    %v1970 = vand.u32 %v1969, 4294901760
    %1971 = vmatpush1.xpose.msra.mxu0 %v1970
    %1972 = vmatprep.subr.mxu0 0.0
    %v1973 = vand.u32 %v1817, 4294901760
    %v1974 = vsub.f32 %v1817, %v1973
    %v1975 = vand.u32 %v1974, 4294901760
    %v1976 = vsub.f32 %v1974, %v1975
    %v1977 = vand.u32 %v1976, 4294901760
    %1978 = vmatpush1.xpose.msra.mxu0 %v1977
    %1979 = vmatprep.subr.mxu0 0.0
    %v1980 = vand.u32 %v1814, 4294901760
    %v1981 = vsub.f32 %v1814, %v1980
    %v1982 = vand.u32 %v1981, 4294901760
    %v1983 = vsub.f32 %v1981, %v1982
    %v1984 = vand.u32 %v1983, 4294901760
    %1985 = vmatpush1.xpose.msra.mxu0 %v1984
    %1986 = vmatprep.subr.mxu0 0.0
    %1987 = vmatpush2.xpose.msra.mxu0 0.0
    %1988 = vmatprep.subr.mxu0 0.0
    %1989 = vmatpush2.xpose.msra.mxu0 0.0
    %1990 = vmatprep.subr.mxu0 0.0
    %1991 = vmatpush2.xpose.msra.mxu0 0.0
    %1992 = vmatprep.subr.mxu0 0.0
    %1993 = vmatpush2.xpose.msra.mxu0 0.0
    %1994 = vmatprep.subr.mxu0 0.0
    %1995 = vmatpush2.xpose.msra.mxu0 0.0
    %1996 = vmatprep.subr.mxu0 0.0
    %1997 = vmatpush2.xpose.msra.mxu0 0.0
    %1998 = vmatprep.subr.mxu0 0.0
    %1999 = vmatpush2.xpose.msra.mxu0 0.0
    %2000 = vmatprep.subr.mxu0 0.0
    %2001 = vmatpush2.xpose.msra.mxu0 0.0
    %2002 = vmatprep.subr.mxu0 0.0
    %2003 = vmatpush2.xpose.msra.mxu0 0.0
    %2004 = vmatprep.subr.mxu0 0.0
    %2005 = vmatpush2.xpose.msra.mxu0 0.0
    %2006 = vmatprep.subr.mxu0 0.0
    %2007 = vmatpush2.xpose.msra.mxu0 0.0
    %2008 = vmatprep.subr.mxu0 0.0
    %2009 = vmatpush2.xpose.msra.mxu0 0.0
    %2010 = vmatprep.subr.mxu0 0.0
    %2011 = vmatpush2.xpose.msra.mxu0 0.0
    %2012 = vmatprep.subr.mxu0 0.0
    %2013 = vmatpush2.xpose.msra.mxu0 0.0
    %2014 = vmatprep.subr.mxu0 0.0
    %2015 = vmatpush2.xpose.msra.mxu0 0.0
    %2016 = vmatprep.subr.mxu0 0.0
    %2017 = vmatpush2.xpose.msra.mxu0 0.0
    %2018 = vmatprep.mubr.f32.mxu0 0.0
    %v2019 = vand.u32 %v1165, 4294901760
    %2020 = vmatmul.mubr.f32.gmra.mxu0 %v2019
    %v2021 = vpop.f32.mrf.mxu0
    %v2022 = vadd.f32 %v1901, %v2021
    %v2023 = vpop.f32.mrf.mxu0
    %2024 = vmatprep.mubr.f32.mxu0 0.0
    %v2025 = vand.u32 %v1168, 4294901760
    %2026 = vmatmul.mubr.f32.gmra.mxu0 %v2025
    %v2027 = vpop.f32.mrf.mxu0
    %v2028 = vadd.f32 %v1911, %v2027
    %v2029 = vpop.f32.mrf.mxu0
    %2030 = vmatprep.mubr.f32.mxu0 0.0
    %v2031 = vand.u32 %v1171, 4294901760
    %2032 = vmatmul.mubr.f32.gmra.mxu0 %v2031
    %v2033 = vpop.f32.mrf.mxu0
    %v2034 = vadd.f32 %v1921, %v2033
    %v2035 = vpop.f32.mrf.mxu0
    %2036 = vmatprep.mubr.f32.mxu0 0.0
    %v2037 = vand.u32 %v1174, 4294901760
    %2038 = vmatmul.mubr.f32.gmra.mxu0 %v2037
    %v2039 = vpop.f32.mrf.mxu0
    %v2040 = vadd.f32 %v1931, %v2039
    %v2041 = vpop.f32.mrf.mxu0
    %2042 = vdwg.mxu0
    %2043 = vmatprep.subr.mxu0 0.0
    %2044 = vmatpush1.xpose.msra.mxu0 0.0
    %2045 = vmatprep.subr.mxu0 0.0
    %2046 = vmatpush1.xpose.msra.mxu0 0.0
    %2047 = vmatprep.subr.mxu0 0.0
    %2048 = vmatpush1.xpose.msra.mxu0 0.0
    %2049 = vmatprep.subr.mxu0 0.0
    %2050 = vmatpush1.xpose.msra.mxu0 0.0
    %2051 = vmatprep.subr.mxu0 0.0
    %2052 = vmatpush1.xpose.msra.mxu0 0.0
    %2053 = vmatprep.subr.mxu0 0.0
    %2054 = vmatpush1.xpose.msra.mxu0 0.0
    %2055 = vmatprep.subr.mxu0 0.0
    %2056 = vmatpush1.xpose.msra.mxu0 0.0
    %2057 = vmatprep.subr.mxu0 0.0
    %2058 = vmatpush1.xpose.msra.mxu0 0.0
    %2059 = vmatprep.subr.mxu0 0.0
    %2060 = vmatpush1.xpose.msra.mxu0 0.0
    %2061 = vmatprep.subr.mxu0 0.0
    %2062 = vmatpush1.xpose.msra.mxu0 0.0
    %2063 = vmatprep.subr.mxu0 0.0
    %2064 = vmatpush1.xpose.msra.mxu0 0.0
    %2065 = vmatprep.subr.mxu0 0.0
    %2066 = vmatpush1.xpose.msra.mxu0 0.0
    %2067 = vmatprep.subr.mxu0 0.0
    %v2068 = vand.u32 %v1823, 4294901760
    %v2069 = vsub.f32 %v1823, %v2068
    %2070 = vmatpush1.xpose.msra.mxu0 %v2069
    %2071 = vmatprep.subr.mxu0 0.0
    %v2072 = vand.u32 %v1820, 4294901760
    %v2073 = vsub.f32 %v1820, %v2072
    %2074 = vmatpush1.xpose.msra.mxu0 %v2073
    %2075 = vmatprep.subr.mxu0 0.0
    %v2076 = vand.u32 %v1817, 4294901760
    %v2077 = vsub.f32 %v1817, %v2076
    %2078 = vmatpush1.xpose.msra.mxu0 %v2077
    %2079 = vmatprep.subr.mxu0 0.0
    %v2080 = vand.u32 %v1814, 4294901760
    %v2081 = vsub.f32 %v1814, %v2080
    %2082 = vmatpush1.xpose.msra.mxu0 %v2081
    %2083 = vmatprep.subr.mxu0 0.0
    %2084 = vmatpush2.xpose.msra.mxu0 0.0
    %2085 = vmatprep.subr.mxu0 0.0
    %2086 = vmatpush2.xpose.msra.mxu0 0.0
    %2087 = vmatprep.subr.mxu0 0.0
    %2088 = vmatpush2.xpose.msra.mxu0 0.0
    %2089 = vmatprep.subr.mxu0 0.0
    %2090 = vmatpush2.xpose.msra.mxu0 0.0
    %2091 = vmatprep.subr.mxu0 0.0
    %2092 = vmatpush2.xpose.msra.mxu0 0.0
    %2093 = vmatprep.subr.mxu0 0.0
    %2094 = vmatpush2.xpose.msra.mxu0 0.0
    %2095 = vmatprep.subr.mxu0 0.0
    %2096 = vmatpush2.xpose.msra.mxu0 0.0
    %2097 = vmatprep.subr.mxu0 0.0
    %2098 = vmatpush2.xpose.msra.mxu0 0.0
    %2099 = vmatprep.subr.mxu0 0.0
    %2100 = vmatpush2.xpose.msra.mxu0 0.0
    %2101 = vmatprep.subr.mxu0 0.0
    %2102 = vmatpush2.xpose.msra.mxu0 0.0
    %2103 = vmatprep.subr.mxu0 0.0
    %2104 = vmatpush2.xpose.msra.mxu0 0.0
    %2105 = vmatprep.subr.mxu0 0.0
    %2106 = vmatpush2.xpose.msra.mxu0 0.0
    %2107 = vmatprep.subr.mxu0 0.0
    %2108 = vmatpush2.xpose.msra.mxu0 0.0
    %2109 = vmatprep.subr.mxu0 0.0
    %2110 = vmatpush2.xpose.msra.mxu0 0.0
    %2111 = vmatprep.subr.mxu0 0.0
    %2112 = vmatpush2.xpose.msra.mxu0 0.0
    %2113 = vmatprep.subr.mxu0 0.0
    %2114 = vmatpush2.xpose.msra.mxu0 0.0
    %2115 = vmatprep.mubr.f32.mxu0 0.0
    %v2116 = vand.u32 %v1165, 4294901760
    %v2117 = vsub.f32 %v1165, %v2116
    %2118 = vmatmul.mubr.f32.gmra.mxu0 %v2117
    %v2119 = vpop.f32.mrf.mxu0
    %v2120 = vadd.f32 %v2022, %v2119
    %v2121 = vpop.f32.mrf.mxu0
    %2122 = vmatprep.mubr.f32.mxu0 0.0
    %v2123 = vand.u32 %v1168, 4294901760
    %v2124 = vsub.f32 %v1168, %v2123
    %2125 = vmatmul.mubr.f32.gmra.mxu0 %v2124
    %v2126 = vpop.f32.mrf.mxu0
    %v2127 = vadd.f32 %v2028, %v2126
    %v2128 = vpop.f32.mrf.mxu0
    %2129 = vmatprep.mubr.f32.mxu0 0.0
    %v2130 = vand.u32 %v1171, 4294901760
    %v2131 = vsub.f32 %v1171, %v2130
    %2132 = vmatmul.mubr.f32.gmra.mxu0 %v2131
    %v2133 = vpop.f32.mrf.mxu0
    %v2134 = vadd.f32 %v2034, %v2133
    %v2135 = vpop.f32.mrf.mxu0
    %2136 = vmatprep.mubr.f32.mxu0 0.0
    %v2137 = vand.u32 %v1174, 4294901760
    %v2138 = vsub.f32 %v1174, %v2137
    %2139 = vmatmul.mubr.f32.gmra.mxu0 %v2138
    %v2140 = vpop.f32.mrf.mxu0
    %v2141 = vadd.f32 %v2040, %v2140
    %v2142 = vpop.f32.mrf.mxu0
    %2143 = vdwg.mxu0
    %2144 = vmatprep.subr.mxu0 0.0
    %2145 = vmatpush1.xpose.msra.mxu0 0.0
    %2146 = vmatprep.subr.mxu0 0.0
    %2147 = vmatpush1.xpose.msra.mxu0 0.0
    %2148 = vmatprep.subr.mxu0 0.0
    %2149 = vmatpush1.xpose.msra.mxu0 0.0
    %2150 = vmatprep.subr.mxu0 0.0
    %2151 = vmatpush1.xpose.msra.mxu0 0.0
    %2152 = vmatprep.subr.mxu0 0.0
    %2153 = vmatpush1.xpose.msra.mxu0 0.0
    %2154 = vmatprep.subr.mxu0 0.0
    %2155 = vmatpush1.xpose.msra.mxu0 0.0
    %2156 = vmatprep.subr.mxu0 0.0
    %2157 = vmatpush1.xpose.msra.mxu0 0.0
    %2158 = vmatprep.subr.mxu0 0.0
    %2159 = vmatpush1.xpose.msra.mxu0 0.0
    %2160 = vmatprep.subr.mxu0 0.0
    %2161 = vmatpush1.xpose.msra.mxu0 0.0
    %2162 = vmatprep.subr.mxu0 0.0
    %2163 = vmatpush1.xpose.msra.mxu0 0.0
    %2164 = vmatprep.subr.mxu0 0.0
    %2165 = vmatpush1.xpose.msra.mxu0 0.0
    %2166 = vmatprep.subr.mxu0 0.0
    %2167 = vmatpush1.xpose.msra.mxu0 0.0
    %2168 = vmatprep.subr.mxu0 0.0
    %v2169 = vand.u32 %v1823, 4294901760
    %2170 = vmatpush1.xpose.msra.mxu0 %v2169
    %2171 = vmatprep.subr.mxu0 0.0
    %v2172 = vand.u32 %v1820, 4294901760
    %2173 = vmatpush1.xpose.msra.mxu0 %v2172
    %2174 = vmatprep.subr.mxu0 0.0
    %v2175 = vand.u32 %v1817, 4294901760
    %2176 = vmatpush1.xpose.msra.mxu0 %v2175
    %2177 = vmatprep.subr.mxu0 0.0
    %v2178 = vand.u32 %v1814, 4294901760
    %2179 = vmatpush1.xpose.msra.mxu0 %v2178
    %2180 = vmatprep.subr.mxu0 0.0
    %2181 = vmatpush2.xpose.msra.mxu0 0.0
    %2182 = vmatprep.subr.mxu0 0.0
    %2183 = vmatpush2.xpose.msra.mxu0 0.0
    %2184 = vmatprep.subr.mxu0 0.0
    %2185 = vmatpush2.xpose.msra.mxu0 0.0
    %2186 = vmatprep.subr.mxu0 0.0
    %2187 = vmatpush2.xpose.msra.mxu0 0.0
    %2188 = vmatprep.subr.mxu0 0.0
    %2189 = vmatpush2.xpose.msra.mxu0 0.0
    %2190 = vmatprep.subr.mxu0 0.0
    %2191 = vmatpush2.xpose.msra.mxu0 0.0
    %2192 = vmatprep.subr.mxu0 0.0
    %2193 = vmatpush2.xpose.msra.mxu0 0.0
    %2194 = vmatprep.subr.mxu0 0.0
    %2195 = vmatpush2.xpose.msra.mxu0 0.0
    %2196 = vmatprep.subr.mxu0 0.0
    %2197 = vmatpush2.xpose.msra.mxu0 0.0
    %2198 = vmatprep.subr.mxu0 0.0
    %2199 = vmatpush2.xpose.msra.mxu0 0.0
    %2200 = vmatprep.subr.mxu0 0.0
    %2201 = vmatpush2.xpose.msra.mxu0 0.0
    %2202 = vmatprep.subr.mxu0 0.0
    %2203 = vmatpush2.xpose.msra.mxu0 0.0
    %2204 = vmatprep.subr.mxu0 0.0
    %2205 = vmatpush2.xpose.msra.mxu0 0.0
    %2206 = vmatprep.subr.mxu0 0.0
    %2207 = vmatpush2.xpose.msra.mxu0 0.0
    %2208 = vmatprep.subr.mxu0 0.0
    %2209 = vmatpush2.xpose.msra.mxu0 0.0
    %2210 = vmatprep.subr.mxu0 0.0
    %2211 = vmatpush2.xpose.msra.mxu0 0.0
    %2212 = vmatprep.mubr.f32.mxu0 0.0
    %v2213 = vand.u32 %v1165, 4294901760
    %v2214 = vsub.f32 %v1165, %v2213
    %v2215 = vand.u32 %v2214, 4294901760
    %2216 = vmatmul.mubr.f32.gmra.mxu0 %v2215
    %v2217 = vpop.f32.mrf.mxu0
    %v2218 = vadd.f32 %v2120, %v2217
    %v2219 = vpop.f32.mrf.mxu0
    %2220 = vmatprep.mubr.f32.mxu0 0.0
    %v2221 = vand.u32 %v1168, 4294901760
    %v2222 = vsub.f32 %v1168, %v2221
    %v2223 = vand.u32 %v2222, 4294901760
    %2224 = vmatmul.mubr.f32.gmra.mxu0 %v2223
    %v2225 = vpop.f32.mrf.mxu0
    %v2226 = vadd.f32 %v2127, %v2225
    %v2227 = vpop.f32.mrf.mxu0
    %2228 = vmatprep.mubr.f32.mxu0 0.0
    %v2229 = vand.u32 %v1171, 4294901760
    %v2230 = vsub.f32 %v1171, %v2229
    %v2231 = vand.u32 %v2230, 4294901760
    %2232 = vmatmul.mubr.f32.gmra.mxu0 %v2231
    %v2233 = vpop.f32.mrf.mxu0
    %v2234 = vadd.f32 %v2134, %v2233
    %v2235 = vpop.f32.mrf.mxu0
    %2236 = vmatprep.mubr.f32.mxu0 0.0
    %v2237 = vand.u32 %v1174, 4294901760
    %v2238 = vsub.f32 %v1174, %v2237
    %v2239 = vand.u32 %v2238, 4294901760
    %2240 = vmatmul.mubr.f32.gmra.mxu0 %v2239
    %v2241 = vpop.f32.mrf.mxu0
    %v2242 = vadd.f32 %v2141, %v2241
    %v2243 = vpop.f32.mrf.mxu0
    %2244 = vdwg.mxu0
    %2245 = vmatprep.subr.mxu0 0.0
    %2246 = vmatpush1.xpose.msra.mxu0 0.0
    %2247 = vmatprep.subr.mxu0 0.0
    %2248 = vmatpush1.xpose.msra.mxu0 0.0
    %2249 = vmatprep.subr.mxu0 0.0
    %2250 = vmatpush1.xpose.msra.mxu0 0.0
    %2251 = vmatprep.subr.mxu0 0.0
    %2252 = vmatpush1.xpose.msra.mxu0 0.0
    %2253 = vmatprep.subr.mxu0 0.0
    %2254 = vmatpush1.xpose.msra.mxu0 0.0
    %2255 = vmatprep.subr.mxu0 0.0
    %2256 = vmatpush1.xpose.msra.mxu0 0.0
    %2257 = vmatprep.subr.mxu0 0.0
    %2258 = vmatpush1.xpose.msra.mxu0 0.0
    %2259 = vmatprep.subr.mxu0 0.0
    %2260 = vmatpush1.xpose.msra.mxu0 0.0
    %2261 = vmatprep.subr.mxu0 0.0
    %2262 = vmatpush1.xpose.msra.mxu0 0.0
    %2263 = vmatprep.subr.mxu0 0.0
    %2264 = vmatpush1.xpose.msra.mxu0 0.0
    %2265 = vmatprep.subr.mxu0 0.0
    %2266 = vmatpush1.xpose.msra.mxu0 0.0
    %2267 = vmatprep.subr.mxu0 0.0
    %2268 = vmatpush1.xpose.msra.mxu0 0.0
    %2269 = vmatprep.subr.mxu0 0.0
    %v2270 = vand.u32 %v1823, 4294901760
    %v2271 = vsub.f32 %v1823, %v2270
    %v2272 = vand.u32 %v2271, 4294901760
    %2273 = vmatpush1.xpose.msra.mxu0 %v2272
    %2274 = vmatprep.subr.mxu0 0.0
    %v2275 = vand.u32 %v1820, 4294901760
    %v2276 = vsub.f32 %v1820, %v2275
    %v2277 = vand.u32 %v2276, 4294901760
    %2278 = vmatpush1.xpose.msra.mxu0 %v2277
    %2279 = vmatprep.subr.mxu0 0.0
    %v2280 = vand.u32 %v1817, 4294901760
    %v2281 = vsub.f32 %v1817, %v2280
    %v2282 = vand.u32 %v2281, 4294901760
    %2283 = vmatpush1.xpose.msra.mxu0 %v2282
    %2284 = vmatprep.subr.mxu0 0.0
    %v2285 = vand.u32 %v1814, 4294901760
    %v2286 = vsub.f32 %v1814, %v2285
    %v2287 = vand.u32 %v2286, 4294901760
    %2288 = vmatpush1.xpose.msra.mxu0 %v2287
    %2289 = vmatprep.subr.mxu0 0.0
    %2290 = vmatpush2.xpose.msra.mxu0 0.0
    %2291 = vmatprep.subr.mxu0 0.0
    %2292 = vmatpush2.xpose.msra.mxu0 0.0
    %2293 = vmatprep.subr.mxu0 0.0
    %2294 = vmatpush2.xpose.msra.mxu0 0.0
    %2295 = vmatprep.subr.mxu0 0.0
    %2296 = vmatpush2.xpose.msra.mxu0 0.0
    %2297 = vmatprep.subr.mxu0 0.0
    %2298 = vmatpush2.xpose.msra.mxu0 0.0
    %2299 = vmatprep.subr.mxu0 0.0
    %2300 = vmatpush2.xpose.msra.mxu0 0.0
    %2301 = vmatprep.subr.mxu0 0.0
    %2302 = vmatpush2.xpose.msra.mxu0 0.0
    %2303 = vmatprep.subr.mxu0 0.0
    %2304 = vmatpush2.xpose.msra.mxu0 0.0
    %2305 = vmatprep.subr.mxu0 0.0
    %2306 = vmatpush2.xpose.msra.mxu0 0.0
    %2307 = vmatprep.subr.mxu0 0.0
    %2308 = vmatpush2.xpose.msra.mxu0 0.0
    %2309 = vmatprep.subr.mxu0 0.0
    %2310 = vmatpush2.xpose.msra.mxu0 0.0
    %2311 = vmatprep.subr.mxu0 0.0
    %2312 = vmatpush2.xpose.msra.mxu0 0.0
    %2313 = vmatprep.subr.mxu0 0.0
    %2314 = vmatpush2.xpose.msra.mxu0 0.0
    %2315 = vmatprep.subr.mxu0 0.0
    %2316 = vmatpush2.xpose.msra.mxu0 0.0
    %2317 = vmatprep.subr.mxu0 0.0
    %2318 = vmatpush2.xpose.msra.mxu0 0.0
    %2319 = vmatprep.subr.mxu0 0.0
    %2320 = vmatpush2.xpose.msra.mxu0 0.0
    %2321 = vmatprep.mubr.f32.mxu0 0.0
    %v2322 = vand.u32 %v1165, 4294901760
    %2323 = vmatmul.mubr.f32.gmra.mxu0 %v2322
    %v2324 = vpop.f32.mrf.mxu0
    %v2325 = vadd.f32 %v2218, %v2324
    %v2326 = vpop.f32.mrf.mxu0
    %2327 = vmatprep.mubr.f32.mxu0 0.0
    %v2328 = vand.u32 %v1168, 4294901760
    %2329 = vmatmul.mubr.f32.gmra.mxu0 %v2328
    %v2330 = vpop.f32.mrf.mxu0
    %v2331 = vadd.f32 %v2226, %v2330
    %v2332 = vpop.f32.mrf.mxu0
    %2333 = vmatprep.mubr.f32.mxu0 0.0
    %v2334 = vand.u32 %v1171, 4294901760
    %2335 = vmatmul.mubr.f32.gmra.mxu0 %v2334
    %v2336 = vpop.f32.mrf.mxu0
    %v2337 = vadd.f32 %v2234, %v2336
    %v2338 = vpop.f32.mrf.mxu0
    %2339 = vmatprep.mubr.f32.mxu0 0.0
    %v2340 = vand.u32 %v1174, 4294901760
    %2341 = vmatmul.mubr.f32.gmra.mxu0 %v2340
    %v2342 = vpop.f32.mrf.mxu0
    %v2343 = vadd.f32 %v2242, %v2342
    %v2344 = vpop.f32.mrf.mxu0
    %2345 = vdwg.mxu0
    %2346 = vmatprep.subr.mxu0 0.0
    %2347 = vmatpush1.xpose.msra.mxu0 0.0
    %2348 = vmatprep.subr.mxu0 0.0
    %2349 = vmatpush1.xpose.msra.mxu0 0.0
    %2350 = vmatprep.subr.mxu0 0.0
    %2351 = vmatpush1.xpose.msra.mxu0 0.0
    %2352 = vmatprep.subr.mxu0 0.0
    %2353 = vmatpush1.xpose.msra.mxu0 0.0
    %2354 = vmatprep.subr.mxu0 0.0
    %2355 = vmatpush1.xpose.msra.mxu0 0.0
    %2356 = vmatprep.subr.mxu0 0.0
    %2357 = vmatpush1.xpose.msra.mxu0 0.0
    %2358 = vmatprep.subr.mxu0 0.0
    %2359 = vmatpush1.xpose.msra.mxu0 0.0
    %2360 = vmatprep.subr.mxu0 0.0
    %2361 = vmatpush1.xpose.msra.mxu0 0.0
    %2362 = vmatprep.subr.mxu0 0.0
    %2363 = vmatpush1.xpose.msra.mxu0 0.0
    %2364 = vmatprep.subr.mxu0 0.0
    %2365 = vmatpush1.xpose.msra.mxu0 0.0
    %2366 = vmatprep.subr.mxu0 0.0
    %2367 = vmatpush1.xpose.msra.mxu0 0.0
    %2368 = vmatprep.subr.mxu0 0.0
    %2369 = vmatpush1.xpose.msra.mxu0 0.0
    %2370 = vmatprep.subr.mxu0 0.0
    %v2371 = vand.u32 %v1823, 4294901760
    %2372 = vmatpush1.xpose.msra.mxu0 %v2371
    %2373 = vmatprep.subr.mxu0 0.0
    %v2374 = vand.u32 %v1820, 4294901760
    %2375 = vmatpush1.xpose.msra.mxu0 %v2374
    %2376 = vmatprep.subr.mxu0 0.0
    %v2377 = vand.u32 %v1817, 4294901760
    %2378 = vmatpush1.xpose.msra.mxu0 %v2377
    %2379 = vmatprep.subr.mxu0 0.0
    %v2380 = vand.u32 %v1814, 4294901760
    %2381 = vmatpush1.xpose.msra.mxu0 %v2380
    %2382 = vmatprep.subr.mxu0 0.0
    %2383 = vmatpush2.xpose.msra.mxu0 0.0
    %2384 = vmatprep.subr.mxu0 0.0
    %2385 = vmatpush2.xpose.msra.mxu0 0.0
    %2386 = vmatprep.subr.mxu0 0.0
    %2387 = vmatpush2.xpose.msra.mxu0 0.0
    %2388 = vmatprep.subr.mxu0 0.0
    %2389 = vmatpush2.xpose.msra.mxu0 0.0
    %2390 = vmatprep.subr.mxu0 0.0
    %2391 = vmatpush2.xpose.msra.mxu0 0.0
    %2392 = vmatprep.subr.mxu0 0.0
    %2393 = vmatpush2.xpose.msra.mxu0 0.0
    %2394 = vmatprep.subr.mxu0 0.0
    %2395 = vmatpush2.xpose.msra.mxu0 0.0
    %2396 = vmatprep.subr.mxu0 0.0
    %2397 = vmatpush2.xpose.msra.mxu0 0.0
    %2398 = vmatprep.subr.mxu0 0.0
    %2399 = vmatpush2.xpose.msra.mxu0 0.0
    %2400 = vmatprep.subr.mxu0 0.0
    %2401 = vmatpush2.xpose.msra.mxu0 0.0
    %2402 = vmatprep.subr.mxu0 0.0
    %2403 = vmatpush2.xpose.msra.mxu0 0.0
    %2404 = vmatprep.subr.mxu0 0.0
    %2405 = vmatpush2.xpose.msra.mxu0 0.0
    %2406 = vmatprep.subr.mxu0 0.0
    %2407 = vmatpush2.xpose.msra.mxu0 0.0
    %2408 = vmatprep.subr.mxu0 0.0
    %2409 = vmatpush2.xpose.msra.mxu0 0.0
    %2410 = vmatprep.subr.mxu0 0.0
    %2411 = vmatpush2.xpose.msra.mxu0 0.0
    %2412 = vmatprep.subr.mxu0 0.0
    %2413 = vmatpush2.xpose.msra.mxu0 0.0
    %2414 = vmatprep.mubr.f32.mxu0 0.0
    %v2415 = vand.u32 %v1165, 4294901760
    %2416 = vmatmul.mubr.f32.gmra.mxu0 %v2415
    %v2417 = vpop.f32.mrf.mxu0
    %v2418 = vadd.f32 %v2325, %v2417
    %v2419 = vpop.f32.mrf.mxu0
    %2420 = vmatprep.mubr.f32.mxu0 0.0
    %v2421 = vand.u32 %v1168, 4294901760
    %2422 = vmatmul.mubr.f32.gmra.mxu0 %v2421
    %v2423 = vpop.f32.mrf.mxu0
    %v2424 = vadd.f32 %v2331, %v2423
    %v2425 = vpop.f32.mrf.mxu0
    %2426 = vmatprep.mubr.f32.mxu0 0.0
    %v2427 = vand.u32 %v1171, 4294901760
    %2428 = vmatmul.mubr.f32.gmra.mxu0 %v2427
    %v2429 = vpop.f32.mrf.mxu0
    %v2430 = vadd.f32 %v2337, %v2429
    %v2431 = vpop.f32.mrf.mxu0
    %2432 = vmatprep.mubr.f32.mxu0 0.0
    %v2433 = vand.u32 %v1174, 4294901760
    %2434 = vmatmul.mubr.f32.gmra.mxu0 %v2433
    %v2435 = vpop.f32.mrf.mxu0
    %v2436 = vadd.f32 %v2343, %v2435
    %v2437 = vpop.f32.mrf.mxu0
    %2438 = vdwg.mxu0
    %v2439 = vld [vmem:[%s5] sm:$0xff]
    %v2440 = vld [vmem:[%s5 + $0x8] sm:$0xff]
    %v2441 = vld [vmem:[%s5 + $0x10] sm:$0xff]
    %v2442 = vld [vmem:[%s5 + $0x18] sm:$0xff]
    %v2443 = vld [vmem:[%s6] sm:$0x1]
    %v2445 = vlaneseq
    %v2446 = vshrl.u32 %v2445, 7
    %v2447 = vsub.s32 0, %v2446
    %v2448 = vrot.slane %v2443, %v2447
    %v2451 = vsel %vm1163, %v2439, 0
    %v2454 = vsel %vm1163, %v2440, 0
    %v2457 = vsel %vm1163, %v2441, 0
    %v2460 = vsel %vm1163, %v2442, 0
    %2462 = vmatprep.subr.mxu0 0.0
    %2463 = vmatpush1.xpose.msra.mxu0 0.0
    %2464 = vmatprep.subr.mxu0 0.0
    %2465 = vmatpush1.xpose.msra.mxu0 0.0
    %2466 = vmatprep.subr.mxu0 0.0
    %2467 = vmatpush1.xpose.msra.mxu0 0.0
    %2468 = vmatprep.subr.mxu0 0.0
    %2469 = vmatpush1.xpose.msra.mxu0 0.0
    %2470 = vmatprep.subr.mxu0 0.0
    %2471 = vmatpush1.xpose.msra.mxu0 0.0
    %2472 = vmatprep.subr.mxu0 0.0
    %2473 = vmatpush1.xpose.msra.mxu0 0.0
    %2474 = vmatprep.subr.mxu0 0.0
    %2475 = vmatpush1.xpose.msra.mxu0 0.0
    %2476 = vmatprep.subr.mxu0 0.0
    %2477 = vmatpush1.xpose.msra.mxu0 0.0
    %2478 = vmatprep.subr.mxu0 0.0
    %2479 = vmatpush1.xpose.msra.mxu0 0.0
    %2480 = vmatprep.subr.mxu0 0.0
    %2481 = vmatpush1.xpose.msra.mxu0 0.0
    %2482 = vmatprep.subr.mxu0 0.0
    %2483 = vmatpush1.xpose.msra.mxu0 0.0
    %2484 = vmatprep.subr.mxu0 0.0
    %2485 = vmatpush1.xpose.msra.mxu0 0.0
    %2486 = vmatprep.subr.mxu0 0.0
    %v2487 = vand.u32 %v2460, 4294901760
    %2488 = vmatpush1.xpose.msra.mxu0 %v2487
    %2489 = vmatprep.subr.mxu0 0.0
    %v2490 = vand.u32 %v2457, 4294901760
    %2491 = vmatpush1.xpose.msra.mxu0 %v2490
    %2492 = vmatprep.subr.mxu0 0.0
    %v2493 = vand.u32 %v2454, 4294901760
    %2494 = vmatpush1.xpose.msra.mxu0 %v2493
    %2495 = vmatprep.subr.mxu0 0.0
    %v2496 = vand.u32 %v2451, 4294901760
    %2497 = vmatpush1.xpose.msra.mxu0 %v2496
    %2498 = vmatprep.subr.mxu0 0.0
    %2499 = vmatpush2.xpose.msra.mxu0 0.0
    %2500 = vmatprep.subr.mxu0 0.0
    %2501 = vmatpush2.xpose.msra.mxu0 0.0
    %2502 = vmatprep.subr.mxu0 0.0
    %2503 = vmatpush2.xpose.msra.mxu0 0.0
    %2504 = vmatprep.subr.mxu0 0.0
    %2505 = vmatpush2.xpose.msra.mxu0 0.0
    %2506 = vmatprep.subr.mxu0 0.0
    %2507 = vmatpush2.xpose.msra.mxu0 0.0
    %2508 = vmatprep.subr.mxu0 0.0
    %2509 = vmatpush2.xpose.msra.mxu0 0.0
    %2510 = vmatprep.subr.mxu0 0.0
    %2511 = vmatpush2.xpose.msra.mxu0 0.0
    %2512 = vmatprep.subr.mxu0 0.0
    %2513 = vmatpush2.xpose.msra.mxu0 0.0
    %2514 = vmatprep.subr.mxu0 0.0
    %2515 = vmatpush2.xpose.msra.mxu0 0.0
    %2516 = vmatprep.subr.mxu0 0.0
    %2517 = vmatpush2.xpose.msra.mxu0 0.0
    %2518 = vmatprep.subr.mxu0 0.0
    %2519 = vmatpush2.xpose.msra.mxu0 0.0
    %2520 = vmatprep.subr.mxu0 0.0
    %2521 = vmatpush2.xpose.msra.mxu0 0.0
    %2522 = vmatprep.subr.mxu0 0.0
    %2523 = vmatpush2.xpose.msra.mxu0 0.0
    %2524 = vmatprep.subr.mxu0 0.0
    %2525 = vmatpush2.xpose.msra.mxu0 0.0
    %2526 = vmatprep.subr.mxu0 0.0
    %2527 = vmatpush2.xpose.msra.mxu0 0.0
    %2528 = vmatprep.subr.mxu0 0.0
    %2529 = vmatpush2.xpose.msra.mxu0 0.0
    %2530 = vmatprep.mubr.f32.mxu0 0.0
    %v2531 = vand.u32 %v1165, 4294901760
    %v2532 = vsub.f32 %v1165, %v2531
    %v2533 = vand.u32 %v2532, 4294901760
    %v2534 = vsub.f32 %v2532, %v2533
    %v2535 = vand.u32 %v2534, 4294901760
    %2536 = vmatmul.mubr.f32.gmra.mxu0 %v2535
    %v2537 = vpop.f32.mrf.mxu0
    %v2538 = vadd.f32 %v2448, %v2537
    %v2539 = vpop.f32.mrf.mxu0
    %2540 = vmatprep.mubr.f32.mxu0 0.0
    %v2541 = vand.u32 %v1168, 4294901760
    %v2542 = vsub.f32 %v1168, %v2541
    %v2543 = vand.u32 %v2542, 4294901760
    %v2544 = vsub.f32 %v2542, %v2543
    %v2545 = vand.u32 %v2544, 4294901760
    %2546 = vmatmul.mubr.f32.gmra.mxu0 %v2545
    %v2547 = vpop.f32.mrf.mxu0
    %v2548 = vadd.f32 %v2448, %v2547
    %v2549 = vpop.f32.mrf.mxu0
    %2550 = vmatprep.mubr.f32.mxu0 0.0
    %v2551 = vand.u32 %v1171, 4294901760
    %v2552 = vsub.f32 %v1171, %v2551
    %v2553 = vand.u32 %v2552, 4294901760
    %v2554 = vsub.f32 %v2552, %v2553
    %v2555 = vand.u32 %v2554, 4294901760
    %2556 = vmatmul.mubr.f32.gmra.mxu0 %v2555
    %v2557 = vpop.f32.mrf.mxu0
    %v2558 = vadd.f32 %v2448, %v2557
    %v2559 = vpop.f32.mrf.mxu0
    %2560 = vmatprep.mubr.f32.mxu0 0.0
    %v2561 = vand.u32 %v1174, 4294901760
    %v2562 = vsub.f32 %v1174, %v2561
    %v2563 = vand.u32 %v2562, 4294901760
    %v2564 = vsub.f32 %v2562, %v2563
    %v2565 = vand.u32 %v2564, 4294901760
    %2566 = vmatmul.mubr.f32.gmra.mxu0 %v2565
    %v2567 = vpop.f32.mrf.mxu0
    %v2568 = vadd.f32 %v2448, %v2567
    %v2569 = vpop.f32.mrf.mxu0
    %2570 = vdwg.mxu0
    %2571 = vmatprep.subr.mxu0 0.0
    %2572 = vmatpush1.xpose.msra.mxu0 0.0
    %2573 = vmatprep.subr.mxu0 0.0
    %2574 = vmatpush1.xpose.msra.mxu0 0.0
    %2575 = vmatprep.subr.mxu0 0.0
    %2576 = vmatpush1.xpose.msra.mxu0 0.0
    %2577 = vmatprep.subr.mxu0 0.0
    %2578 = vmatpush1.xpose.msra.mxu0 0.0
    %2579 = vmatprep.subr.mxu0 0.0
    %2580 = vmatpush1.xpose.msra.mxu0 0.0
    %2581 = vmatprep.subr.mxu0 0.0
    %2582 = vmatpush1.xpose.msra.mxu0 0.0
    %2583 = vmatprep.subr.mxu0 0.0
    %2584 = vmatpush1.xpose.msra.mxu0 0.0
    %2585 = vmatprep.subr.mxu0 0.0
    %2586 = vmatpush1.xpose.msra.mxu0 0.0
    %2587 = vmatprep.subr.mxu0 0.0
    %2588 = vmatpush1.xpose.msra.mxu0 0.0
    %2589 = vmatprep.subr.mxu0 0.0
    %2590 = vmatpush1.xpose.msra.mxu0 0.0
    %2591 = vmatprep.subr.mxu0 0.0
    %2592 = vmatpush1.xpose.msra.mxu0 0.0
    %2593 = vmatprep.subr.mxu0 0.0
    %2594 = vmatpush1.xpose.msra.mxu0 0.0
    %2595 = vmatprep.subr.mxu0 0.0
    %v2596 = vand.u32 %v2460, 4294901760
    %v2597 = vsub.f32 %v2460, %v2596
    %v2598 = vand.u32 %v2597, 4294901760
    %v2599 = vsub.f32 %v2597, %v2598
    %v2600 = vand.u32 %v2599, 4294901760
    %2601 = vmatpush1.xpose.msra.mxu0 %v2600
    %2602 = vmatprep.subr.mxu0 0.0
    %v2603 = vand.u32 %v2457, 4294901760
    %v2604 = vsub.f32 %v2457, %v2603
    %v2605 = vand.u32 %v2604, 4294901760
    %v2606 = vsub.f32 %v2604, %v2605
    %v2607 = vand.u32 %v2606, 4294901760
    %2608 = vmatpush1.xpose.msra.mxu0 %v2607
    %2609 = vmatprep.subr.mxu0 0.0
    %v2610 = vand.u32 %v2454, 4294901760
    %v2611 = vsub.f32 %v2454, %v2610
    %v2612 = vand.u32 %v2611, 4294901760
    %v2613 = vsub.f32 %v2611, %v2612
    %v2614 = vand.u32 %v2613, 4294901760
    %2615 = vmatpush1.xpose.msra.mxu0 %v2614
    %2616 = vmatprep.subr.mxu0 0.0
    %v2617 = vand.u32 %v2451, 4294901760
    %v2618 = vsub.f32 %v2451, %v2617
    %v2619 = vand.u32 %v2618, 4294901760
    %v2620 = vsub.f32 %v2618, %v2619
    %v2621 = vand.u32 %v2620, 4294901760
    %2622 = vmatpush1.xpose.msra.mxu0 %v2621
    %2623 = vmatprep.subr.mxu0 0.0
    %2624 = vmatpush2.xpose.msra.mxu0 0.0
    %2625 = vmatprep.subr.mxu0 0.0
    %2626 = vmatpush2.xpose.msra.mxu0 0.0
    %2627 = vmatprep.subr.mxu0 0.0
    %2628 = vmatpush2.xpose.msra.mxu0 0.0
    %2629 = vmatprep.subr.mxu0 0.0
    %2630 = vmatpush2.xpose.msra.mxu0 0.0
    %2631 = vmatprep.subr.mxu0 0.0
    %2632 = vmatpush2.xpose.msra.mxu0 0.0
    %2633 = vmatprep.subr.mxu0 0.0
    %2634 = vmatpush2.xpose.msra.mxu0 0.0
    %2635 = vmatprep.subr.mxu0 0.0
    %2636 = vmatpush2.xpose.msra.mxu0 0.0
    %2637 = vmatprep.subr.mxu0 0.0
    %2638 = vmatpush2.xpose.msra.mxu0 0.0
    %2639 = vmatprep.subr.mxu0 0.0
    %2640 = vmatpush2.xpose.msra.mxu0 0.0
    %2641 = vmatprep.subr.mxu0 0.0
    %2642 = vmatpush2.xpose.msra.mxu0 0.0
    %2643 = vmatprep.subr.mxu0 0.0
    %2644 = vmatpush2.xpose.msra.mxu0 0.0
    %2645 = vmatprep.subr.mxu0 0.0
    %2646 = vmatpush2.xpose.msra.mxu0 0.0
    %2647 = vmatprep.subr.mxu0 0.0
    %2648 = vmatpush2.xpose.msra.mxu0 0.0
    %2649 = vmatprep.subr.mxu0 0.0
    %2650 = vmatpush2.xpose.msra.mxu0 0.0
    %2651 = vmatprep.subr.mxu0 0.0
    %2652 = vmatpush2.xpose.msra.mxu0 0.0
    %2653 = vmatprep.subr.mxu0 0.0
    %2654 = vmatpush2.xpose.msra.mxu0 0.0
    %2655 = vmatprep.mubr.f32.mxu0 0.0
    %v2656 = vand.u32 %v1165, 4294901760
    %2657 = vmatmul.mubr.f32.gmra.mxu0 %v2656
    %v2658 = vpop.f32.mrf.mxu0
    %v2659 = vadd.f32 %v2538, %v2658
    %v2660 = vpop.f32.mrf.mxu0
    %2661 = vmatprep.mubr.f32.mxu0 0.0
    %v2662 = vand.u32 %v1168, 4294901760
    %2663 = vmatmul.mubr.f32.gmra.mxu0 %v2662
    %v2664 = vpop.f32.mrf.mxu0
    %v2665 = vadd.f32 %v2548, %v2664
    %v2666 = vpop.f32.mrf.mxu0
    %2667 = vmatprep.mubr.f32.mxu0 0.0
    %v2668 = vand.u32 %v1171, 4294901760
    %2669 = vmatmul.mubr.f32.gmra.mxu0 %v2668
    %v2670 = vpop.f32.mrf.mxu0
    %v2671 = vadd.f32 %v2558, %v2670
    %v2672 = vpop.f32.mrf.mxu0
    %2673 = vmatprep.mubr.f32.mxu0 0.0
    %v2674 = vand.u32 %v1174, 4294901760
    %2675 = vmatmul.mubr.f32.gmra.mxu0 %v2674
    %v2676 = vpop.f32.mrf.mxu0
    %v2677 = vadd.f32 %v2568, %v2676
    %v2678 = vpop.f32.mrf.mxu0
    %2679 = vdwg.mxu0
    %2680 = vmatprep.subr.mxu0 0.0
    %2681 = vmatpush1.xpose.msra.mxu0 0.0
    %2682 = vmatprep.subr.mxu0 0.0
    %2683 = vmatpush1.xpose.msra.mxu0 0.0
    %2684 = vmatprep.subr.mxu0 0.0
    %2685 = vmatpush1.xpose.msra.mxu0 0.0
    %2686 = vmatprep.subr.mxu0 0.0
    %2687 = vmatpush1.xpose.msra.mxu0 0.0
    %2688 = vmatprep.subr.mxu0 0.0
    %2689 = vmatpush1.xpose.msra.mxu0 0.0
    %2690 = vmatprep.subr.mxu0 0.0
    %2691 = vmatpush1.xpose.msra.mxu0 0.0
    %2692 = vmatprep.subr.mxu0 0.0
    %2693 = vmatpush1.xpose.msra.mxu0 0.0
    %2694 = vmatprep.subr.mxu0 0.0
    %2695 = vmatpush1.xpose.msra.mxu0 0.0
    %2696 = vmatprep.subr.mxu0 0.0
    %2697 = vmatpush1.xpose.msra.mxu0 0.0
    %2698 = vmatprep.subr.mxu0 0.0
    %2699 = vmatpush1.xpose.msra.mxu0 0.0
    %2700 = vmatprep.subr.mxu0 0.0
    %2701 = vmatpush1.xpose.msra.mxu0 0.0
    %2702 = vmatprep.subr.mxu0 0.0
    %2703 = vmatpush1.xpose.msra.mxu0 0.0
    %2704 = vmatprep.subr.mxu0 0.0
    %v2705 = vand.u32 %v2460, 4294901760
    %v2706 = vsub.f32 %v2460, %v2705
    %2707 = vmatpush1.xpose.msra.mxu0 %v2706
    %2708 = vmatprep.subr.mxu0 0.0
    %v2709 = vand.u32 %v2457, 4294901760
    %v2710 = vsub.f32 %v2457, %v2709
    %2711 = vmatpush1.xpose.msra.mxu0 %v2710
    %2712 = vmatprep.subr.mxu0 0.0
    %v2713 = vand.u32 %v2454, 4294901760
    %v2714 = vsub.f32 %v2454, %v2713
    %2715 = vmatpush1.xpose.msra.mxu0 %v2714
    %2716 = vmatprep.subr.mxu0 0.0
    %v2717 = vand.u32 %v2451, 4294901760
    %v2718 = vsub.f32 %v2451, %v2717
    %2719 = vmatpush1.xpose.msra.mxu0 %v2718
    %2720 = vmatprep.subr.mxu0 0.0
    %2721 = vmatpush2.xpose.msra.mxu0 0.0
    %2722 = vmatprep.subr.mxu0 0.0
    %2723 = vmatpush2.xpose.msra.mxu0 0.0
    %2724 = vmatprep.subr.mxu0 0.0
    %2725 = vmatpush2.xpose.msra.mxu0 0.0
    %2726 = vmatprep.subr.mxu0 0.0
    %2727 = vmatpush2.xpose.msra.mxu0 0.0
    %2728 = vmatprep.subr.mxu0 0.0
    %2729 = vmatpush2.xpose.msra.mxu0 0.0
    %2730 = vmatprep.subr.mxu0 0.0
    %2731 = vmatpush2.xpose.msra.mxu0 0.0
    %2732 = vmatprep.subr.mxu0 0.0
    %2733 = vmatpush2.xpose.msra.mxu0 0.0
    %2734 = vmatprep.subr.mxu0 0.0
    %2735 = vmatpush2.xpose.msra.mxu0 0.0
    %2736 = vmatprep.subr.mxu0 0.0
    %2737 = vmatpush2.xpose.msra.mxu0 0.0
    %2738 = vmatprep.subr.mxu0 0.0
    %2739 = vmatpush2.xpose.msra.mxu0 0.0
    %2740 = vmatprep.subr.mxu0 0.0
    %2741 = vmatpush2.xpose.msra.mxu0 0.0
    %2742 = vmatprep.subr.mxu0 0.0
    %2743 = vmatpush2.xpose.msra.mxu0 0.0
    %2744 = vmatprep.subr.mxu0 0.0
    %2745 = vmatpush2.xpose.msra.mxu0 0.0
    %2746 = vmatprep.subr.mxu0 0.0
    %2747 = vmatpush2.xpose.msra.mxu0 0.0
    %2748 = vmatprep.subr.mxu0 0.0
    %2749 = vmatpush2.xpose.msra.mxu0 0.0
    %2750 = vmatprep.subr.mxu0 0.0
    %2751 = vmatpush2.xpose.msra.mxu0 0.0
    %2752 = vmatprep.mubr.f32.mxu0 0.0
    %v2753 = vand.u32 %v1165, 4294901760
    %v2754 = vsub.f32 %v1165, %v2753
    %2755 = vmatmul.mubr.f32.gmra.mxu0 %v2754
    %v2756 = vpop.f32.mrf.mxu0
    %v2757 = vadd.f32 %v2659, %v2756
    %v2758 = vpop.f32.mrf.mxu0
    %2759 = vmatprep.mubr.f32.mxu0 0.0
    %v2760 = vand.u32 %v1168, 4294901760
    %v2761 = vsub.f32 %v1168, %v2760
    %2762 = vmatmul.mubr.f32.gmra.mxu0 %v2761
    %v2763 = vpop.f32.mrf.mxu0
    %v2764 = vadd.f32 %v2665, %v2763
    %v2765 = vpop.f32.mrf.mxu0
    %2766 = vmatprep.mubr.f32.mxu0 0.0
    %v2767 = vand.u32 %v1171, 4294901760
    %v2768 = vsub.f32 %v1171, %v2767
    %2769 = vmatmul.mubr.f32.gmra.mxu0 %v2768
    %v2770 = vpop.f32.mrf.mxu0
    %v2771 = vadd.f32 %v2671, %v2770
    %v2772 = vpop.f32.mrf.mxu0
    %2773 = vmatprep.mubr.f32.mxu0 0.0
    %v2774 = vand.u32 %v1174, 4294901760
    %v2775 = vsub.f32 %v1174, %v2774
    %2776 = vmatmul.mubr.f32.gmra.mxu0 %v2775
    %v2777 = vpop.f32.mrf.mxu0
    %v2778 = vadd.f32 %v2677, %v2777
    %v2779 = vpop.f32.mrf.mxu0
    %2780 = vdwg.mxu0
    %2781 = vmatprep.subr.mxu0 0.0
    %2782 = vmatpush1.xpose.msra.mxu0 0.0
    %2783 = vmatprep.subr.mxu0 0.0
    %2784 = vmatpush1.xpose.msra.mxu0 0.0
    %2785 = vmatprep.subr.mxu0 0.0
    %2786 = vmatpush1.xpose.msra.mxu0 0.0
    %2787 = vmatprep.subr.mxu0 0.0
    %2788 = vmatpush1.xpose.msra.mxu0 0.0
    %2789 = vmatprep.subr.mxu0 0.0
    %2790 = vmatpush1.xpose.msra.mxu0 0.0
    %2791 = vmatprep.subr.mxu0 0.0
    %2792 = vmatpush1.xpose.msra.mxu0 0.0
    %2793 = vmatprep.subr.mxu0 0.0
    %2794 = vmatpush1.xpose.msra.mxu0 0.0
    %2795 = vmatprep.subr.mxu0 0.0
    %2796 = vmatpush1.xpose.msra.mxu0 0.0
    %2797 = vmatprep.subr.mxu0 0.0
    %2798 = vmatpush1.xpose.msra.mxu0 0.0
    %2799 = vmatprep.subr.mxu0 0.0
    %2800 = vmatpush1.xpose.msra.mxu0 0.0
    %2801 = vmatprep.subr.mxu0 0.0
    %2802 = vmatpush1.xpose.msra.mxu0 0.0
    %2803 = vmatprep.subr.mxu0 0.0
    %2804 = vmatpush1.xpose.msra.mxu0 0.0
    %2805 = vmatprep.subr.mxu0 0.0
    %v2806 = vand.u32 %v2460, 4294901760
    %2807 = vmatpush1.xpose.msra.mxu0 %v2806
    %2808 = vmatprep.subr.mxu0 0.0
    %v2809 = vand.u32 %v2457, 4294901760
    %2810 = vmatpush1.xpose.msra.mxu0 %v2809
    %2811 = vmatprep.subr.mxu0 0.0
    %v2812 = vand.u32 %v2454, 4294901760
    %2813 = vmatpush1.xpose.msra.mxu0 %v2812
    %2814 = vmatprep.subr.mxu0 0.0
    %v2815 = vand.u32 %v2451, 4294901760
    %2816 = vmatpush1.xpose.msra.mxu0 %v2815
    %2817 = vmatprep.subr.mxu0 0.0
    %2818 = vmatpush2.xpose.msra.mxu0 0.0
    %2819 = vmatprep.subr.mxu0 0.0
    %2820 = vmatpush2.xpose.msra.mxu0 0.0
    %2821 = vmatprep.subr.mxu0 0.0
    %2822 = vmatpush2.xpose.msra.mxu0 0.0
    %2823 = vmatprep.subr.mxu0 0.0
    %2824 = vmatpush2.xpose.msra.mxu0 0.0
    %2825 = vmatprep.subr.mxu0 0.0
    %2826 = vmatpush2.xpose.msra.mxu0 0.0
    %2827 = vmatprep.subr.mxu0 0.0
    %2828 = vmatpush2.xpose.msra.mxu0 0.0
    %2829 = vmatprep.subr.mxu0 0.0
    %2830 = vmatpush2.xpose.msra.mxu0 0.0
    %2831 = vmatprep.subr.mxu0 0.0
    %2832 = vmatpush2.xpose.msra.mxu0 0.0
    %2833 = vmatprep.subr.mxu0 0.0
    %2834 = vmatpush2.xpose.msra.mxu0 0.0
    %2835 = vmatprep.subr.mxu0 0.0
    %2836 = vmatpush2.xpose.msra.mxu0 0.0
    %2837 = vmatprep.subr.mxu0 0.0
    %2838 = vmatpush2.xpose.msra.mxu0 0.0
    %2839 = vmatprep.subr.mxu0 0.0
    %2840 = vmatpush2.xpose.msra.mxu0 0.0
    %2841 = vmatprep.subr.mxu0 0.0
    %2842 = vmatpush2.xpose.msra.mxu0 0.0
    %2843 = vmatprep.subr.mxu0 0.0
    %2844 = vmatpush2.xpose.msra.mxu0 0.0
    %2845 = vmatprep.subr.mxu0 0.0
    %2846 = vmatpush2.xpose.msra.mxu0 0.0
    %2847 = vmatprep.subr.mxu0 0.0
    %2848 = vmatpush2.xpose.msra.mxu0 0.0
    %2849 = vmatprep.mubr.f32.mxu0 0.0
    %v2850 = vand.u32 %v1165, 4294901760
    %v2851 = vsub.f32 %v1165, %v2850
    %v2852 = vand.u32 %v2851, 4294901760
    %2853 = vmatmul.mubr.f32.gmra.mxu0 %v2852
    %v2854 = vpop.f32.mrf.mxu0
    %v2855 = vadd.f32 %v2757, %v2854
    %v2856 = vpop.f32.mrf.mxu0
    %2857 = vmatprep.mubr.f32.mxu0 0.0
    %v2858 = vand.u32 %v1168, 4294901760
    %v2859 = vsub.f32 %v1168, %v2858
    %v2860 = vand.u32 %v2859, 4294901760
    %2861 = vmatmul.mubr.f32.gmra.mxu0 %v2860
    %v2862 = vpop.f32.mrf.mxu0
    %v2863 = vadd.f32 %v2764, %v2862
    %v2864 = vpop.f32.mrf.mxu0
    %2865 = vmatprep.mubr.f32.mxu0 0.0
    %v2866 = vand.u32 %v1171, 4294901760
    %v2867 = vsub.f32 %v1171, %v2866
    %v2868 = vand.u32 %v2867, 4294901760
    %2869 = vmatmul.mubr.f32.gmra.mxu0 %v2868
    %v2870 = vpop.f32.mrf.mxu0
    %v2871 = vadd.f32 %v2771, %v2870
    %v2872 = vpop.f32.mrf.mxu0
    %2873 = vmatprep.mubr.f32.mxu0 0.0
    %v2874 = vand.u32 %v1174, 4294901760
    %v2875 = vsub.f32 %v1174, %v2874
    %v2876 = vand.u32 %v2875, 4294901760
    %2877 = vmatmul.mubr.f32.gmra.mxu0 %v2876
    %v2878 = vpop.f32.mrf.mxu0
    %v2879 = vadd.f32 %v2778, %v2878
    %v2880 = vpop.f32.mrf.mxu0
    %2881 = vdwg.mxu0
    %2882 = vmatprep.subr.mxu0 0.0
    %2883 = vmatpush1.xpose.msra.mxu0 0.0
    %2884 = vmatprep.subr.mxu0 0.0
    %2885 = vmatpush1.xpose.msra.mxu0 0.0
    %2886 = vmatprep.subr.mxu0 0.0
    %2887 = vmatpush1.xpose.msra.mxu0 0.0
    %2888 = vmatprep.subr.mxu0 0.0
    %2889 = vmatpush1.xpose.msra.mxu0 0.0
    %2890 = vmatprep.subr.mxu0 0.0
    %2891 = vmatpush1.xpose.msra.mxu0 0.0
    %2892 = vmatprep.subr.mxu0 0.0
    %2893 = vmatpush1.xpose.msra.mxu0 0.0
    %2894 = vmatprep.subr.mxu0 0.0
    %2895 = vmatpush1.xpose.msra.mxu0 0.0
    %2896 = vmatprep.subr.mxu0 0.0
    %2897 = vmatpush1.xpose.msra.mxu0 0.0
    %2898 = vmatprep.subr.mxu0 0.0
    %2899 = vmatpush1.xpose.msra.mxu0 0.0
    %2900 = vmatprep.subr.mxu0 0.0
    %2901 = vmatpush1.xpose.msra.mxu0 0.0
    %2902 = vmatprep.subr.mxu0 0.0
    %2903 = vmatpush1.xpose.msra.mxu0 0.0
    %2904 = vmatprep.subr.mxu0 0.0
    %2905 = vmatpush1.xpose.msra.mxu0 0.0
    %2906 = vmatprep.subr.mxu0 0.0
    %v2907 = vand.u32 %v2460, 4294901760
    %v2908 = vsub.f32 %v2460, %v2907
    %v2909 = vand.u32 %v2908, 4294901760
    %2910 = vmatpush1.xpose.msra.mxu0 %v2909
    %2911 = vmatprep.subr.mxu0 0.0
    %v2912 = vand.u32 %v2457, 4294901760
    %v2913 = vsub.f32 %v2457, %v2912
    %v2914 = vand.u32 %v2913, 4294901760
    %2915 = vmatpush1.xpose.msra.mxu0 %v2914
    %2916 = vmatprep.subr.mxu0 0.0
    %v2917 = vand.u32 %v2454, 4294901760
    %v2918 = vsub.f32 %v2454, %v2917
    %v2919 = vand.u32 %v2918, 4294901760
    %2920 = vmatpush1.xpose.msra.mxu0 %v2919
    %2921 = vmatprep.subr.mxu0 0.0
    %v2922 = vand.u32 %v2451, 4294901760
    %v2923 = vsub.f32 %v2451, %v2922
    %v2924 = vand.u32 %v2923, 4294901760
    %2925 = vmatpush1.xpose.msra.mxu0 %v2924
    %2926 = vmatprep.subr.mxu0 0.0
    %2927 = vmatpush2.xpose.msra.mxu0 0.0
    %2928 = vmatprep.subr.mxu0 0.0
    %2929 = vmatpush2.xpose.msra.mxu0 0.0
    %2930 = vmatprep.subr.mxu0 0.0
    %2931 = vmatpush2.xpose.msra.mxu0 0.0
    %2932 = vmatprep.subr.mxu0 0.0
    %2933 = vmatpush2.xpose.msra.mxu0 0.0
    %2934 = vmatprep.subr.mxu0 0.0
    %2935 = vmatpush2.xpose.msra.mxu0 0.0
    %2936 = vmatprep.subr.mxu0 0.0
    %2937 = vmatpush2.xpose.msra.mxu0 0.0
    %2938 = vmatprep.subr.mxu0 0.0
    %2939 = vmatpush2.xpose.msra.mxu0 0.0
    %2940 = vmatprep.subr.mxu0 0.0
    %2941 = vmatpush2.xpose.msra.mxu0 0.0
    %2942 = vmatprep.subr.mxu0 0.0
    %2943 = vmatpush2.xpose.msra.mxu0 0.0
    %2944 = vmatprep.subr.mxu0 0.0
    %2945 = vmatpush2.xpose.msra.mxu0 0.0
    %2946 = vmatprep.subr.mxu0 0.0
    %2947 = vmatpush2.xpose.msra.mxu0 0.0
    %2948 = vmatprep.subr.mxu0 0.0
    %2949 = vmatpush2.xpose.msra.mxu0 0.0
    %2950 = vmatprep.subr.mxu0 0.0
    %2951 = vmatpush2.xpose.msra.mxu0 0.0
    %2952 = vmatprep.subr.mxu0 0.0
    %2953 = vmatpush2.xpose.msra.mxu0 0.0
    %2954 = vmatprep.subr.mxu0 0.0
    %2955 = vmatpush2.xpose.msra.mxu0 0.0
    %2956 = vmatprep.subr.mxu0 0.0
    %2957 = vmatpush2.xpose.msra.mxu0 0.0
    %2958 = vmatprep.mubr.f32.mxu0 0.0
    %v2959 = vand.u32 %v1165, 4294901760
    %2960 = vmatmul.mubr.f32.gmra.mxu0 %v2959
    %v2961 = vpop.f32.mrf.mxu0
    %v2962 = vadd.f32 %v2855, %v2961
    %v2963 = vpop.f32.mrf.mxu0
    %2964 = vmatprep.mubr.f32.mxu0 0.0
    %v2965 = vand.u32 %v1168, 4294901760
    %2966 = vmatmul.mubr.f32.gmra.mxu0 %v2965
    %v2967 = vpop.f32.mrf.mxu0
    %v2968 = vadd.f32 %v2863, %v2967
    %v2969 = vpop.f32.mrf.mxu0
    %2970 = vmatprep.mubr.f32.mxu0 0.0
    %v2971 = vand.u32 %v1171, 4294901760
    %2972 = vmatmul.mubr.f32.gmra.mxu0 %v2971
    %v2973 = vpop.f32.mrf.mxu0
    %v2974 = vadd.f32 %v2871, %v2973
    %v2975 = vpop.f32.mrf.mxu0
    %2976 = vmatprep.mubr.f32.mxu0 0.0
    %v2977 = vand.u32 %v1174, 4294901760
    %2978 = vmatmul.mubr.f32.gmra.mxu0 %v2977
    %v2979 = vpop.f32.mrf.mxu0
    %v2980 = vadd.f32 %v2879, %v2979
    %v2981 = vpop.f32.mrf.mxu0
    %2982 = vdwg.mxu0
    %2983 = vmatprep.subr.mxu0 0.0
    %2984 = vmatpush1.xpose.msra.mxu0 0.0
    %2985 = vmatprep.subr.mxu0 0.0
    %2986 = vmatpush1.xpose.msra.mxu0 0.0
    %2987 = vmatprep.subr.mxu0 0.0
    %2988 = vmatpush1.xpose.msra.mxu0 0.0
    %2989 = vmatprep.subr.mxu0 0.0
    %2990 = vmatpush1.xpose.msra.mxu0 0.0
    %2991 = vmatprep.subr.mxu0 0.0
    %2992 = vmatpush1.xpose.msra.mxu0 0.0
    %2993 = vmatprep.subr.mxu0 0.0
    %2994 = vmatpush1.xpose.msra.mxu0 0.0
    %2995 = vmatprep.subr.mxu0 0.0
    %2996 = vmatpush1.xpose.msra.mxu0 0.0
    %2997 = vmatprep.subr.mxu0 0.0
    %2998 = vmatpush1.xpose.msra.mxu0 0.0
    %2999 = vmatprep.subr.mxu0 0.0
    %3000 = vmatpush1.xpose.msra.mxu0 0.0
    %3001 = vmatprep.subr.mxu0 0.0
    %3002 = vmatpush1.xpose.msra.mxu0 0.0
    %3003 = vmatprep.subr.mxu0 0.0
    %3004 = vmatpush1.xpose.msra.mxu0 0.0
    %3005 = vmatprep.subr.mxu0 0.0
    %3006 = vmatpush1.xpose.msra.mxu0 0.0
    %3007 = vmatprep.subr.mxu0 0.0
    %v3008 = vand.u32 %v2460, 4294901760
    %3009 = vmatpush1.xpose.msra.mxu0 %v3008
    %3010 = vmatprep.subr.mxu0 0.0
    %v3011 = vand.u32 %v2457, 4294901760
    %3012 = vmatpush1.xpose.msra.mxu0 %v3011
    %3013 = vmatprep.subr.mxu0 0.0
    %v3014 = vand.u32 %v2454, 4294901760
    %3015 = vmatpush1.xpose.msra.mxu0 %v3014
    %3016 = vmatprep.subr.mxu0 0.0
    %v3017 = vand.u32 %v2451, 4294901760
    %3018 = vmatpush1.xpose.msra.mxu0 %v3017
    %3019 = vmatprep.subr.mxu0 0.0
    %3020 = vmatpush2.xpose.msra.mxu0 0.0
    %3021 = vmatprep.subr.mxu0 0.0
    %3022 = vmatpush2.xpose.msra.mxu0 0.0
    %3023 = vmatprep.subr.mxu0 0.0
    %3024 = vmatpush2.xpose.msra.mxu0 0.0
    %3025 = vmatprep.subr.mxu0 0.0
    %3026 = vmatpush2.xpose.msra.mxu0 0.0
    %3027 = vmatprep.subr.mxu0 0.0
    %3028 = vmatpush2.xpose.msra.mxu0 0.0
    %3029 = vmatprep.subr.mxu0 0.0
    %3030 = vmatpush2.xpose.msra.mxu0 0.0
    %3031 = vmatprep.subr.mxu0 0.0
    %3032 = vmatpush2.xpose.msra.mxu0 0.0
    %3033 = vmatprep.subr.mxu0 0.0
    %3034 = vmatpush2.xpose.msra.mxu0 0.0
    %3035 = vmatprep.subr.mxu0 0.0
    %3036 = vmatpush2.xpose.msra.mxu0 0.0
    %3037 = vmatprep.subr.mxu0 0.0
    %3038 = vmatpush2.xpose.msra.mxu0 0.0
    %3039 = vmatprep.subr.mxu0 0.0
    %3040 = vmatpush2.xpose.msra.mxu0 0.0
    %3041 = vmatprep.subr.mxu0 0.0
    %3042 = vmatpush2.xpose.msra.mxu0 0.0
    %3043 = vmatprep.subr.mxu0 0.0
    %3044 = vmatpush2.xpose.msra.mxu0 0.0
    %3045 = vmatprep.subr.mxu0 0.0
    %3046 = vmatpush2.xpose.msra.mxu0 0.0
    %3047 = vmatprep.subr.mxu0 0.0
    %3048 = vmatpush2.xpose.msra.mxu0 0.0
    %3049 = vmatprep.subr.mxu0 0.0
    %3050 = vmatpush2.xpose.msra.mxu0 0.0
    %3051 = vmatprep.mubr.f32.mxu0 0.0
    %v3052 = vand.u32 %v1165, 4294901760
    %3053 = vmatmul.mubr.f32.gmra.mxu0 %v3052
    %v3054 = vpop.f32.mrf.mxu0
    %v3055 = vadd.f32 %v2962, %v3054
    %v3056 = vpop.f32.mrf.mxu0
    %3057 = vmatprep.mubr.f32.mxu0 0.0
    %v3058 = vand.u32 %v1168, 4294901760
    %3059 = vmatmul.mubr.f32.gmra.mxu0 %v3058
    %v3060 = vpop.f32.mrf.mxu0
    %v3061 = vadd.f32 %v2968, %v3060
    %v3062 = vpop.f32.mrf.mxu0
    %3063 = vmatprep.mubr.f32.mxu0 0.0
    %v3064 = vand.u32 %v1171, 4294901760
    %3065 = vmatmul.mubr.f32.gmra.mxu0 %v3064
    %v3066 = vpop.f32.mrf.mxu0
    %v3067 = vadd.f32 %v2974, %v3066
    %v3068 = vpop.f32.mrf.mxu0
    %3069 = vmatprep.mubr.f32.mxu0 0.0
    %v3070 = vand.u32 %v1174, 4294901760
    %3071 = vmatmul.mubr.f32.gmra.mxu0 %v3070
    %v3072 = vpop.f32.mrf.mxu0
    %v3073 = vadd.f32 %v2980, %v3072
    %v3074 = vpop.f32.mrf.mxu0
    %3075 = vdwg.mxu0
    %v3076 = vld [vmem:[%s7] sm:$0xff]
    %v3077 = vld [vmem:[%s7 + $0x8] sm:$0xff]
    %v3078 = vld [vmem:[%s10] sm:$0x1]
    %v3079 = vld [vmem:[%s11] sm:$0xff]
    %v3080 = vld [vmem:[%s12] sm:$0x1]
    %v3082 = vsel %vm1163, %v2418, 0
    %v3085 = vsel %vm1163, %v2424, 0
    %v3088 = vsel %vm1163, %v3055, 0
    %v3091 = vsel %vm1163, %v3061, 0
    %3093 = vmatprep.subr.mxu0 0.0
    %3094 = vmatpush1.xpose.msra.mxu0 0.0
    %3095 = vmatprep.subr.mxu0 0.0
    %3096 = vmatpush1.xpose.msra.mxu0 0.0
    %3097 = vmatprep.subr.mxu0 0.0
    %3098 = vmatpush1.xpose.msra.mxu0 0.0
    %3099 = vmatprep.subr.mxu0 0.0
    %3100 = vmatpush1.xpose.msra.mxu0 0.0
    %3101 = vmatprep.subr.mxu0 0.0
    %3102 = vmatpush1.xpose.msra.mxu0 0.0
    %3103 = vmatprep.subr.mxu0 0.0
    %3104 = vmatpush1.xpose.msra.mxu0 0.0
    %3105 = vmatprep.subr.mxu0 0.0
    %3106 = vmatpush1.xpose.msra.mxu0 0.0
    %3107 = vmatprep.subr.mxu0 0.0
    %3108 = vmatpush1.xpose.msra.mxu0 0.0
    %3109 = vmatprep.subr.mxu0 0.0
    %3110 = vmatpush1.xpose.msra.mxu0 0.0
    %3111 = vmatprep.subr.mxu0 0.0
    %3112 = vmatpush1.xpose.msra.mxu0 0.0
    %3113 = vmatprep.subr.mxu0 0.0
    %3114 = vmatpush1.xpose.msra.mxu0 0.0
    %3115 = vmatprep.subr.mxu0 0.0
    %3116 = vmatpush1.xpose.msra.mxu0 0.0
    %3117 = vmatprep.subr.mxu0 0.0
    %3118 = vmatpush1.xpose.msra.mxu0 0.0
    %3119 = vmatprep.subr.mxu0 0.0
    %3120 = vmatpush1.xpose.msra.mxu0 0.0
    %3121 = vmatprep.subr.mxu0 0.0
    %v3122 = vand.u32 %v3091, 4294901760
    %3123 = vmatpush1.xpose.msra.mxu0 %v3122
    %3124 = vmatprep.subr.mxu0 0.0
    %v3125 = vand.u32 %v3088, 4294901760
    %3126 = vmatpush1.xpose.msra.mxu0 %v3125
    %3127 = vmatprep.subr.mxu0 0.0
    %3128 = vmatpush2.xpose.msra.mxu0 0.0
    %3129 = vmatprep.subr.mxu0 0.0
    %3130 = vmatpush2.xpose.msra.mxu0 0.0
    %3131 = vmatprep.subr.mxu0 0.0
    %3132 = vmatpush2.xpose.msra.mxu0 0.0
    %3133 = vmatprep.subr.mxu0 0.0
    %3134 = vmatpush2.xpose.msra.mxu0 0.0
    %3135 = vmatprep.subr.mxu0 0.0
    %3136 = vmatpush2.xpose.msra.mxu0 0.0
    %3137 = vmatprep.subr.mxu0 0.0
    %3138 = vmatpush2.xpose.msra.mxu0 0.0
    %3139 = vmatprep.subr.mxu0 0.0
    %3140 = vmatpush2.xpose.msra.mxu0 0.0
    %3141 = vmatprep.subr.mxu0 0.0
    %3142 = vmatpush2.xpose.msra.mxu0 0.0
    %3143 = vmatprep.subr.mxu0 0.0
    %3144 = vmatpush2.xpose.msra.mxu0 0.0
    %3145 = vmatprep.subr.mxu0 0.0
    %3146 = vmatpush2.xpose.msra.mxu0 0.0
    %3147 = vmatprep.subr.mxu0 0.0
    %3148 = vmatpush2.xpose.msra.mxu0 0.0
    %3149 = vmatprep.subr.mxu0 0.0
    %3150 = vmatpush2.xpose.msra.mxu0 0.0
    %3151 = vmatprep.subr.mxu0 0.0
    %3152 = vmatpush2.xpose.msra.mxu0 0.0
    %3153 = vmatprep.subr.mxu0 0.0
    %3154 = vmatpush2.xpose.msra.mxu0 0.0
    %3155 = vmatprep.subr.mxu0 0.0
    %3156 = vmatpush2.xpose.msra.mxu0 0.0
    %3157 = vmatprep.subr.mxu0 0.0
    %3158 = vmatpush2.xpose.msra.mxu0 0.0
    %3159 = vmatprep.mubr.f32.mxu0 0.0
    %v3160 = vand.u32 %v3082, 4294901760
    %v3161 = vsub.f32 %v3082, %v3160
    %v3162 = vand.u32 %v3161, 4294901760
    %v3163 = vsub.f32 %v3161, %v3162
    %v3164 = vand.u32 %v3163, 4294901760
    %3165 = vmatmul.mubr.f32.gmra.mxu0 %v3164
    %v3166 = vpop.f32.mrf.mxu0
    %v3167 = vadd.f32 0.0, %v3166
    %v3168 = vpop.f32.mrf.mxu0
    %3169 = vmatprep.mubr.f32.mxu0 0.0
    %v3170 = vand.u32 %v3085, 4294901760
    %v3171 = vsub.f32 %v3085, %v3170
    %v3172 = vand.u32 %v3171, 4294901760
    %v3173 = vsub.f32 %v3171, %v3172
    %v3174 = vand.u32 %v3173, 4294901760
    %3175 = vmatmul.mubr.f32.gmra.mxu0 %v3174
    %v3176 = vpop.f32.mrf.mxu0
    %v3177 = vadd.f32 0.0, %v3176
    %v3178 = vpop.f32.mrf.mxu0
    %3179 = vdwg.mxu0
    %3180 = vmatprep.subr.mxu0 0.0
    %3181 = vmatpush1.xpose.msra.mxu0 0.0
    %3182 = vmatprep.subr.mxu0 0.0
    %3183 = vmatpush1.xpose.msra.mxu0 0.0
    %3184 = vmatprep.subr.mxu0 0.0
    %3185 = vmatpush1.xpose.msra.mxu0 0.0
    %3186 = vmatprep.subr.mxu0 0.0
    %3187 = vmatpush1.xpose.msra.mxu0 0.0
    %3188 = vmatprep.subr.mxu0 0.0
    %3189 = vmatpush1.xpose.msra.mxu0 0.0
    %3190 = vmatprep.subr.mxu0 0.0
    %3191 = vmatpush1.xpose.msra.mxu0 0.0
    %3192 = vmatprep.subr.mxu0 0.0
    %3193 = vmatpush1.xpose.msra.mxu0 0.0
    %3194 = vmatprep.subr.mxu0 0.0
    %3195 = vmatpush1.xpose.msra.mxu0 0.0
    %3196 = vmatprep.subr.mxu0 0.0
    %3197 = vmatpush1.xpose.msra.mxu0 0.0
    %3198 = vmatprep.subr.mxu0 0.0
    %3199 = vmatpush1.xpose.msra.mxu0 0.0
    %3200 = vmatprep.subr.mxu0 0.0
    %3201 = vmatpush1.xpose.msra.mxu0 0.0
    %3202 = vmatprep.subr.mxu0 0.0
    %3203 = vmatpush1.xpose.msra.mxu0 0.0
    %3204 = vmatprep.subr.mxu0 0.0
    %3205 = vmatpush1.xpose.msra.mxu0 0.0
    %3206 = vmatprep.subr.mxu0 0.0
    %3207 = vmatpush1.xpose.msra.mxu0 0.0
    %3208 = vmatprep.subr.mxu0 0.0
    %v3209 = vand.u32 %v3091, 4294901760
    %v3210 = vsub.f32 %v3091, %v3209
    %v3211 = vand.u32 %v3210, 4294901760
    %v3212 = vsub.f32 %v3210, %v3211
    %v3213 = vand.u32 %v3212, 4294901760
    %3214 = vmatpush1.xpose.msra.mxu0 %v3213
    %3215 = vmatprep.subr.mxu0 0.0
    %v3216 = vand.u32 %v3088, 4294901760
    %v3217 = vsub.f32 %v3088, %v3216
    %v3218 = vand.u32 %v3217, 4294901760
    %v3219 = vsub.f32 %v3217, %v3218
    %v3220 = vand.u32 %v3219, 4294901760
    %3221 = vmatpush1.xpose.msra.mxu0 %v3220
    %3222 = vmatprep.subr.mxu0 0.0
    %3223 = vmatpush2.xpose.msra.mxu0 0.0
    %3224 = vmatprep.subr.mxu0 0.0
    %3225 = vmatpush2.xpose.msra.mxu0 0.0
    %3226 = vmatprep.subr.mxu0 0.0
    %3227 = vmatpush2.xpose.msra.mxu0 0.0
    %3228 = vmatprep.subr.mxu0 0.0
    %3229 = vmatpush2.xpose.msra.mxu0 0.0
    %3230 = vmatprep.subr.mxu0 0.0
    %3231 = vmatpush2.xpose.msra.mxu0 0.0
    %3232 = vmatprep.subr.mxu0 0.0
    %3233 = vmatpush2.xpose.msra.mxu0 0.0
    %3234 = vmatprep.subr.mxu0 0.0
    %3235 = vmatpush2.xpose.msra.mxu0 0.0
    %3236 = vmatprep.subr.mxu0 0.0
    %3237 = vmatpush2.xpose.msra.mxu0 0.0
    %3238 = vmatprep.subr.mxu0 0.0
    %3239 = vmatpush2.xpose.msra.mxu0 0.0
    %3240 = vmatprep.subr.mxu0 0.0
    %3241 = vmatpush2.xpose.msra.mxu0 0.0
    %3242 = vmatprep.subr.mxu0 0.0
    %3243 = vmatpush2.xpose.msra.mxu0 0.0
    %3244 = vmatprep.subr.mxu0 0.0
    %3245 = vmatpush2.xpose.msra.mxu0 0.0
    %3246 = vmatprep.subr.mxu0 0.0
    %3247 = vmatpush2.xpose.msra.mxu0 0.0
    %3248 = vmatprep.subr.mxu0 0.0
    %3249 = vmatpush2.xpose.msra.mxu0 0.0
    %3250 = vmatprep.subr.mxu0 0.0
    %3251 = vmatpush2.xpose.msra.mxu0 0.0
    %3252 = vmatprep.subr.mxu0 0.0
    %3253 = vmatpush2.xpose.msra.mxu0 0.0
    %3254 = vmatprep.mubr.f32.mxu0 0.0
    %v3255 = vand.u32 %v3082, 4294901760
    %3256 = vmatmul.mubr.f32.gmra.mxu0 %v3255
    %v3257 = vpop.f32.mrf.mxu0
    %v3258 = vadd.f32 %v3167, %v3257
    %v3259 = vpop.f32.mrf.mxu0
    %3260 = vmatprep.mubr.f32.mxu0 0.0
    %v3261 = vand.u32 %v3085, 4294901760
    %3262 = vmatmul.mubr.f32.gmra.mxu0 %v3261
    %v3263 = vpop.f32.mrf.mxu0
    %v3264 = vadd.f32 %v3177, %v3263
    %v3265 = vpop.f32.mrf.mxu0
    %3266 = vdwg.mxu0
    %3267 = vmatprep.subr.mxu0 0.0
    %3268 = vmatpush1.xpose.msra.mxu0 0.0
    %3269 = vmatprep.subr.mxu0 0.0
    %3270 = vmatpush1.xpose.msra.mxu0 0.0
    %3271 = vmatprep.subr.mxu0 0.0
    %3272 = vmatpush1.xpose.msra.mxu0 0.0
    %3273 = vmatprep.subr.mxu0 0.0
    %3274 = vmatpush1.xpose.msra.mxu0 0.0
    %3275 = vmatprep.subr.mxu0 0.0
    %3276 = vmatpush1.xpose.msra.mxu0 0.0
    %3277 = vmatprep.subr.mxu0 0.0
    %3278 = vmatpush1.xpose.msra.mxu0 0.0
    %3279 = vmatprep.subr.mxu0 0.0
    %3280 = vmatpush1.xpose.msra.mxu0 0.0
    %3281 = vmatprep.subr.mxu0 0.0
    %3282 = vmatpush1.xpose.msra.mxu0 0.0
    %3283 = vmatprep.subr.mxu0 0.0
    %3284 = vmatpush1.xpose.msra.mxu0 0.0
    %3285 = vmatprep.subr.mxu0 0.0
    %3286 = vmatpush1.xpose.msra.mxu0 0.0
    %3287 = vmatprep.subr.mxu0 0.0
    %3288 = vmatpush1.xpose.msra.mxu0 0.0
    %3289 = vmatprep.subr.mxu0 0.0
    %3290 = vmatpush1.xpose.msra.mxu0 0.0
    %3291 = vmatprep.subr.mxu0 0.0
    %3292 = vmatpush1.xpose.msra.mxu0 0.0
    %3293 = vmatprep.subr.mxu0 0.0
    %3294 = vmatpush1.xpose.msra.mxu0 0.0
    %3295 = vmatprep.subr.mxu0 0.0
    %v3296 = vand.u32 %v3091, 4294901760
    %v3297 = vsub.f32 %v3091, %v3296
    %3298 = vmatpush1.xpose.msra.mxu0 %v3297
    %3299 = vmatprep.subr.mxu0 0.0
    %v3300 = vand.u32 %v3088, 4294901760
    %v3301 = vsub.f32 %v3088, %v3300
    %3302 = vmatpush1.xpose.msra.mxu0 %v3301
    %3303 = vmatprep.subr.mxu0 0.0
    %3304 = vmatpush2.xpose.msra.mxu0 0.0
    %3305 = vmatprep.subr.mxu0 0.0
    %3306 = vmatpush2.xpose.msra.mxu0 0.0
    %3307 = vmatprep.subr.mxu0 0.0
    %3308 = vmatpush2.xpose.msra.mxu0 0.0
    %3309 = vmatprep.subr.mxu0 0.0
    %3310 = vmatpush2.xpose.msra.mxu0 0.0
    %3311 = vmatprep.subr.mxu0 0.0
    %3312 = vmatpush2.xpose.msra.mxu0 0.0
    %3313 = vmatprep.subr.mxu0 0.0
    %3314 = vmatpush2.xpose.msra.mxu0 0.0
    %3315 = vmatprep.subr.mxu0 0.0
    %3316 = vmatpush2.xpose.msra.mxu0 0.0
    %3317 = vmatprep.subr.mxu0 0.0
    %3318 = vmatpush2.xpose.msra.mxu0 0.0
    %3319 = vmatprep.subr.mxu0 0.0
    %3320 = vmatpush2.xpose.msra.mxu0 0.0
    %3321 = vmatprep.subr.mxu0 0.0
    %3322 = vmatpush2.xpose.msra.mxu0 0.0
    %3323 = vmatprep.subr.mxu0 0.0
    %3324 = vmatpush2.xpose.msra.mxu0 0.0
    %3325 = vmatprep.subr.mxu0 0.0
    %3326 = vmatpush2.xpose.msra.mxu0 0.0
    %3327 = vmatprep.subr.mxu0 0.0
    %3328 = vmatpush2.xpose.msra.mxu0 0.0
    %3329 = vmatprep.subr.mxu0 0.0
    %3330 = vmatpush2.xpose.msra.mxu0 0.0
    %3331 = vmatprep.subr.mxu0 0.0
    %3332 = vmatpush2.xpose.msra.mxu0 0.0
    %3333 = vmatprep.subr.mxu0 0.0
    %3334 = vmatpush2.xpose.msra.mxu0 0.0
    %3335 = vmatprep.mubr.f32.mxu0 0.0
    %v3336 = vand.u32 %v3082, 4294901760
    %v3337 = vsub.f32 %v3082, %v3336
    %3338 = vmatmul.mubr.f32.gmra.mxu0 %v3337
    %v3339 = vpop.f32.mrf.mxu0
    %v3340 = vadd.f32 %v3258, %v3339
    %v3341 = vpop.f32.mrf.mxu0
    %3342 = vmatprep.mubr.f32.mxu0 0.0
    %v3343 = vand.u32 %v3085, 4294901760
    %v3344 = vsub.f32 %v3085, %v3343
    %3345 = vmatmul.mubr.f32.gmra.mxu0 %v3344
    %v3346 = vpop.f32.mrf.mxu0
    %v3347 = vadd.f32 %v3264, %v3346
    %v3348 = vpop.f32.mrf.mxu0
    %3349 = vdwg.mxu0
    %3350 = vmatprep.subr.mxu0 0.0
    %3351 = vmatpush1.xpose.msra.mxu0 0.0
    %3352 = vmatprep.subr.mxu0 0.0
    %3353 = vmatpush1.xpose.msra.mxu0 0.0
    %3354 = vmatprep.subr.mxu0 0.0
    %3355 = vmatpush1.xpose.msra.mxu0 0.0
    %3356 = vmatprep.subr.mxu0 0.0
    %3357 = vmatpush1.xpose.msra.mxu0 0.0
    %3358 = vmatprep.subr.mxu0 0.0
    %3359 = vmatpush1.xpose.msra.mxu0 0.0
    %3360 = vmatprep.subr.mxu0 0.0
    %3361 = vmatpush1.xpose.msra.mxu0 0.0
    %3362 = vmatprep.subr.mxu0 0.0
    %3363 = vmatpush1.xpose.msra.mxu0 0.0
    %3364 = vmatprep.subr.mxu0 0.0
    %3365 = vmatpush1.xpose.msra.mxu0 0.0
    %3366 = vmatprep.subr.mxu0 0.0
    %3367 = vmatpush1.xpose.msra.mxu0 0.0
    %3368 = vmatprep.subr.mxu0 0.0
    %3369 = vmatpush1.xpose.msra.mxu0 0.0
    %3370 = vmatprep.subr.mxu0 0.0
    %3371 = vmatpush1.xpose.msra.mxu0 0.0
    %3372 = vmatprep.subr.mxu0 0.0
    %3373 = vmatpush1.xpose.msra.mxu0 0.0
    %3374 = vmatprep.subr.mxu0 0.0
    %3375 = vmatpush1.xpose.msra.mxu0 0.0
    %3376 = vmatprep.subr.mxu0 0.0
    %3377 = vmatpush1.xpose.msra.mxu0 0.0
    %3378 = vmatprep.subr.mxu0 0.0
    %v3379 = vand.u32 %v3091, 4294901760
    %3380 = vmatpush1.xpose.msra.mxu0 %v3379
    %3381 = vmatprep.subr.mxu0 0.0
    %v3382 = vand.u32 %v3088, 4294901760
    %3383 = vmatpush1.xpose.msra.mxu0 %v3382
    %3384 = vmatprep.subr.mxu0 0.0
    %3385 = vmatpush2.xpose.msra.mxu0 0.0
    %3386 = vmatprep.subr.mxu0 0.0
    %3387 = vmatpush2.xpose.msra.mxu0 0.0
    %3388 = vmatprep.subr.mxu0 0.0
    %3389 = vmatpush2.xpose.msra.mxu0 0.0
    %3390 = vmatprep.subr.mxu0 0.0
    %3391 = vmatpush2.xpose.msra.mxu0 0.0
    %3392 = vmatprep.subr.mxu0 0.0
    %3393 = vmatpush2.xpose.msra.mxu0 0.0
    %3394 = vmatprep.subr.mxu0 0.0
    %3395 = vmatpush2.xpose.msra.mxu0 0.0
    %3396 = vmatprep.subr.mxu0 0.0
    %3397 = vmatpush2.xpose.msra.mxu0 0.0
    %3398 = vmatprep.subr.mxu0 0.0
    %3399 = vmatpush2.xpose.msra.mxu0 0.0
    %3400 = vmatprep.subr.mxu0 0.0
    %3401 = vmatpush2.xpose.msra.mxu0 0.0
    %3402 = vmatprep.subr.mxu0 0.0
    %3403 = vmatpush2.xpose.msra.mxu0 0.0
    %3404 = vmatprep.subr.mxu0 0.0
    %3405 = vmatpush2.xpose.msra.mxu0 0.0
    %3406 = vmatprep.subr.mxu0 0.0
    %3407 = vmatpush2.xpose.msra.mxu0 0.0
    %3408 = vmatprep.subr.mxu0 0.0
    %3409 = vmatpush2.xpose.msra.mxu0 0.0
    %3410 = vmatprep.subr.mxu0 0.0
    %3411 = vmatpush2.xpose.msra.mxu0 0.0
    %3412 = vmatprep.subr.mxu0 0.0
    %3413 = vmatpush2.xpose.msra.mxu0 0.0
    %3414 = vmatprep.subr.mxu0 0.0
    %3415 = vmatpush2.xpose.msra.mxu0 0.0
    %3416 = vmatprep.mubr.f32.mxu0 0.0
    %v3417 = vand.u32 %v3082, 4294901760
    %v3418 = vsub.f32 %v3082, %v3417
    %v3419 = vand.u32 %v3418, 4294901760
    %3420 = vmatmul.mubr.f32.gmra.mxu0 %v3419
    %v3421 = vpop.f32.mrf.mxu0
    %v3422 = vadd.f32 %v3340, %v3421
    %v3423 = vpop.f32.mrf.mxu0
    %3424 = vmatprep.mubr.f32.mxu0 0.0
    %v3425 = vand.u32 %v3085, 4294901760
    %v3426 = vsub.f32 %v3085, %v3425
    %v3427 = vand.u32 %v3426, 4294901760
    %3428 = vmatmul.mubr.f32.gmra.mxu0 %v3427
    %v3429 = vpop.f32.mrf.mxu0
    %v3430 = vadd.f32 %v3347, %v3429
    %v3431 = vpop.f32.mrf.mxu0
    %3432 = vdwg.mxu0
    %3433 = vmatprep.subr.mxu0 0.0
    %3434 = vmatpush1.xpose.msra.mxu0 0.0
    %3435 = vmatprep.subr.mxu0 0.0
    %3436 = vmatpush1.xpose.msra.mxu0 0.0
    %3437 = vmatprep.subr.mxu0 0.0
    %3438 = vmatpush1.xpose.msra.mxu0 0.0
    %3439 = vmatprep.subr.mxu0 0.0
    %3440 = vmatpush1.xpose.msra.mxu0 0.0
    %3441 = vmatprep.subr.mxu0 0.0
    %3442 = vmatpush1.xpose.msra.mxu0 0.0
    %3443 = vmatprep.subr.mxu0 0.0
    %3444 = vmatpush1.xpose.msra.mxu0 0.0
    %3445 = vmatprep.subr.mxu0 0.0
    %3446 = vmatpush1.xpose.msra.mxu0 0.0
    %3447 = vmatprep.subr.mxu0 0.0
    %3448 = vmatpush1.xpose.msra.mxu0 0.0
    %3449 = vmatprep.subr.mxu0 0.0
    %3450 = vmatpush1.xpose.msra.mxu0 0.0
    %3451 = vmatprep.subr.mxu0 0.0
    %3452 = vmatpush1.xpose.msra.mxu0 0.0
    %3453 = vmatprep.subr.mxu0 0.0
    %3454 = vmatpush1.xpose.msra.mxu0 0.0
    %3455 = vmatprep.subr.mxu0 0.0
    %3456 = vmatpush1.xpose.msra.mxu0 0.0
    %3457 = vmatprep.subr.mxu0 0.0
    %3458 = vmatpush1.xpose.msra.mxu0 0.0
    %3459 = vmatprep.subr.mxu0 0.0
    %3460 = vmatpush1.xpose.msra.mxu0 0.0
    %3461 = vmatprep.subr.mxu0 0.0
    %v3462 = vand.u32 %v3091, 4294901760
    %v3463 = vsub.f32 %v3091, %v3462
    %v3464 = vand.u32 %v3463, 4294901760
    %3465 = vmatpush1.xpose.msra.mxu0 %v3464
    %3466 = vmatprep.subr.mxu0 0.0
    %v3467 = vand.u32 %v3088, 4294901760
    %v3468 = vsub.f32 %v3088, %v3467
    %v3469 = vand.u32 %v3468, 4294901760
    %3470 = vmatpush1.xpose.msra.mxu0 %v3469
    %3471 = vmatprep.subr.mxu0 0.0
    %3472 = vmatpush2.xpose.msra.mxu0 0.0
    %3473 = vmatprep.subr.mxu0 0.0
    %3474 = vmatpush2.xpose.msra.mxu0 0.0
    %3475 = vmatprep.subr.mxu0 0.0
    %3476 = vmatpush2.xpose.msra.mxu0 0.0
    %3477 = vmatprep.subr.mxu0 0.0
    %3478 = vmatpush2.xpose.msra.mxu0 0.0
    %3479 = vmatprep.subr.mxu0 0.0
    %3480 = vmatpush2.xpose.msra.mxu0 0.0
    %3481 = vmatprep.subr.mxu0 0.0
    %3482 = vmatpush2.xpose.msra.mxu0 0.0
    %3483 = vmatprep.subr.mxu0 0.0
    %3484 = vmatpush2.xpose.msra.mxu0 0.0
    %3485 = vmatprep.subr.mxu0 0.0
    %3486 = vmatpush2.xpose.msra.mxu0 0.0
    %3487 = vmatprep.subr.mxu0 0.0
    %3488 = vmatpush2.xpose.msra.mxu0 0.0
    %3489 = vmatprep.subr.mxu0 0.0
    %3490 = vmatpush2.xpose.msra.mxu0 0.0
    %3491 = vmatprep.subr.mxu0 0.0
    %3492 = vmatpush2.xpose.msra.mxu0 0.0
    %3493 = vmatprep.subr.mxu0 0.0
    %3494 = vmatpush2.xpose.msra.mxu0 0.0
    %3495 = vmatprep.subr.mxu0 0.0
    %3496 = vmatpush2.xpose.msra.mxu0 0.0
    %3497 = vmatprep.subr.mxu0 0.0
    %3498 = vmatpush2.xpose.msra.mxu0 0.0
    %3499 = vmatprep.subr.mxu0 0.0
    %3500 = vmatpush2.xpose.msra.mxu0 0.0
    %3501 = vmatprep.subr.mxu0 0.0
    %3502 = vmatpush2.xpose.msra.mxu0 0.0
    %3503 = vmatprep.mubr.f32.mxu0 0.0
    %v3504 = vand.u32 %v3082, 4294901760
    %3505 = vmatmul.mubr.f32.gmra.mxu0 %v3504
    %v3506 = vpop.f32.mrf.mxu0
    %v3507 = vadd.f32 %v3422, %v3506
    %v3508 = vpop.f32.mrf.mxu0
    %3509 = vmatprep.mubr.f32.mxu0 0.0
    %v3510 = vand.u32 %v3085, 4294901760
    %3511 = vmatmul.mubr.f32.gmra.mxu0 %v3510
    %v3512 = vpop.f32.mrf.mxu0
    %v3513 = vadd.f32 %v3430, %v3512
    %v3514 = vpop.f32.mrf.mxu0
    %3515 = vdwg.mxu0
    %3516 = vmatprep.subr.mxu0 0.0
    %3517 = vmatpush1.xpose.msra.mxu0 0.0
    %3518 = vmatprep.subr.mxu0 0.0
    %3519 = vmatpush1.xpose.msra.mxu0 0.0
    %3520 = vmatprep.subr.mxu0 0.0
    %3521 = vmatpush1.xpose.msra.mxu0 0.0
    %3522 = vmatprep.subr.mxu0 0.0
    %3523 = vmatpush1.xpose.msra.mxu0 0.0
    %3524 = vmatprep.subr.mxu0 0.0
    %3525 = vmatpush1.xpose.msra.mxu0 0.0
    %3526 = vmatprep.subr.mxu0 0.0
    %3527 = vmatpush1.xpose.msra.mxu0 0.0
    %3528 = vmatprep.subr.mxu0 0.0
    %3529 = vmatpush1.xpose.msra.mxu0 0.0
    %3530 = vmatprep.subr.mxu0 0.0
    %3531 = vmatpush1.xpose.msra.mxu0 0.0
    %3532 = vmatprep.subr.mxu0 0.0
    %3533 = vmatpush1.xpose.msra.mxu0 0.0
    %3534 = vmatprep.subr.mxu0 0.0
    %3535 = vmatpush1.xpose.msra.mxu0 0.0
    %3536 = vmatprep.subr.mxu0 0.0
    %3537 = vmatpush1.xpose.msra.mxu0 0.0
    %3538 = vmatprep.subr.mxu0 0.0
    %3539 = vmatpush1.xpose.msra.mxu0 0.0
    %3540 = vmatprep.subr.mxu0 0.0
    %3541 = vmatpush1.xpose.msra.mxu0 0.0
    %3542 = vmatprep.subr.mxu0 0.0
    %3543 = vmatpush1.xpose.msra.mxu0 0.0
    %3544 = vmatprep.subr.mxu0 0.0
    %v3545 = vand.u32 %v3091, 4294901760
    %3546 = vmatpush1.xpose.msra.mxu0 %v3545
    %3547 = vmatprep.subr.mxu0 0.0
    %v3548 = vand.u32 %v3088, 4294901760
    %3549 = vmatpush1.xpose.msra.mxu0 %v3548
    %3550 = vmatprep.subr.mxu0 0.0
    %3551 = vmatpush2.xpose.msra.mxu0 0.0
    %3552 = vmatprep.subr.mxu0 0.0
    %3553 = vmatpush2.xpose.msra.mxu0 0.0
    %3554 = vmatprep.subr.mxu0 0.0
    %3555 = vmatpush2.xpose.msra.mxu0 0.0
    %3556 = vmatprep.subr.mxu0 0.0
    %3557 = vmatpush2.xpose.msra.mxu0 0.0
    %3558 = vmatprep.subr.mxu0 0.0
    %3559 = vmatpush2.xpose.msra.mxu0 0.0
    %3560 = vmatprep.subr.mxu0 0.0
    %3561 = vmatpush2.xpose.msra.mxu0 0.0
    %3562 = vmatprep.subr.mxu0 0.0
    %3563 = vmatpush2.xpose.msra.mxu0 0.0
    %3564 = vmatprep.subr.mxu0 0.0
    %3565 = vmatpush2.xpose.msra.mxu0 0.0
    %3566 = vmatprep.subr.mxu0 0.0
    %3567 = vmatpush2.xpose.msra.mxu0 0.0
    %3568 = vmatprep.subr.mxu0 0.0
    %3569 = vmatpush2.xpose.msra.mxu0 0.0
    %3570 = vmatprep.subr.mxu0 0.0
    %3571 = vmatpush2.xpose.msra.mxu0 0.0
    %3572 = vmatprep.subr.mxu0 0.0
    %3573 = vmatpush2.xpose.msra.mxu0 0.0
    %3574 = vmatprep.subr.mxu0 0.0
    %3575 = vmatpush2.xpose.msra.mxu0 0.0
    %3576 = vmatprep.subr.mxu0 0.0
    %3577 = vmatpush2.xpose.msra.mxu0 0.0
    %3578 = vmatprep.subr.mxu0 0.0
    %3579 = vmatpush2.xpose.msra.mxu0 0.0
    %3580 = vmatprep.subr.mxu0 0.0
    %3581 = vmatpush2.xpose.msra.mxu0 0.0
    %3582 = vmatprep.mubr.f32.mxu0 0.0
    %v3583 = vand.u32 %v3082, 4294901760
    %3584 = vmatmul.mubr.f32.gmra.mxu0 %v3583
    %v3585 = vpop.f32.mrf.mxu0
    %v3586 = vadd.f32 %v3507, %v3585
    %v3587 = vpop.f32.mrf.mxu0
    %3588 = vmatprep.mubr.f32.mxu0 0.0
    %v3589 = vand.u32 %v3085, 4294901760
    %3590 = vmatmul.mubr.f32.gmra.mxu0 %v3589
    %v3591 = vpop.f32.mrf.mxu0
    %v3592 = vadd.f32 %v3513, %v3591
    %v3593 = vpop.f32.mrf.mxu0
    %3594 = vdwg.mxu0
    %v3596 = vsel %vm60, %v3586, 0
    %v3599 = vsel %vm60, %v3592, 0
    %3601 = vmatprep.subr.mxu0 0.0
    %3602 = vmatpush1.msra.mxu0 0.0
    %3603 = vmatprep.subr.mxu0 0.0
    %3604 = vmatpush1.msra.mxu0 0.0
    %3605 = vmatprep.subr.mxu0 0.0
    %3606 = vmatpush1.msra.mxu0 0.0
    %3607 = vmatprep.subr.mxu0 0.0
    %3608 = vmatpush1.msra.mxu0 0.0
    %3609 = vmatprep.subr.mxu0 0.0
    %3610 = vmatpush1.msra.mxu0 0.0
    %3611 = vmatprep.subr.mxu0 0.0
    %3612 = vmatpush1.msra.mxu0 0.0
    %3613 = vmatprep.subr.mxu0 0.0
    %3614 = vmatpush1.msra.mxu0 0.0
    %3615 = vmatprep.subr.mxu0 0.0
    %3616 = vmatpush1.msra.mxu0 0.0
    %3617 = vmatprep.subr.mxu0 0.0
    %3618 = vmatpush1.msra.mxu0 0.0
    %3619 = vmatprep.subr.mxu0 0.0
    %3620 = vmatpush1.msra.mxu0 0.0
    %3621 = vmatprep.subr.mxu0 0.0
    %3622 = vmatpush1.msra.mxu0 0.0
    %3623 = vmatprep.subr.mxu0 0.0
    %3624 = vmatpush1.msra.mxu0 0.0
    %3625 = vmatprep.subr.mxu0 0.0
    %3626 = vmatpush1.msra.mxu0 0.0
    %3627 = vmatprep.subr.mxu0 0.0
    %3628 = vmatpush1.msra.mxu0 0.0
    %3629 = vmatprep.subr.mxu0 0.0
    %v3630 = vand.u32 %v1787, 4294901760
    %3631 = vmatpush1.msra.mxu0 %v3630
    %3632 = vmatprep.subr.mxu0 0.0
    %v3633 = vand.u32 %v1781, 4294901760
    %3634 = vmatpush1.msra.mxu0 %v3633
    %3635 = vmatprep.subr.mxu0 0.0
    %3636 = vmatpush2.msra.mxu0 0.0
    %3637 = vmatprep.subr.mxu0 0.0
    %3638 = vmatpush2.msra.mxu0 0.0
    %3639 = vmatprep.subr.mxu0 0.0
    %3640 = vmatpush2.msra.mxu0 0.0
    %3641 = vmatprep.subr.mxu0 0.0
    %3642 = vmatpush2.msra.mxu0 0.0
    %3643 = vmatprep.subr.mxu0 0.0
    %3644 = vmatpush2.msra.mxu0 0.0
    %3645 = vmatprep.subr.mxu0 0.0
    %3646 = vmatpush2.msra.mxu0 0.0
    %3647 = vmatprep.subr.mxu0 0.0
    %3648 = vmatpush2.msra.mxu0 0.0
    %3649 = vmatprep.subr.mxu0 0.0
    %3650 = vmatpush2.msra.mxu0 0.0
    %3651 = vmatprep.subr.mxu0 0.0
    %3652 = vmatpush2.msra.mxu0 0.0
    %3653 = vmatprep.subr.mxu0 0.0
    %3654 = vmatpush2.msra.mxu0 0.0
    %3655 = vmatprep.subr.mxu0 0.0
    %3656 = vmatpush2.msra.mxu0 0.0
    %3657 = vmatprep.subr.mxu0 0.0
    %3658 = vmatpush2.msra.mxu0 0.0
    %3659 = vmatprep.subr.mxu0 0.0
    %3660 = vmatpush2.msra.mxu0 0.0
    %3661 = vmatprep.subr.mxu0 0.0
    %3662 = vmatpush2.msra.mxu0 0.0
    %3663 = vmatprep.subr.mxu0 0.0
    %3664 = vmatpush2.msra.mxu0 0.0
    %3665 = vmatprep.subr.mxu0 0.0
    %3666 = vmatpush2.msra.mxu0 0.0
    %3667 = vmatprep.mubr.f32.mxu0 0.0
    %v3668 = vand.u32 %v3596, 4294901760
    %v3669 = vsub.f32 %v3596, %v3668
    %v3670 = vand.u32 %v3669, 4294901760
    %v3671 = vsub.f32 %v3669, %v3670
    %v3672 = vand.u32 %v3671, 4294901760
    %3673 = vmatmul.mubr.f32.gmra.mxu0 %v3672
    %v3674 = vpop.f32.mrf.mxu0
    %v3675 = vadd.f32 0.0, %v3674
    %v3676 = vpop.f32.mrf.mxu0
    %3677 = vmatprep.mubr.f32.mxu0 0.0
    %v3678 = vand.u32 %v3599, 4294901760
    %v3679 = vsub.f32 %v3599, %v3678
    %v3680 = vand.u32 %v3679, 4294901760
    %v3681 = vsub.f32 %v3679, %v3680
    %v3682 = vand.u32 %v3681, 4294901760
    %3683 = vmatmul.mubr.f32.gmra.mxu0 %v3682
    %v3684 = vpop.f32.mrf.mxu0
    %v3685 = vadd.f32 0.0, %v3684
    %v3686 = vpop.f32.mrf.mxu0
    %3687 = vdwg.mxu0
    %3688 = vmatprep.subr.mxu0 0.0
    %3689 = vmatpush1.msra.mxu0 0.0
    %3690 = vmatprep.subr.mxu0 0.0
    %3691 = vmatpush1.msra.mxu0 0.0
    %3692 = vmatprep.subr.mxu0 0.0
    %3693 = vmatpush1.msra.mxu0 0.0
    %3694 = vmatprep.subr.mxu0 0.0
    %3695 = vmatpush1.msra.mxu0 0.0
    %3696 = vmatprep.subr.mxu0 0.0
    %3697 = vmatpush1.msra.mxu0 0.0
    %3698 = vmatprep.subr.mxu0 0.0
    %3699 = vmatpush1.msra.mxu0 0.0
    %3700 = vmatprep.subr.mxu0 0.0
    %3701 = vmatpush1.msra.mxu0 0.0
    %3702 = vmatprep.subr.mxu0 0.0
    %3703 = vmatpush1.msra.mxu0 0.0
    %3704 = vmatprep.subr.mxu0 0.0
    %3705 = vmatpush1.msra.mxu0 0.0
    %3706 = vmatprep.subr.mxu0 0.0
    %3707 = vmatpush1.msra.mxu0 0.0
    %3708 = vmatprep.subr.mxu0 0.0
    %3709 = vmatpush1.msra.mxu0 0.0
    %3710 = vmatprep.subr.mxu0 0.0
    %3711 = vmatpush1.msra.mxu0 0.0
    %3712 = vmatprep.subr.mxu0 0.0
    %3713 = vmatpush1.msra.mxu0 0.0
    %3714 = vmatprep.subr.mxu0 0.0
    %3715 = vmatpush1.msra.mxu0 0.0
    %3716 = vmatprep.subr.mxu0 0.0
    %v3717 = vand.u32 %v1787, 4294901760
    %v3718 = vsub.f32 %v1787, %v3717
    %v3719 = vand.u32 %v3718, 4294901760
    %v3720 = vsub.f32 %v3718, %v3719
    %v3721 = vand.u32 %v3720, 4294901760
    %3722 = vmatpush1.msra.mxu0 %v3721
    %3723 = vmatprep.subr.mxu0 0.0
    %v3724 = vand.u32 %v1781, 4294901760
    %v3725 = vsub.f32 %v1781, %v3724
    %v3726 = vand.u32 %v3725, 4294901760
    %v3727 = vsub.f32 %v3725, %v3726
    %v3728 = vand.u32 %v3727, 4294901760
    %3729 = vmatpush1.msra.mxu0 %v3728
    %3730 = vmatprep.subr.mxu0 0.0
    %3731 = vmatpush2.msra.mxu0 0.0
    %3732 = vmatprep.subr.mxu0 0.0
    %3733 = vmatpush2.msra.mxu0 0.0
    %3734 = vmatprep.subr.mxu0 0.0
    %3735 = vmatpush2.msra.mxu0 0.0
    %3736 = vmatprep.subr.mxu0 0.0
    %3737 = vmatpush2.msra.mxu0 0.0
    %3738 = vmatprep.subr.mxu0 0.0
    %3739 = vmatpush2.msra.mxu0 0.0
    %3740 = vmatprep.subr.mxu0 0.0
    %3741 = vmatpush2.msra.mxu0 0.0
    %3742 = vmatprep.subr.mxu0 0.0
    %3743 = vmatpush2.msra.mxu0 0.0
    %3744 = vmatprep.subr.mxu0 0.0
    %3745 = vmatpush2.msra.mxu0 0.0
    %3746 = vmatprep.subr.mxu0 0.0
    %3747 = vmatpush2.msra.mxu0 0.0
    %3748 = vmatprep.subr.mxu0 0.0
    %3749 = vmatpush2.msra.mxu0 0.0
    %3750 = vmatprep.subr.mxu0 0.0
    %3751 = vmatpush2.msra.mxu0 0.0
    %3752 = vmatprep.subr.mxu0 0.0
    %3753 = vmatpush2.msra.mxu0 0.0
    %3754 = vmatprep.subr.mxu0 0.0
    %3755 = vmatpush2.msra.mxu0 0.0
    %3756 = vmatprep.subr.mxu0 0.0
    %3757 = vmatpush2.msra.mxu0 0.0
    %3758 = vmatprep.subr.mxu0 0.0
    %3759 = vmatpush2.msra.mxu0 0.0
    %3760 = vmatprep.subr.mxu0 0.0
    %3761 = vmatpush2.msra.mxu0 0.0
    %3762 = vmatprep.mubr.f32.mxu0 0.0
    %v3763 = vand.u32 %v3596, 4294901760
    %3764 = vmatmul.mubr.f32.gmra.mxu0 %v3763
    %v3765 = vpop.f32.mrf.mxu0
    %v3766 = vadd.f32 %v3675, %v3765
    %v3767 = vpop.f32.mrf.mxu0
    %3768 = vmatprep.mubr.f32.mxu0 0.0
    %v3769 = vand.u32 %v3599, 4294901760
    %3770 = vmatmul.mubr.f32.gmra.mxu0 %v3769
    %v3771 = vpop.f32.mrf.mxu0
    %v3772 = vadd.f32 %v3685, %v3771
    %v3773 = vpop.f32.mrf.mxu0
    %3774 = vdwg.mxu0
    %3775 = vmatprep.subr.mxu0 0.0
    %3776 = vmatpush1.msra.mxu0 0.0
    %3777 = vmatprep.subr.mxu0 0.0
    %3778 = vmatpush1.msra.mxu0 0.0
    %3779 = vmatprep.subr.mxu0 0.0
    %3780 = vmatpush1.msra.mxu0 0.0
    %3781 = vmatprep.subr.mxu0 0.0
    %3782 = vmatpush1.msra.mxu0 0.0
    %3783 = vmatprep.subr.mxu0 0.0
    %3784 = vmatpush1.msra.mxu0 0.0
    %3785 = vmatprep.subr.mxu0 0.0
    %3786 = vmatpush1.msra.mxu0 0.0
    %3787 = vmatprep.subr.mxu0 0.0
    %3788 = vmatpush1.msra.mxu0 0.0
    %3789 = vmatprep.subr.mxu0 0.0
    %3790 = vmatpush1.msra.mxu0 0.0
    %3791 = vmatprep.subr.mxu0 0.0
    %3792 = vmatpush1.msra.mxu0 0.0
    %3793 = vmatprep.subr.mxu0 0.0
    %3794 = vmatpush1.msra.mxu0 0.0
    %3795 = vmatprep.subr.mxu0 0.0
    %3796 = vmatpush1.msra.mxu0 0.0
    %3797 = vmatprep.subr.mxu0 0.0
    %3798 = vmatpush1.msra.mxu0 0.0
    %3799 = vmatprep.subr.mxu0 0.0
    %3800 = vmatpush1.msra.mxu0 0.0
    %3801 = vmatprep.subr.mxu0 0.0
    %3802 = vmatpush1.msra.mxu0 0.0
    %3803 = vmatprep.subr.mxu0 0.0
    %v3804 = vand.u32 %v1787, 4294901760
    %v3805 = vsub.f32 %v1787, %v3804
    %3806 = vmatpush1.msra.mxu0 %v3805
    %3807 = vmatprep.subr.mxu0 0.0
    %v3808 = vand.u32 %v1781, 4294901760
    %v3809 = vsub.f32 %v1781, %v3808
    %3810 = vmatpush1.msra.mxu0 %v3809
    %3811 = vmatprep.subr.mxu0 0.0
    %3812 = vmatpush2.msra.mxu0 0.0
    %3813 = vmatprep.subr.mxu0 0.0
    %3814 = vmatpush2.msra.mxu0 0.0
    %3815 = vmatprep.subr.mxu0 0.0
    %3816 = vmatpush2.msra.mxu0 0.0
    %3817 = vmatprep.subr.mxu0 0.0
    %3818 = vmatpush2.msra.mxu0 0.0
    %3819 = vmatprep.subr.mxu0 0.0
    %3820 = vmatpush2.msra.mxu0 0.0
    %3821 = vmatprep.subr.mxu0 0.0
    %3822 = vmatpush2.msra.mxu0 0.0
    %3823 = vmatprep.subr.mxu0 0.0
    %3824 = vmatpush2.msra.mxu0 0.0
    %3825 = vmatprep.subr.mxu0 0.0
    %3826 = vmatpush2.msra.mxu0 0.0
    %3827 = vmatprep.subr.mxu0 0.0
    %3828 = vmatpush2.msra.mxu0 0.0
    %3829 = vmatprep.subr.mxu0 0.0
    %3830 = vmatpush2.msra.mxu0 0.0
    %3831 = vmatprep.subr.mxu0 0.0
    %3832 = vmatpush2.msra.mxu0 0.0
    %3833 = vmatprep.subr.mxu0 0.0
    %3834 = vmatpush2.msra.mxu0 0.0
    %3835 = vmatprep.subr.mxu0 0.0
    %3836 = vmatpush2.msra.mxu0 0.0
    %3837 = vmatprep.subr.mxu0 0.0
    %3838 = vmatpush2.msra.mxu0 0.0
    %3839 = vmatprep.subr.mxu0 0.0
    %3840 = vmatpush2.msra.mxu0 0.0
    %3841 = vmatprep.subr.mxu0 0.0
    %3842 = vmatpush2.msra.mxu0 0.0
    %3843 = vmatprep.mubr.f32.mxu0 0.0
    %v3844 = vand.u32 %v3596, 4294901760
    %v3845 = vsub.f32 %v3596, %v3844
    %3846 = vmatmul.mubr.f32.gmra.mxu0 %v3845
    %v3847 = vpop.f32.mrf.mxu0
    %v3848 = vadd.f32 %v3766, %v3847
    %v3849 = vpop.f32.mrf.mxu0
    %3850 = vmatprep.mubr.f32.mxu0 0.0
    %v3851 = vand.u32 %v3599, 4294901760
    %v3852 = vsub.f32 %v3599, %v3851
    %3853 = vmatmul.mubr.f32.gmra.mxu0 %v3852
    %v3854 = vpop.f32.mrf.mxu0
    %v3855 = vadd.f32 %v3772, %v3854
    %v3856 = vpop.f32.mrf.mxu0
    %3857 = vdwg.mxu0
    %3858 = vmatprep.subr.mxu0 0.0
    %3859 = vmatpush1.msra.mxu0 0.0
    %3860 = vmatprep.subr.mxu0 0.0
    %3861 = vmatpush1.msra.mxu0 0.0
    %3862 = vmatprep.subr.mxu0 0.0
    %3863 = vmatpush1.msra.mxu0 0.0
    %3864 = vmatprep.subr.mxu0 0.0
    %3865 = vmatpush1.msra.mxu0 0.0
    %3866 = vmatprep.subr.mxu0 0.0
    %3867 = vmatpush1.msra.mxu0 0.0
    %3868 = vmatprep.subr.mxu0 0.0
    %3869 = vmatpush1.msra.mxu0 0.0
    %3870 = vmatprep.subr.mxu0 0.0
    %3871 = vmatpush1.msra.mxu0 0.0
    %3872 = vmatprep.subr.mxu0 0.0
    %3873 = vmatpush1.msra.mxu0 0.0
    %3874 = vmatprep.subr.mxu0 0.0
    %3875 = vmatpush1.msra.mxu0 0.0
    %3876 = vmatprep.subr.mxu0 0.0
    %3877 = vmatpush1.msra.mxu0 0.0
    %3878 = vmatprep.subr.mxu0 0.0
    %3879 = vmatpush1.msra.mxu0 0.0
    %3880 = vmatprep.subr.mxu0 0.0
    %3881 = vmatpush1.msra.mxu0 0.0
    %3882 = vmatprep.subr.mxu0 0.0
    %3883 = vmatpush1.msra.mxu0 0.0
    %3884 = vmatprep.subr.mxu0 0.0
    %3885 = vmatpush1.msra.mxu0 0.0
    %3886 = vmatprep.subr.mxu0 0.0
    %v3887 = vand.u32 %v1787, 4294901760
    %3888 = vmatpush1.msra.mxu0 %v3887
    %3889 = vmatprep.subr.mxu0 0.0
    %v3890 = vand.u32 %v1781, 4294901760
    %3891 = vmatpush1.msra.mxu0 %v3890
    %3892 = vmatprep.subr.mxu0 0.0
    %3893 = vmatpush2.msra.mxu0 0.0
    %3894 = vmatprep.subr.mxu0 0.0
    %3895 = vmatpush2.msra.mxu0 0.0
    %3896 = vmatprep.subr.mxu0 0.0
    %3897 = vmatpush2.msra.mxu0 0.0
    %3898 = vmatprep.subr.mxu0 0.0
    %3899 = vmatpush2.msra.mxu0 0.0
    %3900 = vmatprep.subr.mxu0 0.0
    %3901 = vmatpush2.msra.mxu0 0.0
    %3902 = vmatprep.subr.mxu0 0.0
    %3903 = vmatpush2.msra.mxu0 0.0
    %3904 = vmatprep.subr.mxu0 0.0
    %3905 = vmatpush2.msra.mxu0 0.0
    %3906 = vmatprep.subr.mxu0 0.0
    %3907 = vmatpush2.msra.mxu0 0.0
    %3908 = vmatprep.subr.mxu0 0.0
    %3909 = vmatpush2.msra.mxu0 0.0
    %3910 = vmatprep.subr.mxu0 0.0
    %3911 = vmatpush2.msra.mxu0 0.0
    %3912 = vmatprep.subr.mxu0 0.0
    %3913 = vmatpush2.msra.mxu0 0.0
    %3914 = vmatprep.subr.mxu0 0.0
    %3915 = vmatpush2.msra.mxu0 0.0
    %3916 = vmatprep.subr.mxu0 0.0
    %3917 = vmatpush2.msra.mxu0 0.0
    %3918 = vmatprep.subr.mxu0 0.0
    %3919 = vmatpush2.msra.mxu0 0.0
    %3920 = vmatprep.subr.mxu0 0.0
    %3921 = vmatpush2.msra.mxu0 0.0
    %3922 = vmatprep.subr.mxu0 0.0
    %3923 = vmatpush2.msra.mxu0 0.0
    %3924 = vmatprep.mubr.f32.mxu0 0.0
    %v3925 = vand.u32 %v3596, 4294901760
    %v3926 = vsub.f32 %v3596, %v3925
    %v3927 = vand.u32 %v3926, 4294901760
    %3928 = vmatmul.mubr.f32.gmra.mxu0 %v3927
    %v3929 = vpop.f32.mrf.mxu0
    %v3930 = vadd.f32 %v3848, %v3929
    %v3931 = vpop.f32.mrf.mxu0
    %3932 = vmatprep.mubr.f32.mxu0 0.0
    %v3933 = vand.u32 %v3599, 4294901760
    %v3934 = vsub.f32 %v3599, %v3933
    %v3935 = vand.u32 %v3934, 4294901760
    %3936 = vmatmul.mubr.f32.gmra.mxu0 %v3935
    %v3937 = vpop.f32.mrf.mxu0
    %v3938 = vadd.f32 %v3855, %v3937
    %v3939 = vpop.f32.mrf.mxu0
    %3940 = vdwg.mxu0
    %3941 = vmatprep.subr.mxu0 0.0
    %3942 = vmatpush1.msra.mxu0 0.0
    %3943 = vmatprep.subr.mxu0 0.0
    %3944 = vmatpush1.msra.mxu0 0.0
    %3945 = vmatprep.subr.mxu0 0.0
    %3946 = vmatpush1.msra.mxu0 0.0
    %3947 = vmatprep.subr.mxu0 0.0
    %3948 = vmatpush1.msra.mxu0 0.0
    %3949 = vmatprep.subr.mxu0 0.0
    %3950 = vmatpush1.msra.mxu0 0.0
    %3951 = vmatprep.subr.mxu0 0.0
    %3952 = vmatpush1.msra.mxu0 0.0
    %3953 = vmatprep.subr.mxu0 0.0
    %3954 = vmatpush1.msra.mxu0 0.0
    %3955 = vmatprep.subr.mxu0 0.0
    %3956 = vmatpush1.msra.mxu0 0.0
    %3957 = vmatprep.subr.mxu0 0.0
    %3958 = vmatpush1.msra.mxu0 0.0
    %3959 = vmatprep.subr.mxu0 0.0
    %3960 = vmatpush1.msra.mxu0 0.0
    %3961 = vmatprep.subr.mxu0 0.0
    %3962 = vmatpush1.msra.mxu0 0.0
    %3963 = vmatprep.subr.mxu0 0.0
    %3964 = vmatpush1.msra.mxu0 0.0
    %3965 = vmatprep.subr.mxu0 0.0
    %3966 = vmatpush1.msra.mxu0 0.0
    %3967 = vmatprep.subr.mxu0 0.0
    %3968 = vmatpush1.msra.mxu0 0.0
    %3969 = vmatprep.subr.mxu0 0.0
    %v3970 = vand.u32 %v1787, 4294901760
    %v3971 = vsub.f32 %v1787, %v3970
    %v3972 = vand.u32 %v3971, 4294901760
    %3973 = vmatpush1.msra.mxu0 %v3972
    %3974 = vmatprep.subr.mxu0 0.0
    %v3975 = vand.u32 %v1781, 4294901760
    %v3976 = vsub.f32 %v1781, %v3975
    %v3977 = vand.u32 %v3976, 4294901760
    %3978 = vmatpush1.msra.mxu0 %v3977
    %3979 = vmatprep.subr.mxu0 0.0
    %3980 = vmatpush2.msra.mxu0 0.0
    %3981 = vmatprep.subr.mxu0 0.0
    %3982 = vmatpush2.msra.mxu0 0.0
    %3983 = vmatprep.subr.mxu0 0.0
    %3984 = vmatpush2.msra.mxu0 0.0
    %3985 = vmatprep.subr.mxu0 0.0
    %3986 = vmatpush2.msra.mxu0 0.0
    %3987 = vmatprep.subr.mxu0 0.0
    %3988 = vmatpush2.msra.mxu0 0.0
    %3989 = vmatprep.subr.mxu0 0.0
    %3990 = vmatpush2.msra.mxu0 0.0
    %3991 = vmatprep.subr.mxu0 0.0
    %3992 = vmatpush2.msra.mxu0 0.0
    %3993 = vmatprep.subr.mxu0 0.0
    %3994 = vmatpush2.msra.mxu0 0.0
    %3995 = vmatprep.subr.mxu0 0.0
    %3996 = vmatpush2.msra.mxu0 0.0
    %3997 = vmatprep.subr.mxu0 0.0
    %3998 = vmatpush2.msra.mxu0 0.0
    %3999 = vmatprep.subr.mxu0 0.0
    %4000 = vmatpush2.msra.mxu0 0.0
    %4001 = vmatprep.subr.mxu0 0.0
    %4002 = vmatpush2.msra.mxu0 0.0
    %4003 = vmatprep.subr.mxu0 0.0
    %4004 = vmatpush2.msra.mxu0 0.0
    %4005 = vmatprep.subr.mxu0 0.0
    %4006 = vmatpush2.msra.mxu0 0.0
    %4007 = vmatprep.subr.mxu0 0.0
    %4008 = vmatpush2.msra.mxu0 0.0
    %4009 = vmatprep.subr.mxu0 0.0
    %4010 = vmatpush2.msra.mxu0 0.0
    %4011 = vmatprep.mubr.f32.mxu0 0.0
    %v4012 = vand.u32 %v3596, 4294901760
    %4013 = vmatmul.mubr.f32.gmra.mxu0 %v4012
    %v4014 = vpop.f32.mrf.mxu0
    %v4015 = vadd.f32 %v3930, %v4014
    %v4016 = vpop.f32.mrf.mxu0
    %4017 = vmatprep.mubr.f32.mxu0 0.0
    %v4018 = vand.u32 %v3599, 4294901760
    %4019 = vmatmul.mubr.f32.gmra.mxu0 %v4018
    %v4020 = vpop.f32.mrf.mxu0
    %v4021 = vadd.f32 %v3938, %v4020
    %v4022 = vpop.f32.mrf.mxu0
    %4023 = vdwg.mxu0
    %4024 = vmatprep.subr.mxu0 0.0
    %4025 = vmatpush1.msra.mxu0 0.0
    %4026 = vmatprep.subr.mxu0 0.0
    %4027 = vmatpush1.msra.mxu0 0.0
    %4028 = vmatprep.subr.mxu0 0.0
    %4029 = vmatpush1.msra.mxu0 0.0
    %4030 = vmatprep.subr.mxu0 0.0
    %4031 = vmatpush1.msra.mxu0 0.0
    %4032 = vmatprep.subr.mxu0 0.0
    %4033 = vmatpush1.msra.mxu0 0.0
    %4034 = vmatprep.subr.mxu0 0.0
    %4035 = vmatpush1.msra.mxu0 0.0
    %4036 = vmatprep.subr.mxu0 0.0
    %4037 = vmatpush1.msra.mxu0 0.0
    %4038 = vmatprep.subr.mxu0 0.0
    %4039 = vmatpush1.msra.mxu0 0.0
    %4040 = vmatprep.subr.mxu0 0.0
    %4041 = vmatpush1.msra.mxu0 0.0
    %4042 = vmatprep.subr.mxu0 0.0
    %4043 = vmatpush1.msra.mxu0 0.0
    %4044 = vmatprep.subr.mxu0 0.0
    %4045 = vmatpush1.msra.mxu0 0.0
    %4046 = vmatprep.subr.mxu0 0.0
    %4047 = vmatpush1.msra.mxu0 0.0
    %4048 = vmatprep.subr.mxu0 0.0
    %4049 = vmatpush1.msra.mxu0 0.0
    %4050 = vmatprep.subr.mxu0 0.0
    %4051 = vmatpush1.msra.mxu0 0.0
    %4052 = vmatprep.subr.mxu0 0.0
    %v4053 = vand.u32 %v1787, 4294901760
    %4054 = vmatpush1.msra.mxu0 %v4053
    %4055 = vmatprep.subr.mxu0 0.0
    %v4056 = vand.u32 %v1781, 4294901760
    %4057 = vmatpush1.msra.mxu0 %v4056
    %4058 = vmatprep.subr.mxu0 0.0
    %4059 = vmatpush2.msra.mxu0 0.0
    %4060 = vmatprep.subr.mxu0 0.0
    %4061 = vmatpush2.msra.mxu0 0.0
    %4062 = vmatprep.subr.mxu0 0.0
    %4063 = vmatpush2.msra.mxu0 0.0
    %4064 = vmatprep.subr.mxu0 0.0
    %4065 = vmatpush2.msra.mxu0 0.0
    %4066 = vmatprep.subr.mxu0 0.0
    %4067 = vmatpush2.msra.mxu0 0.0
    %4068 = vmatprep.subr.mxu0 0.0
    %4069 = vmatpush2.msra.mxu0 0.0
    %4070 = vmatprep.subr.mxu0 0.0
    %4071 = vmatpush2.msra.mxu0 0.0
    %4072 = vmatprep.subr.mxu0 0.0
    %4073 = vmatpush2.msra.mxu0 0.0
    %4074 = vmatprep.subr.mxu0 0.0
    %4075 = vmatpush2.msra.mxu0 0.0
    %4076 = vmatprep.subr.mxu0 0.0
    %4077 = vmatpush2.msra.mxu0 0.0
    %4078 = vmatprep.subr.mxu0 0.0
    %4079 = vmatpush2.msra.mxu0 0.0
    %4080 = vmatprep.subr.mxu0 0.0
    %4081 = vmatpush2.msra.mxu0 0.0
    %4082 = vmatprep.subr.mxu0 0.0
    %4083 = vmatpush2.msra.mxu0 0.0
    %4084 = vmatprep.subr.mxu0 0.0
    %4085 = vmatpush2.msra.mxu0 0.0
    %4086 = vmatprep.subr.mxu0 0.0
    %4087 = vmatpush2.msra.mxu0 0.0
    %4088 = vmatprep.subr.mxu0 0.0
    %4089 = vmatpush2.msra.mxu0 0.0
    %4090 = vmatprep.mubr.f32.mxu0 0.0
    %v4091 = vand.u32 %v3596, 4294901760
    %4092 = vmatmul.mubr.f32.gmra.mxu0 %v4091
    %v4093 = vpop.f32.mrf.mxu0
    %v4094 = vadd.f32 %v4015, %v4093
    %v4095 = vpop.f32.mrf.mxu0
    %4096 = vmatprep.mubr.f32.mxu0 0.0
    %v4097 = vand.u32 %v3599, 4294901760
    %4098 = vmatmul.mubr.f32.gmra.mxu0 %v4097
    %v4099 = vpop.f32.mrf.mxu0
    %v4100 = vadd.f32 %v4021, %v4099
    %v4101 = vpop.f32.mrf.mxu0
    %4102 = vdwg.mxu0
    %v4103 = vmul.f32 %v4094, %v3076
    %v4104 = vmul.f32 %v4100, %v3077
    %v4105 = vld [vmem:[%s8] sm:$0x1]
    %v4107 = vsel %vm60, %v4105, 0
    %4109 = vmatprep.subr.mxu0 0.0
    %4110 = vmatpush1.msra.mxu0 0.0
    %4111 = vmatprep.subr.mxu0 0.0
    %4112 = vmatpush1.msra.mxu0 0.0
    %4113 = vmatprep.subr.mxu0 0.0
    %4114 = vmatpush1.msra.mxu0 0.0
    %4115 = vmatprep.subr.mxu0 0.0
    %4116 = vmatpush1.msra.mxu0 0.0
    %4117 = vmatprep.subr.mxu0 0.0
    %4118 = vmatpush1.msra.mxu0 0.0
    %4119 = vmatprep.subr.mxu0 0.0
    %4120 = vmatpush1.msra.mxu0 0.0
    %4121 = vmatprep.subr.mxu0 0.0
    %4122 = vmatpush1.msra.mxu0 0.0
    %4123 = vmatprep.subr.mxu0 0.0
    %4124 = vmatpush1.msra.mxu0 0.0
    %4125 = vmatprep.subr.mxu0 0.0
    %4126 = vmatpush1.msra.mxu0 0.0
    %4127 = vmatprep.subr.mxu0 0.0
    %4128 = vmatpush1.msra.mxu0 0.0
    %4129 = vmatprep.subr.mxu0 0.0
    %4130 = vmatpush1.msra.mxu0 0.0
    %4131 = vmatprep.subr.mxu0 0.0
    %4132 = vmatpush1.msra.mxu0 0.0
    %4133 = vmatprep.subr.mxu0 0.0
    %4134 = vmatpush1.msra.mxu0 0.0
    %4135 = vmatprep.subr.mxu0 0.0
    %4136 = vmatpush1.msra.mxu0 0.0
    %4137 = vmatprep.subr.mxu0 0.0
    %v4138 = vand.u32 %v4104, 4294901760
    %4139 = vmatpush1.msra.mxu0 %v4138
    %4140 = vmatprep.subr.mxu0 0.0
    %v4141 = vand.u32 %v4103, 4294901760
    %4142 = vmatpush1.msra.mxu0 %v4141
    %4143 = vmatprep.subr.mxu0 0.0
    %4144 = vmatpush2.msra.mxu0 0.0
    %4145 = vmatprep.subr.mxu0 0.0
    %4146 = vmatpush2.msra.mxu0 0.0
    %4147 = vmatprep.subr.mxu0 0.0
    %4148 = vmatpush2.msra.mxu0 0.0
    %4149 = vmatprep.subr.mxu0 0.0
    %4150 = vmatpush2.msra.mxu0 0.0
    %4151 = vmatprep.subr.mxu0 0.0
    %4152 = vmatpush2.msra.mxu0 0.0
    %4153 = vmatprep.subr.mxu0 0.0
    %4154 = vmatpush2.msra.mxu0 0.0
    %4155 = vmatprep.subr.mxu0 0.0
    %4156 = vmatpush2.msra.mxu0 0.0
    %4157 = vmatprep.subr.mxu0 0.0
    %4158 = vmatpush2.msra.mxu0 0.0
    %4159 = vmatprep.subr.mxu0 0.0
    %4160 = vmatpush2.msra.mxu0 0.0
    %4161 = vmatprep.subr.mxu0 0.0
    %4162 = vmatpush2.msra.mxu0 0.0
    %4163 = vmatprep.subr.mxu0 0.0
    %4164 = vmatpush2.msra.mxu0 0.0
    %4165 = vmatprep.subr.mxu0 0.0
    %4166 = vmatpush2.msra.mxu0 0.0
    %4167 = vmatprep.subr.mxu0 0.0
    %4168 = vmatpush2.msra.mxu0 0.0
    %4169 = vmatprep.subr.mxu0 0.0
    %4170 = vmatpush2.msra.mxu0 0.0
    %4171 = vmatprep.subr.mxu0 0.0
    %4172 = vmatpush2.msra.mxu0 0.0
    %4173 = vmatprep.subr.mxu0 0.0
    %4174 = vmatpush2.msra.mxu0 0.0
    %4175 = vmatprep.mubr.f32.mxu0 0.0
    %v4176 = vand.u32 %v4107, 4294901760
    %v4177 = vsub.f32 %v4107, %v4176
    %v4178 = vand.u32 %v4177, 4294901760
    %v4179 = vsub.f32 %v4177, %v4178
    %v4180 = vand.u32 %v4179, 4294901760
    %4181 = vmatmul.mubr.f32.gmra.mxu0 %v4180
    %v4182 = vpop.f32.mrf.mxu0
    %v4183 = vadd.f32 0.0, %v4182
    %v4184 = vpop.f32.mrf.mxu0
    %4185 = vdwg.mxu0
    %4186 = vmatprep.subr.mxu0 0.0
    %4187 = vmatpush1.msra.mxu0 0.0
    %4188 = vmatprep.subr.mxu0 0.0
    %4189 = vmatpush1.msra.mxu0 0.0
    %4190 = vmatprep.subr.mxu0 0.0
    %4191 = vmatpush1.msra.mxu0 0.0
    %4192 = vmatprep.subr.mxu0 0.0
    %4193 = vmatpush1.msra.mxu0 0.0
    %4194 = vmatprep.subr.mxu0 0.0
    %4195 = vmatpush1.msra.mxu0 0.0
    %4196 = vmatprep.subr.mxu0 0.0
    %4197 = vmatpush1.msra.mxu0 0.0
    %4198 = vmatprep.subr.mxu0 0.0
    %4199 = vmatpush1.msra.mxu0 0.0
    %4200 = vmatprep.subr.mxu0 0.0
    %4201 = vmatpush1.msra.mxu0 0.0
    %4202 = vmatprep.subr.mxu0 0.0
    %4203 = vmatpush1.msra.mxu0 0.0
    %4204 = vmatprep.subr.mxu0 0.0
    %4205 = vmatpush1.msra.mxu0 0.0
    %4206 = vmatprep.subr.mxu0 0.0
    %4207 = vmatpush1.msra.mxu0 0.0
    %4208 = vmatprep.subr.mxu0 0.0
    %4209 = vmatpush1.msra.mxu0 0.0
    %4210 = vmatprep.subr.mxu0 0.0
    %4211 = vmatpush1.msra.mxu0 0.0
    %4212 = vmatprep.subr.mxu0 0.0
    %4213 = vmatpush1.msra.mxu0 0.0
    %4214 = vmatprep.subr.mxu0 0.0
    %v4215 = vand.u32 %v4104, 4294901760
    %v4216 = vsub.f32 %v4104, %v4215
    %v4217 = vand.u32 %v4216, 4294901760
    %v4218 = vsub.f32 %v4216, %v4217
    %v4219 = vand.u32 %v4218, 4294901760
    %4220 = vmatpush1.msra.mxu0 %v4219
    %4221 = vmatprep.subr.mxu0 0.0
    %v4222 = vand.u32 %v4103, 4294901760
    %v4223 = vsub.f32 %v4103, %v4222
    %v4224 = vand.u32 %v4223, 4294901760
    %v4225 = vsub.f32 %v4223, %v4224
    %v4226 = vand.u32 %v4225, 4294901760
    %4227 = vmatpush1.msra.mxu0 %v4226
    %4228 = vmatprep.subr.mxu0 0.0
    %4229 = vmatpush2.msra.mxu0 0.0
    %4230 = vmatprep.subr.mxu0 0.0
    %4231 = vmatpush2.msra.mxu0 0.0
    %4232 = vmatprep.subr.mxu0 0.0
    %4233 = vmatpush2.msra.mxu0 0.0
    %4234 = vmatprep.subr.mxu0 0.0
    %4235 = vmatpush2.msra.mxu0 0.0
    %4236 = vmatprep.subr.mxu0 0.0
    %4237 = vmatpush2.msra.mxu0 0.0
    %4238 = vmatprep.subr.mxu0 0.0
    %4239 = vmatpush2.msra.mxu0 0.0
    %4240 = vmatprep.subr.mxu0 0.0
    %4241 = vmatpush2.msra.mxu0 0.0
    %4242 = vmatprep.subr.mxu0 0.0
    %4243 = vmatpush2.msra.mxu0 0.0
    %4244 = vmatprep.subr.mxu0 0.0
    %4245 = vmatpush2.msra.mxu0 0.0
    %4246 = vmatprep.subr.mxu0 0.0
    %4247 = vmatpush2.msra.mxu0 0.0
    %4248 = vmatprep.subr.mxu0 0.0
    %4249 = vmatpush2.msra.mxu0 0.0
    %4250 = vmatprep.subr.mxu0 0.0
    %4251 = vmatpush2.msra.mxu0 0.0
    %4252 = vmatprep.subr.mxu0 0.0
    %4253 = vmatpush2.msra.mxu0 0.0
    %4254 = vmatprep.subr.mxu0 0.0
    %4255 = vmatpush2.msra.mxu0 0.0
    %4256 = vmatprep.subr.mxu0 0.0
    %4257 = vmatpush2.msra.mxu0 0.0
    %4258 = vmatprep.subr.mxu0 0.0
    %4259 = vmatpush2.msra.mxu0 0.0
    %4260 = vmatprep.mubr.f32.mxu0 0.0
    %v4261 = vand.u32 %v4107, 4294901760
    %4262 = vmatmul.mubr.f32.gmra.mxu0 %v4261
    %v4263 = vpop.f32.mrf.mxu0
    %v4264 = vadd.f32 %v4183, %v4263
    %v4265 = vpop.f32.mrf.mxu0
    %4266 = vdwg.mxu0
    %4267 = vmatprep.subr.mxu0 0.0
    %4268 = vmatpush1.msra.mxu0 0.0
    %4269 = vmatprep.subr.mxu0 0.0
    %4270 = vmatpush1.msra.mxu0 0.0
    %4271 = vmatprep.subr.mxu0 0.0
    %4272 = vmatpush1.msra.mxu0 0.0
    %4273 = vmatprep.subr.mxu0 0.0
    %4274 = vmatpush1.msra.mxu0 0.0
    %4275 = vmatprep.subr.mxu0 0.0
    %4276 = vmatpush1.msra.mxu0 0.0
    %4277 = vmatprep.subr.mxu0 0.0
    %4278 = vmatpush1.msra.mxu0 0.0
    %4279 = vmatprep.subr.mxu0 0.0
    %4280 = vmatpush1.msra.mxu0 0.0
    %4281 = vmatprep.subr.mxu0 0.0
    %4282 = vmatpush1.msra.mxu0 0.0
    %4283 = vmatprep.subr.mxu0 0.0
    %4284 = vmatpush1.msra.mxu0 0.0
    %4285 = vmatprep.subr.mxu0 0.0
    %4286 = vmatpush1.msra.mxu0 0.0
    %4287 = vmatprep.subr.mxu0 0.0
    %4288 = vmatpush1.msra.mxu0 0.0
    %4289 = vmatprep.subr.mxu0 0.0
    %4290 = vmatpush1.msra.mxu0 0.0
    %4291 = vmatprep.subr.mxu0 0.0
    %4292 = vmatpush1.msra.mxu0 0.0
    %4293 = vmatprep.subr.mxu0 0.0
    %4294 = vmatpush1.msra.mxu0 0.0
    %4295 = vmatprep.subr.mxu0 0.0
    %v4296 = vand.u32 %v4104, 4294901760
    %v4297 = vsub.f32 %v4104, %v4296
    %4298 = vmatpush1.msra.mxu0 %v4297
    %4299 = vmatprep.subr.mxu0 0.0
    %v4300 = vand.u32 %v4103, 4294901760
    %v4301 = vsub.f32 %v4103, %v4300
    %4302 = vmatpush1.msra.mxu0 %v4301
    %4303 = vmatprep.subr.mxu0 0.0
    %4304 = vmatpush2.msra.mxu0 0.0
    %4305 = vmatprep.subr.mxu0 0.0
    %4306 = vmatpush2.msra.mxu0 0.0
    %4307 = vmatprep.subr.mxu0 0.0
    %4308 = vmatpush2.msra.mxu0 0.0
    %4309 = vmatprep.subr.mxu0 0.0
    %4310 = vmatpush2.msra.mxu0 0.0
    %4311 = vmatprep.subr.mxu0 0.0
    %4312 = vmatpush2.msra.mxu0 0.0
    %4313 = vmatprep.subr.mxu0 0.0
    %4314 = vmatpush2.msra.mxu0 0.0
    %4315 = vmatprep.subr.mxu0 0.0
    %4316 = vmatpush2.msra.mxu0 0.0
    %4317 = vmatprep.subr.mxu0 0.0
    %4318 = vmatpush2.msra.mxu0 0.0
    %4319 = vmatprep.subr.mxu0 0.0
    %4320 = vmatpush2.msra.mxu0 0.0
    %4321 = vmatprep.subr.mxu0 0.0
    %4322 = vmatpush2.msra.mxu0 0.0
    %4323 = vmatprep.subr.mxu0 0.0
    %4324 = vmatpush2.msra.mxu0 0.0
    %4325 = vmatprep.subr.mxu0 0.0
    %4326 = vmatpush2.msra.mxu0 0.0
    %4327 = vmatprep.subr.mxu0 0.0
    %4328 = vmatpush2.msra.mxu0 0.0
    %4329 = vmatprep.subr.mxu0 0.0
    %4330 = vmatpush2.msra.mxu0 0.0
    %4331 = vmatprep.subr.mxu0 0.0
    %4332 = vmatpush2.msra.mxu0 0.0
    %4333 = vmatprep.subr.mxu0 0.0
    %4334 = vmatpush2.msra.mxu0 0.0
    %4335 = vmatprep.mubr.f32.mxu0 0.0
    %v4336 = vand.u32 %v4107, 4294901760
    %v4337 = vsub.f32 %v4107, %v4336
    %4338 = vmatmul.mubr.f32.gmra.mxu0 %v4337
    %v4339 = vpop.f32.mrf.mxu0
    %v4340 = vadd.f32 %v4264, %v4339
    %v4341 = vpop.f32.mrf.mxu0
    %4342 = vdwg.mxu0
    %4343 = vmatprep.subr.mxu0 0.0
    %4344 = vmatpush1.msra.mxu0 0.0
    %4345 = vmatprep.subr.mxu0 0.0
    %4346 = vmatpush1.msra.mxu0 0.0
    %4347 = vmatprep.subr.mxu0 0.0
    %4348 = vmatpush1.msra.mxu0 0.0
    %4349 = vmatprep.subr.mxu0 0.0
    %4350 = vmatpush1.msra.mxu0 0.0
    %4351 = vmatprep.subr.mxu0 0.0
    %4352 = vmatpush1.msra.mxu0 0.0
    %4353 = vmatprep.subr.mxu0 0.0
    %4354 = vmatpush1.msra.mxu0 0.0
    %4355 = vmatprep.subr.mxu0 0.0
    %4356 = vmatpush1.msra.mxu0 0.0
    %4357 = vmatprep.subr.mxu0 0.0
    %4358 = vmatpush1.msra.mxu0 0.0
    %4359 = vmatprep.subr.mxu0 0.0
    %4360 = vmatpush1.msra.mxu0 0.0
    %4361 = vmatprep.subr.mxu0 0.0
    %4362 = vmatpush1.msra.mxu0 0.0
    %4363 = vmatprep.subr.mxu0 0.0
    %4364 = vmatpush1.msra.mxu0 0.0
    %4365 = vmatprep.subr.mxu0 0.0
    %4366 = vmatpush1.msra.mxu0 0.0
    %4367 = vmatprep.subr.mxu0 0.0
    %4368 = vmatpush1.msra.mxu0 0.0
    %4369 = vmatprep.subr.mxu0 0.0
    %4370 = vmatpush1.msra.mxu0 0.0
    %4371 = vmatprep.subr.mxu0 0.0
    %v4372 = vand.u32 %v4104, 4294901760
    %4373 = vmatpush1.msra.mxu0 %v4372
    %4374 = vmatprep.subr.mxu0 0.0
    %v4375 = vand.u32 %v4103, 4294901760
    %4376 = vmatpush1.msra.mxu0 %v4375
    %4377 = vmatprep.subr.mxu0 0.0
    %4378 = vmatpush2.msra.mxu0 0.0
    %4379 = vmatprep.subr.mxu0 0.0
    %4380 = vmatpush2.msra.mxu0 0.0
    %4381 = vmatprep.subr.mxu0 0.0
    %4382 = vmatpush2.msra.mxu0 0.0
    %4383 = vmatprep.subr.mxu0 0.0
    %4384 = vmatpush2.msra.mxu0 0.0
    %4385 = vmatprep.subr.mxu0 0.0
    %4386 = vmatpush2.msra.mxu0 0.0
    %4387 = vmatprep.subr.mxu0 0.0
    %4388 = vmatpush2.msra.mxu0 0.0
    %4389 = vmatprep.subr.mxu0 0.0
    %4390 = vmatpush2.msra.mxu0 0.0
    %4391 = vmatprep.subr.mxu0 0.0
    %4392 = vmatpush2.msra.mxu0 0.0
    %4393 = vmatprep.subr.mxu0 0.0
    %4394 = vmatpush2.msra.mxu0 0.0
    %4395 = vmatprep.subr.mxu0 0.0
    %4396 = vmatpush2.msra.mxu0 0.0
    %4397 = vmatprep.subr.mxu0 0.0
    %4398 = vmatpush2.msra.mxu0 0.0
    %4399 = vmatprep.subr.mxu0 0.0
    %4400 = vmatpush2.msra.mxu0 0.0
    %4401 = vmatprep.subr.mxu0 0.0
    %4402 = vmatpush2.msra.mxu0 0.0
    %4403 = vmatprep.subr.mxu0 0.0
    %4404 = vmatpush2.msra.mxu0 0.0
    %4405 = vmatprep.subr.mxu0 0.0
    %4406 = vmatpush2.msra.mxu0 0.0
    %4407 = vmatprep.subr.mxu0 0.0
    %4408 = vmatpush2.msra.mxu0 0.0
    %4409 = vmatprep.mubr.f32.mxu0 0.0
    %v4410 = vand.u32 %v4107, 4294901760
    %v4411 = vsub.f32 %v4107, %v4410
    %v4412 = vand.u32 %v4411, 4294901760
    %4413 = vmatmul.mubr.f32.gmra.mxu0 %v4412
    %v4414 = vpop.f32.mrf.mxu0
    %v4415 = vadd.f32 %v4340, %v4414
    %v4416 = vpop.f32.mrf.mxu0
    %4417 = vdwg.mxu0
    %4418 = vmatprep.subr.mxu0 0.0
    %4419 = vmatpush1.msra.mxu0 0.0
    %4420 = vmatprep.subr.mxu0 0.0
    %4421 = vmatpush1.msra.mxu0 0.0
    %4422 = vmatprep.subr.mxu0 0.0
    %4423 = vmatpush1.msra.mxu0 0.0
    %4424 = vmatprep.subr.mxu0 0.0
    %4425 = vmatpush1.msra.mxu0 0.0
    %4426 = vmatprep.subr.mxu0 0.0
    %4427 = vmatpush1.msra.mxu0 0.0
    %4428 = vmatprep.subr.mxu0 0.0
    %4429 = vmatpush1.msra.mxu0 0.0
    %4430 = vmatprep.subr.mxu0 0.0
    %4431 = vmatpush1.msra.mxu0 0.0
    %4432 = vmatprep.subr.mxu0 0.0
    %4433 = vmatpush1.msra.mxu0 0.0
    %4434 = vmatprep.subr.mxu0 0.0
    %4435 = vmatpush1.msra.mxu0 0.0
    %4436 = vmatprep.subr.mxu0 0.0
    %4437 = vmatpush1.msra.mxu0 0.0
    %4438 = vmatprep.subr.mxu0 0.0
    %4439 = vmatpush1.msra.mxu0 0.0
    %4440 = vmatprep.subr.mxu0 0.0
    %4441 = vmatpush1.msra.mxu0 0.0
    %4442 = vmatprep.subr.mxu0 0.0
    %4443 = vmatpush1.msra.mxu0 0.0
    %4444 = vmatprep.subr.mxu0 0.0
    %4445 = vmatpush1.msra.mxu0 0.0
    %4446 = vmatprep.subr.mxu0 0.0
    %v4447 = vand.u32 %v4104, 4294901760
    %v4448 = vsub.f32 %v4104, %v4447
    %v4449 = vand.u32 %v4448, 4294901760
    %4450 = vmatpush1.msra.mxu0 %v4449
    %4451 = vmatprep.subr.mxu0 0.0
    %v4452 = vand.u32 %v4103, 4294901760
    %v4453 = vsub.f32 %v4103, %v4452
    %v4454 = vand.u32 %v4453, 4294901760
    %4455 = vmatpush1.msra.mxu0 %v4454
    %4456 = vmatprep.subr.mxu0 0.0
    %4457 = vmatpush2.msra.mxu0 0.0
    %4458 = vmatprep.subr.mxu0 0.0
    %4459 = vmatpush2.msra.mxu0 0.0
    %4460 = vmatprep.subr.mxu0 0.0
    %4461 = vmatpush2.msra.mxu0 0.0
    %4462 = vmatprep.subr.mxu0 0.0
    %4463 = vmatpush2.msra.mxu0 0.0
    %4464 = vmatprep.subr.mxu0 0.0
    %4465 = vmatpush2.msra.mxu0 0.0
    %4466 = vmatprep.subr.mxu0 0.0
    %4467 = vmatpush2.msra.mxu0 0.0
    %4468 = vmatprep.subr.mxu0 0.0
    %4469 = vmatpush2.msra.mxu0 0.0
    %4470 = vmatprep.subr.mxu0 0.0
    %4471 = vmatpush2.msra.mxu0 0.0
    %4472 = vmatprep.subr.mxu0 0.0
    %4473 = vmatpush2.msra.mxu0 0.0
    %4474 = vmatprep.subr.mxu0 0.0
    %4475 = vmatpush2.msra.mxu0 0.0
    %4476 = vmatprep.subr.mxu0 0.0
    %4477 = vmatpush2.msra.mxu0 0.0
    %4478 = vmatprep.subr.mxu0 0.0
    %4479 = vmatpush2.msra.mxu0 0.0
    %4480 = vmatprep.subr.mxu0 0.0
    %4481 = vmatpush2.msra.mxu0 0.0
    %4482 = vmatprep.subr.mxu0 0.0
    %4483 = vmatpush2.msra.mxu0 0.0
    %4484 = vmatprep.subr.mxu0 0.0
    %4485 = vmatpush2.msra.mxu0 0.0
    %4486 = vmatprep.subr.mxu0 0.0
    %4487 = vmatpush2.msra.mxu0 0.0
    %4488 = vmatprep.mubr.f32.mxu0 0.0
    %v4489 = vand.u32 %v4107, 4294901760
    %4490 = vmatmul.mubr.f32.gmra.mxu0 %v4489
    %v4491 = vpop.f32.mrf.mxu0
    %v4492 = vadd.f32 %v4415, %v4491
    %v4493 = vpop.f32.mrf.mxu0
    %4494 = vdwg.mxu0
    %4495 = vmatprep.subr.mxu0 0.0
    %4496 = vmatpush1.msra.mxu0 0.0
    %4497 = vmatprep.subr.mxu0 0.0
    %4498 = vmatpush1.msra.mxu0 0.0
    %4499 = vmatprep.subr.mxu0 0.0
    %4500 = vmatpush1.msra.mxu0 0.0
    %4501 = vmatprep.subr.mxu0 0.0
    %4502 = vmatpush1.msra.mxu0 0.0
    %4503 = vmatprep.subr.mxu0 0.0
    %4504 = vmatpush1.msra.mxu0 0.0
    %4505 = vmatprep.subr.mxu0 0.0
    %4506 = vmatpush1.msra.mxu0 0.0
    %4507 = vmatprep.subr.mxu0 0.0
    %4508 = vmatpush1.msra.mxu0 0.0
    %4509 = vmatprep.subr.mxu0 0.0
    %4510 = vmatpush1.msra.mxu0 0.0
    %4511 = vmatprep.subr.mxu0 0.0
    %4512 = vmatpush1.msra.mxu0 0.0
    %4513 = vmatprep.subr.mxu0 0.0
    %4514 = vmatpush1.msra.mxu0 0.0
    %4515 = vmatprep.subr.mxu0 0.0
    %4516 = vmatpush1.msra.mxu0 0.0
    %4517 = vmatprep.subr.mxu0 0.0
    %4518 = vmatpush1.msra.mxu0 0.0
    %4519 = vmatprep.subr.mxu0 0.0
    %4520 = vmatpush1.msra.mxu0 0.0
    %4521 = vmatprep.subr.mxu0 0.0
    %4522 = vmatpush1.msra.mxu0 0.0
    %4523 = vmatprep.subr.mxu0 0.0
    %v4524 = vand.u32 %v4104, 4294901760
    %4525 = vmatpush1.msra.mxu0 %v4524
    %4526 = vmatprep.subr.mxu0 0.0
    %v4527 = vand.u32 %v4103, 4294901760
    %4528 = vmatpush1.msra.mxu0 %v4527
    %4529 = vmatprep.subr.mxu0 0.0
    %4530 = vmatpush2.msra.mxu0 0.0
    %4531 = vmatprep.subr.mxu0 0.0
    %4532 = vmatpush2.msra.mxu0 0.0
    %4533 = vmatprep.subr.mxu0 0.0
    %4534 = vmatpush2.msra.mxu0 0.0
    %4535 = vmatprep.subr.mxu0 0.0
    %4536 = vmatpush2.msra.mxu0 0.0
    %4537 = vmatprep.subr.mxu0 0.0
    %4538 = vmatpush2.msra.mxu0 0.0
    %4539 = vmatprep.subr.mxu0 0.0
    %4540 = vmatpush2.msra.mxu0 0.0
    %4541 = vmatprep.subr.mxu0 0.0
    %4542 = vmatpush2.msra.mxu0 0.0
    %4543 = vmatprep.subr.mxu0 0.0
    %4544 = vmatpush2.msra.mxu0 0.0
    %4545 = vmatprep.subr.mxu0 0.0
    %4546 = vmatpush2.msra.mxu0 0.0
    %4547 = vmatprep.subr.mxu0 0.0
    %4548 = vmatpush2.msra.mxu0 0.0
    %4549 = vmatprep.subr.mxu0 0.0
    %4550 = vmatpush2.msra.mxu0 0.0
    %4551 = vmatprep.subr.mxu0 0.0
    %4552 = vmatpush2.msra.mxu0 0.0
    %4553 = vmatprep.subr.mxu0 0.0
    %4554 = vmatpush2.msra.mxu0 0.0
    %4555 = vmatprep.subr.mxu0 0.0
    %4556 = vmatpush2.msra.mxu0 0.0
    %4557 = vmatprep.subr.mxu0 0.0
    %4558 = vmatpush2.msra.mxu0 0.0
    %4559 = vmatprep.subr.mxu0 0.0
    %4560 = vmatpush2.msra.mxu0 0.0
    %4561 = vmatprep.mubr.f32.mxu0 0.0
    %v4562 = vand.u32 %v4107, 4294901760
    %4563 = vmatmul.mubr.f32.gmra.mxu0 %v4562
    %v4564 = vpop.f32.mrf.mxu0
    %v4565 = vadd.f32 %v4492, %v4564
    %v4566 = vpop.f32.mrf.mxu0
    %4567 = vdwg.mxu0
    %v4568 = vld [vmem:[%s9] sm:$0xff]
    %v4569 = vld [vmem:[%s9 + $0x8] sm:$0xff]
    %v4570 = vld [vmem:[%s9 + $0x10] sm:$0xff]
    %v4571 = vld [vmem:[%s9 + $0x18] sm:$0xff]
    %v4573 = vsel %vm1163, %v4565, 0
    %4575 = vmatprep.subr.mxu0 0.0
    %4576 = vmatpush1.msra.mxu0 0.0
    %4577 = vmatprep.subr.mxu0 0.0
    %4578 = vmatpush1.msra.mxu0 0.0
    %4579 = vmatprep.subr.mxu0 0.0
    %4580 = vmatpush1.msra.mxu0 0.0
    %4581 = vmatprep.subr.mxu0 0.0
    %4582 = vmatpush1.msra.mxu0 0.0
    %4583 = vmatprep.subr.mxu0 0.0
    %4584 = vmatpush1.msra.mxu0 0.0
    %4585 = vmatprep.subr.mxu0 0.0
    %4586 = vmatpush1.msra.mxu0 0.0
    %4587 = vmatprep.subr.mxu0 0.0
    %4588 = vmatpush1.msra.mxu0 0.0
    %4589 = vmatprep.subr.mxu0 0.0
    %4590 = vmatpush1.msra.mxu0 0.0
    %4591 = vmatprep.subr.mxu0 0.0
    %4592 = vmatpush1.msra.mxu0 0.0
    %4593 = vmatprep.subr.mxu0 0.0
    %4594 = vmatpush1.msra.mxu0 0.0
    %4595 = vmatprep.subr.mxu0 0.0
    %4596 = vmatpush1.msra.mxu0 0.0
    %4597 = vmatprep.subr.mxu0 0.0
    %4598 = vmatpush1.msra.mxu0 0.0
    %4599 = vmatprep.subr.mxu0 0.0
    %v4600 = vand.u32 %v4571, 4294901760
    %4601 = vmatpush1.msra.mxu0 %v4600
    %4602 = vmatprep.subr.mxu0 0.0
    %v4603 = vand.u32 %v4570, 4294901760
    %4604 = vmatpush1.msra.mxu0 %v4603
    %4605 = vmatprep.subr.mxu0 0.0
    %v4606 = vand.u32 %v4569, 4294901760
    %4607 = vmatpush1.msra.mxu0 %v4606
    %4608 = vmatprep.subr.mxu0 0.0
    %v4609 = vand.u32 %v4568, 4294901760
    %4610 = vmatpush1.msra.mxu0 %v4609
    %4611 = vmatprep.subr.mxu0 0.0
    %4612 = vmatpush2.msra.mxu0 0.0
    %4613 = vmatprep.subr.mxu0 0.0
    %4614 = vmatpush2.msra.mxu0 0.0
    %4615 = vmatprep.subr.mxu0 0.0
    %4616 = vmatpush2.msra.mxu0 0.0
    %4617 = vmatprep.subr.mxu0 0.0
    %4618 = vmatpush2.msra.mxu0 0.0
    %4619 = vmatprep.subr.mxu0 0.0
    %4620 = vmatpush2.msra.mxu0 0.0
    %4621 = vmatprep.subr.mxu0 0.0
    %4622 = vmatpush2.msra.mxu0 0.0
    %4623 = vmatprep.subr.mxu0 0.0
    %4624 = vmatpush2.msra.mxu0 0.0
    %4625 = vmatprep.subr.mxu0 0.0
    %4626 = vmatpush2.msra.mxu0 0.0
    %4627 = vmatprep.subr.mxu0 0.0
    %4628 = vmatpush2.msra.mxu0 0.0
    %4629 = vmatprep.subr.mxu0 0.0
    %4630 = vmatpush2.msra.mxu0 0.0
    %4631 = vmatprep.subr.mxu0 0.0
    %4632 = vmatpush2.msra.mxu0 0.0
    %4633 = vmatprep.subr.mxu0 0.0
    %4634 = vmatpush2.msra.mxu0 0.0
    %4635 = vmatprep.subr.mxu0 0.0
    %4636 = vmatpush2.msra.mxu0 0.0
    %4637 = vmatprep.subr.mxu0 0.0
    %4638 = vmatpush2.msra.mxu0 0.0
    %4639 = vmatprep.subr.mxu0 0.0
    %4640 = vmatpush2.msra.mxu0 0.0
    %4641 = vmatprep.subr.mxu0 0.0
    %4642 = vmatpush2.msra.mxu0 0.0
    %4643 = vmatprep.mubr.f32.mxu0 0.0
    %v4644 = vand.u32 %v4573, 4294901760
    %v4645 = vsub.f32 %v4573, %v4644
    %v4646 = vand.u32 %v4645, 4294901760
    %v4647 = vsub.f32 %v4645, %v4646
    %v4648 = vand.u32 %v4647, 4294901760
    %4649 = vmatmul.mubr.f32.gmra.mxu0 %v4648
    %v4650 = vpop.f32.mrf.mxu0
    %v4651 = vadd.f32 0.0, %v4650
    %v4652 = vpop.f32.mrf.mxu0
    %4653 = vdwg.mxu0
    %4654 = vmatprep.subr.mxu0 0.0
    %4655 = vmatpush1.msra.mxu0 0.0
    %4656 = vmatprep.subr.mxu0 0.0
    %4657 = vmatpush1.msra.mxu0 0.0
    %4658 = vmatprep.subr.mxu0 0.0
    %4659 = vmatpush1.msra.mxu0 0.0
    %4660 = vmatprep.subr.mxu0 0.0
    %4661 = vmatpush1.msra.mxu0 0.0
    %4662 = vmatprep.subr.mxu0 0.0
    %4663 = vmatpush1.msra.mxu0 0.0
    %4664 = vmatprep.subr.mxu0 0.0
    %4665 = vmatpush1.msra.mxu0 0.0
    %4666 = vmatprep.subr.mxu0 0.0
    %4667 = vmatpush1.msra.mxu0 0.0
    %4668 = vmatprep.subr.mxu0 0.0
    %4669 = vmatpush1.msra.mxu0 0.0
    %4670 = vmatprep.subr.mxu0 0.0
    %4671 = vmatpush1.msra.mxu0 0.0
    %4672 = vmatprep.subr.mxu0 0.0
    %4673 = vmatpush1.msra.mxu0 0.0
    %4674 = vmatprep.subr.mxu0 0.0
    %4675 = vmatpush1.msra.mxu0 0.0
    %4676 = vmatprep.subr.mxu0 0.0
    %4677 = vmatpush1.msra.mxu0 0.0
    %4678 = vmatprep.subr.mxu0 0.0
    %v4679 = vand.u32 %v4571, 4294901760
    %v4680 = vsub.f32 %v4571, %v4679
    %v4681 = vand.u32 %v4680, 4294901760
    %v4682 = vsub.f32 %v4680, %v4681
    %v4683 = vand.u32 %v4682, 4294901760
    %4684 = vmatpush1.msra.mxu0 %v4683
    %4685 = vmatprep.subr.mxu0 0.0
    %v4686 = vand.u32 %v4570, 4294901760
    %v4687 = vsub.f32 %v4570, %v4686
    %v4688 = vand.u32 %v4687, 4294901760
    %v4689 = vsub.f32 %v4687, %v4688
    %v4690 = vand.u32 %v4689, 4294901760
    %4691 = vmatpush1.msra.mxu0 %v4690
    %4692 = vmatprep.subr.mxu0 0.0
    %v4693 = vand.u32 %v4569, 4294901760
    %v4694 = vsub.f32 %v4569, %v4693
    %v4695 = vand.u32 %v4694, 4294901760
    %v4696 = vsub.f32 %v4694, %v4695
    %v4697 = vand.u32 %v4696, 4294901760
    %4698 = vmatpush1.msra.mxu0 %v4697
    %4699 = vmatprep.subr.mxu0 0.0
    %v4700 = vand.u32 %v4568, 4294901760
    %v4701 = vsub.f32 %v4568, %v4700
    %v4702 = vand.u32 %v4701, 4294901760
    %v4703 = vsub.f32 %v4701, %v4702
    %v4704 = vand.u32 %v4703, 4294901760
    %4705 = vmatpush1.msra.mxu0 %v4704
    %4706 = vmatprep.subr.mxu0 0.0
    %4707 = vmatpush2.msra.mxu0 0.0
    %4708 = vmatprep.subr.mxu0 0.0
    %4709 = vmatpush2.msra.mxu0 0.0
    %4710 = vmatprep.subr.mxu0 0.0
    %4711 = vmatpush2.msra.mxu0 0.0
    %4712 = vmatprep.subr.mxu0 0.0
    %4713 = vmatpush2.msra.mxu0 0.0
    %4714 = vmatprep.subr.mxu0 0.0
    %4715 = vmatpush2.msra.mxu0 0.0
    %4716 = vmatprep.subr.mxu0 0.0
    %4717 = vmatpush2.msra.mxu0 0.0
    %4718 = vmatprep.subr.mxu0 0.0
    %4719 = vmatpush2.msra.mxu0 0.0
    %4720 = vmatprep.subr.mxu0 0.0
    %4721 = vmatpush2.msra.mxu0 0.0
    %4722 = vmatprep.subr.mxu0 0.0
    %4723 = vmatpush2.msra.mxu0 0.0
    %4724 = vmatprep.subr.mxu0 0.0
    %4725 = vmatpush2.msra.mxu0 0.0
    %4726 = vmatprep.subr.mxu0 0.0
    %4727 = vmatpush2.msra.mxu0 0.0
    %4728 = vmatprep.subr.mxu0 0.0
    %4729 = vmatpush2.msra.mxu0 0.0
    %4730 = vmatprep.subr.mxu0 0.0
    %4731 = vmatpush2.msra.mxu0 0.0
    %4732 = vmatprep.subr.mxu0 0.0
    %4733 = vmatpush2.msra.mxu0 0.0
    %4734 = vmatprep.subr.mxu0 0.0
    %4735 = vmatpush2.msra.mxu0 0.0
    %4736 = vmatprep.subr.mxu0 0.0
    %4737 = vmatpush2.msra.mxu0 0.0
    %4738 = vmatprep.mubr.f32.mxu0 0.0
    %v4739 = vand.u32 %v4573, 4294901760
    %4740 = vmatmul.mubr.f32.gmra.mxu0 %v4739
    %v4741 = vpop.f32.mrf.mxu0
    %v4742 = vadd.f32 %v4651, %v4741
    %v4743 = vpop.f32.mrf.mxu0
    %4744 = vdwg.mxu0
    %4745 = vmatprep.subr.mxu0 0.0
    %4746 = vmatpush1.msra.mxu0 0.0
    %4747 = vmatprep.subr.mxu0 0.0
    %4748 = vmatpush1.msra.mxu0 0.0
    %4749 = vmatprep.subr.mxu0 0.0
    %4750 = vmatpush1.msra.mxu0 0.0
    %4751 = vmatprep.subr.mxu0 0.0
    %4752 = vmatpush1.msra.mxu0 0.0
    %4753 = vmatprep.subr.mxu0 0.0
    %4754 = vmatpush1.msra.mxu0 0.0
    %4755 = vmatprep.subr.mxu0 0.0
    %4756 = vmatpush1.msra.mxu0 0.0
    %4757 = vmatprep.subr.mxu0 0.0
    %4758 = vmatpush1.msra.mxu0 0.0
    %4759 = vmatprep.subr.mxu0 0.0
    %4760 = vmatpush1.msra.mxu0 0.0
    %4761 = vmatprep.subr.mxu0 0.0
    %4762 = vmatpush1.msra.mxu0 0.0
    %4763 = vmatprep.subr.mxu0 0.0
    %4764 = vmatpush1.msra.mxu0 0.0
    %4765 = vmatprep.subr.mxu0 0.0
    %4766 = vmatpush1.msra.mxu0 0.0
    %4767 = vmatprep.subr.mxu0 0.0
    %4768 = vmatpush1.msra.mxu0 0.0
    %4769 = vmatprep.subr.mxu0 0.0
    %v4770 = vand.u32 %v4571, 4294901760
    %v4771 = vsub.f32 %v4571, %v4770
    %4772 = vmatpush1.msra.mxu0 %v4771
    %4773 = vmatprep.subr.mxu0 0.0
    %v4774 = vand.u32 %v4570, 4294901760
    %v4775 = vsub.f32 %v4570, %v4774
    %4776 = vmatpush1.msra.mxu0 %v4775
    %4777 = vmatprep.subr.mxu0 0.0
    %v4778 = vand.u32 %v4569, 4294901760
    %v4779 = vsub.f32 %v4569, %v4778
    %4780 = vmatpush1.msra.mxu0 %v4779
    %4781 = vmatprep.subr.mxu0 0.0
    %v4782 = vand.u32 %v4568, 4294901760
    %v4783 = vsub.f32 %v4568, %v4782
    %4784 = vmatpush1.msra.mxu0 %v4783
    %4785 = vmatprep.subr.mxu0 0.0
    %4786 = vmatpush2.msra.mxu0 0.0
    %4787 = vmatprep.subr.mxu0 0.0
    %4788 = vmatpush2.msra.mxu0 0.0
    %4789 = vmatprep.subr.mxu0 0.0
    %4790 = vmatpush2.msra.mxu0 0.0
    %4791 = vmatprep.subr.mxu0 0.0
    %4792 = vmatpush2.msra.mxu0 0.0
    %4793 = vmatprep.subr.mxu0 0.0
    %4794 = vmatpush2.msra.mxu0 0.0
    %4795 = vmatprep.subr.mxu0 0.0
    %4796 = vmatpush2.msra.mxu0 0.0
    %4797 = vmatprep.subr.mxu0 0.0
    %4798 = vmatpush2.msra.mxu0 0.0
    %4799 = vmatprep.subr.mxu0 0.0
    %4800 = vmatpush2.msra.mxu0 0.0
    %4801 = vmatprep.subr.mxu0 0.0
    %4802 = vmatpush2.msra.mxu0 0.0
    %4803 = vmatprep.subr.mxu0 0.0
    %4804 = vmatpush2.msra.mxu0 0.0
    %4805 = vmatprep.subr.mxu0 0.0
    %4806 = vmatpush2.msra.mxu0 0.0
    %4807 = vmatprep.subr.mxu0 0.0
    %4808 = vmatpush2.msra.mxu0 0.0
    %4809 = vmatprep.subr.mxu0 0.0
    %4810 = vmatpush2.msra.mxu0 0.0
    %4811 = vmatprep.subr.mxu0 0.0
    %4812 = vmatpush2.msra.mxu0 0.0
    %4813 = vmatprep.subr.mxu0 0.0
    %4814 = vmatpush2.msra.mxu0 0.0
    %4815 = vmatprep.subr.mxu0 0.0
    %4816 = vmatpush2.msra.mxu0 0.0
    %4817 = vmatprep.mubr.f32.mxu0 0.0
    %v4818 = vand.u32 %v4573, 4294901760
    %v4819 = vsub.f32 %v4573, %v4818
    %4820 = vmatmul.mubr.f32.gmra.mxu0 %v4819
    %v4821 = vpop.f32.mrf.mxu0
    %v4822 = vadd.f32 %v4742, %v4821
    %v4823 = vpop.f32.mrf.mxu0
    %4824 = vdwg.mxu0
    %4825 = vmatprep.subr.mxu0 0.0
    %4826 = vmatpush1.msra.mxu0 0.0
    %4827 = vmatprep.subr.mxu0 0.0
    %4828 = vmatpush1.msra.mxu0 0.0
    %4829 = vmatprep.subr.mxu0 0.0
    %4830 = vmatpush1.msra.mxu0 0.0
    %4831 = vmatprep.subr.mxu0 0.0
    %4832 = vmatpush1.msra.mxu0 0.0
    %4833 = vmatprep.subr.mxu0 0.0
    %4834 = vmatpush1.msra.mxu0 0.0
    %4835 = vmatprep.subr.mxu0 0.0
    %4836 = vmatpush1.msra.mxu0 0.0
    %4837 = vmatprep.subr.mxu0 0.0
    %4838 = vmatpush1.msra.mxu0 0.0
    %4839 = vmatprep.subr.mxu0 0.0
    %4840 = vmatpush1.msra.mxu0 0.0
    %4841 = vmatprep.subr.mxu0 0.0
    %4842 = vmatpush1.msra.mxu0 0.0
    %4843 = vmatprep.subr.mxu0 0.0
    %4844 = vmatpush1.msra.mxu0 0.0
    %4845 = vmatprep.subr.mxu0 0.0
    %4846 = vmatpush1.msra.mxu0 0.0
    %4847 = vmatprep.subr.mxu0 0.0
    %4848 = vmatpush1.msra.mxu0 0.0
    %4849 = vmatprep.subr.mxu0 0.0
    %v4850 = vand.u32 %v4571, 4294901760
    %4851 = vmatpush1.msra.mxu0 %v4850
    %4852 = vmatprep.subr.mxu0 0.0
    %v4853 = vand.u32 %v4570, 4294901760
    %4854 = vmatpush1.msra.mxu0 %v4853
    %4855 = vmatprep.subr.mxu0 0.0
    %v4856 = vand.u32 %v4569, 4294901760
    %4857 = vmatpush1.msra.mxu0 %v4856
    %4858 = vmatprep.subr.mxu0 0.0
    %v4859 = vand.u32 %v4568, 4294901760
    %4860 = vmatpush1.msra.mxu0 %v4859
    %4861 = vmatprep.subr.mxu0 0.0
    %4862 = vmatpush2.msra.mxu0 0.0
    %4863 = vmatprep.subr.mxu0 0.0
    %4864 = vmatpush2.msra.mxu0 0.0
    %4865 = vmatprep.subr.mxu0 0.0
    %4866 = vmatpush2.msra.mxu0 0.0
    %4867 = vmatprep.subr.mxu0 0.0
    %4868 = vmatpush2.msra.mxu0 0.0
    %4869 = vmatprep.subr.mxu0 0.0
    %4870 = vmatpush2.msra.mxu0 0.0
    %4871 = vmatprep.subr.mxu0 0.0
    %4872 = vmatpush2.msra.mxu0 0.0
    %4873 = vmatprep.subr.mxu0 0.0
    %4874 = vmatpush2.msra.mxu0 0.0
    %4875 = vmatprep.subr.mxu0 0.0
    %4876 = vmatpush2.msra.mxu0 0.0
    %4877 = vmatprep.subr.mxu0 0.0
    %4878 = vmatpush2.msra.mxu0 0.0
    %4879 = vmatprep.subr.mxu0 0.0
    %4880 = vmatpush2.msra.mxu0 0.0
    %4881 = vmatprep.subr.mxu0 0.0
    %4882 = vmatpush2.msra.mxu0 0.0
    %4883 = vmatprep.subr.mxu0 0.0
    %4884 = vmatpush2.msra.mxu0 0.0
    %4885 = vmatprep.subr.mxu0 0.0
    %4886 = vmatpush2.msra.mxu0 0.0
    %4887 = vmatprep.subr.mxu0 0.0
    %4888 = vmatpush2.msra.mxu0 0.0
    %4889 = vmatprep.subr.mxu0 0.0
    %4890 = vmatpush2.msra.mxu0 0.0
    %4891 = vmatprep.subr.mxu0 0.0
    %4892 = vmatpush2.msra.mxu0 0.0
    %4893 = vmatprep.mubr.f32.mxu0 0.0
    %v4894 = vand.u32 %v4573, 4294901760
    %v4895 = vsub.f32 %v4573, %v4894
    %v4896 = vand.u32 %v4895, 4294901760
    %4897 = vmatmul.mubr.f32.gmra.mxu0 %v4896
    %v4898 = vpop.f32.mrf.mxu0
    %v4899 = vadd.f32 %v4822, %v4898
    %v4900 = vpop.f32.mrf.mxu0
    %4901 = vdwg.mxu0
    %4902 = vmatprep.subr.mxu0 0.0
    %4903 = vmatpush1.msra.mxu0 0.0
    %4904 = vmatprep.subr.mxu0 0.0
    %4905 = vmatpush1.msra.mxu0 0.0
    %4906 = vmatprep.subr.mxu0 0.0
    %4907 = vmatpush1.msra.mxu0 0.0
    %4908 = vmatprep.subr.mxu0 0.0
    %4909 = vmatpush1.msra.mxu0 0.0
    %4910 = vmatprep.subr.mxu0 0.0
    %4911 = vmatpush1.msra.mxu0 0.0
    %4912 = vmatprep.subr.mxu0 0.0
    %4913 = vmatpush1.msra.mxu0 0.0
    %4914 = vmatprep.subr.mxu0 0.0
    %4915 = vmatpush1.msra.mxu0 0.0
    %4916 = vmatprep.subr.mxu0 0.0
    %4917 = vmatpush1.msra.mxu0 0.0
    %4918 = vmatprep.subr.mxu0 0.0
    %4919 = vmatpush1.msra.mxu0 0.0
    %4920 = vmatprep.subr.mxu0 0.0
    %4921 = vmatpush1.msra.mxu0 0.0
    %4922 = vmatprep.subr.mxu0 0.0
    %4923 = vmatpush1.msra.mxu0 0.0
    %4924 = vmatprep.subr.mxu0 0.0
    %4925 = vmatpush1.msra.mxu0 0.0
    %4926 = vmatprep.subr.mxu0 0.0
    %v4927 = vand.u32 %v4571, 4294901760
    %v4928 = vsub.f32 %v4571, %v4927
    %v4929 = vand.u32 %v4928, 4294901760
    %4930 = vmatpush1.msra.mxu0 %v4929
    %4931 = vmatprep.subr.mxu0 0.0
    %v4932 = vand.u32 %v4570, 4294901760
    %v4933 = vsub.f32 %v4570, %v4932
    %v4934 = vand.u32 %v4933, 4294901760
    %4935 = vmatpush1.msra.mxu0 %v4934
    %4936 = vmatprep.subr.mxu0 0.0
    %v4937 = vand.u32 %v4569, 4294901760
    %v4938 = vsub.f32 %v4569, %v4937
    %v4939 = vand.u32 %v4938, 4294901760
    %4940 = vmatpush1.msra.mxu0 %v4939
    %4941 = vmatprep.subr.mxu0 0.0
    %v4942 = vand.u32 %v4568, 4294901760
    %v4943 = vsub.f32 %v4568, %v4942
    %v4944 = vand.u32 %v4943, 4294901760
    %4945 = vmatpush1.msra.mxu0 %v4944
    %4946 = vmatprep.subr.mxu0 0.0
    %4947 = vmatpush2.msra.mxu0 0.0
    %4948 = vmatprep.subr.mxu0 0.0
    %4949 = vmatpush2.msra.mxu0 0.0
    %4950 = vmatprep.subr.mxu0 0.0
    %4951 = vmatpush2.msra.mxu0 0.0
    %4952 = vmatprep.subr.mxu0 0.0
    %4953 = vmatpush2.msra.mxu0 0.0
    %4954 = vmatprep.subr.mxu0 0.0
    %4955 = vmatpush2.msra.mxu0 0.0
    %4956 = vmatprep.subr.mxu0 0.0
    %4957 = vmatpush2.msra.mxu0 0.0
    %4958 = vmatprep.subr.mxu0 0.0
    %4959 = vmatpush2.msra.mxu0 0.0
    %4960 = vmatprep.subr.mxu0 0.0
    %4961 = vmatpush2.msra.mxu0 0.0
    %4962 = vmatprep.subr.mxu0 0.0
    %4963 = vmatpush2.msra.mxu0 0.0
    %4964 = vmatprep.subr.mxu0 0.0
    %4965 = vmatpush2.msra.mxu0 0.0
    %4966 = vmatprep.subr.mxu0 0.0
    %4967 = vmatpush2.msra.mxu0 0.0
    %4968 = vmatprep.subr.mxu0 0.0
    %4969 = vmatpush2.msra.mxu0 0.0
    %4970 = vmatprep.subr.mxu0 0.0
    %4971 = vmatpush2.msra.mxu0 0.0
    %4972 = vmatprep.subr.mxu0 0.0
    %4973 = vmatpush2.msra.mxu0 0.0
    %4974 = vmatprep.subr.mxu0 0.0
    %4975 = vmatpush2.msra.mxu0 0.0
    %4976 = vmatprep.subr.mxu0 0.0
    %4977 = vmatpush2.msra.mxu0 0.0
    %4978 = vmatprep.mubr.f32.mxu0 0.0
    %v4979 = vand.u32 %v4573, 4294901760
    %4980 = vmatmul.mubr.f32.gmra.mxu0 %v4979
    %v4981 = vpop.f32.mrf.mxu0
    %v4982 = vadd.f32 %v4899, %v4981
    %v4983 = vpop.f32.mrf.mxu0
    %4984 = vdwg.mxu0
    %4985 = vmatprep.subr.mxu0 0.0
    %4986 = vmatpush1.msra.mxu0 0.0
    %4987 = vmatprep.subr.mxu0 0.0
    %4988 = vmatpush1.msra.mxu0 0.0
    %4989 = vmatprep.subr.mxu0 0.0
    %4990 = vmatpush1.msra.mxu0 0.0
    %4991 = vmatprep.subr.mxu0 0.0
    %4992 = vmatpush1.msra.mxu0 0.0
    %4993 = vmatprep.subr.mxu0 0.0
    %4994 = vmatpush1.msra.mxu0 0.0
    %4995 = vmatprep.subr.mxu0 0.0
    %4996 = vmatpush1.msra.mxu0 0.0
    %4997 = vmatprep.subr.mxu0 0.0
    %4998 = vmatpush1.msra.mxu0 0.0
    %4999 = vmatprep.subr.mxu0 0.0
    %5000 = vmatpush1.msra.mxu0 0.0
    %5001 = vmatprep.subr.mxu0 0.0
    %5002 = vmatpush1.msra.mxu0 0.0
    %5003 = vmatprep.subr.mxu0 0.0
    %5004 = vmatpush1.msra.mxu0 0.0
    %5005 = vmatprep.subr.mxu0 0.0
    %5006 = vmatpush1.msra.mxu0 0.0
    %5007 = vmatprep.subr.mxu0 0.0
    %5008 = vmatpush1.msra.mxu0 0.0
    %5009 = vmatprep.subr.mxu0 0.0
    %v5010 = vand.u32 %v4571, 4294901760
    %5011 = vmatpush1.msra.mxu0 %v5010
    %5012 = vmatprep.subr.mxu0 0.0
    %v5013 = vand.u32 %v4570, 4294901760
    %5014 = vmatpush1.msra.mxu0 %v5013
    %5015 = vmatprep.subr.mxu0 0.0
    %v5016 = vand.u32 %v4569, 4294901760
    %5017 = vmatpush1.msra.mxu0 %v5016
    %5018 = vmatprep.subr.mxu0 0.0
    %v5019 = vand.u32 %v4568, 4294901760
    %5020 = vmatpush1.msra.mxu0 %v5019
    %5021 = vmatprep.subr.mxu0 0.0
    %5022 = vmatpush2.msra.mxu0 0.0
    %5023 = vmatprep.subr.mxu0 0.0
    %5024 = vmatpush2.msra.mxu0 0.0
    %5025 = vmatprep.subr.mxu0 0.0
    %5026 = vmatpush2.msra.mxu0 0.0
    %5027 = vmatprep.subr.mxu0 0.0
    %5028 = vmatpush2.msra.mxu0 0.0
    %5029 = vmatprep.subr.mxu0 0.0
    %5030 = vmatpush2.msra.mxu0 0.0
    %5031 = vmatprep.subr.mxu0 0.0
    %5032 = vmatpush2.msra.mxu0 0.0
    %5033 = vmatprep.subr.mxu0 0.0
    %5034 = vmatpush2.msra.mxu0 0.0
    %5035 = vmatprep.subr.mxu0 0.0
    %5036 = vmatpush2.msra.mxu0 0.0
    %5037 = vmatprep.subr.mxu0 0.0
    %5038 = vmatpush2.msra.mxu0 0.0
    %5039 = vmatprep.subr.mxu0 0.0
    %5040 = vmatpush2.msra.mxu0 0.0
    %5041 = vmatprep.subr.mxu0 0.0
    %5042 = vmatpush2.msra.mxu0 0.0
    %5043 = vmatprep.subr.mxu0 0.0
    %5044 = vmatpush2.msra.mxu0 0.0
    %5045 = vmatprep.subr.mxu0 0.0
    %5046 = vmatpush2.msra.mxu0 0.0
    %5047 = vmatprep.subr.mxu0 0.0
    %5048 = vmatpush2.msra.mxu0 0.0
    %5049 = vmatprep.subr.mxu0 0.0
    %5050 = vmatpush2.msra.mxu0 0.0
    %5051 = vmatprep.subr.mxu0 0.0
    %5052 = vmatpush2.msra.mxu0 0.0
    %5053 = vmatprep.mubr.f32.mxu0 0.0
    %v5054 = vand.u32 %v4573, 4294901760
    %5055 = vmatmul.mubr.f32.gmra.mxu0 %v5054
    %v5056 = vpop.f32.mrf.mxu0
    %v5057 = vadd.f32 %v4982, %v5056
    %v5058 = vpop.f32.mrf.mxu0
    %5059 = vdwg.mxu0
    %v5061 = vsel %vm1163, %v3078, 0
    %5063 = vmatprep.subr.mxu0 0.0
    %5064 = vmatpush1.msra.mxu0 0.0
    %5065 = vmatprep.subr.mxu0 0.0
    %5066 = vmatpush1.msra.mxu0 0.0
    %5067 = vmatprep.subr.mxu0 0.0
    %5068 = vmatpush1.msra.mxu0 0.0
    %5069 = vmatprep.subr.mxu0 0.0
    %5070 = vmatpush1.msra.mxu0 0.0
    %5071 = vmatprep.subr.mxu0 0.0
    %5072 = vmatpush1.msra.mxu0 0.0
    %5073 = vmatprep.subr.mxu0 0.0
    %5074 = vmatpush1.msra.mxu0 0.0
    %5075 = vmatprep.subr.mxu0 0.0
    %5076 = vmatpush1.msra.mxu0 0.0
    %5077 = vmatprep.subr.mxu0 0.0
    %5078 = vmatpush1.msra.mxu0 0.0
    %5079 = vmatprep.subr.mxu0 0.0
    %5080 = vmatpush1.msra.mxu0 0.0
    %5081 = vmatprep.subr.mxu0 0.0
    %5082 = vmatpush1.msra.mxu0 0.0
    %5083 = vmatprep.subr.mxu0 0.0
    %5084 = vmatpush1.msra.mxu0 0.0
    %5085 = vmatprep.subr.mxu0 0.0
    %5086 = vmatpush1.msra.mxu0 0.0
    %5087 = vmatprep.subr.mxu0 0.0
    %v5088 = vand.u32 %v59, 4294901760
    %5089 = vmatpush1.msra.mxu0 %v5088
    %5090 = vmatprep.subr.mxu0 0.0
    %v5091 = vand.u32 %v58, 4294901760
    %5092 = vmatpush1.msra.mxu0 %v5091
    %5093 = vmatprep.subr.mxu0 0.0
    %v5094 = vand.u32 %v57, 4294901760
    %5095 = vmatpush1.msra.mxu0 %v5094
    %5096 = vmatprep.subr.mxu0 0.0
    %v5097 = vand.u32 %v56, 4294901760
    %5098 = vmatpush1.msra.mxu0 %v5097
    %5099 = vmatprep.subr.mxu0 0.0
    %5100 = vmatpush2.msra.mxu0 0.0
    %5101 = vmatprep.subr.mxu0 0.0
    %5102 = vmatpush2.msra.mxu0 0.0
    %5103 = vmatprep.subr.mxu0 0.0
    %5104 = vmatpush2.msra.mxu0 0.0
    %5105 = vmatprep.subr.mxu0 0.0
    %5106 = vmatpush2.msra.mxu0 0.0
    %5107 = vmatprep.subr.mxu0 0.0
    %5108 = vmatpush2.msra.mxu0 0.0
    %5109 = vmatprep.subr.mxu0 0.0
    %5110 = vmatpush2.msra.mxu0 0.0
    %5111 = vmatprep.subr.mxu0 0.0
    %5112 = vmatpush2.msra.mxu0 0.0
    %5113 = vmatprep.subr.mxu0 0.0
    %5114 = vmatpush2.msra.mxu0 0.0
    %5115 = vmatprep.subr.mxu0 0.0
    %5116 = vmatpush2.msra.mxu0 0.0
    %5117 = vmatprep.subr.mxu0 0.0
    %5118 = vmatpush2.msra.mxu0 0.0
    %5119 = vmatprep.subr.mxu0 0.0
    %5120 = vmatpush2.msra.mxu0 0.0
    %5121 = vmatprep.subr.mxu0 0.0
    %5122 = vmatpush2.msra.mxu0 0.0
    %5123 = vmatprep.subr.mxu0 0.0
    %5124 = vmatpush2.msra.mxu0 0.0
    %5125 = vmatprep.subr.mxu0 0.0
    %5126 = vmatpush2.msra.mxu0 0.0
    %5127 = vmatprep.subr.mxu0 0.0
    %5128 = vmatpush2.msra.mxu0 0.0
    %5129 = vmatprep.subr.mxu0 0.0
    %5130 = vmatpush2.msra.mxu0 0.0
    %5131 = vmatprep.mubr.f32.mxu0 0.0
    %v5132 = vand.u32 %v5061, 4294901760
    %v5133 = vsub.f32 %v5061, %v5132
    %v5134 = vand.u32 %v5133, 4294901760
    %v5135 = vsub.f32 %v5133, %v5134
    %v5136 = vand.u32 %v5135, 4294901760
    %5137 = vmatmul.mubr.f32.gmra.mxu0 %v5136
    %v5138 = vpop.f32.mrf.mxu0
    %v5139 = vadd.f32 %v5057, %v5138
    %v5140 = vpop.f32.mrf.mxu0
    %5141 = vdwg.mxu0
    %5142 = vmatprep.subr.mxu0 0.0
    %5143 = vmatpush1.msra.mxu0 0.0
    %5144 = vmatprep.subr.mxu0 0.0
    %5145 = vmatpush1.msra.mxu0 0.0
    %5146 = vmatprep.subr.mxu0 0.0
    %5147 = vmatpush1.msra.mxu0 0.0
    %5148 = vmatprep.subr.mxu0 0.0
    %5149 = vmatpush1.msra.mxu0 0.0
    %5150 = vmatprep.subr.mxu0 0.0
    %5151 = vmatpush1.msra.mxu0 0.0
    %5152 = vmatprep.subr.mxu0 0.0
    %5153 = vmatpush1.msra.mxu0 0.0
    %5154 = vmatprep.subr.mxu0 0.0
    %5155 = vmatpush1.msra.mxu0 0.0
    %5156 = vmatprep.subr.mxu0 0.0
    %5157 = vmatpush1.msra.mxu0 0.0
    %5158 = vmatprep.subr.mxu0 0.0
    %5159 = vmatpush1.msra.mxu0 0.0
    %5160 = vmatprep.subr.mxu0 0.0
    %5161 = vmatpush1.msra.mxu0 0.0
    %5162 = vmatprep.subr.mxu0 0.0
    %5163 = vmatpush1.msra.mxu0 0.0
    %5164 = vmatprep.subr.mxu0 0.0
    %5165 = vmatpush1.msra.mxu0 0.0
    %5166 = vmatprep.subr.mxu0 0.0
    %v5167 = vand.u32 %v59, 4294901760
    %v5168 = vsub.f32 %v59, %v5167
    %v5169 = vand.u32 %v5168, 4294901760
    %v5170 = vsub.f32 %v5168, %v5169
    %v5171 = vand.u32 %v5170, 4294901760
    %5172 = vmatpush1.msra.mxu0 %v5171
    %5173 = vmatprep.subr.mxu0 0.0
    %v5174 = vand.u32 %v58, 4294901760
    %v5175 = vsub.f32 %v58, %v5174
    %v5176 = vand.u32 %v5175, 4294901760
    %v5177 = vsub.f32 %v5175, %v5176
    %v5178 = vand.u32 %v5177, 4294901760
    %5179 = vmatpush1.msra.mxu0 %v5178
    %5180 = vmatprep.subr.mxu0 0.0
    %v5181 = vand.u32 %v57, 4294901760
    %v5182 = vsub.f32 %v57, %v5181
    %v5183 = vand.u32 %v5182, 4294901760
    %v5184 = vsub.f32 %v5182, %v5183
    %v5185 = vand.u32 %v5184, 4294901760
    %5186 = vmatpush1.msra.mxu0 %v5185
    %5187 = vmatprep.subr.mxu0 0.0
    %v5188 = vand.u32 %v56, 4294901760
    %v5189 = vsub.f32 %v56, %v5188
    %v5190 = vand.u32 %v5189, 4294901760
    %v5191 = vsub.f32 %v5189, %v5190
    %v5192 = vand.u32 %v5191, 4294901760
    %5193 = vmatpush1.msra.mxu0 %v5192
    %5194 = vmatprep.subr.mxu0 0.0
    %5195 = vmatpush2.msra.mxu0 0.0
    %5196 = vmatprep.subr.mxu0 0.0
    %5197 = vmatpush2.msra.mxu0 0.0
    %5198 = vmatprep.subr.mxu0 0.0
    %5199 = vmatpush2.msra.mxu0 0.0
    %5200 = vmatprep.subr.mxu0 0.0
    %5201 = vmatpush2.msra.mxu0 0.0
    %5202 = vmatprep.subr.mxu0 0.0
    %5203 = vmatpush2.msra.mxu0 0.0
    %5204 = vmatprep.subr.mxu0 0.0
    %5205 = vmatpush2.msra.mxu0 0.0
    %5206 = vmatprep.subr.mxu0 0.0
    %5207 = vmatpush2.msra.mxu0 0.0
    %5208 = vmatprep.subr.mxu0 0.0
    %5209 = vmatpush2.msra.mxu0 0.0
    %5210 = vmatprep.subr.mxu0 0.0
    %5211 = vmatpush2.msra.mxu0 0.0
    %5212 = vmatprep.subr.mxu0 0.0
    %5213 = vmatpush2.msra.mxu0 0.0
    %5214 = vmatprep.subr.mxu0 0.0
    %5215 = vmatpush2.msra.mxu0 0.0
    %5216 = vmatprep.subr.mxu0 0.0
    %5217 = vmatpush2.msra.mxu0 0.0
    %5218 = vmatprep.subr.mxu0 0.0
    %5219 = vmatpush2.msra.mxu0 0.0
    %5220 = vmatprep.subr.mxu0 0.0
    %5221 = vmatpush2.msra.mxu0 0.0
    %5222 = vmatprep.subr.mxu0 0.0
    %5223 = vmatpush2.msra.mxu0 0.0
    %5224 = vmatprep.subr.mxu0 0.0
    %5225 = vmatpush2.msra.mxu0 0.0
    %5226 = vmatprep.mubr.f32.mxu0 0.0
    %v5227 = vand.u32 %v5061, 4294901760
    %5228 = vmatmul.mubr.f32.gmra.mxu0 %v5227
    %v5229 = vpop.f32.mrf.mxu0
    %v5230 = vadd.f32 %v5139, %v5229
    %v5231 = vpop.f32.mrf.mxu0
    %5232 = vdwg.mxu0
    %5233 = vmatprep.subr.mxu0 0.0
    %5234 = vmatpush1.msra.mxu0 0.0
    %5235 = vmatprep.subr.mxu0 0.0
    %5236 = vmatpush1.msra.mxu0 0.0
    %5237 = vmatprep.subr.mxu0 0.0
    %5238 = vmatpush1.msra.mxu0 0.0
    %5239 = vmatprep.subr.mxu0 0.0
    %5240 = vmatpush1.msra.mxu0 0.0
    %5241 = vmatprep.subr.mxu0 0.0
    %5242 = vmatpush1.msra.mxu0 0.0
    %5243 = vmatprep.subr.mxu0 0.0
    %5244 = vmatpush1.msra.mxu0 0.0
    %5245 = vmatprep.subr.mxu0 0.0
    %5246 = vmatpush1.msra.mxu0 0.0
    %5247 = vmatprep.subr.mxu0 0.0
    %5248 = vmatpush1.msra.mxu0 0.0
    %5249 = vmatprep.subr.mxu0 0.0
    %5250 = vmatpush1.msra.mxu0 0.0
    %5251 = vmatprep.subr.mxu0 0.0
    %5252 = vmatpush1.msra.mxu0 0.0
    %5253 = vmatprep.subr.mxu0 0.0
    %5254 = vmatpush1.msra.mxu0 0.0
    %5255 = vmatprep.subr.mxu0 0.0
    %5256 = vmatpush1.msra.mxu0 0.0
    %5257 = vmatprep.subr.mxu0 0.0
    %v5258 = vand.u32 %v59, 4294901760
    %v5259 = vsub.f32 %v59, %v5258
    %5260 = vmatpush1.msra.mxu0 %v5259
    %5261 = vmatprep.subr.mxu0 0.0
    %v5262 = vand.u32 %v58, 4294901760
    %v5263 = vsub.f32 %v58, %v5262
    %5264 = vmatpush1.msra.mxu0 %v5263
    %5265 = vmatprep.subr.mxu0 0.0
    %v5266 = vand.u32 %v57, 4294901760
    %v5267 = vsub.f32 %v57, %v5266
    %5268 = vmatpush1.msra.mxu0 %v5267
    %5269 = vmatprep.subr.mxu0 0.0
    %v5270 = vand.u32 %v56, 4294901760
    %v5271 = vsub.f32 %v56, %v5270
    %5272 = vmatpush1.msra.mxu0 %v5271
    %5273 = vmatprep.subr.mxu0 0.0
    %5274 = vmatpush2.msra.mxu0 0.0
    %5275 = vmatprep.subr.mxu0 0.0
    %5276 = vmatpush2.msra.mxu0 0.0
    %5277 = vmatprep.subr.mxu0 0.0
    %5278 = vmatpush2.msra.mxu0 0.0
    %5279 = vmatprep.subr.mxu0 0.0
    %5280 = vmatpush2.msra.mxu0 0.0
    %5281 = vmatprep.subr.mxu0 0.0
    %5282 = vmatpush2.msra.mxu0 0.0
    %5283 = vmatprep.subr.mxu0 0.0
    %5284 = vmatpush2.msra.mxu0 0.0
    %5285 = vmatprep.subr.mxu0 0.0
    %5286 = vmatpush2.msra.mxu0 0.0
    %5287 = vmatprep.subr.mxu0 0.0
    %5288 = vmatpush2.msra.mxu0 0.0
    %5289 = vmatprep.subr.mxu0 0.0
    %5290 = vmatpush2.msra.mxu0 0.0
    %5291 = vmatprep.subr.mxu0 0.0
    %5292 = vmatpush2.msra.mxu0 0.0
    %5293 = vmatprep.subr.mxu0 0.0
    %5294 = vmatpush2.msra.mxu0 0.0
    %5295 = vmatprep.subr.mxu0 0.0
    %5296 = vmatpush2.msra.mxu0 0.0
    %5297 = vmatprep.subr.mxu0 0.0
    %5298 = vmatpush2.msra.mxu0 0.0
    %5299 = vmatprep.subr.mxu0 0.0
    %5300 = vmatpush2.msra.mxu0 0.0
    %5301 = vmatprep.subr.mxu0 0.0
    %5302 = vmatpush2.msra.mxu0 0.0
    %5303 = vmatprep.subr.mxu0 0.0
    %5304 = vmatpush2.msra.mxu0 0.0
    %5305 = vmatprep.mubr.f32.mxu0 0.0
    %v5306 = vand.u32 %v5061, 4294901760
    %v5307 = vsub.f32 %v5061, %v5306
    %5308 = vmatmul.mubr.f32.gmra.mxu0 %v5307
    %v5309 = vpop.f32.mrf.mxu0
    %v5310 = vadd.f32 %v5230, %v5309
    %v5311 = vpop.f32.mrf.mxu0
    %5312 = vdwg.mxu0
    %5313 = vmatprep.subr.mxu0 0.0
    %5314 = vmatpush1.msra.mxu0 0.0
    %5315 = vmatprep.subr.mxu0 0.0
    %5316 = vmatpush1.msra.mxu0 0.0
    %5317 = vmatprep.subr.mxu0 0.0
    %5318 = vmatpush1.msra.mxu0 0.0
    %5319 = vmatprep.subr.mxu0 0.0
    %5320 = vmatpush1.msra.mxu0 0.0
    %5321 = vmatprep.subr.mxu0 0.0
    %5322 = vmatpush1.msra.mxu0 0.0
    %5323 = vmatprep.subr.mxu0 0.0
    %5324 = vmatpush1.msra.mxu0 0.0
    %5325 = vmatprep.subr.mxu0 0.0
    %5326 = vmatpush1.msra.mxu0 0.0
    %5327 = vmatprep.subr.mxu0 0.0
    %5328 = vmatpush1.msra.mxu0 0.0
    %5329 = vmatprep.subr.mxu0 0.0
    %5330 = vmatpush1.msra.mxu0 0.0
    %5331 = vmatprep.subr.mxu0 0.0
    %5332 = vmatpush1.msra.mxu0 0.0
    %5333 = vmatprep.subr.mxu0 0.0
    %5334 = vmatpush1.msra.mxu0 0.0
    %5335 = vmatprep.subr.mxu0 0.0
    %5336 = vmatpush1.msra.mxu0 0.0
    %5337 = vmatprep.subr.mxu0 0.0
    %v5338 = vand.u32 %v59, 4294901760
    %5339 = vmatpush1.msra.mxu0 %v5338
    %5340 = vmatprep.subr.mxu0 0.0
    %v5341 = vand.u32 %v58, 4294901760
    %5342 = vmatpush1.msra.mxu0 %v5341
    %5343 = vmatprep.subr.mxu0 0.0
    %v5344 = vand.u32 %v57, 4294901760
    %5345 = vmatpush1.msra.mxu0 %v5344
    %5346 = vmatprep.subr.mxu0 0.0
    %v5347 = vand.u32 %v56, 4294901760
    %5348 = vmatpush1.msra.mxu0 %v5347
    %5349 = vmatprep.subr.mxu0 0.0
    %5350 = vmatpush2.msra.mxu0 0.0
    %5351 = vmatprep.subr.mxu0 0.0
    %5352 = vmatpush2.msra.mxu0 0.0
    %5353 = vmatprep.subr.mxu0 0.0
    %5354 = vmatpush2.msra.mxu0 0.0
    %5355 = vmatprep.subr.mxu0 0.0
    %5356 = vmatpush2.msra.mxu0 0.0
    %5357 = vmatprep.subr.mxu0 0.0
    %5358 = vmatpush2.msra.mxu0 0.0
    %5359 = vmatprep.subr.mxu0 0.0
    %5360 = vmatpush2.msra.mxu0 0.0
    %5361 = vmatprep.subr.mxu0 0.0
    %5362 = vmatpush2.msra.mxu0 0.0
    %5363 = vmatprep.subr.mxu0 0.0
    %5364 = vmatpush2.msra.mxu0 0.0
    %5365 = vmatprep.subr.mxu0 0.0
    %5366 = vmatpush2.msra.mxu0 0.0
    %5367 = vmatprep.subr.mxu0 0.0
    %5368 = vmatpush2.msra.mxu0 0.0
    %5369 = vmatprep.subr.mxu0 0.0
    %5370 = vmatpush2.msra.mxu0 0.0
    %5371 = vmatprep.subr.mxu0 0.0
    %5372 = vmatpush2.msra.mxu0 0.0
    %5373 = vmatprep.subr.mxu0 0.0
    %5374 = vmatpush2.msra.mxu0 0.0
    %5375 = vmatprep.subr.mxu0 0.0
    %5376 = vmatpush2.msra.mxu0 0.0
    %5377 = vmatprep.subr.mxu0 0.0
    %5378 = vmatpush2.msra.mxu0 0.0
    %5379 = vmatprep.subr.mxu0 0.0
    %5380 = vmatpush2.msra.mxu0 0.0
    %5381 = vmatprep.mubr.f32.mxu0 0.0
    %v5382 = vand.u32 %v5061, 4294901760
    %v5383 = vsub.f32 %v5061, %v5382
    %v5384 = vand.u32 %v5383, 4294901760
    %5385 = vmatmul.mubr.f32.gmra.mxu0 %v5384
    %v5386 = vpop.f32.mrf.mxu0
    %v5387 = vadd.f32 %v5310, %v5386
    %v5388 = vpop.f32.mrf.mxu0
    %5389 = vdwg.mxu0
    %5390 = vmatprep.subr.mxu0 0.0
    %5391 = vmatpush1.msra.mxu0 0.0
    %5392 = vmatprep.subr.mxu0 0.0
    %5393 = vmatpush1.msra.mxu0 0.0
    %5394 = vmatprep.subr.mxu0 0.0
    %5395 = vmatpush1.msra.mxu0 0.0
    %5396 = vmatprep.subr.mxu0 0.0
    %5397 = vmatpush1.msra.mxu0 0.0
    %5398 = vmatprep.subr.mxu0 0.0
    %5399 = vmatpush1.msra.mxu0 0.0
    %5400 = vmatprep.subr.mxu0 0.0
    %5401 = vmatpush1.msra.mxu0 0.0
    %5402 = vmatprep.subr.mxu0 0.0
    %5403 = vmatpush1.msra.mxu0 0.0
    %5404 = vmatprep.subr.mxu0 0.0
    %5405 = vmatpush1.msra.mxu0 0.0
    %5406 = vmatprep.subr.mxu0 0.0
    %5407 = vmatpush1.msra.mxu0 0.0
    %5408 = vmatprep.subr.mxu0 0.0
    %5409 = vmatpush1.msra.mxu0 0.0
    %5410 = vmatprep.subr.mxu0 0.0
    %5411 = vmatpush1.msra.mxu0 0.0
    %5412 = vmatprep.subr.mxu0 0.0
    %5413 = vmatpush1.msra.mxu0 0.0
    %5414 = vmatprep.subr.mxu0 0.0
    %v5415 = vand.u32 %v59, 4294901760
    %v5416 = vsub.f32 %v59, %v5415
    %v5417 = vand.u32 %v5416, 4294901760
    %5418 = vmatpush1.msra.mxu0 %v5417
    %5419 = vmatprep.subr.mxu0 0.0
    %v5420 = vand.u32 %v58, 4294901760
    %v5421 = vsub.f32 %v58, %v5420
    %v5422 = vand.u32 %v5421, 4294901760
    %5423 = vmatpush1.msra.mxu0 %v5422
    %5424 = vmatprep.subr.mxu0 0.0
    %v5425 = vand.u32 %v57, 4294901760
    %v5426 = vsub.f32 %v57, %v5425
    %v5427 = vand.u32 %v5426, 4294901760
    %5428 = vmatpush1.msra.mxu0 %v5427
    %5429 = vmatprep.subr.mxu0 0.0
    %v5430 = vand.u32 %v56, 4294901760
    %v5431 = vsub.f32 %v56, %v5430
    %v5432 = vand.u32 %v5431, 4294901760
    %5433 = vmatpush1.msra.mxu0 %v5432
    %5434 = vmatprep.subr.mxu0 0.0
    %5435 = vmatpush2.msra.mxu0 0.0
    %5436 = vmatprep.subr.mxu0 0.0
    %5437 = vmatpush2.msra.mxu0 0.0
    %5438 = vmatprep.subr.mxu0 0.0
    %5439 = vmatpush2.msra.mxu0 0.0
    %5440 = vmatprep.subr.mxu0 0.0
    %5441 = vmatpush2.msra.mxu0 0.0
    %5442 = vmatprep.subr.mxu0 0.0
    %5443 = vmatpush2.msra.mxu0 0.0
    %5444 = vmatprep.subr.mxu0 0.0
    %5445 = vmatpush2.msra.mxu0 0.0
    %5446 = vmatprep.subr.mxu0 0.0
    %5447 = vmatpush2.msra.mxu0 0.0
    %5448 = vmatprep.subr.mxu0 0.0
    %5449 = vmatpush2.msra.mxu0 0.0
    %5450 = vmatprep.subr.mxu0 0.0
    %5451 = vmatpush2.msra.mxu0 0.0
    %5452 = vmatprep.subr.mxu0 0.0
    %5453 = vmatpush2.msra.mxu0 0.0
    %5454 = vmatprep.subr.mxu0 0.0
    %5455 = vmatpush2.msra.mxu0 0.0
    %5456 = vmatprep.subr.mxu0 0.0
    %5457 = vmatpush2.msra.mxu0 0.0
    %5458 = vmatprep.subr.mxu0 0.0
    %5459 = vmatpush2.msra.mxu0 0.0
    %5460 = vmatprep.subr.mxu0 0.0
    %5461 = vmatpush2.msra.mxu0 0.0
    %5462 = vmatprep.subr.mxu0 0.0
    %5463 = vmatpush2.msra.mxu0 0.0
    %5464 = vmatprep.subr.mxu0 0.0
    %5465 = vmatpush2.msra.mxu0 0.0
    %5466 = vmatprep.mubr.f32.mxu0 0.0
    %v5467 = vand.u32 %v5061, 4294901760
    %5468 = vmatmul.mubr.f32.gmra.mxu0 %v5467
    %v5469 = vpop.f32.mrf.mxu0
    %v5470 = vadd.f32 %v5387, %v5469
    %v5471 = vpop.f32.mrf.mxu0
    %5472 = vdwg.mxu0
    %5473 = vmatprep.subr.mxu0 0.0
    %5474 = vmatpush1.msra.mxu0 0.0
    %5475 = vmatprep.subr.mxu0 0.0
    %5476 = vmatpush1.msra.mxu0 0.0
    %5477 = vmatprep.subr.mxu0 0.0
    %5478 = vmatpush1.msra.mxu0 0.0
    %5479 = vmatprep.subr.mxu0 0.0
    %5480 = vmatpush1.msra.mxu0 0.0
    %5481 = vmatprep.subr.mxu0 0.0
    %5482 = vmatpush1.msra.mxu0 0.0
    %5483 = vmatprep.subr.mxu0 0.0
    %5484 = vmatpush1.msra.mxu0 0.0
    %5485 = vmatprep.subr.mxu0 0.0
    %5486 = vmatpush1.msra.mxu0 0.0
    %5487 = vmatprep.subr.mxu0 0.0
    %5488 = vmatpush1.msra.mxu0 0.0
    %5489 = vmatprep.subr.mxu0 0.0
    %5490 = vmatpush1.msra.mxu0 0.0
    %5491 = vmatprep.subr.mxu0 0.0
    %5492 = vmatpush1.msra.mxu0 0.0
    %5493 = vmatprep.subr.mxu0 0.0
    %5494 = vmatpush1.msra.mxu0 0.0
    %5495 = vmatprep.subr.mxu0 0.0
    %5496 = vmatpush1.msra.mxu0 0.0
    %5497 = vmatprep.subr.mxu0 0.0
    %v5498 = vand.u32 %v59, 4294901760
    %5499 = vmatpush1.msra.mxu0 %v5498
    %5500 = vmatprep.subr.mxu0 0.0
    %v5501 = vand.u32 %v58, 4294901760
    %5502 = vmatpush1.msra.mxu0 %v5501
    %5503 = vmatprep.subr.mxu0 0.0
    %v5504 = vand.u32 %v57, 4294901760
    %5505 = vmatpush1.msra.mxu0 %v5504
    %5506 = vmatprep.subr.mxu0 0.0
    %v5507 = vand.u32 %v56, 4294901760
    %5508 = vmatpush1.msra.mxu0 %v5507
    %5509 = vmatprep.subr.mxu0 0.0
    %5510 = vmatpush2.msra.mxu0 0.0
    %5511 = vmatprep.subr.mxu0 0.0
    %5512 = vmatpush2.msra.mxu0 0.0
    %5513 = vmatprep.subr.mxu0 0.0
    %5514 = vmatpush2.msra.mxu0 0.0
    %5515 = vmatprep.subr.mxu0 0.0
    %5516 = vmatpush2.msra.mxu0 0.0
    %5517 = vmatprep.subr.mxu0 0.0
    %5518 = vmatpush2.msra.mxu0 0.0
    %5519 = vmatprep.subr.mxu0 0.0
    %5520 = vmatpush2.msra.mxu0 0.0
    %5521 = vmatprep.subr.mxu0 0.0
    %5522 = vmatpush2.msra.mxu0 0.0
    %5523 = vmatprep.subr.mxu0 0.0
    %5524 = vmatpush2.msra.mxu0 0.0
    %5525 = vmatprep.subr.mxu0 0.0
    %5526 = vmatpush2.msra.mxu0 0.0
    %5527 = vmatprep.subr.mxu0 0.0
    %5528 = vmatpush2.msra.mxu0 0.0
    %5529 = vmatprep.subr.mxu0 0.0
    %5530 = vmatpush2.msra.mxu0 0.0
    %5531 = vmatprep.subr.mxu0 0.0
    %5532 = vmatpush2.msra.mxu0 0.0
    %5533 = vmatprep.subr.mxu0 0.0
    %5534 = vmatpush2.msra.mxu0 0.0
    %5535 = vmatprep.subr.mxu0 0.0
    %5536 = vmatpush2.msra.mxu0 0.0
    %5537 = vmatprep.subr.mxu0 0.0
    %5538 = vmatpush2.msra.mxu0 0.0
    %5539 = vmatprep.subr.mxu0 0.0
    %5540 = vmatpush2.msra.mxu0 0.0
    %5541 = vmatprep.mubr.f32.mxu0 0.0
    %v5542 = vand.u32 %v5061, 4294901760
    %5543 = vmatmul.mubr.f32.gmra.mxu0 %v5542
    %v5544 = vpop.f32.mrf.mxu0
    %v5545 = vadd.f32 %v5470, %v5544
    %v5546 = vpop.f32.mrf.mxu0
    %5547 = vdwg.mxu0
    %v5549 = vsel %vm60, %v5545, 0
    %v5552 = vsel %vm60, %v3079, 0
    %5554 = vmatprep.subr.mxu0 0.0
    %5555 = vmatpush1.xpose.msra.mxu0 0.0
    %5556 = vmatprep.subr.mxu0 0.0
    %5557 = vmatpush1.xpose.msra.mxu0 0.0
    %5558 = vmatprep.subr.mxu0 0.0
    %5559 = vmatpush1.xpose.msra.mxu0 0.0
    %5560 = vmatprep.subr.mxu0 0.0
    %5561 = vmatpush1.xpose.msra.mxu0 0.0
    %5562 = vmatprep.subr.mxu0 0.0
    %5563 = vmatpush1.xpose.msra.mxu0 0.0
    %5564 = vmatprep.subr.mxu0 0.0
    %5565 = vmatpush1.xpose.msra.mxu0 0.0
    %5566 = vmatprep.subr.mxu0 0.0
    %5567 = vmatpush1.xpose.msra.mxu0 0.0
    %5568 = vmatprep.subr.mxu0 0.0
    %5569 = vmatpush1.xpose.msra.mxu0 0.0
    %5570 = vmatprep.subr.mxu0 0.0
    %5571 = vmatpush1.xpose.msra.mxu0 0.0
    %5572 = vmatprep.subr.mxu0 0.0
    %5573 = vmatpush1.xpose.msra.mxu0 0.0
    %5574 = vmatprep.subr.mxu0 0.0
    %5575 = vmatpush1.xpose.msra.mxu0 0.0
    %5576 = vmatprep.subr.mxu0 0.0
    %5577 = vmatpush1.xpose.msra.mxu0 0.0
    %5578 = vmatprep.subr.mxu0 0.0
    %5579 = vmatpush1.xpose.msra.mxu0 0.0
    %5580 = vmatprep.subr.mxu0 0.0
    %5581 = vmatpush1.xpose.msra.mxu0 0.0
    %5582 = vmatprep.subr.mxu0 0.0
    %5583 = vmatpush1.xpose.msra.mxu0 0.0
    %5584 = vmatprep.subr.mxu0 0.0
    %v5585 = vand.u32 %v5552, 4294901760
    %5586 = vmatpush1.xpose.msra.mxu0 %v5585
    %5587 = vmatprep.subr.mxu0 0.0
    %5588 = vmatpush2.xpose.msra.mxu0 0.0
    %5589 = vmatprep.subr.mxu0 0.0
    %5590 = vmatpush2.xpose.msra.mxu0 0.0
    %5591 = vmatprep.subr.mxu0 0.0
    %5592 = vmatpush2.xpose.msra.mxu0 0.0
    %5593 = vmatprep.subr.mxu0 0.0
    %5594 = vmatpush2.xpose.msra.mxu0 0.0
    %5595 = vmatprep.subr.mxu0 0.0
    %5596 = vmatpush2.xpose.msra.mxu0 0.0
    %5597 = vmatprep.subr.mxu0 0.0
    %5598 = vmatpush2.xpose.msra.mxu0 0.0
    %5599 = vmatprep.subr.mxu0 0.0
    %5600 = vmatpush2.xpose.msra.mxu0 0.0
    %5601 = vmatprep.subr.mxu0 0.0
    %5602 = vmatpush2.xpose.msra.mxu0 0.0
    %5603 = vmatprep.subr.mxu0 0.0
    %5604 = vmatpush2.xpose.msra.mxu0 0.0
    %5605 = vmatprep.subr.mxu0 0.0
    %5606 = vmatpush2.xpose.msra.mxu0 0.0
    %5607 = vmatprep.subr.mxu0 0.0
    %5608 = vmatpush2.xpose.msra.mxu0 0.0
    %5609 = vmatprep.subr.mxu0 0.0
    %5610 = vmatpush2.xpose.msra.mxu0 0.0
    %5611 = vmatprep.subr.mxu0 0.0
    %5612 = vmatpush2.xpose.msra.mxu0 0.0
    %5613 = vmatprep.subr.mxu0 0.0
    %5614 = vmatpush2.xpose.msra.mxu0 0.0
    %5615 = vmatprep.subr.mxu0 0.0
    %5616 = vmatpush2.xpose.msra.mxu0 0.0
    %5617 = vmatprep.subr.mxu0 0.0
    %5618 = vmatpush2.xpose.msra.mxu0 0.0
    %5619 = vmatprep.mubr.f32.mxu0 0.0
    %v5620 = vand.u32 %v5549, 4294901760
    %v5621 = vsub.f32 %v5549, %v5620
    %v5622 = vand.u32 %v5621, 4294901760
    %v5623 = vsub.f32 %v5621, %v5622
    %v5624 = vand.u32 %v5623, 4294901760
    %5625 = vmatmul.mubr.f32.gmra.mxu0 %v5624
    %v5626 = vpop.f32.mrf.mxu0
    %v5627 = vadd.f32 %v3080, %v5626
    %v5628 = vpop.f32.mrf.mxu0
    %5629 = vdwg.mxu0
    %5630 = vmatprep.subr.mxu0 0.0
    %5631 = vmatpush1.xpose.msra.mxu0 0.0
    %5632 = vmatprep.subr.mxu0 0.0
    %5633 = vmatpush1.xpose.msra.mxu0 0.0
    %5634 = vmatprep.subr.mxu0 0.0
    %5635 = vmatpush1.xpose.msra.mxu0 0.0
    %5636 = vmatprep.subr.mxu0 0.0
    %5637 = vmatpush1.xpose.msra.mxu0 0.0
    %5638 = vmatprep.subr.mxu0 0.0
    %5639 = vmatpush1.xpose.msra.mxu0 0.0
    %5640 = vmatprep.subr.mxu0 0.0
    %5641 = vmatpush1.xpose.msra.mxu0 0.0
    %5642 = vmatprep.subr.mxu0 0.0
    %5643 = vmatpush1.xpose.msra.mxu0 0.0
    %5644 = vmatprep.subr.mxu0 0.0
    %5645 = vmatpush1.xpose.msra.mxu0 0.0
    %5646 = vmatprep.subr.mxu0 0.0
    %5647 = vmatpush1.xpose.msra.mxu0 0.0
    %5648 = vmatprep.subr.mxu0 0.0
    %5649 = vmatpush1.xpose.msra.mxu0 0.0
    %5650 = vmatprep.subr.mxu0 0.0
    %5651 = vmatpush1.xpose.msra.mxu0 0.0
    %5652 = vmatprep.subr.mxu0 0.0
    %5653 = vmatpush1.xpose.msra.mxu0 0.0
    %5654 = vmatprep.subr.mxu0 0.0
    %5655 = vmatpush1.xpose.msra.mxu0 0.0
    %5656 = vmatprep.subr.mxu0 0.0
    %5657 = vmatpush1.xpose.msra.mxu0 0.0
    %5658 = vmatprep.subr.mxu0 0.0
    %5659 = vmatpush1.xpose.msra.mxu0 0.0
    %5660 = vmatprep.subr.mxu0 0.0
    %v5661 = vand.u32 %v5552, 4294901760
    %v5662 = vsub.f32 %v5552, %v5661
    %v5663 = vand.u32 %v5662, 4294901760
    %v5664 = vsub.f32 %v5662, %v5663
    %v5665 = vand.u32 %v5664, 4294901760
    %5666 = vmatpush1.xpose.msra.mxu0 %v5665
    %5667 = vmatprep.subr.mxu0 0.0
    %5668 = vmatpush2.xpose.msra.mxu0 0.0
    %5669 = vmatprep.subr.mxu0 0.0
    %5670 = vmatpush2.xpose.msra.mxu0 0.0
    %5671 = vmatprep.subr.mxu0 0.0
    %5672 = vmatpush2.xpose.msra.mxu0 0.0
    %5673 = vmatprep.subr.mxu0 0.0
    %5674 = vmatpush2.xpose.msra.mxu0 0.0
    %5675 = vmatprep.subr.mxu0 0.0
    %5676 = vmatpush2.xpose.msra.mxu0 0.0
    %5677 = vmatprep.subr.mxu0 0.0
    %5678 = vmatpush2.xpose.msra.mxu0 0.0
    %5679 = vmatprep.subr.mxu0 0.0
    %5680 = vmatpush2.xpose.msra.mxu0 0.0
    %5681 = vmatprep.subr.mxu0 0.0
    %5682 = vmatpush2.xpose.msra.mxu0 0.0
    %5683 = vmatprep.subr.mxu0 0.0
    %5684 = vmatpush2.xpose.msra.mxu0 0.0
    %5685 = vmatprep.subr.mxu0 0.0
    %5686 = vmatpush2.xpose.msra.mxu0 0.0
    %5687 = vmatprep.subr.mxu0 0.0
    %5688 = vmatpush2.xpose.msra.mxu0 0.0
    %5689 = vmatprep.subr.mxu0 0.0
    %5690 = vmatpush2.xpose.msra.mxu0 0.0
    %5691 = vmatprep.subr.mxu0 0.0
    %5692 = vmatpush2.xpose.msra.mxu0 0.0
    %5693 = vmatprep.subr.mxu0 0.0
    %5694 = vmatpush2.xpose.msra.mxu0 0.0
    %5695 = vmatprep.subr.mxu0 0.0
    %5696 = vmatpush2.xpose.msra.mxu0 0.0
    %5697 = vmatprep.subr.mxu0 0.0
    %5698 = vmatpush2.xpose.msra.mxu0 0.0
    %5699 = vmatprep.mubr.f32.mxu0 0.0
    %v5700 = vand.u32 %v5549, 4294901760
    %5701 = vmatmul.mubr.f32.gmra.mxu0 %v5700
    %v5702 = vpop.f32.mrf.mxu0
    %v5703 = vadd.f32 %v5627, %v5702
    %v5704 = vpop.f32.mrf.mxu0
    %5705 = vdwg.mxu0
    %5706 = vmatprep.subr.mxu0 0.0
    %5707 = vmatpush1.xpose.msra.mxu0 0.0
    %5708 = vmatprep.subr.mxu0 0.0
    %5709 = vmatpush1.xpose.msra.mxu0 0.0
    %5710 = vmatprep.subr.mxu0 0.0
    %5711 = vmatpush1.xpose.msra.mxu0 0.0
    %5712 = vmatprep.subr.mxu0 0.0
    %5713 = vmatpush1.xpose.msra.mxu0 0.0
    %5714 = vmatprep.subr.mxu0 0.0
    %5715 = vmatpush1.xpose.msra.mxu0 0.0
    %5716 = vmatprep.subr.mxu0 0.0
    %5717 = vmatpush1.xpose.msra.mxu0 0.0
    %5718 = vmatprep.subr.mxu0 0.0
    %5719 = vmatpush1.xpose.msra.mxu0 0.0
    %5720 = vmatprep.subr.mxu0 0.0
    %5721 = vmatpush1.xpose.msra.mxu0 0.0
    %5722 = vmatprep.subr.mxu0 0.0
    %5723 = vmatpush1.xpose.msra.mxu0 0.0
    %5724 = vmatprep.subr.mxu0 0.0
    %5725 = vmatpush1.xpose.msra.mxu0 0.0
    %5726 = vmatprep.subr.mxu0 0.0
    %5727 = vmatpush1.xpose.msra.mxu0 0.0
    %5728 = vmatprep.subr.mxu0 0.0
    %5729 = vmatpush1.xpose.msra.mxu0 0.0
    %5730 = vmatprep.subr.mxu0 0.0
    %5731 = vmatpush1.xpose.msra.mxu0 0.0
    %5732 = vmatprep.subr.mxu0 0.0
    %5733 = vmatpush1.xpose.msra.mxu0 0.0
    %5734 = vmatprep.subr.mxu0 0.0
    %5735 = vmatpush1.xpose.msra.mxu0 0.0
    %5736 = vmatprep.subr.mxu0 0.0
    %v5737 = vand.u32 %v5552, 4294901760
    %v5738 = vsub.f32 %v5552, %v5737
    %5739 = vmatpush1.xpose.msra.mxu0 %v5738
    %5740 = vmatprep.subr.mxu0 0.0
    %5741 = vmatpush2.xpose.msra.mxu0 0.0
    %5742 = vmatprep.subr.mxu0 0.0
    %5743 = vmatpush2.xpose.msra.mxu0 0.0
    %5744 = vmatprep.subr.mxu0 0.0
    %5745 = vmatpush2.xpose.msra.mxu0 0.0
    %5746 = vmatprep.subr.mxu0 0.0
    %5747 = vmatpush2.xpose.msra.mxu0 0.0
    %5748 = vmatprep.subr.mxu0 0.0
    %5749 = vmatpush2.xpose.msra.mxu0 0.0
    %5750 = vmatprep.subr.mxu0 0.0
    %5751 = vmatpush2.xpose.msra.mxu0 0.0
    %5752 = vmatprep.subr.mxu0 0.0
    %5753 = vmatpush2.xpose.msra.mxu0 0.0
    %5754 = vmatprep.subr.mxu0 0.0
    %5755 = vmatpush2.xpose.msra.mxu0 0.0
    %5756 = vmatprep.subr.mxu0 0.0
    %5757 = vmatpush2.xpose.msra.mxu0 0.0
    %5758 = vmatprep.subr.mxu0 0.0
    %5759 = vmatpush2.xpose.msra.mxu0 0.0
    %5760 = vmatprep.subr.mxu0 0.0
    %5761 = vmatpush2.xpose.msra.mxu0 0.0
    %5762 = vmatprep.subr.mxu0 0.0
    %5763 = vmatpush2.xpose.msra.mxu0 0.0
    %5764 = vmatprep.subr.mxu0 0.0
    %5765 = vmatpush2.xpose.msra.mxu0 0.0
    %5766 = vmatprep.subr.mxu0 0.0
    %5767 = vmatpush2.xpose.msra.mxu0 0.0
    %5768 = vmatprep.subr.mxu0 0.0
    %5769 = vmatpush2.xpose.msra.mxu0 0.0
    %5770 = vmatprep.subr.mxu0 0.0
    %5771 = vmatpush2.xpose.msra.mxu0 0.0
    %5772 = vmatprep.mubr.f32.mxu0 0.0
    %v5773 = vand.u32 %v5549, 4294901760
    %v5774 = vsub.f32 %v5549, %v5773
    %5775 = vmatmul.mubr.f32.gmra.mxu0 %v5774
    %v5776 = vpop.f32.mrf.mxu0
    %v5777 = vadd.f32 %v5703, %v5776
    %v5778 = vpop.f32.mrf.mxu0
    %5779 = vdwg.mxu0
    %5780 = vmatprep.subr.mxu0 0.0
    %5781 = vmatpush1.xpose.msra.mxu0 0.0
    %5782 = vmatprep.subr.mxu0 0.0
    %5783 = vmatpush1.xpose.msra.mxu0 0.0
    %5784 = vmatprep.subr.mxu0 0.0
    %5785 = vmatpush1.xpose.msra.mxu0 0.0
    %5786 = vmatprep.subr.mxu0 0.0
    %5787 = vmatpush1.xpose.msra.mxu0 0.0
    %5788 = vmatprep.subr.mxu0 0.0
    %5789 = vmatpush1.xpose.msra.mxu0 0.0
    %5790 = vmatprep.subr.mxu0 0.0
    %5791 = vmatpush1.xpose.msra.mxu0 0.0
    %5792 = vmatprep.subr.mxu0 0.0
    %5793 = vmatpush1.xpose.msra.mxu0 0.0
    %5794 = vmatprep.subr.mxu0 0.0
    %5795 = vmatpush1.xpose.msra.mxu0 0.0
    %5796 = vmatprep.subr.mxu0 0.0
    %5797 = vmatpush1.xpose.msra.mxu0 0.0
    %5798 = vmatprep.subr.mxu0 0.0
    %5799 = vmatpush1.xpose.msra.mxu0 0.0
    %5800 = vmatprep.subr.mxu0 0.0
    %5801 = vmatpush1.xpose.msra.mxu0 0.0
    %5802 = vmatprep.subr.mxu0 0.0
    %5803 = vmatpush1.xpose.msra.mxu0 0.0
    %5804 = vmatprep.subr.mxu0 0.0
    %5805 = vmatpush1.xpose.msra.mxu0 0.0
    %5806 = vmatprep.subr.mxu0 0.0
    %5807 = vmatpush1.xpose.msra.mxu0 0.0
    %5808 = vmatprep.subr.mxu0 0.0
    %5809 = vmatpush1.xpose.msra.mxu0 0.0
    %5810 = vmatprep.subr.mxu0 0.0
    %v5811 = vand.u32 %v5552, 4294901760
    %5812 = vmatpush1.xpose.msra.mxu0 %v5811
    %5813 = vmatprep.subr.mxu0 0.0
    %5814 = vmatpush2.xpose.msra.mxu0 0.0
    %5815 = vmatprep.subr.mxu0 0.0
    %5816 = vmatpush2.xpose.msra.mxu0 0.0
    %5817 = vmatprep.subr.mxu0 0.0
    %5818 = vmatpush2.xpose.msra.mxu0 0.0
    %5819 = vmatprep.subr.mxu0 0.0
    %5820 = vmatpush2.xpose.msra.mxu0 0.0
    %5821 = vmatprep.subr.mxu0 0.0
    %5822 = vmatpush2.xpose.msra.mxu0 0.0
    %5823 = vmatprep.subr.mxu0 0.0
    %5824 = vmatpush2.xpose.msra.mxu0 0.0
    %5825 = vmatprep.subr.mxu0 0.0
    %5826 = vmatpush2.xpose.msra.mxu0 0.0
    %5827 = vmatprep.subr.mxu0 0.0
    %5828 = vmatpush2.xpose.msra.mxu0 0.0
    %5829 = vmatprep.subr.mxu0 0.0
    %5830 = vmatpush2.xpose.msra.mxu0 0.0
    %5831 = vmatprep.subr.mxu0 0.0
    %5832 = vmatpush2.xpose.msra.mxu0 0.0
    %5833 = vmatprep.subr.mxu0 0.0
    %5834 = vmatpush2.xpose.msra.mxu0 0.0
    %5835 = vmatprep.subr.mxu0 0.0
    %5836 = vmatpush2.xpose.msra.mxu0 0.0
    %5837 = vmatprep.subr.mxu0 0.0
    %5838 = vmatpush2.xpose.msra.mxu0 0.0
    %5839 = vmatprep.subr.mxu0 0.0
    %5840 = vmatpush2.xpose.msra.mxu0 0.0
    %5841 = vmatprep.subr.mxu0 0.0
    %5842 = vmatpush2.xpose.msra.mxu0 0.0
    %5843 = vmatprep.subr.mxu0 0.0
    %5844 = vmatpush2.xpose.msra.mxu0 0.0
    %5845 = vmatprep.mubr.f32.mxu0 0.0
    %v5846 = vand.u32 %v5549, 4294901760
    %v5847 = vsub.f32 %v5549, %v5846
    %v5848 = vand.u32 %v5847, 4294901760
    %5849 = vmatmul.mubr.f32.gmra.mxu0 %v5848
    %v5850 = vpop.f32.mrf.mxu0
    %v5851 = vadd.f32 %v5777, %v5850
    %v5852 = vpop.f32.mrf.mxu0
    %5853 = vdwg.mxu0
    %5854 = vmatprep.subr.mxu0 0.0
    %5855 = vmatpush1.xpose.msra.mxu0 0.0
    %5856 = vmatprep.subr.mxu0 0.0
    %5857 = vmatpush1.xpose.msra.mxu0 0.0
    %5858 = vmatprep.subr.mxu0 0.0
    %5859 = vmatpush1.xpose.msra.mxu0 0.0
    %5860 = vmatprep.subr.mxu0 0.0
    %5861 = vmatpush1.xpose.msra.mxu0 0.0
    %5862 = vmatprep.subr.mxu0 0.0
    %5863 = vmatpush1.xpose.msra.mxu0 0.0
    %5864 = vmatprep.subr.mxu0 0.0
    %5865 = vmatpush1.xpose.msra.mxu0 0.0
    %5866 = vmatprep.subr.mxu0 0.0
    %5867 = vmatpush1.xpose.msra.mxu0 0.0
    %5868 = vmatprep.subr.mxu0 0.0
    %5869 = vmatpush1.xpose.msra.mxu0 0.0
    %5870 = vmatprep.subr.mxu0 0.0
    %5871 = vmatpush1.xpose.msra.mxu0 0.0
    %5872 = vmatprep.subr.mxu0 0.0
    %5873 = vmatpush1.xpose.msra.mxu0 0.0
    %5874 = vmatprep.subr.mxu0 0.0
    %5875 = vmatpush1.xpose.msra.mxu0 0.0
    %5876 = vmatprep.subr.mxu0 0.0
    %5877 = vmatpush1.xpose.msra.mxu0 0.0
    %5878 = vmatprep.subr.mxu0 0.0
    %5879 = vmatpush1.xpose.msra.mxu0 0.0
    %5880 = vmatprep.subr.mxu0 0.0
    %5881 = vmatpush1.xpose.msra.mxu0 0.0
    %5882 = vmatprep.subr.mxu0 0.0
    %5883 = vmatpush1.xpose.msra.mxu0 0.0
    %5884 = vmatprep.subr.mxu0 0.0
    %v5885 = vand.u32 %v5552, 4294901760
    %v5886 = vsub.f32 %v5552, %v5885
    %v5887 = vand.u32 %v5886, 4294901760
    %5888 = vmatpush1.xpose.msra.mxu0 %v5887
    %5889 = vmatprep.subr.mxu0 0.0
    %5890 = vmatpush2.xpose.msra.mxu0 0.0
    %5891 = vmatprep.subr.mxu0 0.0
    %5892 = vmatpush2.xpose.msra.mxu0 0.0
    %5893 = vmatprep.subr.mxu0 0.0
    %5894 = vmatpush2.xpose.msra.mxu0 0.0
    %5895 = vmatprep.subr.mxu0 0.0
    %5896 = vmatpush2.xpose.msra.mxu0 0.0
    %5897 = vmatprep.subr.mxu0 0.0
    %5898 = vmatpush2.xpose.msra.mxu0 0.0
    %5899 = vmatprep.subr.mxu0 0.0
    %5900 = vmatpush2.xpose.msra.mxu0 0.0
    %5901 = vmatprep.subr.mxu0 0.0
    %5902 = vmatpush2.xpose.msra.mxu0 0.0
    %5903 = vmatprep.subr.mxu0 0.0
    %5904 = vmatpush2.xpose.msra.mxu0 0.0
    %5905 = vmatprep.subr.mxu0 0.0
    %5906 = vmatpush2.xpose.msra.mxu0 0.0
    %5907 = vmatprep.subr.mxu0 0.0
    %5908 = vmatpush2.xpose.msra.mxu0 0.0
    %5909 = vmatprep.subr.mxu0 0.0
    %5910 = vmatpush2.xpose.msra.mxu0 0.0
    %5911 = vmatprep.subr.mxu0 0.0
    %5912 = vmatpush2.xpose.msra.mxu0 0.0
    %5913 = vmatprep.subr.mxu0 0.0
    %5914 = vmatpush2.xpose.msra.mxu0 0.0
    %5915 = vmatprep.subr.mxu0 0.0
    %5916 = vmatpush2.xpose.msra.mxu0 0.0
    %5917 = vmatprep.subr.mxu0 0.0
    %5918 = vmatpush2.xpose.msra.mxu0 0.0
    %5919 = vmatprep.subr.mxu0 0.0
    %5920 = vmatpush2.xpose.msra.mxu0 0.0
    %5921 = vmatprep.mubr.f32.mxu0 0.0
    %v5922 = vand.u32 %v5549, 4294901760
    %5923 = vmatmul.mubr.f32.gmra.mxu0 %v5922
    %v5924 = vpop.f32.mrf.mxu0
    %v5925 = vadd.f32 %v5851, %v5924
    %v5926 = vpop.f32.mrf.mxu0
    %5927 = vdwg.mxu0
    %5928 = vmatprep.subr.mxu0 0.0
    %5929 = vmatpush1.xpose.msra.mxu0 0.0
    %5930 = vmatprep.subr.mxu0 0.0
    %5931 = vmatpush1.xpose.msra.mxu0 0.0
    %5932 = vmatprep.subr.mxu0 0.0
    %5933 = vmatpush1.xpose.msra.mxu0 0.0
    %5934 = vmatprep.subr.mxu0 0.0
    %5935 = vmatpush1.xpose.msra.mxu0 0.0
    %5936 = vmatprep.subr.mxu0 0.0
    %5937 = vmatpush1.xpose.msra.mxu0 0.0
    %5938 = vmatprep.subr.mxu0 0.0
    %5939 = vmatpush1.xpose.msra.mxu0 0.0
    %5940 = vmatprep.subr.mxu0 0.0
    %5941 = vmatpush1.xpose.msra.mxu0 0.0
    %5942 = vmatprep.subr.mxu0 0.0
    %5943 = vmatpush1.xpose.msra.mxu0 0.0
    %5944 = vmatprep.subr.mxu0 0.0
    %5945 = vmatpush1.xpose.msra.mxu0 0.0
    %5946 = vmatprep.subr.mxu0 0.0
    %5947 = vmatpush1.xpose.msra.mxu0 0.0
    %5948 = vmatprep.subr.mxu0 0.0
    %5949 = vmatpush1.xpose.msra.mxu0 0.0
    %5950 = vmatprep.subr.mxu0 0.0
    %5951 = vmatpush1.xpose.msra.mxu0 0.0
    %5952 = vmatprep.subr.mxu0 0.0
    %5953 = vmatpush1.xpose.msra.mxu0 0.0
    %5954 = vmatprep.subr.mxu0 0.0
    %5955 = vmatpush1.xpose.msra.mxu0 0.0
    %5956 = vmatprep.subr.mxu0 0.0
    %5957 = vmatpush1.xpose.msra.mxu0 0.0
    %5958 = vmatprep.subr.mxu0 0.0
    %v5959 = vand.u32 %v5552, 4294901760
    %5960 = vmatpush1.xpose.msra.mxu0 %v5959
    %5961 = vmatprep.subr.mxu0 0.0
    %5962 = vmatpush2.xpose.msra.mxu0 0.0
    %5963 = vmatprep.subr.mxu0 0.0
    %5964 = vmatpush2.xpose.msra.mxu0 0.0
    %5965 = vmatprep.subr.mxu0 0.0
    %5966 = vmatpush2.xpose.msra.mxu0 0.0
    %5967 = vmatprep.subr.mxu0 0.0
    %5968 = vmatpush2.xpose.msra.mxu0 0.0
    %5969 = vmatprep.subr.mxu0 0.0
    %5970 = vmatpush2.xpose.msra.mxu0 0.0
    %5971 = vmatprep.subr.mxu0 0.0
    %5972 = vmatpush2.xpose.msra.mxu0 0.0
    %5973 = vmatprep.subr.mxu0 0.0
    %5974 = vmatpush2.xpose.msra.mxu0 0.0
    %5975 = vmatprep.subr.mxu0 0.0
    %5976 = vmatpush2.xpose.msra.mxu0 0.0
    %5977 = vmatprep.subr.mxu0 0.0
    %5978 = vmatpush2.xpose.msra.mxu0 0.0
    %5979 = vmatprep.subr.mxu0 0.0
    %5980 = vmatpush2.xpose.msra.mxu0 0.0
    %5981 = vmatprep.subr.mxu0 0.0
    %5982 = vmatpush2.xpose.msra.mxu0 0.0
    %5983 = vmatprep.subr.mxu0 0.0
    %5984 = vmatpush2.xpose.msra.mxu0 0.0
    %5985 = vmatprep.subr.mxu0 0.0
    %5986 = vmatpush2.xpose.msra.mxu0 0.0
    %5987 = vmatprep.subr.mxu0 0.0
    %5988 = vmatpush2.xpose.msra.mxu0 0.0
    %5989 = vmatprep.subr.mxu0 0.0
    %5990 = vmatpush2.xpose.msra.mxu0 0.0
    %5991 = vmatprep.subr.mxu0 0.0
    %5992 = vmatpush2.xpose.msra.mxu0 0.0
    %5993 = vmatprep.mubr.f32.mxu0 0.0
    %v5994 = vand.u32 %v5549, 4294901760
    %5995 = vmatmul.mubr.f32.gmra.mxu0 %v5994
    %v5996 = vpop.f32.mrf.mxu0
    %v5997 = vadd.f32 %v5925, %v5996
    %v5998 = vpop.f32.mrf.mxu0
    %5999 = vdwg.mxu0
    %vm6000 = vcmask 57344
    %6001 = vst.msk [vmem:[#allocation2] sm:$0x1] %vm6000, %v5997
    %v6003 = vsel %vm1163, %v2430, 0
    %v6006 = vsel %vm1163, %v2436, 0
    %v6009 = vsel %vm1163, %v3067, 0
    %v6012 = vsel %vm1163, %v3073, 0
    %6014 = vmatprep.subr.mxu0 0.0
    %6015 = vmatpush1.xpose.msra.mxu0 0.0
    %6016 = vmatprep.subr.mxu0 0.0
    %6017 = vmatpush1.xpose.msra.mxu0 0.0
    %6018 = vmatprep.subr.mxu0 0.0
    %6019 = vmatpush1.xpose.msra.mxu0 0.0
    %6020 = vmatprep.subr.mxu0 0.0
    %6021 = vmatpush1.xpose.msra.mxu0 0.0
    %6022 = vmatprep.subr.mxu0 0.0
    %6023 = vmatpush1.xpose.msra.mxu0 0.0
    %6024 = vmatprep.subr.mxu0 0.0
    %6025 = vmatpush1.xpose.msra.mxu0 0.0
    %6026 = vmatprep.subr.mxu0 0.0
    %6027 = vmatpush1.xpose.msra.mxu0 0.0
    %6028 = vmatprep.subr.mxu0 0.0
    %6029 = vmatpush1.xpose.msra.mxu0 0.0
    %6030 = vmatprep.subr.mxu0 0.0
    %6031 = vmatpush1.xpose.msra.mxu0 0.0
    %6032 = vmatprep.subr.mxu0 0.0
    %6033 = vmatpush1.xpose.msra.mxu0 0.0
    %6034 = vmatprep.subr.mxu0 0.0
    %6035 = vmatpush1.xpose.msra.mxu0 0.0
    %6036 = vmatprep.subr.mxu0 0.0
    %6037 = vmatpush1.xpose.msra.mxu0 0.0
    %6038 = vmatprep.subr.mxu0 0.0
    %6039 = vmatpush1.xpose.msra.mxu0 0.0
    %6040 = vmatprep.subr.mxu0 0.0
    %6041 = vmatpush1.xpose.msra.mxu0 0.0
    %6042 = vmatprep.subr.mxu0 0.0
    %v6043 = vand.u32 %v6012, 4294901760
    %6044 = vmatpush1.xpose.msra.mxu0 %v6043
    %6045 = vmatprep.subr.mxu0 0.0
    %v6046 = vand.u32 %v6009, 4294901760
    %6047 = vmatpush1.xpose.msra.mxu0 %v6046
    %6048 = vmatprep.subr.mxu0 0.0
    %6049 = vmatpush2.xpose.msra.mxu0 0.0
    %6050 = vmatprep.subr.mxu0 0.0
    %6051 = vmatpush2.xpose.msra.mxu0 0.0
    %6052 = vmatprep.subr.mxu0 0.0
    %6053 = vmatpush2.xpose.msra.mxu0 0.0
    %6054 = vmatprep.subr.mxu0 0.0
    %6055 = vmatpush2.xpose.msra.mxu0 0.0
    %6056 = vmatprep.subr.mxu0 0.0
    %6057 = vmatpush2.xpose.msra.mxu0 0.0
    %6058 = vmatprep.subr.mxu0 0.0
    %6059 = vmatpush2.xpose.msra.mxu0 0.0
    %6060 = vmatprep.subr.mxu0 0.0
    %6061 = vmatpush2.xpose.msra.mxu0 0.0
    %6062 = vmatprep.subr.mxu0 0.0
    %6063 = vmatpush2.xpose.msra.mxu0 0.0
    %6064 = vmatprep.subr.mxu0 0.0
    %6065 = vmatpush2.xpose.msra.mxu0 0.0
    %6066 = vmatprep.subr.mxu0 0.0
    %6067 = vmatpush2.xpose.msra.mxu0 0.0
    %6068 = vmatprep.subr.mxu0 0.0
    %6069 = vmatpush2.xpose.msra.mxu0 0.0
    %6070 = vmatprep.subr.mxu0 0.0
    %6071 = vmatpush2.xpose.msra.mxu0 0.0
    %6072 = vmatprep.subr.mxu0 0.0
    %6073 = vmatpush2.xpose.msra.mxu0 0.0
    %6074 = vmatprep.subr.mxu0 0.0
    %6075 = vmatpush2.xpose.msra.mxu0 0.0
    %6076 = vmatprep.subr.mxu0 0.0
    %6077 = vmatpush2.xpose.msra.mxu0 0.0
    %6078 = vmatprep.subr.mxu0 0.0
    %6079 = vmatpush2.xpose.msra.mxu0 0.0
    %6080 = vmatprep.mubr.f32.mxu0 0.0
    %v6081 = vand.u32 %v6003, 4294901760
    %v6082 = vsub.f32 %v6003, %v6081
    %v6083 = vand.u32 %v6082, 4294901760
    %v6084 = vsub.f32 %v6082, %v6083
    %v6085 = vand.u32 %v6084, 4294901760
    %6086 = vmatmul.mubr.f32.gmra.mxu0 %v6085
    %v6087 = vpop.f32.mrf.mxu0
    %v6088 = vadd.f32 0.0, %v6087
    %v6089 = vpop.f32.mrf.mxu0
    %6090 = vmatprep.mubr.f32.mxu0 0.0
    %v6091 = vand.u32 %v6006, 4294901760
    %v6092 = vsub.f32 %v6006, %v6091
    %v6093 = vand.u32 %v6092, 4294901760
    %v6094 = vsub.f32 %v6092, %v6093
    %v6095 = vand.u32 %v6094, 4294901760
    %6096 = vmatmul.mubr.f32.gmra.mxu0 %v6095
    %v6097 = vpop.f32.mrf.mxu0
    %v6098 = vadd.f32 0.0, %v6097
    %v6099 = vpop.f32.mrf.mxu0
    %6100 = vdwg.mxu0
    %6101 = vmatprep.subr.mxu0 0.0
    %6102 = vmatpush1.xpose.msra.mxu0 0.0
    %6103 = vmatprep.subr.mxu0 0.0
    %6104 = vmatpush1.xpose.msra.mxu0 0.0
    %6105 = vmatprep.subr.mxu0 0.0
    %6106 = vmatpush1.xpose.msra.mxu0 0.0
    %6107 = vmatprep.subr.mxu0 0.0
    %6108 = vmatpush1.xpose.msra.mxu0 0.0
    %6109 = vmatprep.subr.mxu0 0.0
    %6110 = vmatpush1.xpose.msra.mxu0 0.0
    %6111 = vmatprep.subr.mxu0 0.0
    %6112 = vmatpush1.xpose.msra.mxu0 0.0
    %6113 = vmatprep.subr.mxu0 0.0
    %6114 = vmatpush1.xpose.msra.mxu0 0.0
    %6115 = vmatprep.subr.mxu0 0.0
    %6116 = vmatpush1.xpose.msra.mxu0 0.0
    %6117 = vmatprep.subr.mxu0 0.0
    %6118 = vmatpush1.xpose.msra.mxu0 0.0
    %6119 = vmatprep.subr.mxu0 0.0
    %6120 = vmatpush1.xpose.msra.mxu0 0.0
    %6121 = vmatprep.subr.mxu0 0.0
    %6122 = vmatpush1.xpose.msra.mxu0 0.0
    %6123 = vmatprep.subr.mxu0 0.0
    %6124 = vmatpush1.xpose.msra.mxu0 0.0
    %6125 = vmatprep.subr.mxu0 0.0
    %6126 = vmatpush1.xpose.msra.mxu0 0.0
    %6127 = vmatprep.subr.mxu0 0.0
    %6128 = vmatpush1.xpose.msra.mxu0 0.0
    %6129 = vmatprep.subr.mxu0 0.0
    %v6130 = vand.u32 %v6012, 4294901760
    %v6131 = vsub.f32 %v6012, %v6130
    %v6132 = vand.u32 %v6131, 4294901760
    %v6133 = vsub.f32 %v6131, %v6132
    %v6134 = vand.u32 %v6133, 4294901760
    %6135 = vmatpush1.xpose.msra.mxu0 %v6134
    %6136 = vmatprep.subr.mxu0 0.0
    %v6137 = vand.u32 %v6009, 4294901760
    %v6138 = vsub.f32 %v6009, %v6137
    %v6139 = vand.u32 %v6138, 4294901760
    %v6140 = vsub.f32 %v6138, %v6139
    %v6141 = vand.u32 %v6140, 4294901760
    %6142 = vmatpush1.xpose.msra.mxu0 %v6141
    %6143 = vmatprep.subr.mxu0 0.0
    %6144 = vmatpush2.xpose.msra.mxu0 0.0
    %6145 = vmatprep.subr.mxu0 0.0
    %6146 = vmatpush2.xpose.msra.mxu0 0.0
    %6147 = vmatprep.subr.mxu0 0.0
    %6148 = vmatpush2.xpose.msra.mxu0 0.0
    %6149 = vmatprep.subr.mxu0 0.0
    %6150 = vmatpush2.xpose.msra.mxu0 0.0
    %6151 = vmatprep.subr.mxu0 0.0
    %6152 = vmatpush2.xpose.msra.mxu0 0.0
    %6153 = vmatprep.subr.mxu0 0.0
    %6154 = vmatpush2.xpose.msra.mxu0 0.0
    %6155 = vmatprep.subr.mxu0 0.0
    %6156 = vmatpush2.xpose.msra.mxu0 0.0
    %6157 = vmatprep.subr.mxu0 0.0
    %6158 = vmatpush2.xpose.msra.mxu0 0.0
    %6159 = vmatprep.subr.mxu0 0.0
    %6160 = vmatpush2.xpose.msra.mxu0 0.0
    %6161 = vmatprep.subr.mxu0 0.0
    %6162 = vmatpush2.xpose.msra.mxu0 0.0
    %6163 = vmatprep.subr.mxu0 0.0
    %6164 = vmatpush2.xpose.msra.mxu0 0.0
    %6165 = vmatprep.subr.mxu0 0.0
    %6166 = vmatpush2.xpose.msra.mxu0 0.0
    %6167 = vmatprep.subr.mxu0 0.0
    %6168 = vmatpush2.xpose.msra.mxu0 0.0
    %6169 = vmatprep.subr.mxu0 0.0
    %6170 = vmatpush2.xpose.msra.mxu0 0.0
    %6171 = vmatprep.subr.mxu0 0.0
    %6172 = vmatpush2.xpose.msra.mxu0 0.0
    %6173 = vmatprep.subr.mxu0 0.0
    %6174 = vmatpush2.xpose.msra.mxu0 0.0
    %6175 = vmatprep.mubr.f32.mxu0 0.0
    %v6176 = vand.u32 %v6003, 4294901760
    %6177 = vmatmul.mubr.f32.gmra.mxu0 %v6176
    %v6178 = vpop.f32.mrf.mxu0
    %v6179 = vadd.f32 %v6088, %v6178
    %v6180 = vpop.f32.mrf.mxu0
    %6181 = vmatprep.mubr.f32.mxu0 0.0
    %v6182 = vand.u32 %v6006, 4294901760
    %6183 = vmatmul.mubr.f32.gmra.mxu0 %v6182
    %v6184 = vpop.f32.mrf.mxu0
    %v6185 = vadd.f32 %v6098, %v6184
    %v6186 = vpop.f32.mrf.mxu0
    %6187 = vdwg.mxu0
    %6188 = vmatprep.subr.mxu0 0.0
    %6189 = vmatpush1.xpose.msra.mxu0 0.0
    %6190 = vmatprep.subr.mxu0 0.0
    %6191 = vmatpush1.xpose.msra.mxu0 0.0
    %6192 = vmatprep.subr.mxu0 0.0
    %6193 = vmatpush1.xpose.msra.mxu0 0.0
    %6194 = vmatprep.subr.mxu0 0.0
    %6195 = vmatpush1.xpose.msra.mxu0 0.0
    %6196 = vmatprep.subr.mxu0 0.0
    %6197 = vmatpush1.xpose.msra.mxu0 0.0
    %6198 = vmatprep.subr.mxu0 0.0
    %6199 = vmatpush1.xpose.msra.mxu0 0.0
    %6200 = vmatprep.subr.mxu0 0.0
    %6201 = vmatpush1.xpose.msra.mxu0 0.0
    %6202 = vmatprep.subr.mxu0 0.0
    %6203 = vmatpush1.xpose.msra.mxu0 0.0
    %6204 = vmatprep.subr.mxu0 0.0
    %6205 = vmatpush1.xpose.msra.mxu0 0.0
    %6206 = vmatprep.subr.mxu0 0.0
    %6207 = vmatpush1.xpose.msra.mxu0 0.0
    %6208 = vmatprep.subr.mxu0 0.0
    %6209 = vmatpush1.xpose.msra.mxu0 0.0
    %6210 = vmatprep.subr.mxu0 0.0
    %6211 = vmatpush1.xpose.msra.mxu0 0.0
    %6212 = vmatprep.subr.mxu0 0.0
    %6213 = vmatpush1.xpose.msra.mxu0 0.0
    %6214 = vmatprep.subr.mxu0 0.0
    %6215 = vmatpush1.xpose.msra.mxu0 0.0
    %6216 = vmatprep.subr.mxu0 0.0
    %v6217 = vand.u32 %v6012, 4294901760
    %v6218 = vsub.f32 %v6012, %v6217
    %6219 = vmatpush1.xpose.msra.mxu0 %v6218
    %6220 = vmatprep.subr.mxu0 0.0
    %v6221 = vand.u32 %v6009, 4294901760
    %v6222 = vsub.f32 %v6009, %v6221
    %6223 = vmatpush1.xpose.msra.mxu0 %v6222
    %6224 = vmatprep.subr.mxu0 0.0
    %6225 = vmatpush2.xpose.msra.mxu0 0.0
    %6226 = vmatprep.subr.mxu0 0.0
    %6227 = vmatpush2.xpose.msra.mxu0 0.0
    %6228 = vmatprep.subr.mxu0 0.0
    %6229 = vmatpush2.xpose.msra.mxu0 0.0
    %6230 = vmatprep.subr.mxu0 0.0
    %6231 = vmatpush2.xpose.msra.mxu0 0.0
    %6232 = vmatprep.subr.mxu0 0.0
    %6233 = vmatpush2.xpose.msra.mxu0 0.0
    %6234 = vmatprep.subr.mxu0 0.0
    %6235 = vmatpush2.xpose.msra.mxu0 0.0
    %6236 = vmatprep.subr.mxu0 0.0
    %6237 = vmatpush2.xpose.msra.mxu0 0.0
    %6238 = vmatprep.subr.mxu0 0.0
    %6239 = vmatpush2.xpose.msra.mxu0 0.0
    %6240 = vmatprep.subr.mxu0 0.0
    %6241 = vmatpush2.xpose.msra.mxu0 0.0
    %6242 = vmatprep.subr.mxu0 0.0
    %6243 = vmatpush2.xpose.msra.mxu0 0.0
    %6244 = vmatprep.subr.mxu0 0.0
    %6245 = vmatpush2.xpose.msra.mxu0 0.0
    %6246 = vmatprep.subr.mxu0 0.0
    %6247 = vmatpush2.xpose.msra.mxu0 0.0
    %6248 = vmatprep.subr.mxu0 0.0
    %6249 = vmatpush2.xpose.msra.mxu0 0.0
    %6250 = vmatprep.subr.mxu0 0.0
    %6251 = vmatpush2.xpose.msra.mxu0 0.0
    %6252 = vmatprep.subr.mxu0 0.0
    %6253 = vmatpush2.xpose.msra.mxu0 0.0
    %6254 = vmatprep.subr.mxu0 0.0
    %6255 = vmatpush2.xpose.msra.mxu0 0.0
    %6256 = vmatprep.mubr.f32.mxu0 0.0
    %v6257 = vand.u32 %v6003, 4294901760
    %v6258 = vsub.f32 %v6003, %v6257
    %6259 = vmatmul.mubr.f32.gmra.mxu0 %v6258
    %v6260 = vpop.f32.mrf.mxu0
    %v6261 = vadd.f32 %v6179, %v6260
    %v6262 = vpop.f32.mrf.mxu0
    %6263 = vmatprep.mubr.f32.mxu0 0.0
    %v6264 = vand.u32 %v6006, 4294901760
    %v6265 = vsub.f32 %v6006, %v6264
    %6266 = vmatmul.mubr.f32.gmra.mxu0 %v6265
    %v6267 = vpop.f32.mrf.mxu0
    %v6268 = vadd.f32 %v6185, %v6267
    %v6269 = vpop.f32.mrf.mxu0
    %6270 = vdwg.mxu0
    %6271 = vmatprep.subr.mxu0 0.0
    %6272 = vmatpush1.xpose.msra.mxu0 0.0
    %6273 = vmatprep.subr.mxu0 0.0
    %6274 = vmatpush1.xpose.msra.mxu0 0.0
    %6275 = vmatprep.subr.mxu0 0.0
    %6276 = vmatpush1.xpose.msra.mxu0 0.0
    %6277 = vmatprep.subr.mxu0 0.0
    %6278 = vmatpush1.xpose.msra.mxu0 0.0
    %6279 = vmatprep.subr.mxu0 0.0
    %6280 = vmatpush1.xpose.msra.mxu0 0.0
    %6281 = vmatprep.subr.mxu0 0.0
    %6282 = vmatpush1.xpose.msra.mxu0 0.0
    %6283 = vmatprep.subr.mxu0 0.0
    %6284 = vmatpush1.xpose.msra.mxu0 0.0
    %6285 = vmatprep.subr.mxu0 0.0
    %6286 = vmatpush1.xpose.msra.mxu0 0.0
    %6287 = vmatprep.subr.mxu0 0.0
    %6288 = vmatpush1.xpose.msra.mxu0 0.0
    %6289 = vmatprep.subr.mxu0 0.0
    %6290 = vmatpush1.xpose.msra.mxu0 0.0
    %6291 = vmatprep.subr.mxu0 0.0
    %6292 = vmatpush1.xpose.msra.mxu0 0.0
    %6293 = vmatprep.subr.mxu0 0.0
    %6294 = vmatpush1.xpose.msra.mxu0 0.0
    %6295 = vmatprep.subr.mxu0 0.0
    %6296 = vmatpush1.xpose.msra.mxu0 0.0
    %6297 = vmatprep.subr.mxu0 0.0
    %6298 = vmatpush1.xpose.msra.mxu0 0.0
    %6299 = vmatprep.subr.mxu0 0.0
    %v6300 = vand.u32 %v6012, 4294901760
    %6301 = vmatpush1.xpose.msra.mxu0 %v6300
    %6302 = vmatprep.subr.mxu0 0.0
    %v6303 = vand.u32 %v6009, 4294901760
    %6304 = vmatpush1.xpose.msra.mxu0 %v6303
    %6305 = vmatprep.subr.mxu0 0.0
    %6306 = vmatpush2.xpose.msra.mxu0 0.0
    %6307 = vmatprep.subr.mxu0 0.0
    %6308 = vmatpush2.xpose.msra.mxu0 0.0
    %6309 = vmatprep.subr.mxu0 0.0
    %6310 = vmatpush2.xpose.msra.mxu0 0.0
    %6311 = vmatprep.subr.mxu0 0.0
    %6312 = vmatpush2.xpose.msra.mxu0 0.0
    %6313 = vmatprep.subr.mxu0 0.0
    %6314 = vmatpush2.xpose.msra.mxu0 0.0
    %6315 = vmatprep.subr.mxu0 0.0
    %6316 = vmatpush2.xpose.msra.mxu0 0.0
    %6317 = vmatprep.subr.mxu0 0.0
    %6318 = vmatpush2.xpose.msra.mxu0 0.0
    %6319 = vmatprep.subr.mxu0 0.0
    %6320 = vmatpush2.xpose.msra.mxu0 0.0
    %6321 = vmatprep.subr.mxu0 0.0
    %6322 = vmatpush2.xpose.msra.mxu0 0.0
    %6323 = vmatprep.subr.mxu0 0.0
    %6324 = vmatpush2.xpose.msra.mxu0 0.0
    %6325 = vmatprep.subr.mxu0 0.0
    %6326 = vmatpush2.xpose.msra.mxu0 0.0
    %6327 = vmatprep.subr.mxu0 0.0
    %6328 = vmatpush2.xpose.msra.mxu0 0.0
    %6329 = vmatprep.subr.mxu0 0.0
    %6330 = vmatpush2.xpose.msra.mxu0 0.0
    %6331 = vmatprep.subr.mxu0 0.0
    %6332 = vmatpush2.xpose.msra.mxu0 0.0
    %6333 = vmatprep.subr.mxu0 0.0
    %6334 = vmatpush2.xpose.msra.mxu0 0.0
    %6335 = vmatprep.subr.mxu0 0.0
    %6336 = vmatpush2.xpose.msra.mxu0 0.0
    %6337 = vmatprep.mubr.f32.mxu0 0.0
    %v6338 = vand.u32 %v6003, 4294901760
    %v6339 = vsub.f32 %v6003, %v6338
    %v6340 = vand.u32 %v6339, 4294901760
    %6341 = vmatmul.mubr.f32.gmra.mxu0 %v6340
    %v6342 = vpop.f32.mrf.mxu0
    %v6343 = vadd.f32 %v6261, %v6342
    %v6344 = vpop.f32.mrf.mxu0
    %6345 = vmatprep.mubr.f32.mxu0 0.0
    %v6346 = vand.u32 %v6006, 4294901760
    %v6347 = vsub.f32 %v6006, %v6346
    %v6348 = vand.u32 %v6347, 4294901760
    %6349 = vmatmul.mubr.f32.gmra.mxu0 %v6348
    %v6350 = vpop.f32.mrf.mxu0
    %v6351 = vadd.f32 %v6268, %v6350
    %v6352 = vpop.f32.mrf.mxu0
    %6353 = vdwg.mxu0
    %6354 = vmatprep.subr.mxu0 0.0
    %6355 = vmatpush1.xpose.msra.mxu0 0.0
    %6356 = vmatprep.subr.mxu0 0.0
    %6357 = vmatpush1.xpose.msra.mxu0 0.0
    %6358 = vmatprep.subr.mxu0 0.0
    %6359 = vmatpush1.xpose.msra.mxu0 0.0
    %6360 = vmatprep.subr.mxu0 0.0
    %6361 = vmatpush1.xpose.msra.mxu0 0.0
    %6362 = vmatprep.subr.mxu0 0.0
    %6363 = vmatpush1.xpose.msra.mxu0 0.0
    %6364 = vmatprep.subr.mxu0 0.0
    %6365 = vmatpush1.xpose.msra.mxu0 0.0
    %6366 = vmatprep.subr.mxu0 0.0
    %6367 = vmatpush1.xpose.msra.mxu0 0.0
    %6368 = vmatprep.subr.mxu0 0.0
    %6369 = vmatpush1.xpose.msra.mxu0 0.0
    %6370 = vmatprep.subr.mxu0 0.0
    %6371 = vmatpush1.xpose.msra.mxu0 0.0
    %6372 = vmatprep.subr.mxu0 0.0
    %6373 = vmatpush1.xpose.msra.mxu0 0.0
    %6374 = vmatprep.subr.mxu0 0.0
    %6375 = vmatpush1.xpose.msra.mxu0 0.0
    %6376 = vmatprep.subr.mxu0 0.0
    %6377 = vmatpush1.xpose.msra.mxu0 0.0
    %6378 = vmatprep.subr.mxu0 0.0
    %6379 = vmatpush1.xpose.msra.mxu0 0.0
    %6380 = vmatprep.subr.mxu0 0.0
    %6381 = vmatpush1.xpose.msra.mxu0 0.0
    %6382 = vmatprep.subr.mxu0 0.0
    %v6383 = vand.u32 %v6012, 4294901760
    %v6384 = vsub.f32 %v6012, %v6383
    %v6385 = vand.u32 %v6384, 4294901760
    %6386 = vmatpush1.xpose.msra.mxu0 %v6385
    %6387 = vmatprep.subr.mxu0 0.0
    %v6388 = vand.u32 %v6009, 4294901760
    %v6389 = vsub.f32 %v6009, %v6388
    %v6390 = vand.u32 %v6389, 4294901760
    %6391 = vmatpush1.xpose.msra.mxu0 %v6390
    %6392 = vmatprep.subr.mxu0 0.0
    %6393 = vmatpush2.xpose.msra.mxu0 0.0
    %6394 = vmatprep.subr.mxu0 0.0
    %6395 = vmatpush2.xpose.msra.mxu0 0.0
    %6396 = vmatprep.subr.mxu0 0.0
    %6397 = vmatpush2.xpose.msra.mxu0 0.0
    %6398 = vmatprep.subr.mxu0 0.0
    %6399 = vmatpush2.xpose.msra.mxu0 0.0
    %6400 = vmatprep.subr.mxu0 0.0
    %6401 = vmatpush2.xpose.msra.mxu0 0.0
    %6402 = vmatprep.subr.mxu0 0.0
    %6403 = vmatpush2.xpose.msra.mxu0 0.0
    %6404 = vmatprep.subr.mxu0 0.0
    %6405 = vmatpush2.xpose.msra.mxu0 0.0
    %6406 = vmatprep.subr.mxu0 0.0
    %6407 = vmatpush2.xpose.msra.mxu0 0.0
    %6408 = vmatprep.subr.mxu0 0.0
    %6409 = vmatpush2.xpose.msra.mxu0 0.0
    %6410 = vmatprep.subr.mxu0 0.0
    %6411 = vmatpush2.xpose.msra.mxu0 0.0
    %6412 = vmatprep.subr.mxu0 0.0
    %6413 = vmatpush2.xpose.msra.mxu0 0.0
    %6414 = vmatprep.subr.mxu0 0.0
    %6415 = vmatpush2.xpose.msra.mxu0 0.0
    %6416 = vmatprep.subr.mxu0 0.0
    %6417 = vmatpush2.xpose.msra.mxu0 0.0
    %6418 = vmatprep.subr.mxu0 0.0
    %6419 = vmatpush2.xpose.msra.mxu0 0.0
    %6420 = vmatprep.subr.mxu0 0.0
    %6421 = vmatpush2.xpose.msra.mxu0 0.0
    %6422 = vmatprep.subr.mxu0 0.0
    %6423 = vmatpush2.xpose.msra.mxu0 0.0
    %6424 = vmatprep.mubr.f32.mxu0 0.0
    %v6425 = vand.u32 %v6003, 4294901760
    %6426 = vmatmul.mubr.f32.gmra.mxu0 %v6425
    %v6427 = vpop.f32.mrf.mxu0
    %v6428 = vadd.f32 %v6343, %v6427
    %v6429 = vpop.f32.mrf.mxu0
    %6430 = vmatprep.mubr.f32.mxu0 0.0
    %v6431 = vand.u32 %v6006, 4294901760
    %6432 = vmatmul.mubr.f32.gmra.mxu0 %v6431
    %v6433 = vpop.f32.mrf.mxu0
    %v6434 = vadd.f32 %v6351, %v6433
    %v6435 = vpop.f32.mrf.mxu0
    %6436 = vdwg.mxu0
    %6437 = vmatprep.subr.mxu0 0.0
    %6438 = vmatpush1.xpose.msra.mxu0 0.0
    %6439 = vmatprep.subr.mxu0 0.0
    %6440 = vmatpush1.xpose.msra.mxu0 0.0
    %6441 = vmatprep.subr.mxu0 0.0
    %6442 = vmatpush1.xpose.msra.mxu0 0.0
    %6443 = vmatprep.subr.mxu0 0.0
    %6444 = vmatpush1.xpose.msra.mxu0 0.0
    %6445 = vmatprep.subr.mxu0 0.0
    %6446 = vmatpush1.xpose.msra.mxu0 0.0
    %6447 = vmatprep.subr.mxu0 0.0
    %6448 = vmatpush1.xpose.msra.mxu0 0.0
    %6449 = vmatprep.subr.mxu0 0.0
    %6450 = vmatpush1.xpose.msra.mxu0 0.0
    %6451 = vmatprep.subr.mxu0 0.0
    %6452 = vmatpush1.xpose.msra.mxu0 0.0
    %6453 = vmatprep.subr.mxu0 0.0
    %6454 = vmatpush1.xpose.msra.mxu0 0.0
    %6455 = vmatprep.subr.mxu0 0.0
    %6456 = vmatpush1.xpose.msra.mxu0 0.0
    %6457 = vmatprep.subr.mxu0 0.0
    %6458 = vmatpush1.xpose.msra.mxu0 0.0
    %6459 = vmatprep.subr.mxu0 0.0
    %6460 = vmatpush1.xpose.msra.mxu0 0.0
    %6461 = vmatprep.subr.mxu0 0.0
    %6462 = vmatpush1.xpose.msra.mxu0 0.0
    %6463 = vmatprep.subr.mxu0 0.0
    %6464 = vmatpush1.xpose.msra.mxu0 0.0
    %6465 = vmatprep.subr.mxu0 0.0
    %v6466 = vand.u32 %v6012, 4294901760
    %6467 = vmatpush1.xpose.msra.mxu0 %v6466
    %6468 = vmatprep.subr.mxu0 0.0
    %v6469 = vand.u32 %v6009, 4294901760
    %6470 = vmatpush1.xpose.msra.mxu0 %v6469
    %6471 = vmatprep.subr.mxu0 0.0
    %6472 = vmatpush2.xpose.msra.mxu0 0.0
    %6473 = vmatprep.subr.mxu0 0.0
    %6474 = vmatpush2.xpose.msra.mxu0 0.0
    %6475 = vmatprep.subr.mxu0 0.0
    %6476 = vmatpush2.xpose.msra.mxu0 0.0
    %6477 = vmatprep.subr.mxu0 0.0
    %6478 = vmatpush2.xpose.msra.mxu0 0.0
    %6479 = vmatprep.subr.mxu0 0.0
    %6480 = vmatpush2.xpose.msra.mxu0 0.0
    %6481 = vmatprep.subr.mxu0 0.0
    %6482 = vmatpush2.xpose.msra.mxu0 0.0
    %6483 = vmatprep.subr.mxu0 0.0
    %6484 = vmatpush2.xpose.msra.mxu0 0.0
    %6485 = vmatprep.subr.mxu0 0.0
    %6486 = vmatpush2.xpose.msra.mxu0 0.0
    %6487 = vmatprep.subr.mxu0 0.0
    %6488 = vmatpush2.xpose.msra.mxu0 0.0
    %6489 = vmatprep.subr.mxu0 0.0
    %6490 = vmatpush2.xpose.msra.mxu0 0.0
    %6491 = vmatprep.subr.mxu0 0.0
    %6492 = vmatpush2.xpose.msra.mxu0 0.0
    %6493 = vmatprep.subr.mxu0 0.0
    %6494 = vmatpush2.xpose.msra.mxu0 0.0
    %6495 = vmatprep.subr.mxu0 0.0
    %6496 = vmatpush2.xpose.msra.mxu0 0.0
    %6497 = vmatprep.subr.mxu0 0.0
    %6498 = vmatpush2.xpose.msra.mxu0 0.0
    %6499 = vmatprep.subr.mxu0 0.0
    %6500 = vmatpush2.xpose.msra.mxu0 0.0
    %6501 = vmatprep.subr.mxu0 0.0
    %6502 = vmatpush2.xpose.msra.mxu0 0.0
    %6503 = vmatprep.mubr.f32.mxu0 0.0
    %v6504 = vand.u32 %v6003, 4294901760
    %6505 = vmatmul.mubr.f32.gmra.mxu0 %v6504
    %v6506 = vpop.f32.mrf.mxu0
    %v6507 = vadd.f32 %v6428, %v6506
    %v6508 = vpop.f32.mrf.mxu0
    %6509 = vmatprep.mubr.f32.mxu0 0.0
    %v6510 = vand.u32 %v6006, 4294901760
    %6511 = vmatmul.mubr.f32.gmra.mxu0 %v6510
    %v6512 = vpop.f32.mrf.mxu0
    %v6513 = vadd.f32 %v6434, %v6512
    %v6514 = vpop.f32.mrf.mxu0
    %6515 = vdwg.mxu0
    %v6517 = vsel %vm60, %v6507, 0
    %v6520 = vsel %vm60, %v6513, 0
    %6522 = vmatprep.subr.mxu0 0.0
    %6523 = vmatpush1.msra.mxu0 0.0
    %6524 = vmatprep.subr.mxu0 0.0
    %6525 = vmatpush1.msra.mxu0 0.0
    %6526 = vmatprep.subr.mxu0 0.0
    %6527 = vmatpush1.msra.mxu0 0.0
    %6528 = vmatprep.subr.mxu0 0.0
    %6529 = vmatpush1.msra.mxu0 0.0
    %6530 = vmatprep.subr.mxu0 0.0
    %6531 = vmatpush1.msra.mxu0 0.0
    %6532 = vmatprep.subr.mxu0 0.0
    %6533 = vmatpush1.msra.mxu0 0.0
    %6534 = vmatprep.subr.mxu0 0.0
    %6535 = vmatpush1.msra.mxu0 0.0
    %6536 = vmatprep.subr.mxu0 0.0
    %6537 = vmatpush1.msra.mxu0 0.0
    %6538 = vmatprep.subr.mxu0 0.0
    %6539 = vmatpush1.msra.mxu0 0.0
    %6540 = vmatprep.subr.mxu0 0.0
    %6541 = vmatpush1.msra.mxu0 0.0
    %6542 = vmatprep.subr.mxu0 0.0
    %6543 = vmatpush1.msra.mxu0 0.0
    %6544 = vmatprep.subr.mxu0 0.0
    %6545 = vmatpush1.msra.mxu0 0.0
    %6546 = vmatprep.subr.mxu0 0.0
    %6547 = vmatpush1.msra.mxu0 0.0
    %6548 = vmatprep.subr.mxu0 0.0
    %6549 = vmatpush1.msra.mxu0 0.0
    %6550 = vmatprep.subr.mxu0 0.0
    %v6551 = vand.u32 %v1799, 4294901760
    %6552 = vmatpush1.msra.mxu0 %v6551
    %6553 = vmatprep.subr.mxu0 0.0
    %v6554 = vand.u32 %v1793, 4294901760
    %6555 = vmatpush1.msra.mxu0 %v6554
    %6556 = vmatprep.subr.mxu0 0.0
    %6557 = vmatpush2.msra.mxu0 0.0
    %6558 = vmatprep.subr.mxu0 0.0
    %6559 = vmatpush2.msra.mxu0 0.0
    %6560 = vmatprep.subr.mxu0 0.0
    %6561 = vmatpush2.msra.mxu0 0.0
    %6562 = vmatprep.subr.mxu0 0.0
    %6563 = vmatpush2.msra.mxu0 0.0
    %6564 = vmatprep.subr.mxu0 0.0
    %6565 = vmatpush2.msra.mxu0 0.0
    %6566 = vmatprep.subr.mxu0 0.0
    %6567 = vmatpush2.msra.mxu0 0.0
    %6568 = vmatprep.subr.mxu0 0.0
    %6569 = vmatpush2.msra.mxu0 0.0
    %6570 = vmatprep.subr.mxu0 0.0
    %6571 = vmatpush2.msra.mxu0 0.0
    %6572 = vmatprep.subr.mxu0 0.0
    %6573 = vmatpush2.msra.mxu0 0.0
    %6574 = vmatprep.subr.mxu0 0.0
    %6575 = vmatpush2.msra.mxu0 0.0
    %6576 = vmatprep.subr.mxu0 0.0
    %6577 = vmatpush2.msra.mxu0 0.0
    %6578 = vmatprep.subr.mxu0 0.0
    %6579 = vmatpush2.msra.mxu0 0.0
    %6580 = vmatprep.subr.mxu0 0.0
    %6581 = vmatpush2.msra.mxu0 0.0
    %6582 = vmatprep.subr.mxu0 0.0
    %6583 = vmatpush2.msra.mxu0 0.0
    %6584 = vmatprep.subr.mxu0 0.0
    %6585 = vmatpush2.msra.mxu0 0.0
    %6586 = vmatprep.subr.mxu0 0.0
    %6587 = vmatpush2.msra.mxu0 0.0
    %6588 = vmatprep.mubr.f32.mxu0 0.0
    %v6589 = vand.u32 %v6517, 4294901760
    %v6590 = vsub.f32 %v6517, %v6589
    %v6591 = vand.u32 %v6590, 4294901760
    %v6592 = vsub.f32 %v6590, %v6591
    %v6593 = vand.u32 %v6592, 4294901760
    %6594 = vmatmul.mubr.f32.gmra.mxu0 %v6593
    %v6595 = vpop.f32.mrf.mxu0
    %v6596 = vadd.f32 0.0, %v6595
    %v6597 = vpop.f32.mrf.mxu0
    %6598 = vmatprep.mubr.f32.mxu0 0.0
    %v6599 = vand.u32 %v6520, 4294901760
    %v6600 = vsub.f32 %v6520, %v6599
    %v6601 = vand.u32 %v6600, 4294901760
    %v6602 = vsub.f32 %v6600, %v6601
    %v6603 = vand.u32 %v6602, 4294901760
    %6604 = vmatmul.mubr.f32.gmra.mxu0 %v6603
    %v6605 = vpop.f32.mrf.mxu0
    %v6606 = vadd.f32 0.0, %v6605
    %v6607 = vpop.f32.mrf.mxu0
    %6608 = vdwg.mxu0
    %6609 = vmatprep.subr.mxu0 0.0
    %6610 = vmatpush1.msra.mxu0 0.0
    %6611 = vmatprep.subr.mxu0 0.0
    %6612 = vmatpush1.msra.mxu0 0.0
    %6613 = vmatprep.subr.mxu0 0.0
    %6614 = vmatpush1.msra.mxu0 0.0
    %6615 = vmatprep.subr.mxu0 0.0
    %6616 = vmatpush1.msra.mxu0 0.0
    %6617 = vmatprep.subr.mxu0 0.0
    %6618 = vmatpush1.msra.mxu0 0.0
    %6619 = vmatprep.subr.mxu0 0.0
    %6620 = vmatpush1.msra.mxu0 0.0
    %6621 = vmatprep.subr.mxu0 0.0
    %6622 = vmatpush1.msra.mxu0 0.0
    %6623 = vmatprep.subr.mxu0 0.0
    %6624 = vmatpush1.msra.mxu0 0.0
    %6625 = vmatprep.subr.mxu0 0.0
    %6626 = vmatpush1.msra.mxu0 0.0
    %6627 = vmatprep.subr.mxu0 0.0
    %6628 = vmatpush1.msra.mxu0 0.0
    %6629 = vmatprep.subr.mxu0 0.0
    %6630 = vmatpush1.msra.mxu0 0.0
    %6631 = vmatprep.subr.mxu0 0.0
    %6632 = vmatpush1.msra.mxu0 0.0
    %6633 = vmatprep.subr.mxu0 0.0
    %6634 = vmatpush1.msra.mxu0 0.0
    %6635 = vmatprep.subr.mxu0 0.0
    %6636 = vmatpush1.msra.mxu0 0.0
    %6637 = vmatprep.subr.mxu0 0.0
    %v6638 = vand.u32 %v1799, 4294901760
    %v6639 = vsub.f32 %v1799, %v6638
    %v6640 = vand.u32 %v6639, 4294901760
    %v6641 = vsub.f32 %v6639, %v6640
    %v6642 = vand.u32 %v6641, 4294901760
    %6643 = vmatpush1.msra.mxu0 %v6642
    %6644 = vmatprep.subr.mxu0 0.0
    %v6645 = vand.u32 %v1793, 4294901760
    %v6646 = vsub.f32 %v1793, %v6645
    %v6647 = vand.u32 %v6646, 4294901760
    %v6648 = vsub.f32 %v6646, %v6647
    %v6649 = vand.u32 %v6648, 4294901760
    %6650 = vmatpush1.msra.mxu0 %v6649
    %6651 = vmatprep.subr.mxu0 0.0
    %6652 = vmatpush2.msra.mxu0 0.0
    %6653 = vmatprep.subr.mxu0 0.0
    %6654 = vmatpush2.msra.mxu0 0.0
    %6655 = vmatprep.subr.mxu0 0.0
    %6656 = vmatpush2.msra.mxu0 0.0
    %6657 = vmatprep.subr.mxu0 0.0
    %6658 = vmatpush2.msra.mxu0 0.0
    %6659 = vmatprep.subr.mxu0 0.0
    %6660 = vmatpush2.msra.mxu0 0.0
    %6661 = vmatprep.subr.mxu0 0.0
    %6662 = vmatpush2.msra.mxu0 0.0
    %6663 = vmatprep.subr.mxu0 0.0
    %6664 = vmatpush2.msra.mxu0 0.0
    %6665 = vmatprep.subr.mxu0 0.0
    %6666 = vmatpush2.msra.mxu0 0.0
    %6667 = vmatprep.subr.mxu0 0.0
    %6668 = vmatpush2.msra.mxu0 0.0
    %6669 = vmatprep.subr.mxu0 0.0
    %6670 = vmatpush2.msra.mxu0 0.0
    %6671 = vmatprep.subr.mxu0 0.0
    %6672 = vmatpush2.msra.mxu0 0.0
    %6673 = vmatprep.subr.mxu0 0.0
    %6674 = vmatpush2.msra.mxu0 0.0
    %6675 = vmatprep.subr.mxu0 0.0
    %6676 = vmatpush2.msra.mxu0 0.0
    %6677 = vmatprep.subr.mxu0 0.0
    %6678 = vmatpush2.msra.mxu0 0.0
    %6679 = vmatprep.subr.mxu0 0.0
    %6680 = vmatpush2.msra.mxu0 0.0
    %6681 = vmatprep.subr.mxu0 0.0
    %6682 = vmatpush2.msra.mxu0 0.0
    %6683 = vmatprep.mubr.f32.mxu0 0.0
    %v6684 = vand.u32 %v6517, 4294901760
    %6685 = vmatmul.mubr.f32.gmra.mxu0 %v6684
    %v6686 = vpop.f32.mrf.mxu0
    %v6687 = vadd.f32 %v6596, %v6686
    %v6688 = vpop.f32.mrf.mxu0
    %6689 = vmatprep.mubr.f32.mxu0 0.0
    %v6690 = vand.u32 %v6520, 4294901760
    %6691 = vmatmul.mubr.f32.gmra.mxu0 %v6690
    %v6692 = vpop.f32.mrf.mxu0
    %v6693 = vadd.f32 %v6606, %v6692
    %v6694 = vpop.f32.mrf.mxu0
    %6695 = vdwg.mxu0
    %6696 = vmatprep.subr.mxu0 0.0
    %6697 = vmatpush1.msra.mxu0 0.0
    %6698 = vmatprep.subr.mxu0 0.0
    %6699 = vmatpush1.msra.mxu0 0.0
    %6700 = vmatprep.subr.mxu0 0.0
    %6701 = vmatpush1.msra.mxu0 0.0
    %6702 = vmatprep.subr.mxu0 0.0
    %6703 = vmatpush1.msra.mxu0 0.0
    %6704 = vmatprep.subr.mxu0 0.0
    %6705 = vmatpush1.msra.mxu0 0.0
    %6706 = vmatprep.subr.mxu0 0.0
    %6707 = vmatpush1.msra.mxu0 0.0
    %6708 = vmatprep.subr.mxu0 0.0
    %6709 = vmatpush1.msra.mxu0 0.0
    %6710 = vmatprep.subr.mxu0 0.0
    %6711 = vmatpush1.msra.mxu0 0.0
    %6712 = vmatprep.subr.mxu0 0.0
    %6713 = vmatpush1.msra.mxu0 0.0
    %6714 = vmatprep.subr.mxu0 0.0
    %6715 = vmatpush1.msra.mxu0 0.0
    %6716 = vmatprep.subr.mxu0 0.0
    %6717 = vmatpush1.msra.mxu0 0.0
    %6718 = vmatprep.subr.mxu0 0.0
    %6719 = vmatpush1.msra.mxu0 0.0
    %6720 = vmatprep.subr.mxu0 0.0
    %6721 = vmatpush1.msra.mxu0 0.0
    %6722 = vmatprep.subr.mxu0 0.0
    %6723 = vmatpush1.msra.mxu0 0.0
    %6724 = vmatprep.subr.mxu0 0.0
    %v6725 = vand.u32 %v1799, 4294901760
    %v6726 = vsub.f32 %v1799, %v6725
    %6727 = vmatpush1.msra.mxu0 %v6726
    %6728 = vmatprep.subr.mxu0 0.0
    %v6729 = vand.u32 %v1793, 4294901760
    %v6730 = vsub.f32 %v1793, %v6729
    %6731 = vmatpush1.msra.mxu0 %v6730
    %6732 = vmatprep.subr.mxu0 0.0
    %6733 = vmatpush2.msra.mxu0 0.0
    %6734 = vmatprep.subr.mxu0 0.0
    %6735 = vmatpush2.msra.mxu0 0.0
    %6736 = vmatprep.subr.mxu0 0.0
    %6737 = vmatpush2.msra.mxu0 0.0
    %6738 = vmatprep.subr.mxu0 0.0
    %6739 = vmatpush2.msra.mxu0 0.0
    %6740 = vmatprep.subr.mxu0 0.0
    %6741 = vmatpush2.msra.mxu0 0.0
    %6742 = vmatprep.subr.mxu0 0.0
    %6743 = vmatpush2.msra.mxu0 0.0
    %6744 = vmatprep.subr.mxu0 0.0
    %6745 = vmatpush2.msra.mxu0 0.0
    %6746 = vmatprep.subr.mxu0 0.0
    %6747 = vmatpush2.msra.mxu0 0.0
    %6748 = vmatprep.subr.mxu0 0.0
    %6749 = vmatpush2.msra.mxu0 0.0
    %6750 = vmatprep.subr.mxu0 0.0
    %6751 = vmatpush2.msra.mxu0 0.0
    %6752 = vmatprep.subr.mxu0 0.0
    %6753 = vmatpush2.msra.mxu0 0.0
    %6754 = vmatprep.subr.mxu0 0.0
    %6755 = vmatpush2.msra.mxu0 0.0
    %6756 = vmatprep.subr.mxu0 0.0
    %6757 = vmatpush2.msra.mxu0 0.0
    %6758 = vmatprep.subr.mxu0 0.0
    %6759 = vmatpush2.msra.mxu0 0.0
    %6760 = vmatprep.subr.mxu0 0.0
    %6761 = vmatpush2.msra.mxu0 0.0
    %6762 = vmatprep.subr.mxu0 0.0
    %6763 = vmatpush2.msra.mxu0 0.0
    %6764 = vmatprep.mubr.f32.mxu0 0.0
    %v6765 = vand.u32 %v6517, 4294901760
    %v6766 = vsub.f32 %v6517, %v6765
    %6767 = vmatmul.mubr.f32.gmra.mxu0 %v6766
    %v6768 = vpop.f32.mrf.mxu0
    %v6769 = vadd.f32 %v6687, %v6768
    %v6770 = vpop.f32.mrf.mxu0
    %6771 = vmatprep.mubr.f32.mxu0 0.0
    %v6772 = vand.u32 %v6520, 4294901760
    %v6773 = vsub.f32 %v6520, %v6772
    %6774 = vmatmul.mubr.f32.gmra.mxu0 %v6773
    %v6775 = vpop.f32.mrf.mxu0
    %v6776 = vadd.f32 %v6693, %v6775
    %v6777 = vpop.f32.mrf.mxu0
    %6778 = vdwg.mxu0
    %6779 = vmatprep.subr.mxu0 0.0
    %6780 = vmatpush1.msra.mxu0 0.0
    %6781 = vmatprep.subr.mxu0 0.0
    %6782 = vmatpush1.msra.mxu0 0.0
    %6783 = vmatprep.subr.mxu0 0.0
    %6784 = vmatpush1.msra.mxu0 0.0
    %6785 = vmatprep.subr.mxu0 0.0
    %6786 = vmatpush1.msra.mxu0 0.0
    %6787 = vmatprep.subr.mxu0 0.0
    %6788 = vmatpush1.msra.mxu0 0.0
    %6789 = vmatprep.subr.mxu0 0.0
    %6790 = vmatpush1.msra.mxu0 0.0
    %6791 = vmatprep.subr.mxu0 0.0
    %6792 = vmatpush1.msra.mxu0 0.0
    %6793 = vmatprep.subr.mxu0 0.0
    %6794 = vmatpush1.msra.mxu0 0.0
    %6795 = vmatprep.subr.mxu0 0.0
    %6796 = vmatpush1.msra.mxu0 0.0
    %6797 = vmatprep.subr.mxu0 0.0
    %6798 = vmatpush1.msra.mxu0 0.0
    %6799 = vmatprep.subr.mxu0 0.0
    %6800 = vmatpush1.msra.mxu0 0.0
    %6801 = vmatprep.subr.mxu0 0.0
    %6802 = vmatpush1.msra.mxu0 0.0
    %6803 = vmatprep.subr.mxu0 0.0
    %6804 = vmatpush1.msra.mxu0 0.0
    %6805 = vmatprep.subr.mxu0 0.0
    %6806 = vmatpush1.msra.mxu0 0.0
    %6807 = vmatprep.subr.mxu0 0.0
    %v6808 = vand.u32 %v1799, 4294901760
    %6809 = vmatpush1.msra.mxu0 %v6808
    %6810 = vmatprep.subr.mxu0 0.0
    %v6811 = vand.u32 %v1793, 4294901760
    %6812 = vmatpush1.msra.mxu0 %v6811
    %6813 = vmatprep.subr.mxu0 0.0
    %6814 = vmatpush2.msra.mxu0 0.0
    %6815 = vmatprep.subr.mxu0 0.0
    %6816 = vmatpush2.msra.mxu0 0.0
    %6817 = vmatprep.subr.mxu0 0.0
    %6818 = vmatpush2.msra.mxu0 0.0
    %6819 = vmatprep.subr.mxu0 0.0
    %6820 = vmatpush2.msra.mxu0 0.0
    %6821 = vmatprep.subr.mxu0 0.0
    %6822 = vmatpush2.msra.mxu0 0.0
    %6823 = vmatprep.subr.mxu0 0.0
    %6824 = vmatpush2.msra.mxu0 0.0
    %6825 = vmatprep.subr.mxu0 0.0
    %6826 = vmatpush2.msra.mxu0 0.0
    %6827 = vmatprep.subr.mxu0 0.0
    %6828 = vmatpush2.msra.mxu0 0.0
    %6829 = vmatprep.subr.mxu0 0.0
    %6830 = vmatpush2.msra.mxu0 0.0
    %6831 = vmatprep.subr.mxu0 0.0
    %6832 = vmatpush2.msra.mxu0 0.0
    %6833 = vmatprep.subr.mxu0 0.0
    %6834 = vmatpush2.msra.mxu0 0.0
    %6835 = vmatprep.subr.mxu0 0.0
    %6836 = vmatpush2.msra.mxu0 0.0
    %6837 = vmatprep.subr.mxu0 0.0
    %6838 = vmatpush2.msra.mxu0 0.0
    %6839 = vmatprep.subr.mxu0 0.0
    %6840 = vmatpush2.msra.mxu0 0.0
    %6841 = vmatprep.subr.mxu0 0.0
    %6842 = vmatpush2.msra.mxu0 0.0
    %6843 = vmatprep.subr.mxu0 0.0
    %6844 = vmatpush2.msra.mxu0 0.0
    %6845 = vmatprep.mubr.f32.mxu0 0.0
    %v6846 = vand.u32 %v6517, 4294901760
    %v6847 = vsub.f32 %v6517, %v6846
    %v6848 = vand.u32 %v6847, 4294901760
    %6849 = vmatmul.mubr.f32.gmra.mxu0 %v6848
    %v6850 = vpop.f32.mrf.mxu0
    %v6851 = vadd.f32 %v6769, %v6850
    %v6852 = vpop.f32.mrf.mxu0
    %6853 = vmatprep.mubr.f32.mxu0 0.0
    %v6854 = vand.u32 %v6520, 4294901760
    %v6855 = vsub.f32 %v6520, %v6854
    %v6856 = vand.u32 %v6855, 4294901760
    %6857 = vmatmul.mubr.f32.gmra.mxu0 %v6856
    %v6858 = vpop.f32.mrf.mxu0
    %v6859 = vadd.f32 %v6776, %v6858
    %v6860 = vpop.f32.mrf.mxu0
    %6861 = vdwg.mxu0
    %6862 = vmatprep.subr.mxu0 0.0
    %6863 = vmatpush1.msra.mxu0 0.0
    %6864 = vmatprep.subr.mxu0 0.0
    %6865 = vmatpush1.msra.mxu0 0.0
    %6866 = vmatprep.subr.mxu0 0.0
    %6867 = vmatpush1.msra.mxu0 0.0
    %6868 = vmatprep.subr.mxu0 0.0
    %6869 = vmatpush1.msra.mxu0 0.0
    %6870 = vmatprep.subr.mxu0 0.0
    %6871 = vmatpush1.msra.mxu0 0.0
    %6872 = vmatprep.subr.mxu0 0.0
    %6873 = vmatpush1.msra.mxu0 0.0
    %6874 = vmatprep.subr.mxu0 0.0
    %6875 = vmatpush1.msra.mxu0 0.0
    %6876 = vmatprep.subr.mxu0 0.0
    %6877 = vmatpush1.msra.mxu0 0.0
    %6878 = vmatprep.subr.mxu0 0.0
    %6879 = vmatpush1.msra.mxu0 0.0
    %6880 = vmatprep.subr.mxu0 0.0
    %6881 = vmatpush1.msra.mxu0 0.0
    %6882 = vmatprep.subr.mxu0 0.0
    %6883 = vmatpush1.msra.mxu0 0.0
    %6884 = vmatprep.subr.mxu0 0.0
    %6885 = vmatpush1.msra.mxu0 0.0
    %6886 = vmatprep.subr.mxu0 0.0
    %6887 = vmatpush1.msra.mxu0 0.0
    %6888 = vmatprep.subr.mxu0 0.0
    %6889 = vmatpush1.msra.mxu0 0.0
    %6890 = vmatprep.subr.mxu0 0.0
    %v6891 = vand.u32 %v1799, 4294901760
    %v6892 = vsub.f32 %v1799, %v6891
    %v6893 = vand.u32 %v6892, 4294901760
    %6894 = vmatpush1.msra.mxu0 %v6893
    %6895 = vmatprep.subr.mxu0 0.0
    %v6896 = vand.u32 %v1793, 4294901760
    %v6897 = vsub.f32 %v1793, %v6896
    %v6898 = vand.u32 %v6897, 4294901760
    %6899 = vmatpush1.msra.mxu0 %v6898
    %6900 = vmatprep.subr.mxu0 0.0
    %6901 = vmatpush2.msra.mxu0 0.0
    %6902 = vmatprep.subr.mxu0 0.0
    %6903 = vmatpush2.msra.mxu0 0.0
    %6904 = vmatprep.subr.mxu0 0.0
    %6905 = vmatpush2.msra.mxu0 0.0
    %6906 = vmatprep.subr.mxu0 0.0
    %6907 = vmatpush2.msra.mxu0 0.0
    %6908 = vmatprep.subr.mxu0 0.0
    %6909 = vmatpush2.msra.mxu0 0.0
    %6910 = vmatprep.subr.mxu0 0.0
    %6911 = vmatpush2.msra.mxu0 0.0
    %6912 = vmatprep.subr.mxu0 0.0
    %6913 = vmatpush2.msra.mxu0 0.0
    %6914 = vmatprep.subr.mxu0 0.0
    %6915 = vmatpush2.msra.mxu0 0.0
    %6916 = vmatprep.subr.mxu0 0.0
    %6917 = vmatpush2.msra.mxu0 0.0
    %6918 = vmatprep.subr.mxu0 0.0
    %6919 = vmatpush2.msra.mxu0 0.0
    %6920 = vmatprep.subr.mxu0 0.0
    %6921 = vmatpush2.msra.mxu0 0.0
    %6922 = vmatprep.subr.mxu0 0.0
    %6923 = vmatpush2.msra.mxu0 0.0
    %6924 = vmatprep.subr.mxu0 0.0
    %6925 = vmatpush2.msra.mxu0 0.0
    %6926 = vmatprep.subr.mxu0 0.0
    %6927 = vmatpush2.msra.mxu0 0.0
    %6928 = vmatprep.subr.mxu0 0.0
    %6929 = vmatpush2.msra.mxu0 0.0
    %6930 = vmatprep.subr.mxu0 0.0
    %6931 = vmatpush2.msra.mxu0 0.0
    %6932 = vmatprep.mubr.f32.mxu0 0.0
    %v6933 = vand.u32 %v6517, 4294901760
    %6934 = vmatmul.mubr.f32.gmra.mxu0 %v6933
    %v6935 = vpop.f32.mrf.mxu0
    %v6936 = vadd.f32 %v6851, %v6935
    %v6937 = vpop.f32.mrf.mxu0
    %6938 = vmatprep.mubr.f32.mxu0 0.0
    %v6939 = vand.u32 %v6520, 4294901760
    %6940 = vmatmul.mubr.f32.gmra.mxu0 %v6939
    %v6941 = vpop.f32.mrf.mxu0
    %v6942 = vadd.f32 %v6859, %v6941
    %v6943 = vpop.f32.mrf.mxu0
    %6944 = vdwg.mxu0
    %6945 = vmatprep.subr.mxu0 0.0
    %6946 = vmatpush1.msra.mxu0 0.0
    %6947 = vmatprep.subr.mxu0 0.0
    %6948 = vmatpush1.msra.mxu0 0.0
    %6949 = vmatprep.subr.mxu0 0.0
    %6950 = vmatpush1.msra.mxu0 0.0
    %6951 = vmatprep.subr.mxu0 0.0
    %6952 = vmatpush1.msra.mxu0 0.0
    %6953 = vmatprep.subr.mxu0 0.0
    %6954 = vmatpush1.msra.mxu0 0.0
    %6955 = vmatprep.subr.mxu0 0.0
    %6956 = vmatpush1.msra.mxu0 0.0
    %6957 = vmatprep.subr.mxu0 0.0
    %6958 = vmatpush1.msra.mxu0 0.0
    %6959 = vmatprep.subr.mxu0 0.0
    %6960 = vmatpush1.msra.mxu0 0.0
    %6961 = vmatprep.subr.mxu0 0.0
    %6962 = vmatpush1.msra.mxu0 0.0
    %6963 = vmatprep.subr.mxu0 0.0
    %6964 = vmatpush1.msra.mxu0 0.0
    %6965 = vmatprep.subr.mxu0 0.0
    %6966 = vmatpush1.msra.mxu0 0.0
    %6967 = vmatprep.subr.mxu0 0.0
    %6968 = vmatpush1.msra.mxu0 0.0
    %6969 = vmatprep.subr.mxu0 0.0
    %6970 = vmatpush1.msra.mxu0 0.0
    %6971 = vmatprep.subr.mxu0 0.0
    %6972 = vmatpush1.msra.mxu0 0.0
    %6973 = vmatprep.subr.mxu0 0.0
    %v6974 = vand.u32 %v1799, 4294901760
    %6975 = vmatpush1.msra.mxu0 %v6974
    %6976 = vmatprep.subr.mxu0 0.0
    %v6977 = vand.u32 %v1793, 4294901760
    %6978 = vmatpush1.msra.mxu0 %v6977
    %6979 = vmatprep.subr.mxu0 0.0
    %6980 = vmatpush2.msra.mxu0 0.0
    %6981 = vmatprep.subr.mxu0 0.0
    %6982 = vmatpush2.msra.mxu0 0.0
    %6983 = vmatprep.subr.mxu0 0.0
    %6984 = vmatpush2.msra.mxu0 0.0
    %6985 = vmatprep.subr.mxu0 0.0
    %6986 = vmatpush2.msra.mxu0 0.0
    %6987 = vmatprep.subr.mxu0 0.0
    %6988 = vmatpush2.msra.mxu0 0.0
    %6989 = vmatprep.subr.mxu0 0.0
    %6990 = vmatpush2.msra.mxu0 0.0
    %6991 = vmatprep.subr.mxu0 0.0
    %6992 = vmatpush2.msra.mxu0 0.0
    %6993 = vmatprep.subr.mxu0 0.0
    %6994 = vmatpush2.msra.mxu0 0.0
    %6995 = vmatprep.subr.mxu0 0.0
    %6996 = vmatpush2.msra.mxu0 0.0
    %6997 = vmatprep.subr.mxu0 0.0
    %6998 = vmatpush2.msra.mxu0 0.0
    %6999 = vmatprep.subr.mxu0 0.0
    %7000 = vmatpush2.msra.mxu0 0.0
    %7001 = vmatprep.subr.mxu0 0.0
    %7002 = vmatpush2.msra.mxu0 0.0
    %7003 = vmatprep.subr.mxu0 0.0
    %7004 = vmatpush2.msra.mxu0 0.0
    %7005 = vmatprep.subr.mxu0 0.0
    %7006 = vmatpush2.msra.mxu0 0.0
    %7007 = vmatprep.subr.mxu0 0.0
    %7008 = vmatpush2.msra.mxu0 0.0
    %7009 = vmatprep.subr.mxu0 0.0
    %7010 = vmatpush2.msra.mxu0 0.0
    %7011 = vmatprep.mubr.f32.mxu0 0.0
    %v7012 = vand.u32 %v6517, 4294901760
    %7013 = vmatmul.mubr.f32.gmra.mxu0 %v7012
    %v7014 = vpop.f32.mrf.mxu0
    %v7015 = vadd.f32 %v6936, %v7014
    %v7016 = vpop.f32.mrf.mxu0
    %7017 = vmatprep.mubr.f32.mxu0 0.0
    %v7018 = vand.u32 %v6520, 4294901760
    %7019 = vmatmul.mubr.f32.gmra.mxu0 %v7018
    %v7020 = vpop.f32.mrf.mxu0
    %v7021 = vadd.f32 %v6942, %v7020
    %v7022 = vpop.f32.mrf.mxu0
    %7023 = vdwg.mxu0
    %v7024 = vmul.f32 %v7015, %v3076
    %v7025 = vmul.f32 %v7021, %v3077
    %v7026 = vld [vmem:[%s607] sm:$0xff]
    %v7027 = vld [vmem:[%s607 + $0x8] sm:$0xff]
    %v7028 = vld [vmem:[%s607 + $0x10] sm:$0xff]
    %v7029 = vld [vmem:[%s607 + $0x18] sm:$0xff]
    %v7030 = vld [vmem:[%s8] sm:$0x1]
    %v7032 = vsel %vm60, %v7030, 0
    %7034 = vmatprep.subr.mxu0 0.0
    %7035 = vmatpush1.msra.mxu0 0.0
    %7036 = vmatprep.subr.mxu0 0.0
    %7037 = vmatpush1.msra.mxu0 0.0
    %7038 = vmatprep.subr.mxu0 0.0
    %7039 = vmatpush1.msra.mxu0 0.0
    %7040 = vmatprep.subr.mxu0 0.0
    %7041 = vmatpush1.msra.mxu0 0.0
    %7042 = vmatprep.subr.mxu0 0.0
    %7043 = vmatpush1.msra.mxu0 0.0
    %7044 = vmatprep.subr.mxu0 0.0
    %7045 = vmatpush1.msra.mxu0 0.0
    %7046 = vmatprep.subr.mxu0 0.0
    %7047 = vmatpush1.msra.mxu0 0.0
    %7048 = vmatprep.subr.mxu0 0.0
    %7049 = vmatpush1.msra.mxu0 0.0
    %7050 = vmatprep.subr.mxu0 0.0
    %7051 = vmatpush1.msra.mxu0 0.0
    %7052 = vmatprep.subr.mxu0 0.0
    %7053 = vmatpush1.msra.mxu0 0.0
    %7054 = vmatprep.subr.mxu0 0.0
    %7055 = vmatpush1.msra.mxu0 0.0
    %7056 = vmatprep.subr.mxu0 0.0
    %7057 = vmatpush1.msra.mxu0 0.0
    %7058 = vmatprep.subr.mxu0 0.0
    %7059 = vmatpush1.msra.mxu0 0.0
    %7060 = vmatprep.subr.mxu0 0.0
    %7061 = vmatpush1.msra.mxu0 0.0
    %7062 = vmatprep.subr.mxu0 0.0
    %v7063 = vand.u32 %v7025, 4294901760
    %7064 = vmatpush1.msra.mxu0 %v7063
    %7065 = vmatprep.subr.mxu0 0.0
    %v7066 = vand.u32 %v7024, 4294901760
    %7067 = vmatpush1.msra.mxu0 %v7066
    %7068 = vmatprep.subr.mxu0 0.0
    %7069 = vmatpush2.msra.mxu0 0.0
    %7070 = vmatprep.subr.mxu0 0.0
    %7071 = vmatpush2.msra.mxu0 0.0
    %7072 = vmatprep.subr.mxu0 0.0
    %7073 = vmatpush2.msra.mxu0 0.0
    %7074 = vmatprep.subr.mxu0 0.0
    %7075 = vmatpush2.msra.mxu0 0.0
    %7076 = vmatprep.subr.mxu0 0.0
    %7077 = vmatpush2.msra.mxu0 0.0
    %7078 = vmatprep.subr.mxu0 0.0
    %7079 = vmatpush2.msra.mxu0 0.0
    %7080 = vmatprep.subr.mxu0 0.0
    %7081 = vmatpush2.msra.mxu0 0.0
    %7082 = vmatprep.subr.mxu0 0.0
    %7083 = vmatpush2.msra.mxu0 0.0
    %7084 = vmatprep.subr.mxu0 0.0
    %7085 = vmatpush2.msra.mxu0 0.0
    %7086 = vmatprep.subr.mxu0 0.0
    %7087 = vmatpush2.msra.mxu0 0.0
    %7088 = vmatprep.subr.mxu0 0.0
    %7089 = vmatpush2.msra.mxu0 0.0
    %7090 = vmatprep.subr.mxu0 0.0
    %7091 = vmatpush2.msra.mxu0 0.0
    %7092 = vmatprep.subr.mxu0 0.0
    %7093 = vmatpush2.msra.mxu0 0.0
    %7094 = vmatprep.subr.mxu0 0.0
    %7095 = vmatpush2.msra.mxu0 0.0
    %7096 = vmatprep.subr.mxu0 0.0
    %7097 = vmatpush2.msra.mxu0 0.0
    %7098 = vmatprep.subr.mxu0 0.0
    %7099 = vmatpush2.msra.mxu0 0.0
    %7100 = vmatprep.mubr.f32.mxu0 0.0
    %v7101 = vand.u32 %v7032, 4294901760
    %v7102 = vsub.f32 %v7032, %v7101
    %v7103 = vand.u32 %v7102, 4294901760
    %v7104 = vsub.f32 %v7102, %v7103
    %v7105 = vand.u32 %v7104, 4294901760
    %7106 = vmatmul.mubr.f32.gmra.mxu0 %v7105
    %v7107 = vpop.f32.mrf.mxu0
    %v7108 = vadd.f32 0.0, %v7107
    %v7109 = vpop.f32.mrf.mxu0
    %7110 = vdwg.mxu0
    %7111 = vmatprep.subr.mxu0 0.0
    %7112 = vmatpush1.msra.mxu0 0.0
    %7113 = vmatprep.subr.mxu0 0.0
    %7114 = vmatpush1.msra.mxu0 0.0
    %7115 = vmatprep.subr.mxu0 0.0
    %7116 = vmatpush1.msra.mxu0 0.0
    %7117 = vmatprep.subr.mxu0 0.0
    %7118 = vmatpush1.msra.mxu0 0.0
    %7119 = vmatprep.subr.mxu0 0.0
    %7120 = vmatpush1.msra.mxu0 0.0
    %7121 = vmatprep.subr.mxu0 0.0
    %7122 = vmatpush1.msra.mxu0 0.0
    %7123 = vmatprep.subr.mxu0 0.0
    %7124 = vmatpush1.msra.mxu0 0.0
    %7125 = vmatprep.subr.mxu0 0.0
    %7126 = vmatpush1.msra.mxu0 0.0
    %7127 = vmatprep.subr.mxu0 0.0
    %7128 = vmatpush1.msra.mxu0 0.0
    %7129 = vmatprep.subr.mxu0 0.0
    %7130 = vmatpush1.msra.mxu0 0.0
    %7131 = vmatprep.subr.mxu0 0.0
    %7132 = vmatpush1.msra.mxu0 0.0
    %7133 = vmatprep.subr.mxu0 0.0
    %7134 = vmatpush1.msra.mxu0 0.0
    %7135 = vmatprep.subr.mxu0 0.0
    %7136 = vmatpush1.msra.mxu0 0.0
    %7137 = vmatprep.subr.mxu0 0.0
    %7138 = vmatpush1.msra.mxu0 0.0
    %7139 = vmatprep.subr.mxu0 0.0
    %v7140 = vand.u32 %v7025, 4294901760
    %v7141 = vsub.f32 %v7025, %v7140
    %v7142 = vand.u32 %v7141, 4294901760
    %v7143 = vsub.f32 %v7141, %v7142
    %v7144 = vand.u32 %v7143, 4294901760
    %7145 = vmatpush1.msra.mxu0 %v7144
    %7146 = vmatprep.subr.mxu0 0.0
    %v7147 = vand.u32 %v7024, 4294901760
    %v7148 = vsub.f32 %v7024, %v7147
    %v7149 = vand.u32 %v7148, 4294901760
    %v7150 = vsub.f32 %v7148, %v7149
    %v7151 = vand.u32 %v7150, 4294901760
    %7152 = vmatpush1.msra.mxu0 %v7151
    %7153 = vmatprep.subr.mxu0 0.0
    %7154 = vmatpush2.msra.mxu0 0.0
    %7155 = vmatprep.subr.mxu0 0.0
    %7156 = vmatpush2.msra.mxu0 0.0
    %7157 = vmatprep.subr.mxu0 0.0
    %7158 = vmatpush2.msra.mxu0 0.0
    %7159 = vmatprep.subr.mxu0 0.0
    %7160 = vmatpush2.msra.mxu0 0.0
    %7161 = vmatprep.subr.mxu0 0.0
    %7162 = vmatpush2.msra.mxu0 0.0
    %7163 = vmatprep.subr.mxu0 0.0
    %7164 = vmatpush2.msra.mxu0 0.0
    %7165 = vmatprep.subr.mxu0 0.0
    %7166 = vmatpush2.msra.mxu0 0.0
    %7167 = vmatprep.subr.mxu0 0.0
    %7168 = vmatpush2.msra.mxu0 0.0
    %7169 = vmatprep.subr.mxu0 0.0
    %7170 = vmatpush2.msra.mxu0 0.0
    %7171 = vmatprep.subr.mxu0 0.0
    %7172 = vmatpush2.msra.mxu0 0.0
    %7173 = vmatprep.subr.mxu0 0.0
    %7174 = vmatpush2.msra.mxu0 0.0
    %7175 = vmatprep.subr.mxu0 0.0
    %7176 = vmatpush2.msra.mxu0 0.0
    %7177 = vmatprep.subr.mxu0 0.0
    %7178 = vmatpush2.msra.mxu0 0.0
    %7179 = vmatprep.subr.mxu0 0.0
    %7180 = vmatpush2.msra.mxu0 0.0
    %7181 = vmatprep.subr.mxu0 0.0
    %7182 = vmatpush2.msra.mxu0 0.0
    %7183 = vmatprep.subr.mxu0 0.0
    %7184 = vmatpush2.msra.mxu0 0.0
    %7185 = vmatprep.mubr.f32.mxu0 0.0
    %v7186 = vand.u32 %v7032, 4294901760
    %7187 = vmatmul.mubr.f32.gmra.mxu0 %v7186
    %v7188 = vpop.f32.mrf.mxu0
    %v7189 = vadd.f32 %v7108, %v7188
    %v7190 = vpop.f32.mrf.mxu0
    %7191 = vdwg.mxu0
    %7192 = vmatprep.subr.mxu0 0.0
    %7193 = vmatpush1.msra.mxu0 0.0
    %7194 = vmatprep.subr.mxu0 0.0
    %7195 = vmatpush1.msra.mxu0 0.0
    %7196 = vmatprep.subr.mxu0 0.0
    %7197 = vmatpush1.msra.mxu0 0.0
    %7198 = vmatprep.subr.mxu0 0.0
    %7199 = vmatpush1.msra.mxu0 0.0
    %7200 = vmatprep.subr.mxu0 0.0
    %7201 = vmatpush1.msra.mxu0 0.0
    %7202 = vmatprep.subr.mxu0 0.0
    %7203 = vmatpush1.msra.mxu0 0.0
    %7204 = vmatprep.subr.mxu0 0.0
    %7205 = vmatpush1.msra.mxu0 0.0
    %7206 = vmatprep.subr.mxu0 0.0
    %7207 = vmatpush1.msra.mxu0 0.0
    %7208 = vmatprep.subr.mxu0 0.0
    %7209 = vmatpush1.msra.mxu0 0.0
    %7210 = vmatprep.subr.mxu0 0.0
    %7211 = vmatpush1.msra.mxu0 0.0
    %7212 = vmatprep.subr.mxu0 0.0
    %7213 = vmatpush1.msra.mxu0 0.0
    %7214 = vmatprep.subr.mxu0 0.0
    %7215 = vmatpush1.msra.mxu0 0.0
    %7216 = vmatprep.subr.mxu0 0.0
    %7217 = vmatpush1.msra.mxu0 0.0
    %7218 = vmatprep.subr.mxu0 0.0
    %7219 = vmatpush1.msra.mxu0 0.0
    %7220 = vmatprep.subr.mxu0 0.0
    %v7221 = vand.u32 %v7025, 4294901760
    %v7222 = vsub.f32 %v7025, %v7221
    %7223 = vmatpush1.msra.mxu0 %v7222
    %7224 = vmatprep.subr.mxu0 0.0
    %v7225 = vand.u32 %v7024, 4294901760
    %v7226 = vsub.f32 %v7024, %v7225
    %7227 = vmatpush1.msra.mxu0 %v7226
    %7228 = vmatprep.subr.mxu0 0.0
    %7229 = vmatpush2.msra.mxu0 0.0
    %7230 = vmatprep.subr.mxu0 0.0
    %7231 = vmatpush2.msra.mxu0 0.0
    %7232 = vmatprep.subr.mxu0 0.0
    %7233 = vmatpush2.msra.mxu0 0.0
    %7234 = vmatprep.subr.mxu0 0.0
    %7235 = vmatpush2.msra.mxu0 0.0
    %7236 = vmatprep.subr.mxu0 0.0
    %7237 = vmatpush2.msra.mxu0 0.0
    %7238 = vmatprep.subr.mxu0 0.0
    %7239 = vmatpush2.msra.mxu0 0.0
    %7240 = vmatprep.subr.mxu0 0.0
    %7241 = vmatpush2.msra.mxu0 0.0
    %7242 = vmatprep.subr.mxu0 0.0
    %7243 = vmatpush2.msra.mxu0 0.0
    %7244 = vmatprep.subr.mxu0 0.0
    %7245 = vmatpush2.msra.mxu0 0.0
    %7246 = vmatprep.subr.mxu0 0.0
    %7247 = vmatpush2.msra.mxu0 0.0
    %7248 = vmatprep.subr.mxu0 0.0
    %7249 = vmatpush2.msra.mxu0 0.0
    %7250 = vmatprep.subr.mxu0 0.0
    %7251 = vmatpush2.msra.mxu0 0.0
    %7252 = vmatprep.subr.mxu0 0.0
    %7253 = vmatpush2.msra.mxu0 0.0
    %7254 = vmatprep.subr.mxu0 0.0
    %7255 = vmatpush2.msra.mxu0 0.0
    %7256 = vmatprep.subr.mxu0 0.0
    %7257 = vmatpush2.msra.mxu0 0.0
    %7258 = vmatprep.subr.mxu0 0.0
    %7259 = vmatpush2.msra.mxu0 0.0
    %7260 = vmatprep.mubr.f32.mxu0 0.0
    %v7261 = vand.u32 %v7032, 4294901760
    %v7262 = vsub.f32 %v7032, %v7261
    %7263 = vmatmul.mubr.f32.gmra.mxu0 %v7262
    %v7264 = vpop.f32.mrf.mxu0
    %v7265 = vadd.f32 %v7189, %v7264
    %v7266 = vpop.f32.mrf.mxu0
    %7267 = vdwg.mxu0
    %7268 = vmatprep.subr.mxu0 0.0
    %7269 = vmatpush1.msra.mxu0 0.0
    %7270 = vmatprep.subr.mxu0 0.0
    %7271 = vmatpush1.msra.mxu0 0.0
    %7272 = vmatprep.subr.mxu0 0.0
    %7273 = vmatpush1.msra.mxu0 0.0
    %7274 = vmatprep.subr.mxu0 0.0
    %7275 = vmatpush1.msra.mxu0 0.0
    %7276 = vmatprep.subr.mxu0 0.0
    %7277 = vmatpush1.msra.mxu0 0.0
    %7278 = vmatprep.subr.mxu0 0.0
    %7279 = vmatpush1.msra.mxu0 0.0
    %7280 = vmatprep.subr.mxu0 0.0
    %7281 = vmatpush1.msra.mxu0 0.0
    %7282 = vmatprep.subr.mxu0 0.0
    %7283 = vmatpush1.msra.mxu0 0.0
    %7284 = vmatprep.subr.mxu0 0.0
    %7285 = vmatpush1.msra.mxu0 0.0
    %7286 = vmatprep.subr.mxu0 0.0
    %7287 = vmatpush1.msra.mxu0 0.0
    %7288 = vmatprep.subr.mxu0 0.0
    %7289 = vmatpush1.msra.mxu0 0.0
    %7290 = vmatprep.subr.mxu0 0.0
    %7291 = vmatpush1.msra.mxu0 0.0
    %7292 = vmatprep.subr.mxu0 0.0
    %7293 = vmatpush1.msra.mxu0 0.0
    %7294 = vmatprep.subr.mxu0 0.0
    %7295 = vmatpush1.msra.mxu0 0.0
    %7296 = vmatprep.subr.mxu0 0.0
    %v7297 = vand.u32 %v7025, 4294901760
    %7298 = vmatpush1.msra.mxu0 %v7297
    %7299 = vmatprep.subr.mxu0 0.0
    %v7300 = vand.u32 %v7024, 4294901760
    %7301 = vmatpush1.msra.mxu0 %v7300
    %7302 = vmatprep.subr.mxu0 0.0
    %7303 = vmatpush2.msra.mxu0 0.0
    %7304 = vmatprep.subr.mxu0 0.0
    %7305 = vmatpush2.msra.mxu0 0.0
    %7306 = vmatprep.subr.mxu0 0.0
    %7307 = vmatpush2.msra.mxu0 0.0
    %7308 = vmatprep.subr.mxu0 0.0
    %7309 = vmatpush2.msra.mxu0 0.0
    %7310 = vmatprep.subr.mxu0 0.0
    %7311 = vmatpush2.msra.mxu0 0.0
    %7312 = vmatprep.subr.mxu0 0.0
    %7313 = vmatpush2.msra.mxu0 0.0
    %7314 = vmatprep.subr.mxu0 0.0
    %7315 = vmatpush2.msra.mxu0 0.0
    %7316 = vmatprep.subr.mxu0 0.0
    %7317 = vmatpush2.msra.mxu0 0.0
    %7318 = vmatprep.subr.mxu0 0.0
    %7319 = vmatpush2.msra.mxu0 0.0
    %7320 = vmatprep.subr.mxu0 0.0
    %7321 = vmatpush2.msra.mxu0 0.0
    %7322 = vmatprep.subr.mxu0 0.0
    %7323 = vmatpush2.msra.mxu0 0.0
    %7324 = vmatprep.subr.mxu0 0.0
    %7325 = vmatpush2.msra.mxu0 0.0
    %7326 = vmatprep.subr.mxu0 0.0
    %7327 = vmatpush2.msra.mxu0 0.0
    %7328 = vmatprep.subr.mxu0 0.0
    %7329 = vmatpush2.msra.mxu0 0.0
    %7330 = vmatprep.subr.mxu0 0.0
    %7331 = vmatpush2.msra.mxu0 0.0
    %7332 = vmatprep.subr.mxu0 0.0
    %7333 = vmatpush2.msra.mxu0 0.0
    %7334 = vmatprep.mubr.f32.mxu0 0.0
    %v7335 = vand.u32 %v7032, 4294901760
    %v7336 = vsub.f32 %v7032, %v7335
    %v7337 = vand.u32 %v7336, 4294901760
    %7338 = vmatmul.mubr.f32.gmra.mxu0 %v7337
    %v7339 = vpop.f32.mrf.mxu0
    %v7340 = vadd.f32 %v7265, %v7339
    %v7341 = vpop.f32.mrf.mxu0
    %7342 = vdwg.mxu0
    %7343 = vmatprep.subr.mxu0 0.0
    %7344 = vmatpush1.msra.mxu0 0.0
    %7345 = vmatprep.subr.mxu0 0.0
    %7346 = vmatpush1.msra.mxu0 0.0
    %7347 = vmatprep.subr.mxu0 0.0
    %7348 = vmatpush1.msra.mxu0 0.0
    %7349 = vmatprep.subr.mxu0 0.0
    %7350 = vmatpush1.msra.mxu0 0.0
    %7351 = vmatprep.subr.mxu0 0.0
    %7352 = vmatpush1.msra.mxu0 0.0
    %7353 = vmatprep.subr.mxu0 0.0
    %7354 = vmatpush1.msra.mxu0 0.0
    %7355 = vmatprep.subr.mxu0 0.0
    %7356 = vmatpush1.msra.mxu0 0.0
    %7357 = vmatprep.subr.mxu0 0.0
    %7358 = vmatpush1.msra.mxu0 0.0
    %7359 = vmatprep.subr.mxu0 0.0
    %7360 = vmatpush1.msra.mxu0 0.0
    %7361 = vmatprep.subr.mxu0 0.0
    %7362 = vmatpush1.msra.mxu0 0.0
    %7363 = vmatprep.subr.mxu0 0.0
    %7364 = vmatpush1.msra.mxu0 0.0
    %7365 = vmatprep.subr.mxu0 0.0
    %7366 = vmatpush1.msra.mxu0 0.0
    %7367 = vmatprep.subr.mxu0 0.0
    %7368 = vmatpush1.msra.mxu0 0.0
    %7369 = vmatprep.subr.mxu0 0.0
    %7370 = vmatpush1.msra.mxu0 0.0
    %7371 = vmatprep.subr.mxu0 0.0
    %v7372 = vand.u32 %v7025, 4294901760
    %v7373 = vsub.f32 %v7025, %v7372
    %v7374 = vand.u32 %v7373, 4294901760
    %7375 = vmatpush1.msra.mxu0 %v7374
    %7376 = vmatprep.subr.mxu0 0.0
    %v7377 = vand.u32 %v7024, 4294901760
    %v7378 = vsub.f32 %v7024, %v7377
    %v7379 = vand.u32 %v7378, 4294901760
    %7380 = vmatpush1.msra.mxu0 %v7379
    %7381 = vmatprep.subr.mxu0 0.0
    %7382 = vmatpush2.msra.mxu0 0.0
    %7383 = vmatprep.subr.mxu0 0.0
    %7384 = vmatpush2.msra.mxu0 0.0
    %7385 = vmatprep.subr.mxu0 0.0
    %7386 = vmatpush2.msra.mxu0 0.0
    %7387 = vmatprep.subr.mxu0 0.0
    %7388 = vmatpush2.msra.mxu0 0.0
    %7389 = vmatprep.subr.mxu0 0.0
    %7390 = vmatpush2.msra.mxu0 0.0
    %7391 = vmatprep.subr.mxu0 0.0
    %7392 = vmatpush2.msra.mxu0 0.0
    %7393 = vmatprep.subr.mxu0 0.0
    %7394 = vmatpush2.msra.mxu0 0.0
    %7395 = vmatprep.subr.mxu0 0.0
    %7396 = vmatpush2.msra.mxu0 0.0
    %7397 = vmatprep.subr.mxu0 0.0
    %7398 = vmatpush2.msra.mxu0 0.0
    %7399 = vmatprep.subr.mxu0 0.0
    %7400 = vmatpush2.msra.mxu0 0.0
    %7401 = vmatprep.subr.mxu0 0.0
    %7402 = vmatpush2.msra.mxu0 0.0
    %7403 = vmatprep.subr.mxu0 0.0
    %7404 = vmatpush2.msra.mxu0 0.0
    %7405 = vmatprep.subr.mxu0 0.0
    %7406 = vmatpush2.msra.mxu0 0.0
    %7407 = vmatprep.subr.mxu0 0.0
    %7408 = vmatpush2.msra.mxu0 0.0
    %7409 = vmatprep.subr.mxu0 0.0
    %7410 = vmatpush2.msra.mxu0 0.0
    %7411 = vmatprep.subr.mxu0 0.0
    %7412 = vmatpush2.msra.mxu0 0.0
    %7413 = vmatprep.mubr.f32.mxu0 0.0
    %v7414 = vand.u32 %v7032, 4294901760
    %7415 = vmatmul.mubr.f32.gmra.mxu0 %v7414
    %v7416 = vpop.f32.mrf.mxu0
    %v7417 = vadd.f32 %v7340, %v7416
    %v7418 = vpop.f32.mrf.mxu0
    %7419 = vdwg.mxu0
    %7420 = vmatprep.subr.mxu0 0.0
    %7421 = vmatpush1.msra.mxu0 0.0
    %7422 = vmatprep.subr.mxu0 0.0
    %7423 = vmatpush1.msra.mxu0 0.0
    %7424 = vmatprep.subr.mxu0 0.0
    %7425 = vmatpush1.msra.mxu0 0.0
    %7426 = vmatprep.subr.mxu0 0.0
    %7427 = vmatpush1.msra.mxu0 0.0
    %7428 = vmatprep.subr.mxu0 0.0
    %7429 = vmatpush1.msra.mxu0 0.0
    %7430 = vmatprep.subr.mxu0 0.0
    %7431 = vmatpush1.msra.mxu0 0.0
    %7432 = vmatprep.subr.mxu0 0.0
    %7433 = vmatpush1.msra.mxu0 0.0
    %7434 = vmatprep.subr.mxu0 0.0
    %7435 = vmatpush1.msra.mxu0 0.0
    %7436 = vmatprep.subr.mxu0 0.0
    %7437 = vmatpush1.msra.mxu0 0.0
    %7438 = vmatprep.subr.mxu0 0.0
    %7439 = vmatpush1.msra.mxu0 0.0
    %7440 = vmatprep.subr.mxu0 0.0
    %7441 = vmatpush1.msra.mxu0 0.0
    %7442 = vmatprep.subr.mxu0 0.0
    %7443 = vmatpush1.msra.mxu0 0.0
    %7444 = vmatprep.subr.mxu0 0.0
    %7445 = vmatpush1.msra.mxu0 0.0
    %7446 = vmatprep.subr.mxu0 0.0
    %7447 = vmatpush1.msra.mxu0 0.0
    %7448 = vmatprep.subr.mxu0 0.0
    %v7449 = vand.u32 %v7025, 4294901760
    %7450 = vmatpush1.msra.mxu0 %v7449
    %7451 = vmatprep.subr.mxu0 0.0
    %v7452 = vand.u32 %v7024, 4294901760
    %7453 = vmatpush1.msra.mxu0 %v7452
    %7454 = vmatprep.subr.mxu0 0.0
    %7455 = vmatpush2.msra.mxu0 0.0
    %7456 = vmatprep.subr.mxu0 0.0
    %7457 = vmatpush2.msra.mxu0 0.0
    %7458 = vmatprep.subr.mxu0 0.0
    %7459 = vmatpush2.msra.mxu0 0.0
    %7460 = vmatprep.subr.mxu0 0.0
    %7461 = vmatpush2.msra.mxu0 0.0
    %7462 = vmatprep.subr.mxu0 0.0
    %7463 = vmatpush2.msra.mxu0 0.0
    %7464 = vmatprep.subr.mxu0 0.0
    %7465 = vmatpush2.msra.mxu0 0.0
    %7466 = vmatprep.subr.mxu0 0.0
    %7467 = vmatpush2.msra.mxu0 0.0
    %7468 = vmatprep.subr.mxu0 0.0
    %7469 = vmatpush2.msra.mxu0 0.0
    %7470 = vmatprep.subr.mxu0 0.0
    %7471 = vmatpush2.msra.mxu0 0.0
    %7472 = vmatprep.subr.mxu0 0.0
    %7473 = vmatpush2.msra.mxu0 0.0
    %7474 = vmatprep.subr.mxu0 0.0
    %7475 = vmatpush2.msra.mxu0 0.0
    %7476 = vmatprep.subr.mxu0 0.0
    %7477 = vmatpush2.msra.mxu0 0.0
    %7478 = vmatprep.subr.mxu0 0.0
    %7479 = vmatpush2.msra.mxu0 0.0
    %7480 = vmatprep.subr.mxu0 0.0
    %7481 = vmatpush2.msra.mxu0 0.0
    %7482 = vmatprep.subr.mxu0 0.0
    %7483 = vmatpush2.msra.mxu0 0.0
    %7484 = vmatprep.subr.mxu0 0.0
    %7485 = vmatpush2.msra.mxu0 0.0
    %7486 = vmatprep.mubr.f32.mxu0 0.0
    %v7487 = vand.u32 %v7032, 4294901760
    %7488 = vmatmul.mubr.f32.gmra.mxu0 %v7487
    %v7489 = vpop.f32.mrf.mxu0
    %v7490 = vadd.f32 %v7417, %v7489
    %v7491 = vpop.f32.mrf.mxu0
    %7492 = vdwg.mxu0
    %v7493 = vld [vmem:[%s9] sm:$0xff]
    %v7494 = vld [vmem:[%s9 + $0x8] sm:$0xff]
    %v7495 = vld [vmem:[%s9 + $0x10] sm:$0xff]
    %v7496 = vld [vmem:[%s9 + $0x18] sm:$0xff]
    %v7498 = vsel %vm1163, %v7490, 0
    %7500 = vmatprep.subr.mxu0 0.0
    %7501 = vmatpush1.msra.mxu0 0.0
    %7502 = vmatprep.subr.mxu0 0.0
    %7503 = vmatpush1.msra.mxu0 0.0
    %7504 = vmatprep.subr.mxu0 0.0
    %7505 = vmatpush1.msra.mxu0 0.0
    %7506 = vmatprep.subr.mxu0 0.0
    %7507 = vmatpush1.msra.mxu0 0.0
    %7508 = vmatprep.subr.mxu0 0.0
    %7509 = vmatpush1.msra.mxu0 0.0
    %7510 = vmatprep.subr.mxu0 0.0
    %7511 = vmatpush1.msra.mxu0 0.0
    %7512 = vmatprep.subr.mxu0 0.0
    %7513 = vmatpush1.msra.mxu0 0.0
    %7514 = vmatprep.subr.mxu0 0.0
    %7515 = vmatpush1.msra.mxu0 0.0
    %7516 = vmatprep.subr.mxu0 0.0
    %7517 = vmatpush1.msra.mxu0 0.0
    %7518 = vmatprep.subr.mxu0 0.0
    %7519 = vmatpush1.msra.mxu0 0.0
    %7520 = vmatprep.subr.mxu0 0.0
    %7521 = vmatpush1.msra.mxu0 0.0
    %7522 = vmatprep.subr.mxu0 0.0
    %7523 = vmatpush1.msra.mxu0 0.0
    %7524 = vmatprep.subr.mxu0 0.0
    %v7525 = vand.u32 %v7496, 4294901760
    %7526 = vmatpush1.msra.mxu0 %v7525
    %7527 = vmatprep.subr.mxu0 0.0
    %v7528 = vand.u32 %v7495, 4294901760
    %7529 = vmatpush1.msra.mxu0 %v7528
    %7530 = vmatprep.subr.mxu0 0.0
    %v7531 = vand.u32 %v7494, 4294901760
    %7532 = vmatpush1.msra.mxu0 %v7531
    %7533 = vmatprep.subr.mxu0 0.0
    %v7534 = vand.u32 %v7493, 4294901760
    %7535 = vmatpush1.msra.mxu0 %v7534
    %7536 = vmatprep.subr.mxu0 0.0
    %7537 = vmatpush2.msra.mxu0 0.0
    %7538 = vmatprep.subr.mxu0 0.0
    %7539 = vmatpush2.msra.mxu0 0.0
    %7540 = vmatprep.subr.mxu0 0.0
    %7541 = vmatpush2.msra.mxu0 0.0
    %7542 = vmatprep.subr.mxu0 0.0
    %7543 = vmatpush2.msra.mxu0 0.0
    %7544 = vmatprep.subr.mxu0 0.0
    %7545 = vmatpush2.msra.mxu0 0.0
    %7546 = vmatprep.subr.mxu0 0.0
    %7547 = vmatpush2.msra.mxu0 0.0
    %7548 = vmatprep.subr.mxu0 0.0
    %7549 = vmatpush2.msra.mxu0 0.0
    %7550 = vmatprep.subr.mxu0 0.0
    %7551 = vmatpush2.msra.mxu0 0.0
    %7552 = vmatprep.subr.mxu0 0.0
    %7553 = vmatpush2.msra.mxu0 0.0
    %7554 = vmatprep.subr.mxu0 0.0
    %7555 = vmatpush2.msra.mxu0 0.0
    %7556 = vmatprep.subr.mxu0 0.0
    %7557 = vmatpush2.msra.mxu0 0.0
    %7558 = vmatprep.subr.mxu0 0.0
    %7559 = vmatpush2.msra.mxu0 0.0
    %7560 = vmatprep.subr.mxu0 0.0
    %7561 = vmatpush2.msra.mxu0 0.0
    %7562 = vmatprep.subr.mxu0 0.0
    %7563 = vmatpush2.msra.mxu0 0.0
    %7564 = vmatprep.subr.mxu0 0.0
    %7565 = vmatpush2.msra.mxu0 0.0
    %7566 = vmatprep.subr.mxu0 0.0
    %7567 = vmatpush2.msra.mxu0 0.0
    %7568 = vmatprep.mubr.f32.mxu0 0.0
    %v7569 = vand.u32 %v7498, 4294901760
    %v7570 = vsub.f32 %v7498, %v7569
    %v7571 = vand.u32 %v7570, 4294901760
    %v7572 = vsub.f32 %v7570, %v7571
    %v7573 = vand.u32 %v7572, 4294901760
    %7574 = vmatmul.mubr.f32.gmra.mxu0 %v7573
    %v7575 = vpop.f32.mrf.mxu0
    %v7576 = vadd.f32 0.0, %v7575
    %v7577 = vpop.f32.mrf.mxu0
    %7578 = vdwg.mxu0
    %7579 = vmatprep.subr.mxu0 0.0
    %7580 = vmatpush1.msra.mxu0 0.0
    %7581 = vmatprep.subr.mxu0 0.0
    %7582 = vmatpush1.msra.mxu0 0.0
    %7583 = vmatprep.subr.mxu0 0.0
    %7584 = vmatpush1.msra.mxu0 0.0
    %7585 = vmatprep.subr.mxu0 0.0
    %7586 = vmatpush1.msra.mxu0 0.0
    %7587 = vmatprep.subr.mxu0 0.0
    %7588 = vmatpush1.msra.mxu0 0.0
    %7589 = vmatprep.subr.mxu0 0.0
    %7590 = vmatpush1.msra.mxu0 0.0
    %7591 = vmatprep.subr.mxu0 0.0
    %7592 = vmatpush1.msra.mxu0 0.0
    %7593 = vmatprep.subr.mxu0 0.0
    %7594 = vmatpush1.msra.mxu0 0.0
    %7595 = vmatprep.subr.mxu0 0.0
    %7596 = vmatpush1.msra.mxu0 0.0
    %7597 = vmatprep.subr.mxu0 0.0
    %7598 = vmatpush1.msra.mxu0 0.0
    %7599 = vmatprep.subr.mxu0 0.0
    %7600 = vmatpush1.msra.mxu0 0.0
    %7601 = vmatprep.subr.mxu0 0.0
    %7602 = vmatpush1.msra.mxu0 0.0
    %7603 = vmatprep.subr.mxu0 0.0
    %v7604 = vand.u32 %v7496, 4294901760
    %v7605 = vsub.f32 %v7496, %v7604
    %v7606 = vand.u32 %v7605, 4294901760
    %v7607 = vsub.f32 %v7605, %v7606
    %v7608 = vand.u32 %v7607, 4294901760
    %7609 = vmatpush1.msra.mxu0 %v7608
    %7610 = vmatprep.subr.mxu0 0.0
    %v7611 = vand.u32 %v7495, 4294901760
    %v7612 = vsub.f32 %v7495, %v7611
    %v7613 = vand.u32 %v7612, 4294901760
    %v7614 = vsub.f32 %v7612, %v7613
    %v7615 = vand.u32 %v7614, 4294901760
    %7616 = vmatpush1.msra.mxu0 %v7615
    %7617 = vmatprep.subr.mxu0 0.0
    %v7618 = vand.u32 %v7494, 4294901760
    %v7619 = vsub.f32 %v7494, %v7618
    %v7620 = vand.u32 %v7619, 4294901760
    %v7621 = vsub.f32 %v7619, %v7620
    %v7622 = vand.u32 %v7621, 4294901760
    %7623 = vmatpush1.msra.mxu0 %v7622
    %7624 = vmatprep.subr.mxu0 0.0
    %v7625 = vand.u32 %v7493, 4294901760
    %v7626 = vsub.f32 %v7493, %v7625
    %v7627 = vand.u32 %v7626, 4294901760
    %v7628 = vsub.f32 %v7626, %v7627
    %v7629 = vand.u32 %v7628, 4294901760
    %7630 = vmatpush1.msra.mxu0 %v7629
    %7631 = vmatprep.subr.mxu0 0.0
    %7632 = vmatpush2.msra.mxu0 0.0
    %7633 = vmatprep.subr.mxu0 0.0
    %7634 = vmatpush2.msra.mxu0 0.0
    %7635 = vmatprep.subr.mxu0 0.0
    %7636 = vmatpush2.msra.mxu0 0.0
    %7637 = vmatprep.subr.mxu0 0.0
    %7638 = vmatpush2.msra.mxu0 0.0
    %7639 = vmatprep.subr.mxu0 0.0
    %7640 = vmatpush2.msra.mxu0 0.0
    %7641 = vmatprep.subr.mxu0 0.0
    %7642 = vmatpush2.msra.mxu0 0.0
    %7643 = vmatprep.subr.mxu0 0.0
    %7644 = vmatpush2.msra.mxu0 0.0
    %7645 = vmatprep.subr.mxu0 0.0
    %7646 = vmatpush2.msra.mxu0 0.0
    %7647 = vmatprep.subr.mxu0 0.0
    %7648 = vmatpush2.msra.mxu0 0.0
    %7649 = vmatprep.subr.mxu0 0.0
    %7650 = vmatpush2.msra.mxu0 0.0
    %7651 = vmatprep.subr.mxu0 0.0
    %7652 = vmatpush2.msra.mxu0 0.0
    %7653 = vmatprep.subr.mxu0 0.0
    %7654 = vmatpush2.msra.mxu0 0.0
    %7655 = vmatprep.subr.mxu0 0.0
    %7656 = vmatpush2.msra.mxu0 0.0
    %7657 = vmatprep.subr.mxu0 0.0
    %7658 = vmatpush2.msra.mxu0 0.0
    %7659 = vmatprep.subr.mxu0 0.0
    %7660 = vmatpush2.msra.mxu0 0.0
    %7661 = vmatprep.subr.mxu0 0.0
    %7662 = vmatpush2.msra.mxu0 0.0
    %7663 = vmatprep.mubr.f32.mxu0 0.0
    %v7664 = vand.u32 %v7498, 4294901760
    %7665 = vmatmul.mubr.f32.gmra.mxu0 %v7664
    %v7666 = vpop.f32.mrf.mxu0
    %v7667 = vadd.f32 %v7576, %v7666
    %v7668 = vpop.f32.mrf.mxu0
    %7669 = vdwg.mxu0
    %7670 = vmatprep.subr.mxu0 0.0
    %7671 = vmatpush1.msra.mxu0 0.0
    %7672 = vmatprep.subr.mxu0 0.0
    %7673 = vmatpush1.msra.mxu0 0.0
    %7674 = vmatprep.subr.mxu0 0.0
    %7675 = vmatpush1.msra.mxu0 0.0
    %7676 = vmatprep.subr.mxu0 0.0
    %7677 = vmatpush1.msra.mxu0 0.0
    %7678 = vmatprep.subr.mxu0 0.0
    %7679 = vmatpush1.msra.mxu0 0.0
    %7680 = vmatprep.subr.mxu0 0.0
    %7681 = vmatpush1.msra.mxu0 0.0
    %7682 = vmatprep.subr.mxu0 0.0
    %7683 = vmatpush1.msra.mxu0 0.0
    %7684 = vmatprep.subr.mxu0 0.0
    %7685 = vmatpush1.msra.mxu0 0.0
    %7686 = vmatprep.subr.mxu0 0.0
    %7687 = vmatpush1.msra.mxu0 0.0
    %7688 = vmatprep.subr.mxu0 0.0
    %7689 = vmatpush1.msra.mxu0 0.0
    %7690 = vmatprep.subr.mxu0 0.0
    %7691 = vmatpush1.msra.mxu0 0.0
    %7692 = vmatprep.subr.mxu0 0.0
    %7693 = vmatpush1.msra.mxu0 0.0
    %7694 = vmatprep.subr.mxu0 0.0
    %v7695 = vand.u32 %v7496, 4294901760
    %v7696 = vsub.f32 %v7496, %v7695
    %7697 = vmatpush1.msra.mxu0 %v7696
    %7698 = vmatprep.subr.mxu0 0.0
    %v7699 = vand.u32 %v7495, 4294901760
    %v7700 = vsub.f32 %v7495, %v7699
    %7701 = vmatpush1.msra.mxu0 %v7700
    %7702 = vmatprep.subr.mxu0 0.0
    %v7703 = vand.u32 %v7494, 4294901760
    %v7704 = vsub.f32 %v7494, %v7703
    %7705 = vmatpush1.msra.mxu0 %v7704
    %7706 = vmatprep.subr.mxu0 0.0
    %v7707 = vand.u32 %v7493, 4294901760
    %v7708 = vsub.f32 %v7493, %v7707
    %7709 = vmatpush1.msra.mxu0 %v7708
    %7710 = vmatprep.subr.mxu0 0.0
    %7711 = vmatpush2.msra.mxu0 0.0
    %7712 = vmatprep.subr.mxu0 0.0
    %7713 = vmatpush2.msra.mxu0 0.0
    %7714 = vmatprep.subr.mxu0 0.0
    %7715 = vmatpush2.msra.mxu0 0.0
    %7716 = vmatprep.subr.mxu0 0.0
    %7717 = vmatpush2.msra.mxu0 0.0
    %7718 = vmatprep.subr.mxu0 0.0
    %7719 = vmatpush2.msra.mxu0 0.0
    %7720 = vmatprep.subr.mxu0 0.0
    %7721 = vmatpush2.msra.mxu0 0.0
    %7722 = vmatprep.subr.mxu0 0.0
    %7723 = vmatpush2.msra.mxu0 0.0
    %7724 = vmatprep.subr.mxu0 0.0
    %7725 = vmatpush2.msra.mxu0 0.0
    %7726 = vmatprep.subr.mxu0 0.0
    %7727 = vmatpush2.msra.mxu0 0.0
    %7728 = vmatprep.subr.mxu0 0.0
    %7729 = vmatpush2.msra.mxu0 0.0
    %7730 = vmatprep.subr.mxu0 0.0
    %7731 = vmatpush2.msra.mxu0 0.0
    %7732 = vmatprep.subr.mxu0 0.0
    %7733 = vmatpush2.msra.mxu0 0.0
    %7734 = vmatprep.subr.mxu0 0.0
    %7735 = vmatpush2.msra.mxu0 0.0
    %7736 = vmatprep.subr.mxu0 0.0
    %7737 = vmatpush2.msra.mxu0 0.0
    %7738 = vmatprep.subr.mxu0 0.0
    %7739 = vmatpush2.msra.mxu0 0.0
    %7740 = vmatprep.subr.mxu0 0.0
    %7741 = vmatpush2.msra.mxu0 0.0
    %7742 = vmatprep.mubr.f32.mxu0 0.0
    %v7743 = vand.u32 %v7498, 4294901760
    %v7744 = vsub.f32 %v7498, %v7743
    %7745 = vmatmul.mubr.f32.gmra.mxu0 %v7744
    %v7746 = vpop.f32.mrf.mxu0
    %v7747 = vadd.f32 %v7667, %v7746
    %v7748 = vpop.f32.mrf.mxu0
    %7749 = vdwg.mxu0
    %7750 = vmatprep.subr.mxu0 0.0
    %7751 = vmatpush1.msra.mxu0 0.0
    %7752 = vmatprep.subr.mxu0 0.0
    %7753 = vmatpush1.msra.mxu0 0.0
    %7754 = vmatprep.subr.mxu0 0.0
    %7755 = vmatpush1.msra.mxu0 0.0
    %7756 = vmatprep.subr.mxu0 0.0
    %7757 = vmatpush1.msra.mxu0 0.0
    %7758 = vmatprep.subr.mxu0 0.0
    %7759 = vmatpush1.msra.mxu0 0.0
    %7760 = vmatprep.subr.mxu0 0.0
    %7761 = vmatpush1.msra.mxu0 0.0
    %7762 = vmatprep.subr.mxu0 0.0
    %7763 = vmatpush1.msra.mxu0 0.0
    %7764 = vmatprep.subr.mxu0 0.0
    %7765 = vmatpush1.msra.mxu0 0.0
    %7766 = vmatprep.subr.mxu0 0.0
    %7767 = vmatpush1.msra.mxu0 0.0
    %7768 = vmatprep.subr.mxu0 0.0
    %7769 = vmatpush1.msra.mxu0 0.0
    %7770 = vmatprep.subr.mxu0 0.0
    %7771 = vmatpush1.msra.mxu0 0.0
    %7772 = vmatprep.subr.mxu0 0.0
    %7773 = vmatpush1.msra.mxu0 0.0
    %7774 = vmatprep.subr.mxu0 0.0
    %v7775 = vand.u32 %v7496, 4294901760
    %7776 = vmatpush1.msra.mxu0 %v7775
    %7777 = vmatprep.subr.mxu0 0.0
    %v7778 = vand.u32 %v7495, 4294901760
    %7779 = vmatpush1.msra.mxu0 %v7778
    %7780 = vmatprep.subr.mxu0 0.0
    %v7781 = vand.u32 %v7494, 4294901760
    %7782 = vmatpush1.msra.mxu0 %v7781
    %7783 = vmatprep.subr.mxu0 0.0
    %v7784 = vand.u32 %v7493, 4294901760
    %7785 = vmatpush1.msra.mxu0 %v7784
    %7786 = vmatprep.subr.mxu0 0.0
    %7787 = vmatpush2.msra.mxu0 0.0
    %7788 = vmatprep.subr.mxu0 0.0
    %7789 = vmatpush2.msra.mxu0 0.0
    %7790 = vmatprep.subr.mxu0 0.0
    %7791 = vmatpush2.msra.mxu0 0.0
    %7792 = vmatprep.subr.mxu0 0.0
    %7793 = vmatpush2.msra.mxu0 0.0
    %7794 = vmatprep.subr.mxu0 0.0
    %7795 = vmatpush2.msra.mxu0 0.0
    %7796 = vmatprep.subr.mxu0 0.0
    %7797 = vmatpush2.msra.mxu0 0.0
    %7798 = vmatprep.subr.mxu0 0.0
    %7799 = vmatpush2.msra.mxu0 0.0
    %7800 = vmatprep.subr.mxu0 0.0
    %7801 = vmatpush2.msra.mxu0 0.0
    %7802 = vmatprep.subr.mxu0 0.0
    %7803 = vmatpush2.msra.mxu0 0.0
    %7804 = vmatprep.subr.mxu0 0.0
    %7805 = vmatpush2.msra.mxu0 0.0
    %7806 = vmatprep.subr.mxu0 0.0
    %7807 = vmatpush2.msra.mxu0 0.0
    %7808 = vmatprep.subr.mxu0 0.0
    %7809 = vmatpush2.msra.mxu0 0.0
    %7810 = vmatprep.subr.mxu0 0.0
    %7811 = vmatpush2.msra.mxu0 0.0
    %7812 = vmatprep.subr.mxu0 0.0
    %7813 = vmatpush2.msra.mxu0 0.0
    %7814 = vmatprep.subr.mxu0 0.0
    %7815 = vmatpush2.msra.mxu0 0.0
    %7816 = vmatprep.subr.mxu0 0.0
    %7817 = vmatpush2.msra.mxu0 0.0
    %7818 = vmatprep.mubr.f32.mxu0 0.0
    %v7819 = vand.u32 %v7498, 4294901760
    %v7820 = vsub.f32 %v7498, %v7819
    %v7821 = vand.u32 %v7820, 4294901760
    %7822 = vmatmul.mubr.f32.gmra.mxu0 %v7821
    %v7823 = vpop.f32.mrf.mxu0
    %v7824 = vadd.f32 %v7747, %v7823
    %v7825 = vpop.f32.mrf.mxu0
    %7826 = vdwg.mxu0
    %7827 = vmatprep.subr.mxu0 0.0
    %7828 = vmatpush1.msra.mxu0 0.0
    %7829 = vmatprep.subr.mxu0 0.0
    %7830 = vmatpush1.msra.mxu0 0.0
    %7831 = vmatprep.subr.mxu0 0.0
    %7832 = vmatpush1.msra.mxu0 0.0
    %7833 = vmatprep.subr.mxu0 0.0
    %7834 = vmatpush1.msra.mxu0 0.0
    %7835 = vmatprep.subr.mxu0 0.0
    %7836 = vmatpush1.msra.mxu0 0.0
    %7837 = vmatprep.subr.mxu0 0.0
    %7838 = vmatpush1.msra.mxu0 0.0
    %7839 = vmatprep.subr.mxu0 0.0
    %7840 = vmatpush1.msra.mxu0 0.0
    %7841 = vmatprep.subr.mxu0 0.0
    %7842 = vmatpush1.msra.mxu0 0.0
    %7843 = vmatprep.subr.mxu0 0.0
    %7844 = vmatpush1.msra.mxu0 0.0
    %7845 = vmatprep.subr.mxu0 0.0
    %7846 = vmatpush1.msra.mxu0 0.0
    %7847 = vmatprep.subr.mxu0 0.0
    %7848 = vmatpush1.msra.mxu0 0.0
    %7849 = vmatprep.subr.mxu0 0.0
    %7850 = vmatpush1.msra.mxu0 0.0
    %7851 = vmatprep.subr.mxu0 0.0
    %v7852 = vand.u32 %v7496, 4294901760
    %v7853 = vsub.f32 %v7496, %v7852
    %v7854 = vand.u32 %v7853, 4294901760
    %7855 = vmatpush1.msra.mxu0 %v7854
    %7856 = vmatprep.subr.mxu0 0.0
    %v7857 = vand.u32 %v7495, 4294901760
    %v7858 = vsub.f32 %v7495, %v7857
    %v7859 = vand.u32 %v7858, 4294901760
    %7860 = vmatpush1.msra.mxu0 %v7859
    %7861 = vmatprep.subr.mxu0 0.0
    %v7862 = vand.u32 %v7494, 4294901760
    %v7863 = vsub.f32 %v7494, %v7862
    %v7864 = vand.u32 %v7863, 4294901760
    %7865 = vmatpush1.msra.mxu0 %v7864
    %7866 = vmatprep.subr.mxu0 0.0
    %v7867 = vand.u32 %v7493, 4294901760
    %v7868 = vsub.f32 %v7493, %v7867
    %v7869 = vand.u32 %v7868, 4294901760
    %7870 = vmatpush1.msra.mxu0 %v7869
    %7871 = vmatprep.subr.mxu0 0.0
    %7872 = vmatpush2.msra.mxu0 0.0
    %7873 = vmatprep.subr.mxu0 0.0
    %7874 = vmatpush2.msra.mxu0 0.0
    %7875 = vmatprep.subr.mxu0 0.0
    %7876 = vmatpush2.msra.mxu0 0.0
    %7877 = vmatprep.subr.mxu0 0.0
    %7878 = vmatpush2.msra.mxu0 0.0
    %7879 = vmatprep.subr.mxu0 0.0
    %7880 = vmatpush2.msra.mxu0 0.0
    %7881 = vmatprep.subr.mxu0 0.0
    %7882 = vmatpush2.msra.mxu0 0.0
    %7883 = vmatprep.subr.mxu0 0.0
    %7884 = vmatpush2.msra.mxu0 0.0
    %7885 = vmatprep.subr.mxu0 0.0
    %7886 = vmatpush2.msra.mxu0 0.0
    %7887 = vmatprep.subr.mxu0 0.0
    %7888 = vmatpush2.msra.mxu0 0.0
    %7889 = vmatprep.subr.mxu0 0.0
    %7890 = vmatpush2.msra.mxu0 0.0
    %7891 = vmatprep.subr.mxu0 0.0
    %7892 = vmatpush2.msra.mxu0 0.0
    %7893 = vmatprep.subr.mxu0 0.0
    %7894 = vmatpush2.msra.mxu0 0.0
    %7895 = vmatprep.subr.mxu0 0.0
    %7896 = vmatpush2.msra.mxu0 0.0
    %7897 = vmatprep.subr.mxu0 0.0
    %7898 = vmatpush2.msra.mxu0 0.0
    %7899 = vmatprep.subr.mxu0 0.0
    %7900 = vmatpush2.msra.mxu0 0.0
    %7901 = vmatprep.subr.mxu0 0.0
    %7902 = vmatpush2.msra.mxu0 0.0
    %7903 = vmatprep.mubr.f32.mxu0 0.0
    %v7904 = vand.u32 %v7498, 4294901760
    %7905 = vmatmul.mubr.f32.gmra.mxu0 %v7904
    %v7906 = vpop.f32.mrf.mxu0
    %v7907 = vadd.f32 %v7824, %v7906
    %v7908 = vpop.f32.mrf.mxu0
    %7909 = vdwg.mxu0
    %7910 = vmatprep.subr.mxu0 0.0
    %7911 = vmatpush1.msra.mxu0 0.0
    %7912 = vmatprep.subr.mxu0 0.0
    %7913 = vmatpush1.msra.mxu0 0.0
    %7914 = vmatprep.subr.mxu0 0.0
    %7915 = vmatpush1.msra.mxu0 0.0
    %7916 = vmatprep.subr.mxu0 0.0
    %7917 = vmatpush1.msra.mxu0 0.0
    %7918 = vmatprep.subr.mxu0 0.0
    %7919 = vmatpush1.msra.mxu0 0.0
    %7920 = vmatprep.subr.mxu0 0.0
    %7921 = vmatpush1.msra.mxu0 0.0
    %7922 = vmatprep.subr.mxu0 0.0
    %7923 = vmatpush1.msra.mxu0 0.0
    %7924 = vmatprep.subr.mxu0 0.0
    %7925 = vmatpush1.msra.mxu0 0.0
    %7926 = vmatprep.subr.mxu0 0.0
    %7927 = vmatpush1.msra.mxu0 0.0
    %7928 = vmatprep.subr.mxu0 0.0
    %7929 = vmatpush1.msra.mxu0 0.0
    %7930 = vmatprep.subr.mxu0 0.0
    %7931 = vmatpush1.msra.mxu0 0.0
    %7932 = vmatprep.subr.mxu0 0.0
    %7933 = vmatpush1.msra.mxu0 0.0
    %7934 = vmatprep.subr.mxu0 0.0
    %v7935 = vand.u32 %v7496, 4294901760
    %7936 = vmatpush1.msra.mxu0 %v7935
    %7937 = vmatprep.subr.mxu0 0.0
    %v7938 = vand.u32 %v7495, 4294901760
    %7939 = vmatpush1.msra.mxu0 %v7938
    %7940 = vmatprep.subr.mxu0 0.0
    %v7941 = vand.u32 %v7494, 4294901760
    %7942 = vmatpush1.msra.mxu0 %v7941
    %7943 = vmatprep.subr.mxu0 0.0
    %v7944 = vand.u32 %v7493, 4294901760
    %7945 = vmatpush1.msra.mxu0 %v7944
    %7946 = vmatprep.subr.mxu0 0.0
    %7947 = vmatpush2.msra.mxu0 0.0
    %7948 = vmatprep.subr.mxu0 0.0
    %7949 = vmatpush2.msra.mxu0 0.0
    %7950 = vmatprep.subr.mxu0 0.0
    %7951 = vmatpush2.msra.mxu0 0.0
    %7952 = vmatprep.subr.mxu0 0.0
    %7953 = vmatpush2.msra.mxu0 0.0
    %7954 = vmatprep.subr.mxu0 0.0
    %7955 = vmatpush2.msra.mxu0 0.0
    %7956 = vmatprep.subr.mxu0 0.0
    %7957 = vmatpush2.msra.mxu0 0.0
    %7958 = vmatprep.subr.mxu0 0.0
    %7959 = vmatpush2.msra.mxu0 0.0
    %7960 = vmatprep.subr.mxu0 0.0
    %7961 = vmatpush2.msra.mxu0 0.0
    %7962 = vmatprep.subr.mxu0 0.0
    %7963 = vmatpush2.msra.mxu0 0.0
    %7964 = vmatprep.subr.mxu0 0.0
    %7965 = vmatpush2.msra.mxu0 0.0
    %7966 = vmatprep.subr.mxu0 0.0
    %7967 = vmatpush2.msra.mxu0 0.0
    %7968 = vmatprep.subr.mxu0 0.0
    %7969 = vmatpush2.msra.mxu0 0.0
    %7970 = vmatprep.subr.mxu0 0.0
    %7971 = vmatpush2.msra.mxu0 0.0
    %7972 = vmatprep.subr.mxu0 0.0
    %7973 = vmatpush2.msra.mxu0 0.0
    %7974 = vmatprep.subr.mxu0 0.0
    %7975 = vmatpush2.msra.mxu0 0.0
    %7976 = vmatprep.subr.mxu0 0.0
    %7977 = vmatpush2.msra.mxu0 0.0
    %7978 = vmatprep.mubr.f32.mxu0 0.0
    %v7979 = vand.u32 %v7498, 4294901760
    %7980 = vmatmul.mubr.f32.gmra.mxu0 %v7979
    %v7981 = vpop.f32.mrf.mxu0
    %v7982 = vadd.f32 %v7907, %v7981
    %v7983 = vpop.f32.mrf.mxu0
    %7984 = vdwg.mxu0
    %7985 = vmatprep.subr.mxu0 0.0
    %7986 = vmatpush1.msra.mxu0 0.0
    %7987 = vmatprep.subr.mxu0 0.0
    %7988 = vmatpush1.msra.mxu0 0.0
    %7989 = vmatprep.subr.mxu0 0.0
    %7990 = vmatpush1.msra.mxu0 0.0
    %7991 = vmatprep.subr.mxu0 0.0
    %7992 = vmatpush1.msra.mxu0 0.0
    %7993 = vmatprep.subr.mxu0 0.0
    %7994 = vmatpush1.msra.mxu0 0.0
    %7995 = vmatprep.subr.mxu0 0.0
    %7996 = vmatpush1.msra.mxu0 0.0
    %7997 = vmatprep.subr.mxu0 0.0
    %7998 = vmatpush1.msra.mxu0 0.0
    %7999 = vmatprep.subr.mxu0 0.0
    %8000 = vmatpush1.msra.mxu0 0.0
    %8001 = vmatprep.subr.mxu0 0.0
    %8002 = vmatpush1.msra.mxu0 0.0
    %8003 = vmatprep.subr.mxu0 0.0
    %8004 = vmatpush1.msra.mxu0 0.0
    %8005 = vmatprep.subr.mxu0 0.0
    %8006 = vmatpush1.msra.mxu0 0.0
    %8007 = vmatprep.subr.mxu0 0.0
    %8008 = vmatpush1.msra.mxu0 0.0
    %8009 = vmatprep.subr.mxu0 0.0
    %v8010 = vand.u32 %v7029, 4294901760
    %8011 = vmatpush1.msra.mxu0 %v8010
    %8012 = vmatprep.subr.mxu0 0.0
    %v8013 = vand.u32 %v7028, 4294901760
    %8014 = vmatpush1.msra.mxu0 %v8013
    %8015 = vmatprep.subr.mxu0 0.0
    %v8016 = vand.u32 %v7027, 4294901760
    %8017 = vmatpush1.msra.mxu0 %v8016
    %8018 = vmatprep.subr.mxu0 0.0
    %v8019 = vand.u32 %v7026, 4294901760
    %8020 = vmatpush1.msra.mxu0 %v8019
    %8021 = vmatprep.subr.mxu0 0.0
    %8022 = vmatpush2.msra.mxu0 0.0
    %8023 = vmatprep.subr.mxu0 0.0
    %8024 = vmatpush2.msra.mxu0 0.0
    %8025 = vmatprep.subr.mxu0 0.0
    %8026 = vmatpush2.msra.mxu0 0.0
    %8027 = vmatprep.subr.mxu0 0.0
    %8028 = vmatpush2.msra.mxu0 0.0
    %8029 = vmatprep.subr.mxu0 0.0
    %8030 = vmatpush2.msra.mxu0 0.0
    %8031 = vmatprep.subr.mxu0 0.0
    %8032 = vmatpush2.msra.mxu0 0.0
    %8033 = vmatprep.subr.mxu0 0.0
    %8034 = vmatpush2.msra.mxu0 0.0
    %8035 = vmatprep.subr.mxu0 0.0
    %8036 = vmatpush2.msra.mxu0 0.0
    %8037 = vmatprep.subr.mxu0 0.0
    %8038 = vmatpush2.msra.mxu0 0.0
    %8039 = vmatprep.subr.mxu0 0.0
    %8040 = vmatpush2.msra.mxu0 0.0
    %8041 = vmatprep.subr.mxu0 0.0
    %8042 = vmatpush2.msra.mxu0 0.0
    %8043 = vmatprep.subr.mxu0 0.0
    %8044 = vmatpush2.msra.mxu0 0.0
    %8045 = vmatprep.subr.mxu0 0.0
    %8046 = vmatpush2.msra.mxu0 0.0
    %8047 = vmatprep.subr.mxu0 0.0
    %8048 = vmatpush2.msra.mxu0 0.0
    %8049 = vmatprep.subr.mxu0 0.0
    %8050 = vmatpush2.msra.mxu0 0.0
    %8051 = vmatprep.subr.mxu0 0.0
    %8052 = vmatpush2.msra.mxu0 0.0
    %8053 = vmatprep.mubr.f32.mxu0 0.0
    %v8054 = vand.u32 %v5061, 4294901760
    %v8055 = vsub.f32 %v5061, %v8054
    %v8056 = vand.u32 %v8055, 4294901760
    %v8057 = vsub.f32 %v8055, %v8056
    %v8058 = vand.u32 %v8057, 4294901760
    %8059 = vmatmul.mubr.f32.gmra.mxu0 %v8058
    %v8060 = vpop.f32.mrf.mxu0
    %v8061 = vadd.f32 %v7982, %v8060
    %v8062 = vpop.f32.mrf.mxu0
    %8063 = vdwg.mxu0
    %8064 = vmatprep.subr.mxu0 0.0
    %8065 = vmatpush1.msra.mxu0 0.0
    %8066 = vmatprep.subr.mxu0 0.0
    %8067 = vmatpush1.msra.mxu0 0.0
    %8068 = vmatprep.subr.mxu0 0.0
    %8069 = vmatpush1.msra.mxu0 0.0
    %8070 = vmatprep.subr.mxu0 0.0
    %8071 = vmatpush1.msra.mxu0 0.0
    %8072 = vmatprep.subr.mxu0 0.0
    %8073 = vmatpush1.msra.mxu0 0.0
    %8074 = vmatprep.subr.mxu0 0.0
    %8075 = vmatpush1.msra.mxu0 0.0
    %8076 = vmatprep.subr.mxu0 0.0
    %8077 = vmatpush1.msra.mxu0 0.0
    %8078 = vmatprep.subr.mxu0 0.0
    %8079 = vmatpush1.msra.mxu0 0.0
    %8080 = vmatprep.subr.mxu0 0.0
    %8081 = vmatpush1.msra.mxu0 0.0
    %8082 = vmatprep.subr.mxu0 0.0
    %8083 = vmatpush1.msra.mxu0 0.0
    %8084 = vmatprep.subr.mxu0 0.0
    %8085 = vmatpush1.msra.mxu0 0.0
    %8086 = vmatprep.subr.mxu0 0.0
    %8087 = vmatpush1.msra.mxu0 0.0
    %8088 = vmatprep.subr.mxu0 0.0
    %v8089 = vand.u32 %v7029, 4294901760
    %v8090 = vsub.f32 %v7029, %v8089
    %v8091 = vand.u32 %v8090, 4294901760
    %v8092 = vsub.f32 %v8090, %v8091
    %v8093 = vand.u32 %v8092, 4294901760
    %8094 = vmatpush1.msra.mxu0 %v8093
    %8095 = vmatprep.subr.mxu0 0.0
    %v8096 = vand.u32 %v7028, 4294901760
    %v8097 = vsub.f32 %v7028, %v8096
    %v8098 = vand.u32 %v8097, 4294901760
    %v8099 = vsub.f32 %v8097, %v8098
    %v8100 = vand.u32 %v8099, 4294901760
    %8101 = vmatpush1.msra.mxu0 %v8100
    %8102 = vmatprep.subr.mxu0 0.0
    %v8103 = vand.u32 %v7027, 4294901760
    %v8104 = vsub.f32 %v7027, %v8103
    %v8105 = vand.u32 %v8104, 4294901760
    %v8106 = vsub.f32 %v8104, %v8105
    %v8107 = vand.u32 %v8106, 4294901760
    %8108 = vmatpush1.msra.mxu0 %v8107
    %8109 = vmatprep.subr.mxu0 0.0
    %v8110 = vand.u32 %v7026, 4294901760
    %v8111 = vsub.f32 %v7026, %v8110
    %v8112 = vand.u32 %v8111, 4294901760
    %v8113 = vsub.f32 %v8111, %v8112
    %v8114 = vand.u32 %v8113, 4294901760
    %8115 = vmatpush1.msra.mxu0 %v8114
    %8116 = vmatprep.subr.mxu0 0.0
    %8117 = vmatpush2.msra.mxu0 0.0
    %8118 = vmatprep.subr.mxu0 0.0
    %8119 = vmatpush2.msra.mxu0 0.0
    %8120 = vmatprep.subr.mxu0 0.0
    %8121 = vmatpush2.msra.mxu0 0.0
    %8122 = vmatprep.subr.mxu0 0.0
    %8123 = vmatpush2.msra.mxu0 0.0
    %8124 = vmatprep.subr.mxu0 0.0
    %8125 = vmatpush2.msra.mxu0 0.0
    %8126 = vmatprep.subr.mxu0 0.0
    %8127 = vmatpush2.msra.mxu0 0.0
    %8128 = vmatprep.subr.mxu0 0.0
    %8129 = vmatpush2.msra.mxu0 0.0
    %8130 = vmatprep.subr.mxu0 0.0
    %8131 = vmatpush2.msra.mxu0 0.0
    %8132 = vmatprep.subr.mxu0 0.0
    %8133 = vmatpush2.msra.mxu0 0.0
    %8134 = vmatprep.subr.mxu0 0.0
    %8135 = vmatpush2.msra.mxu0 0.0
    %8136 = vmatprep.subr.mxu0 0.0
    %8137 = vmatpush2.msra.mxu0 0.0
    %8138 = vmatprep.subr.mxu0 0.0
    %8139 = vmatpush2.msra.mxu0 0.0
    %8140 = vmatprep.subr.mxu0 0.0
    %8141 = vmatpush2.msra.mxu0 0.0
    %8142 = vmatprep.subr.mxu0 0.0
    %8143 = vmatpush2.msra.mxu0 0.0
    %8144 = vmatprep.subr.mxu0 0.0
    %8145 = vmatpush2.msra.mxu0 0.0
    %8146 = vmatprep.subr.mxu0 0.0
    %8147 = vmatpush2.msra.mxu0 0.0
    %8148 = vmatprep.mubr.f32.mxu0 0.0
    %v8149 = vand.u32 %v5061, 4294901760
    %8150 = vmatmul.mubr.f32.gmra.mxu0 %v8149
    %v8151 = vpop.f32.mrf.mxu0
    %v8152 = vadd.f32 %v8061, %v8151
    %v8153 = vpop.f32.mrf.mxu0
    %8154 = vdwg.mxu0
    %8155 = vmatprep.subr.mxu0 0.0
    %8156 = vmatpush1.msra.mxu0 0.0
    %8157 = vmatprep.subr.mxu0 0.0
    %8158 = vmatpush1.msra.mxu0 0.0
    %8159 = vmatprep.subr.mxu0 0.0
    %8160 = vmatpush1.msra.mxu0 0.0
    %8161 = vmatprep.subr.mxu0 0.0
    %8162 = vmatpush1.msra.mxu0 0.0
    %8163 = vmatprep.subr.mxu0 0.0
    %8164 = vmatpush1.msra.mxu0 0.0
    %8165 = vmatprep.subr.mxu0 0.0
    %8166 = vmatpush1.msra.mxu0 0.0
    %8167 = vmatprep.subr.mxu0 0.0
    %8168 = vmatpush1.msra.mxu0 0.0
    %8169 = vmatprep.subr.mxu0 0.0
    %8170 = vmatpush1.msra.mxu0 0.0
    %8171 = vmatprep.subr.mxu0 0.0
    %8172 = vmatpush1.msra.mxu0 0.0
    %8173 = vmatprep.subr.mxu0 0.0
    %8174 = vmatpush1.msra.mxu0 0.0
    %8175 = vmatprep.subr.mxu0 0.0
    %8176 = vmatpush1.msra.mxu0 0.0
    %8177 = vmatprep.subr.mxu0 0.0
    %8178 = vmatpush1.msra.mxu0 0.0
    %8179 = vmatprep.subr.mxu0 0.0
    %v8180 = vand.u32 %v7029, 4294901760
    %v8181 = vsub.f32 %v7029, %v8180
    %8182 = vmatpush1.msra.mxu0 %v8181
    %8183 = vmatprep.subr.mxu0 0.0
    %v8184 = vand.u32 %v7028, 4294901760
    %v8185 = vsub.f32 %v7028, %v8184
    %8186 = vmatpush1.msra.mxu0 %v8185
    %8187 = vmatprep.subr.mxu0 0.0
    %v8188 = vand.u32 %v7027, 4294901760
    %v8189 = vsub.f32 %v7027, %v8188
    %8190 = vmatpush1.msra.mxu0 %v8189
    %8191 = vmatprep.subr.mxu0 0.0
    %v8192 = vand.u32 %v7026, 4294901760
    %v8193 = vsub.f32 %v7026, %v8192
    %8194 = vmatpush1.msra.mxu0 %v8193
    %8195 = vmatprep.subr.mxu0 0.0
    %8196 = vmatpush2.msra.mxu0 0.0
    %8197 = vmatprep.subr.mxu0 0.0
    %8198 = vmatpush2.msra.mxu0 0.0
    %8199 = vmatprep.subr.mxu0 0.0
    %8200 = vmatpush2.msra.mxu0 0.0
    %8201 = vmatprep.subr.mxu0 0.0
    %8202 = vmatpush2.msra.mxu0 0.0
    %8203 = vmatprep.subr.mxu0 0.0
    %8204 = vmatpush2.msra.mxu0 0.0
    %8205 = vmatprep.subr.mxu0 0.0
    %8206 = vmatpush2.msra.mxu0 0.0
    %8207 = vmatprep.subr.mxu0 0.0
    %8208 = vmatpush2.msra.mxu0 0.0
    %8209 = vmatprep.subr.mxu0 0.0
    %8210 = vmatpush2.msra.mxu0 0.0
    %8211 = vmatprep.subr.mxu0 0.0
    %8212 = vmatpush2.msra.mxu0 0.0
    %8213 = vmatprep.subr.mxu0 0.0
    %8214 = vmatpush2.msra.mxu0 0.0
    %8215 = vmatprep.subr.mxu0 0.0
    %8216 = vmatpush2.msra.mxu0 0.0
    %8217 = vmatprep.subr.mxu0 0.0
    %8218 = vmatpush2.msra.mxu0 0.0
    %8219 = vmatprep.subr.mxu0 0.0
    %8220 = vmatpush2.msra.mxu0 0.0
    %8221 = vmatprep.subr.mxu0 0.0
    %8222 = vmatpush2.msra.mxu0 0.0
    %8223 = vmatprep.subr.mxu0 0.0
    %8224 = vmatpush2.msra.mxu0 0.0
    %8225 = vmatprep.subr.mxu0 0.0
    %8226 = vmatpush2.msra.mxu0 0.0
    %8227 = vmatprep.mubr.f32.mxu0 0.0
    %v8228 = vand.u32 %v5061, 4294901760
    %v8229 = vsub.f32 %v5061, %v8228
    %8230 = vmatmul.mubr.f32.gmra.mxu0 %v8229
    %v8231 = vpop.f32.mrf.mxu0
    %v8232 = vadd.f32 %v8152, %v8231
    %v8233 = vpop.f32.mrf.mxu0
    %8234 = vdwg.mxu0
    %8235 = vmatprep.subr.mxu0 0.0
    %8236 = vmatpush1.msra.mxu0 0.0
    %8237 = vmatprep.subr.mxu0 0.0
    %8238 = vmatpush1.msra.mxu0 0.0
    %8239 = vmatprep.subr.mxu0 0.0
    %8240 = vmatpush1.msra.mxu0 0.0
    %8241 = vmatprep.subr.mxu0 0.0
    %8242 = vmatpush1.msra.mxu0 0.0
    %8243 = vmatprep.subr.mxu0 0.0
    %8244 = vmatpush1.msra.mxu0 0.0
    %8245 = vmatprep.subr.mxu0 0.0
    %8246 = vmatpush1.msra.mxu0 0.0
    %8247 = vmatprep.subr.mxu0 0.0
    %8248 = vmatpush1.msra.mxu0 0.0
    %8249 = vmatprep.subr.mxu0 0.0
    %8250 = vmatpush1.msra.mxu0 0.0
    %8251 = vmatprep.subr.mxu0 0.0
    %8252 = vmatpush1.msra.mxu0 0.0
    %8253 = vmatprep.subr.mxu0 0.0
    %8254 = vmatpush1.msra.mxu0 0.0
    %8255 = vmatprep.subr.mxu0 0.0
    %8256 = vmatpush1.msra.mxu0 0.0
    %8257 = vmatprep.subr.mxu0 0.0
    %8258 = vmatpush1.msra.mxu0 0.0
    %8259 = vmatprep.subr.mxu0 0.0
    %v8260 = vand.u32 %v7029, 4294901760
    %8261 = vmatpush1.msra.mxu0 %v8260
    %8262 = vmatprep.subr.mxu0 0.0
    %v8263 = vand.u32 %v7028, 4294901760
    %8264 = vmatpush1.msra.mxu0 %v8263
    %8265 = vmatprep.subr.mxu0 0.0
    %v8266 = vand.u32 %v7027, 4294901760
    %8267 = vmatpush1.msra.mxu0 %v8266
    %8268 = vmatprep.subr.mxu0 0.0
    %v8269 = vand.u32 %v7026, 4294901760
    %8270 = vmatpush1.msra.mxu0 %v8269
    %8271 = vmatprep.subr.mxu0 0.0
    %8272 = vmatpush2.msra.mxu0 0.0
    %8273 = vmatprep.subr.mxu0 0.0
    %8274 = vmatpush2.msra.mxu0 0.0
    %8275 = vmatprep.subr.mxu0 0.0
    %8276 = vmatpush2.msra.mxu0 0.0
    %8277 = vmatprep.subr.mxu0 0.0
    %8278 = vmatpush2.msra.mxu0 0.0
    %8279 = vmatprep.subr.mxu0 0.0
    %8280 = vmatpush2.msra.mxu0 0.0
    %8281 = vmatprep.subr.mxu0 0.0
    %8282 = vmatpush2.msra.mxu0 0.0
    %8283 = vmatprep.subr.mxu0 0.0
    %8284 = vmatpush2.msra.mxu0 0.0
    %8285 = vmatprep.subr.mxu0 0.0
    %8286 = vmatpush2.msra.mxu0 0.0
    %8287 = vmatprep.subr.mxu0 0.0
    %8288 = vmatpush2.msra.mxu0 0.0
    %8289 = vmatprep.subr.mxu0 0.0
    %8290 = vmatpush2.msra.mxu0 0.0
    %8291 = vmatprep.subr.mxu0 0.0
    %8292 = vmatpush2.msra.mxu0 0.0
    %8293 = vmatprep.subr.mxu0 0.0
    %8294 = vmatpush2.msra.mxu0 0.0
    %8295 = vmatprep.subr.mxu0 0.0
    %8296 = vmatpush2.msra.mxu0 0.0
    %8297 = vmatprep.subr.mxu0 0.0
    %8298 = vmatpush2.msra.mxu0 0.0
    %8299 = vmatprep.subr.mxu0 0.0
    %8300 = vmatpush2.msra.mxu0 0.0
    %8301 = vmatprep.subr.mxu0 0.0
    %8302 = vmatpush2.msra.mxu0 0.0
    %8303 = vmatprep.mubr.f32.mxu0 0.0
    %v8304 = vand.u32 %v5061, 4294901760
    %v8305 = vsub.f32 %v5061, %v8304
    %v8306 = vand.u32 %v8305, 4294901760
    %8307 = vmatmul.mubr.f32.gmra.mxu0 %v8306
    %v8308 = vpop.f32.mrf.mxu0
    %v8309 = vadd.f32 %v8232, %v8308
    %v8310 = vpop.f32.mrf.mxu0
    %8311 = vdwg.mxu0
    %8312 = vmatprep.subr.mxu0 0.0
    %8313 = vmatpush1.msra.mxu0 0.0
    %8314 = vmatprep.subr.mxu0 0.0
    %8315 = vmatpush1.msra.mxu0 0.0
    %8316 = vmatprep.subr.mxu0 0.0
    %8317 = vmatpush1.msra.mxu0 0.0
    %8318 = vmatprep.subr.mxu0 0.0
    %8319 = vmatpush1.msra.mxu0 0.0
    %8320 = vmatprep.subr.mxu0 0.0
    %8321 = vmatpush1.msra.mxu0 0.0
    %8322 = vmatprep.subr.mxu0 0.0
    %8323 = vmatpush1.msra.mxu0 0.0
    %8324 = vmatprep.subr.mxu0 0.0
    %8325 = vmatpush1.msra.mxu0 0.0
    %8326 = vmatprep.subr.mxu0 0.0
    %8327 = vmatpush1.msra.mxu0 0.0
    %8328 = vmatprep.subr.mxu0 0.0
    %8329 = vmatpush1.msra.mxu0 0.0
    %8330 = vmatprep.subr.mxu0 0.0
    %8331 = vmatpush1.msra.mxu0 0.0
    %8332 = vmatprep.subr.mxu0 0.0
    %8333 = vmatpush1.msra.mxu0 0.0
    %8334 = vmatprep.subr.mxu0 0.0
    %8335 = vmatpush1.msra.mxu0 0.0
    %8336 = vmatprep.subr.mxu0 0.0
    %v8337 = vand.u32 %v7029, 4294901760
    %v8338 = vsub.f32 %v7029, %v8337
    %v8339 = vand.u32 %v8338, 4294901760
    %8340 = vmatpush1.msra.mxu0 %v8339
    %8341 = vmatprep.subr.mxu0 0.0
    %v8342 = vand.u32 %v7028, 4294901760
    %v8343 = vsub.f32 %v7028, %v8342
    %v8344 = vand.u32 %v8343, 4294901760
    %8345 = vmatpush1.msra.mxu0 %v8344
    %8346 = vmatprep.subr.mxu0 0.0
    %v8347 = vand.u32 %v7027, 4294901760
    %v8348 = vsub.f32 %v7027, %v8347
    %v8349 = vand.u32 %v8348, 4294901760
    %8350 = vmatpush1.msra.mxu0 %v8349
    %8351 = vmatprep.subr.mxu0 0.0
    %v8352 = vand.u32 %v7026, 4294901760
    %v8353 = vsub.f32 %v7026, %v8352
    %v8354 = vand.u32 %v8353, 4294901760
    %8355 = vmatpush1.msra.mxu0 %v8354
    %8356 = vmatprep.subr.mxu0 0.0
    %8357 = vmatpush2.msra.mxu0 0.0
    %8358 = vmatprep.subr.mxu0 0.0
    %8359 = vmatpush2.msra.mxu0 0.0
    %8360 = vmatprep.subr.mxu0 0.0
    %8361 = vmatpush2.msra.mxu0 0.0
    %8362 = vmatprep.subr.mxu0 0.0
    %8363 = vmatpush2.msra.mxu0 0.0
    %8364 = vmatprep.subr.mxu0 0.0
    %8365 = vmatpush2.msra.mxu0 0.0
    %8366 = vmatprep.subr.mxu0 0.0
    %8367 = vmatpush2.msra.mxu0 0.0
    %8368 = vmatprep.subr.mxu0 0.0
    %8369 = vmatpush2.msra.mxu0 0.0
    %8370 = vmatprep.subr.mxu0 0.0
    %8371 = vmatpush2.msra.mxu0 0.0
    %8372 = vmatprep.subr.mxu0 0.0
    %8373 = vmatpush2.msra.mxu0 0.0
    %8374 = vmatprep.subr.mxu0 0.0
    %8375 = vmatpush2.msra.mxu0 0.0
    %8376 = vmatprep.subr.mxu0 0.0
    %8377 = vmatpush2.msra.mxu0 0.0
    %8378 = vmatprep.subr.mxu0 0.0
    %8379 = vmatpush2.msra.mxu0 0.0
    %8380 = vmatprep.subr.mxu0 0.0
    %8381 = vmatpush2.msra.mxu0 0.0
    %8382 = vmatprep.subr.mxu0 0.0
    %8383 = vmatpush2.msra.mxu0 0.0
    %8384 = vmatprep.subr.mxu0 0.0
    %8385 = vmatpush2.msra.mxu0 0.0
    %8386 = vmatprep.subr.mxu0 0.0
    %8387 = vmatpush2.msra.mxu0 0.0
    %8388 = vmatprep.mubr.f32.mxu0 0.0
    %v8389 = vand.u32 %v5061, 4294901760
    %8390 = vmatmul.mubr.f32.gmra.mxu0 %v8389
    %v8391 = vpop.f32.mrf.mxu0
    %v8392 = vadd.f32 %v8309, %v8391
    %v8393 = vpop.f32.mrf.mxu0
    %8394 = vdwg.mxu0
    %8395 = vmatprep.subr.mxu0 0.0
    %8396 = vmatpush1.msra.mxu0 0.0
    %8397 = vmatprep.subr.mxu0 0.0
    %8398 = vmatpush1.msra.mxu0 0.0
    %8399 = vmatprep.subr.mxu0 0.0
    %8400 = vmatpush1.msra.mxu0 0.0
    %8401 = vmatprep.subr.mxu0 0.0
    %8402 = vmatpush1.msra.mxu0 0.0
    %8403 = vmatprep.subr.mxu0 0.0
    %8404 = vmatpush1.msra.mxu0 0.0
    %8405 = vmatprep.subr.mxu0 0.0
    %8406 = vmatpush1.msra.mxu0 0.0
    %8407 = vmatprep.subr.mxu0 0.0
    %8408 = vmatpush1.msra.mxu0 0.0
    %8409 = vmatprep.subr.mxu0 0.0
    %8410 = vmatpush1.msra.mxu0 0.0
    %8411 = vmatprep.subr.mxu0 0.0
    %8412 = vmatpush1.msra.mxu0 0.0
    %8413 = vmatprep.subr.mxu0 0.0
    %8414 = vmatpush1.msra.mxu0 0.0
    %8415 = vmatprep.subr.mxu0 0.0
    %8416 = vmatpush1.msra.mxu0 0.0
    %8417 = vmatprep.subr.mxu0 0.0
    %8418 = vmatpush1.msra.mxu0 0.0
    %8419 = vmatprep.subr.mxu0 0.0
    %v8420 = vand.u32 %v7029, 4294901760
    %8421 = vmatpush1.msra.mxu0 %v8420
    %8422 = vmatprep.subr.mxu0 0.0
    %v8423 = vand.u32 %v7028, 4294901760
    %8424 = vmatpush1.msra.mxu0 %v8423
    %8425 = vmatprep.subr.mxu0 0.0
    %v8426 = vand.u32 %v7027, 4294901760
    %8427 = vmatpush1.msra.mxu0 %v8426
    %8428 = vmatprep.subr.mxu0 0.0
    %v8429 = vand.u32 %v7026, 4294901760
    %8430 = vmatpush1.msra.mxu0 %v8429
    %8431 = vmatprep.subr.mxu0 0.0
    %8432 = vmatpush2.msra.mxu0 0.0
    %8433 = vmatprep.subr.mxu0 0.0
    %8434 = vmatpush2.msra.mxu0 0.0
    %8435 = vmatprep.subr.mxu0 0.0
    %8436 = vmatpush2.msra.mxu0 0.0
    %8437 = vmatprep.subr.mxu0 0.0
    %8438 = vmatpush2.msra.mxu0 0.0
    %8439 = vmatprep.subr.mxu0 0.0
    %8440 = vmatpush2.msra.mxu0 0.0
    %8441 = vmatprep.subr.mxu0 0.0
    %8442 = vmatpush2.msra.mxu0 0.0
    %8443 = vmatprep.subr.mxu0 0.0
    %8444 = vmatpush2.msra.mxu0 0.0
    %8445 = vmatprep.subr.mxu0 0.0
    %8446 = vmatpush2.msra.mxu0 0.0
    %8447 = vmatprep.subr.mxu0 0.0
    %8448 = vmatpush2.msra.mxu0 0.0
    %8449 = vmatprep.subr.mxu0 0.0
    %8450 = vmatpush2.msra.mxu0 0.0
    %8451 = vmatprep.subr.mxu0 0.0
    %8452 = vmatpush2.msra.mxu0 0.0
    %8453 = vmatprep.subr.mxu0 0.0
    %8454 = vmatpush2.msra.mxu0 0.0
    %8455 = vmatprep.subr.mxu0 0.0
    %8456 = vmatpush2.msra.mxu0 0.0
    %8457 = vmatprep.subr.mxu0 0.0
    %8458 = vmatpush2.msra.mxu0 0.0
    %8459 = vmatprep.subr.mxu0 0.0
    %8460 = vmatpush2.msra.mxu0 0.0
    %8461 = vmatprep.subr.mxu0 0.0
    %8462 = vmatpush2.msra.mxu0 0.0
    %8463 = vmatprep.mubr.f32.mxu0 0.0
    %v8464 = vand.u32 %v5061, 4294901760
    %8465 = vmatmul.mubr.f32.gmra.mxu0 %v8464
    %v8466 = vpop.f32.mrf.mxu0
    %v8467 = vadd.f32 %v8392, %v8466
    %v8468 = vpop.f32.mrf.mxu0
    %8469 = vdwg.mxu0
    %v8471 = vsel %vm60, %v8467, 0
    %8473 = vmatprep.subr.mxu0 0.0
    %8474 = vmatpush1.xpose.msra.mxu0 0.0
    %8475 = vmatprep.subr.mxu0 0.0
    %8476 = vmatpush1.xpose.msra.mxu0 0.0
    %8477 = vmatprep.subr.mxu0 0.0
    %8478 = vmatpush1.xpose.msra.mxu0 0.0
    %8479 = vmatprep.subr.mxu0 0.0
    %8480 = vmatpush1.xpose.msra.mxu0 0.0
    %8481 = vmatprep.subr.mxu0 0.0
    %8482 = vmatpush1.xpose.msra.mxu0 0.0
    %8483 = vmatprep.subr.mxu0 0.0
    %8484 = vmatpush1.xpose.msra.mxu0 0.0
    %8485 = vmatprep.subr.mxu0 0.0
    %8486 = vmatpush1.xpose.msra.mxu0 0.0
    %8487 = vmatprep.subr.mxu0 0.0
    %8488 = vmatpush1.xpose.msra.mxu0 0.0
    %8489 = vmatprep.subr.mxu0 0.0
    %8490 = vmatpush1.xpose.msra.mxu0 0.0
    %8491 = vmatprep.subr.mxu0 0.0
    %8492 = vmatpush1.xpose.msra.mxu0 0.0
    %8493 = vmatprep.subr.mxu0 0.0
    %8494 = vmatpush1.xpose.msra.mxu0 0.0
    %8495 = vmatprep.subr.mxu0 0.0
    %8496 = vmatpush1.xpose.msra.mxu0 0.0
    %8497 = vmatprep.subr.mxu0 0.0
    %8498 = vmatpush1.xpose.msra.mxu0 0.0
    %8499 = vmatprep.subr.mxu0 0.0
    %8500 = vmatpush1.xpose.msra.mxu0 0.0
    %8501 = vmatprep.subr.mxu0 0.0
    %8502 = vmatpush1.xpose.msra.mxu0 0.0
    %8503 = vmatprep.subr.mxu0 0.0
    %v8504 = vand.u32 %v5552, 4294901760
    %8505 = vmatpush1.xpose.msra.mxu0 %v8504
    %8506 = vmatprep.subr.mxu0 0.0
    %8507 = vmatpush2.xpose.msra.mxu0 0.0
    %8508 = vmatprep.subr.mxu0 0.0
    %8509 = vmatpush2.xpose.msra.mxu0 0.0
    %8510 = vmatprep.subr.mxu0 0.0
    %8511 = vmatpush2.xpose.msra.mxu0 0.0
    %8512 = vmatprep.subr.mxu0 0.0
    %8513 = vmatpush2.xpose.msra.mxu0 0.0
    %8514 = vmatprep.subr.mxu0 0.0
    %8515 = vmatpush2.xpose.msra.mxu0 0.0
    %8516 = vmatprep.subr.mxu0 0.0
    %8517 = vmatpush2.xpose.msra.mxu0 0.0
    %8518 = vmatprep.subr.mxu0 0.0
    %8519 = vmatpush2.xpose.msra.mxu0 0.0
    %8520 = vmatprep.subr.mxu0 0.0
    %8521 = vmatpush2.xpose.msra.mxu0 0.0
    %8522 = vmatprep.subr.mxu0 0.0
    %8523 = vmatpush2.xpose.msra.mxu0 0.0
    %8524 = vmatprep.subr.mxu0 0.0
    %8525 = vmatpush2.xpose.msra.mxu0 0.0
    %8526 = vmatprep.subr.mxu0 0.0
    %8527 = vmatpush2.xpose.msra.mxu0 0.0
    %8528 = vmatprep.subr.mxu0 0.0
    %8529 = vmatpush2.xpose.msra.mxu0 0.0
    %8530 = vmatprep.subr.mxu0 0.0
    %8531 = vmatpush2.xpose.msra.mxu0 0.0
    %8532 = vmatprep.subr.mxu0 0.0
    %8533 = vmatpush2.xpose.msra.mxu0 0.0
    %8534 = vmatprep.subr.mxu0 0.0
    %8535 = vmatpush2.xpose.msra.mxu0 0.0
    %8536 = vmatprep.subr.mxu0 0.0
    %8537 = vmatpush2.xpose.msra.mxu0 0.0
    %8538 = vmatprep.mubr.f32.mxu0 0.0
    %v8539 = vand.u32 %v8471, 4294901760
    %v8540 = vsub.f32 %v8471, %v8539
    %v8541 = vand.u32 %v8540, 4294901760
    %v8542 = vsub.f32 %v8540, %v8541
    %v8543 = vand.u32 %v8542, 4294901760
    %8544 = vmatmul.mubr.f32.gmra.mxu0 %v8543
    %v8545 = vpop.f32.mrf.mxu0
    %v8546 = vadd.f32 %v3080, %v8545
    %v8547 = vpop.f32.mrf.mxu0
    %8548 = vdwg.mxu0
    %8549 = vmatprep.subr.mxu0 0.0
    %8550 = vmatpush1.xpose.msra.mxu0 0.0
    %8551 = vmatprep.subr.mxu0 0.0
    %8552 = vmatpush1.xpose.msra.mxu0 0.0
    %8553 = vmatprep.subr.mxu0 0.0
    %8554 = vmatpush1.xpose.msra.mxu0 0.0
    %8555 = vmatprep.subr.mxu0 0.0
    %8556 = vmatpush1.xpose.msra.mxu0 0.0
    %8557 = vmatprep.subr.mxu0 0.0
    %8558 = vmatpush1.xpose.msra.mxu0 0.0
    %8559 = vmatprep.subr.mxu0 0.0
    %8560 = vmatpush1.xpose.msra.mxu0 0.0
    %8561 = vmatprep.subr.mxu0 0.0
    %8562 = vmatpush1.xpose.msra.mxu0 0.0
    %8563 = vmatprep.subr.mxu0 0.0
    %8564 = vmatpush1.xpose.msra.mxu0 0.0
    %8565 = vmatprep.subr.mxu0 0.0
    %8566 = vmatpush1.xpose.msra.mxu0 0.0
    %8567 = vmatprep.subr.mxu0 0.0
    %8568 = vmatpush1.xpose.msra.mxu0 0.0
    %8569 = vmatprep.subr.mxu0 0.0
    %8570 = vmatpush1.xpose.msra.mxu0 0.0
    %8571 = vmatprep.subr.mxu0 0.0
    %8572 = vmatpush1.xpose.msra.mxu0 0.0
    %8573 = vmatprep.subr.mxu0 0.0
    %8574 = vmatpush1.xpose.msra.mxu0 0.0
    %8575 = vmatprep.subr.mxu0 0.0
    %8576 = vmatpush1.xpose.msra.mxu0 0.0
    %8577 = vmatprep.subr.mxu0 0.0
    %8578 = vmatpush1.xpose.msra.mxu0 0.0
    %8579 = vmatprep.subr.mxu0 0.0
    %v8580 = vand.u32 %v5552, 4294901760
    %v8581 = vsub.f32 %v5552, %v8580
    %v8582 = vand.u32 %v8581, 4294901760
    %v8583 = vsub.f32 %v8581, %v8582
    %v8584 = vand.u32 %v8583, 4294901760
    %8585 = vmatpush1.xpose.msra.mxu0 %v8584
    %8586 = vmatprep.subr.mxu0 0.0
    %8587 = vmatpush2.xpose.msra.mxu0 0.0
    %8588 = vmatprep.subr.mxu0 0.0
    %8589 = vmatpush2.xpose.msra.mxu0 0.0
    %8590 = vmatprep.subr.mxu0 0.0
    %8591 = vmatpush2.xpose.msra.mxu0 0.0
    %8592 = vmatprep.subr.mxu0 0.0
    %8593 = vmatpush2.xpose.msra.mxu0 0.0
    %8594 = vmatprep.subr.mxu0 0.0
    %8595 = vmatpush2.xpose.msra.mxu0 0.0
    %8596 = vmatprep.subr.mxu0 0.0
    %8597 = vmatpush2.xpose.msra.mxu0 0.0
    %8598 = vmatprep.subr.mxu0 0.0
    %8599 = vmatpush2.xpose.msra.mxu0 0.0
    %8600 = vmatprep.subr.mxu0 0.0
    %8601 = vmatpush2.xpose.msra.mxu0 0.0
    %8602 = vmatprep.subr.mxu0 0.0
    %8603 = vmatpush2.xpose.msra.mxu0 0.0
    %8604 = vmatprep.subr.mxu0 0.0
    %8605 = vmatpush2.xpose.msra.mxu0 0.0
    %8606 = vmatprep.subr.mxu0 0.0
    %8607 = vmatpush2.xpose.msra.mxu0 0.0
    %8608 = vmatprep.subr.mxu0 0.0
    %8609 = vmatpush2.xpose.msra.mxu0 0.0
    %8610 = vmatprep.subr.mxu0 0.0
    %8611 = vmatpush2.xpose.msra.mxu0 0.0
    %8612 = vmatprep.subr.mxu0 0.0
    %8613 = vmatpush2.xpose.msra.mxu0 0.0
    %8614 = vmatprep.subr.mxu0 0.0
    %8615 = vmatpush2.xpose.msra.mxu0 0.0
    %8616 = vmatprep.subr.mxu0 0.0
    %8617 = vmatpush2.xpose.msra.mxu0 0.0
    %8618 = vmatprep.mubr.f32.mxu0 0.0
    %v8619 = vand.u32 %v8471, 4294901760
    %8620 = vmatmul.mubr.f32.gmra.mxu0 %v8619
    %v8621 = vpop.f32.mrf.mxu0
    %v8622 = vadd.f32 %v8546, %v8621
    %v8623 = vpop.f32.mrf.mxu0
    %8624 = vdwg.mxu0
    %8625 = vmatprep.subr.mxu0 0.0
    %8626 = vmatpush1.xpose.msra.mxu0 0.0
    %8627 = vmatprep.subr.mxu0 0.0
    %8628 = vmatpush1.xpose.msra.mxu0 0.0
    %8629 = vmatprep.subr.mxu0 0.0
    %8630 = vmatpush1.xpose.msra.mxu0 0.0
    %8631 = vmatprep.subr.mxu0 0.0
    %8632 = vmatpush1.xpose.msra.mxu0 0.0
    %8633 = vmatprep.subr.mxu0 0.0
    %8634 = vmatpush1.xpose.msra.mxu0 0.0
    %8635 = vmatprep.subr.mxu0 0.0
    %8636 = vmatpush1.xpose.msra.mxu0 0.0
    %8637 = vmatprep.subr.mxu0 0.0
    %8638 = vmatpush1.xpose.msra.mxu0 0.0
    %8639 = vmatprep.subr.mxu0 0.0
    %8640 = vmatpush1.xpose.msra.mxu0 0.0
    %8641 = vmatprep.subr.mxu0 0.0
    %8642 = vmatpush1.xpose.msra.mxu0 0.0
    %8643 = vmatprep.subr.mxu0 0.0
    %8644 = vmatpush1.xpose.msra.mxu0 0.0
    %8645 = vmatprep.subr.mxu0 0.0
    %8646 = vmatpush1.xpose.msra.mxu0 0.0
    %8647 = vmatprep.subr.mxu0 0.0
    %8648 = vmatpush1.xpose.msra.mxu0 0.0
    %8649 = vmatprep.subr.mxu0 0.0
    %8650 = vmatpush1.xpose.msra.mxu0 0.0
    %8651 = vmatprep.subr.mxu0 0.0
    %8652 = vmatpush1.xpose.msra.mxu0 0.0
    %8653 = vmatprep.subr.mxu0 0.0
    %8654 = vmatpush1.xpose.msra.mxu0 0.0
    %8655 = vmatprep.subr.mxu0 0.0
    %v8656 = vand.u32 %v5552, 4294901760
    %v8657 = vsub.f32 %v5552, %v8656
    %8658 = vmatpush1.xpose.msra.mxu0 %v8657
    %8659 = vmatprep.subr.mxu0 0.0
    %8660 = vmatpush2.xpose.msra.mxu0 0.0
    %8661 = vmatprep.subr.mxu0 0.0
    %8662 = vmatpush2.xpose.msra.mxu0 0.0
    %8663 = vmatprep.subr.mxu0 0.0
    %8664 = vmatpush2.xpose.msra.mxu0 0.0
    %8665 = vmatprep.subr.mxu0 0.0
    %8666 = vmatpush2.xpose.msra.mxu0 0.0
    %8667 = vmatprep.subr.mxu0 0.0
    %8668 = vmatpush2.xpose.msra.mxu0 0.0
    %8669 = vmatprep.subr.mxu0 0.0
    %8670 = vmatpush2.xpose.msra.mxu0 0.0
    %8671 = vmatprep.subr.mxu0 0.0
    %8672 = vmatpush2.xpose.msra.mxu0 0.0
    %8673 = vmatprep.subr.mxu0 0.0
    %8674 = vmatpush2.xpose.msra.mxu0 0.0
    %8675 = vmatprep.subr.mxu0 0.0
    %8676 = vmatpush2.xpose.msra.mxu0 0.0
    %8677 = vmatprep.subr.mxu0 0.0
    %8678 = vmatpush2.xpose.msra.mxu0 0.0
    %8679 = vmatprep.subr.mxu0 0.0
    %8680 = vmatpush2.xpose.msra.mxu0 0.0
    %8681 = vmatprep.subr.mxu0 0.0
    %8682 = vmatpush2.xpose.msra.mxu0 0.0
    %8683 = vmatprep.subr.mxu0 0.0
    %8684 = vmatpush2.xpose.msra.mxu0 0.0
    %8685 = vmatprep.subr.mxu0 0.0
    %8686 = vmatpush2.xpose.msra.mxu0 0.0
    %8687 = vmatprep.subr.mxu0 0.0
    %8688 = vmatpush2.xpose.msra.mxu0 0.0
    %8689 = vmatprep.subr.mxu0 0.0
    %8690 = vmatpush2.xpose.msra.mxu0 0.0
    %8691 = vmatprep.mubr.f32.mxu0 0.0
    %v8692 = vand.u32 %v8471, 4294901760
    %v8693 = vsub.f32 %v8471, %v8692
    %8694 = vmatmul.mubr.f32.gmra.mxu0 %v8693
    %v8695 = vpop.f32.mrf.mxu0
    %v8696 = vadd.f32 %v8622, %v8695
    %v8697 = vpop.f32.mrf.mxu0
    %8698 = vdwg.mxu0
    %8699 = vmatprep.subr.mxu0 0.0
    %8700 = vmatpush1.xpose.msra.mxu0 0.0
    %8701 = vmatprep.subr.mxu0 0.0
    %8702 = vmatpush1.xpose.msra.mxu0 0.0
    %8703 = vmatprep.subr.mxu0 0.0
    %8704 = vmatpush1.xpose.msra.mxu0 0.0
    %8705 = vmatprep.subr.mxu0 0.0
    %8706 = vmatpush1.xpose.msra.mxu0 0.0
    %8707 = vmatprep.subr.mxu0 0.0
    %8708 = vmatpush1.xpose.msra.mxu0 0.0
    %8709 = vmatprep.subr.mxu0 0.0
    %8710 = vmatpush1.xpose.msra.mxu0 0.0
    %8711 = vmatprep.subr.mxu0 0.0
    %8712 = vmatpush1.xpose.msra.mxu0 0.0
    %8713 = vmatprep.subr.mxu0 0.0
    %8714 = vmatpush1.xpose.msra.mxu0 0.0
    %8715 = vmatprep.subr.mxu0 0.0
    %8716 = vmatpush1.xpose.msra.mxu0 0.0
    %8717 = vmatprep.subr.mxu0 0.0
    %8718 = vmatpush1.xpose.msra.mxu0 0.0
    %8719 = vmatprep.subr.mxu0 0.0
    %8720 = vmatpush1.xpose.msra.mxu0 0.0
    %8721 = vmatprep.subr.mxu0 0.0
    %8722 = vmatpush1.xpose.msra.mxu0 0.0
    %8723 = vmatprep.subr.mxu0 0.0
    %8724 = vmatpush1.xpose.msra.mxu0 0.0
    %8725 = vmatprep.subr.mxu0 0.0
    %8726 = vmatpush1.xpose.msra.mxu0 0.0
    %8727 = vmatprep.subr.mxu0 0.0
    %8728 = vmatpush1.xpose.msra.mxu0 0.0
    %8729 = vmatprep.subr.mxu0 0.0
    %v8730 = vand.u32 %v5552, 4294901760
    %8731 = vmatpush1.xpose.msra.mxu0 %v8730
    %8732 = vmatprep.subr.mxu0 0.0
    %8733 = vmatpush2.xpose.msra.mxu0 0.0
    %8734 = vmatprep.subr.mxu0 0.0
    %8735 = vmatpush2.xpose.msra.mxu0 0.0
    %8736 = vmatprep.subr.mxu0 0.0
    %8737 = vmatpush2.xpose.msra.mxu0 0.0
    %8738 = vmatprep.subr.mxu0 0.0
    %8739 = vmatpush2.xpose.msra.mxu0 0.0
    %8740 = vmatprep.subr.mxu0 0.0
    %8741 = vmatpush2.xpose.msra.mxu0 0.0
    %8742 = vmatprep.subr.mxu0 0.0
    %8743 = vmatpush2.xpose.msra.mxu0 0.0
    %8744 = vmatprep.subr.mxu0 0.0
    %8745 = vmatpush2.xpose.msra.mxu0 0.0
    %8746 = vmatprep.subr.mxu0 0.0
    %8747 = vmatpush2.xpose.msra.mxu0 0.0
    %8748 = vmatprep.subr.mxu0 0.0
    %8749 = vmatpush2.xpose.msra.mxu0 0.0
    %8750 = vmatprep.subr.mxu0 0.0
    %8751 = vmatpush2.xpose.msra.mxu0 0.0
    %8752 = vmatprep.subr.mxu0 0.0
    %8753 = vmatpush2.xpose.msra.mxu0 0.0
    %8754 = vmatprep.subr.mxu0 0.0
    %8755 = vmatpush2.xpose.msra.mxu0 0.0
    %8756 = vmatprep.subr.mxu0 0.0
    %8757 = vmatpush2.xpose.msra.mxu0 0.0
    %8758 = vmatprep.subr.mxu0 0.0
    %8759 = vmatpush2.xpose.msra.mxu0 0.0
    %8760 = vmatprep.subr.mxu0 0.0
    %8761 = vmatpush2.xpose.msra.mxu0 0.0
    %8762 = vmatprep.subr.mxu0 0.0
    %8763 = vmatpush2.xpose.msra.mxu0 0.0
    %8764 = vmatprep.mubr.f32.mxu0 0.0
    %v8765 = vand.u32 %v8471, 4294901760
    %v8766 = vsub.f32 %v8471, %v8765
    %v8767 = vand.u32 %v8766, 4294901760
    %8768 = vmatmul.mubr.f32.gmra.mxu0 %v8767
    %v8769 = vpop.f32.mrf.mxu0
    %v8770 = vadd.f32 %v8696, %v8769
    %v8771 = vpop.f32.mrf.mxu0
    %8772 = vdwg.mxu0
    %8773 = vmatprep.subr.mxu0 0.0
    %8774 = vmatpush1.xpose.msra.mxu0 0.0
    %8775 = vmatprep.subr.mxu0 0.0
    %8776 = vmatpush1.xpose.msra.mxu0 0.0
    %8777 = vmatprep.subr.mxu0 0.0
    %8778 = vmatpush1.xpose.msra.mxu0 0.0
    %8779 = vmatprep.subr.mxu0 0.0
    %8780 = vmatpush1.xpose.msra.mxu0 0.0
    %8781 = vmatprep.subr.mxu0 0.0
    %8782 = vmatpush1.xpose.msra.mxu0 0.0
    %8783 = vmatprep.subr.mxu0 0.0
    %8784 = vmatpush1.xpose.msra.mxu0 0.0
    %8785 = vmatprep.subr.mxu0 0.0
    %8786 = vmatpush1.xpose.msra.mxu0 0.0
    %8787 = vmatprep.subr.mxu0 0.0
    %8788 = vmatpush1.xpose.msra.mxu0 0.0
    %8789 = vmatprep.subr.mxu0 0.0
    %8790 = vmatpush1.xpose.msra.mxu0 0.0
    %8791 = vmatprep.subr.mxu0 0.0
    %8792 = vmatpush1.xpose.msra.mxu0 0.0
    %8793 = vmatprep.subr.mxu0 0.0
    %8794 = vmatpush1.xpose.msra.mxu0 0.0
    %8795 = vmatprep.subr.mxu0 0.0
    %8796 = vmatpush1.xpose.msra.mxu0 0.0
    %8797 = vmatprep.subr.mxu0 0.0
    %8798 = vmatpush1.xpose.msra.mxu0 0.0
    %8799 = vmatprep.subr.mxu0 0.0
    %8800 = vmatpush1.xpose.msra.mxu0 0.0
    %8801 = vmatprep.subr.mxu0 0.0
    %8802 = vmatpush1.xpose.msra.mxu0 0.0
    %8803 = vmatprep.subr.mxu0 0.0
    %v8804 = vand.u32 %v5552, 4294901760
    %v8805 = vsub.f32 %v5552, %v8804
    %v8806 = vand.u32 %v8805, 4294901760
    %8807 = vmatpush1.xpose.msra.mxu0 %v8806
    %8808 = vmatprep.subr.mxu0 0.0
    %8809 = vmatpush2.xpose.msra.mxu0 0.0
    %8810 = vmatprep.subr.mxu0 0.0
    %8811 = vmatpush2.xpose.msra.mxu0 0.0
    %8812 = vmatprep.subr.mxu0 0.0
    %8813 = vmatpush2.xpose.msra.mxu0 0.0
    %8814 = vmatprep.subr.mxu0 0.0
    %8815 = vmatpush2.xpose.msra.mxu0 0.0
    %8816 = vmatprep.subr.mxu0 0.0
    %8817 = vmatpush2.xpose.msra.mxu0 0.0
    %8818 = vmatprep.subr.mxu0 0.0
    %8819 = vmatpush2.xpose.msra.mxu0 0.0
    %8820 = vmatprep.subr.mxu0 0.0
    %8821 = vmatpush2.xpose.msra.mxu0 0.0
    %8822 = vmatprep.subr.mxu0 0.0
    %8823 = vmatpush2.xpose.msra.mxu0 0.0
    %8824 = vmatprep.subr.mxu0 0.0
    %8825 = vmatpush2.xpose.msra.mxu0 0.0
    %8826 = vmatprep.subr.mxu0 0.0
    %8827 = vmatpush2.xpose.msra.mxu0 0.0
    %8828 = vmatprep.subr.mxu0 0.0
    %8829 = vmatpush2.xpose.msra.mxu0 0.0
    %8830 = vmatprep.subr.mxu0 0.0
    %8831 = vmatpush2.xpose.msra.mxu0 0.0
    %8832 = vmatprep.subr.mxu0 0.0
    %8833 = vmatpush2.xpose.msra.mxu0 0.0
    %8834 = vmatprep.subr.mxu0 0.0
    %8835 = vmatpush2.xpose.msra.mxu0 0.0
    %8836 = vmatprep.subr.mxu0 0.0
    %8837 = vmatpush2.xpose.msra.mxu0 0.0
    %8838 = vmatprep.subr.mxu0 0.0
    %8839 = vmatpush2.xpose.msra.mxu0 0.0
    %8840 = vmatprep.mubr.f32.mxu0 0.0
    %v8841 = vand.u32 %v8471, 4294901760
    %8842 = vmatmul.mubr.f32.gmra.mxu0 %v8841
    %v8843 = vpop.f32.mrf.mxu0
    %v8844 = vadd.f32 %v8770, %v8843
    %v8845 = vpop.f32.mrf.mxu0
    %8846 = vdwg.mxu0
    %8847 = vmatprep.subr.mxu0 0.0
    %8848 = vmatpush1.xpose.msra.mxu0 0.0
    %8849 = vmatprep.subr.mxu0 0.0
    %8850 = vmatpush1.xpose.msra.mxu0 0.0
    %8851 = vmatprep.subr.mxu0 0.0
    %8852 = vmatpush1.xpose.msra.mxu0 0.0
    %8853 = vmatprep.subr.mxu0 0.0
    %8854 = vmatpush1.xpose.msra.mxu0 0.0
    %8855 = vmatprep.subr.mxu0 0.0
    %8856 = vmatpush1.xpose.msra.mxu0 0.0
    %8857 = vmatprep.subr.mxu0 0.0
    %8858 = vmatpush1.xpose.msra.mxu0 0.0
    %8859 = vmatprep.subr.mxu0 0.0
    %8860 = vmatpush1.xpose.msra.mxu0 0.0
    %8861 = vmatprep.subr.mxu0 0.0
    %8862 = vmatpush1.xpose.msra.mxu0 0.0
    %8863 = vmatprep.subr.mxu0 0.0
    %8864 = vmatpush1.xpose.msra.mxu0 0.0
    %8865 = vmatprep.subr.mxu0 0.0
    %8866 = vmatpush1.xpose.msra.mxu0 0.0
    %8867 = vmatprep.subr.mxu0 0.0
    %8868 = vmatpush1.xpose.msra.mxu0 0.0
    %8869 = vmatprep.subr.mxu0 0.0
    %8870 = vmatpush1.xpose.msra.mxu0 0.0
    %8871 = vmatprep.subr.mxu0 0.0
    %8872 = vmatpush1.xpose.msra.mxu0 0.0
    %8873 = vmatprep.subr.mxu0 0.0
    %8874 = vmatpush1.xpose.msra.mxu0 0.0
    %8875 = vmatprep.subr.mxu0 0.0
    %8876 = vmatpush1.xpose.msra.mxu0 0.0
    %8877 = vmatprep.subr.mxu0 0.0
    %v8878 = vand.u32 %v5552, 4294901760
    %8879 = vmatpush1.xpose.msra.mxu0 %v8878
    %8880 = vmatprep.subr.mxu0 0.0
    %8881 = vmatpush2.xpose.msra.mxu0 0.0
    %8882 = vmatprep.subr.mxu0 0.0
    %8883 = vmatpush2.xpose.msra.mxu0 0.0
    %8884 = vmatprep.subr.mxu0 0.0
    %8885 = vmatpush2.xpose.msra.mxu0 0.0
    %8886 = vmatprep.subr.mxu0 0.0
    %8887 = vmatpush2.xpose.msra.mxu0 0.0
    %8888 = vmatprep.subr.mxu0 0.0
    %8889 = vmatpush2.xpose.msra.mxu0 0.0
    %8890 = vmatprep.subr.mxu0 0.0
    %8891 = vmatpush2.xpose.msra.mxu0 0.0
    %8892 = vmatprep.subr.mxu0 0.0
    %8893 = vmatpush2.xpose.msra.mxu0 0.0
    %8894 = vmatprep.subr.mxu0 0.0
    %8895 = vmatpush2.xpose.msra.mxu0 0.0
    %8896 = vmatprep.subr.mxu0 0.0
    %8897 = vmatpush2.xpose.msra.mxu0 0.0
    %8898 = vmatprep.subr.mxu0 0.0
    %8899 = vmatpush2.xpose.msra.mxu0 0.0
    %8900 = vmatprep.subr.mxu0 0.0
    %8901 = vmatpush2.xpose.msra.mxu0 0.0
    %8902 = vmatprep.subr.mxu0 0.0
    %8903 = vmatpush2.xpose.msra.mxu0 0.0
    %8904 = vmatprep.subr.mxu0 0.0
    %8905 = vmatpush2.xpose.msra.mxu0 0.0
    %8906 = vmatprep.subr.mxu0 0.0
    %8907 = vmatpush2.xpose.msra.mxu0 0.0
    %8908 = vmatprep.subr.mxu0 0.0
    %8909 = vmatpush2.xpose.msra.mxu0 0.0
    %8910 = vmatprep.subr.mxu0 0.0
    %8911 = vmatpush2.xpose.msra.mxu0 0.0
    %8912 = vmatprep.mubr.f32.mxu0 0.0
    %v8913 = vand.u32 %v8471, 4294901760
    %8914 = vmatmul.mubr.f32.gmra.mxu0 %v8913
    %v8915 = vpop.f32.mrf.mxu0
    %v8916 = vadd.f32 %v8844, %v8915
    %v8917 = vpop.f32.mrf.mxu0
    %8918 = vdwg.mxu0
    %8919 = vst.msk [vmem:[#allocation2 + $0x1] sm:$0x1] %vm6000, %v8916
    // Predicated region
    $region54: #{transformer_forward.1} parent=1 // pred_check
      _
    $region55: #{transformer_forward.1} parent=1 // pred_check_branch
      %8921 = sbr.rel (0) target = $region57
    $region56: #{transformer_forward.1} parent=1 // pred_region
      %s8923 = ssub.s32 32, 32
      %8924 = vsyncadd [#allocation3], %s8923
      %s8926 = sshll.u32 [#allocation2], 4
      %s8927 = int_to_ptr.vmem [resolvable:$true] %s8926
      %8929 = dma.vmem_to_hbm [thread:$0]  %s8927, 32, %s13, [#allocation3]
    $region57: #{transformer_forward.1} parent=1 // pred_fallthru
      _
    // Predicated region
    $region58: #{transformer_forward.1} parent=1 // pred_check
      _
    $region59: #{transformer_forward.1} parent=1 // pred_check_branch
      %8931 = sbr.rel (0) target = $region61
    $region60: #{transformer_forward.1} parent=1 // pred_region
      %8932 = dma.done [#allocation3], 32
    $region61: #{transformer_forward.1} parent=1 // pred_fallthru
      _
    %8933 = vsyncpa [#allocation3], 1

</llo_original>
